<compile_context>
chip_gen: v6e
topology: v6e:2x2x1
jax: 0.10.0
libtpu: 0.0.40
codegen_flags: <defaults>
</compile_context>

<pallas_src>
import jax
import jax.numpy as jnp
from jax.experimental import pallas as pl
from jax.experimental.pallas import tpu as pltpu


# ----------------------------- Pallas kernel ---------------------------------

def birnn_kernel(idx_ref,      # VMEM (T*B, 1) int32   time-major token ids (row = t*B + b)
                 tab_ref,      # VMEM (Vpad, 8H) bf16  precomputed emb @ [Wih_f|Wih_b], [i,f,o,g]
                 bias_ref,     # VMEM (1, 8H) f32      [b_f | b_b] (b_ih + b_hh folded, reordered)
                 whh_ref,      # VMEM (2H, 8H) bf16    block_diag(Whh_f, Whh_b), [i,f,o,g]
                 wd_ref,       # VMEM (4H, 2) bf16     decoder weight
                 bd_ref,       # VMEM (1, 2) f32       decoder bias
                 out_ref,      # VMEM (B, 2) f32
                 g_vmem):      # VMEM (T*B, 8H) f32    scratch: pre-activations, both dirs
    B = out_ref.shape[0]
    TB = g_vmem.shape[0]
    T = TB // B
    H = whh_ref.shape[0] // 2
    G = 4 * H
    Vpad = tab_ref.shape[0]

    # ---- 1. vectorized "embedding gather + input projection" in one MXU matmul ----
    # one-hot(tokens) @ gate_table replaces the old per-token scalar gather AND the
    # (T*B,E)x(E,8H) projection; bias is added once in f32.
    col = jax.lax.broadcasted_iota(jnp.int32, (TB, Vpad), 1)
    onehot = (col == idx_ref[...]).astype(jnp.bfloat16)               # (TB, Vpad)
    g_vmem[...] = (jnp.dot(onehot, tab_ref[...],
                           preferred_element_type=jnp.float32)
                   + bias_ref[...])

    # Gate layout within each direction's 4H block: [i, f, o, g]
    # (packed by the wrapper) so one sigmoid call covers (B, 3H).
    def lstm_elem(g4, c):
        ifo = jax.nn.sigmoid(g4[:, 0:3 * H])            # i, f, o in one EUP pass
        g = jnp.tanh(g4[:, 3 * H:4 * H])
        c_new = ifo[:, H:2 * H] * c + ifo[:, 0:H] * g   # f*c + i*g   (f32 elementwise)
        h_new = ifo[:, 2 * H:3 * H] * jnp.tanh(c_new)   # o * tanh(c)
        return h_new, c_new

    zero = jnp.zeros((B, H), jnp.float32)

    # ---- 2. step 0 of each direction (h = c = 0 => no h@Whh term needed) ----
    h_f, c_f = lstm_elem(g_vmem[pl.ds(0, B), 0:G], zero)               # fwd @ t = 0
    h_b, c_b = lstm_elem(g_vmem[pl.ds((T - 1) * B, B), G:2 * G], zero) # bwd @ t = T-1
    h_f0 = h_f          # forward hidden at t = 0
    h_bL = h_b          # backward hidden at t = T-1

    # ---- 3. fused fwd/bwd recurrence: ONE block-diag bf16 dot per step ----
    # (statically unrolled; T is a compile-time constant and small)
    # NOTE: h is re-quantized to bf16 each step; fine at T=8 under the test tolerance.
    for s in range(1, T):
        h2 = jnp.concatenate([h_f, h_b], axis=1).astype(jnp.bfloat16)          # (B, 2H)
        hh = jnp.dot(h2, whh_ref[...], preferred_element_type=jnp.float32)     # (B, 8H)
        gf = g_vmem[pl.ds(s * B, B), 0:G] + hh[:, 0:G]
        gb = g_vmem[pl.ds((T - 1 - s) * B, B), G:2 * G] + hh[:, G:2 * G]
        h_f, c_f = lstm_elem(gf, c_f)
        h_b, c_b = lstm_elem(gb, c_b)
    # Now: h_f = forward hidden at t = T-1 ; h_b = backward hidden at t = 0.

    # ---- 4. decoder: enc = [h_f(0), h_b(0), h_f(T-1), h_b(T-1)] -> single bf16 dot ----
    enc = jnp.concatenate([h_f0, h_b, h_f, h_bL], axis=1).astype(jnp.bfloat16)  # (B, 4H)
    out_ref[...] = (jnp.dot(enc, wd_ref[...], preferred_element_type=jnp.float32)
                    + bd_ref[...])


# ------------------------------ JAX wrapper -----------------------------------

def _reorder_gates(w):
    """Re-order the last-dim 4H gate blocks from PyTorch's [i,f,g,o] to [i,f,o,g]."""
    H = w.shape[-1] // 4
    return jnp.concatenate([w[..., :2 * H], w[..., 3 * H:], w[..., 2 * H:3 * H]], axis=-1)


def pack_params(p):
    """One-time packing of PyTorch-layout params into the kernel's layout / dtypes."""
    V, _E = p["embedding"].shape
    H = p["whh_f"].shape[0]
    Vpad = ((V + 127) // 128) * 128

    # Precomputed gate table: embedding @ [Wih_f | Wih_b]  (gate order [i,f,o,g] per dir).
    w_ih = jnp.concatenate([_reorder_gates(p["wih_f"]),
                            _reorder_gates(p["wih_b"])], axis=1)                  # (E, 8H)
    tab = p["embedding"].astype(jnp.float32) @ w_ih.astype(jnp.float32)           # (V, 8H)
    tab = jnp.pad(tab, ((0, Vpad - V), (0, 0)))                                   # (Vpad, 8H)

    bias = jnp.concatenate([_reorder_gates(p["b_f"]),
                            _reorder_gates(p["b_b"])], axis=1)                    # (1, 8H)

    # Block-diagonal hidden-to-hidden: rows [h_f | h_b], cols [fwd gates | bwd gates].
    z = jnp.zeros((H, 4 * H), jnp.float32)
    whh_blk = jnp.concatenate(
        [jnp.concatenate([_reorder_gates(p["whh_f"]), z], axis=1),
         jnp.concatenate([z, _reorder_gates(p["whh_b"])], axis=1)], axis=0)       # (2H, 8H)

    return {
        "gate_tab": tab.astype(jnp.bfloat16),       # (Vpad, 8H)
        "bias": bias.astype(jnp.float32),           # (1, 8H)
        "whh_blk": whh_blk.astype(jnp.bfloat16),    # (2H, 8H)
        "wd": p["wd"].astype(jnp.bfloat16),         # (4H, 2)
        "bd": p["bd"].astype(jnp.float32),          # (1, 2)
    }


@jax.jit
def birnn_forward(tokens, kp):
    B, T = tokens.shape
    G2 = kp["gate_tab"].shape[1]                 # 8H (both directions)

    # time-major flat ids: row t*B + b holds tokens[b, t]  (matches inputs.permute(1, 0))
    idx = tokens.T.reshape(T * B, 1).astype(jnp.int32)

    vmem = pl.BlockSpec(memory_space=pltpu.MemorySpace.VMEM)
    return pl.pallas_call(
        birnn_kernel,
        out_shape=jax.ShapeDtypeStruct((B, 2), jnp.float32),
        in_specs=[vmem, vmem, vmem, vmem, vmem, vmem],
        out_specs=vmem,
        scratch_shapes=[
            pltpu.VMEM((T * B, G2), jnp.float32),   # precomputed pre-activation slab
        ],
    )(idx, kp["gate_tab"], kp["bias"], kp["whh_blk"], kp["wd"], kp["bd"])


# --------------------------- pure-JAX reference --------------------------------

def birnn_reference(tokens, params):
    emb = jnp.take(params["embedding"], tokens.T, axis=0).astype(jnp.float32)  # (T,B,E)
    T, B, _ = emb.shape
    H = params["whh_f"].shape[0]

    def cell(x, h, c, wih, whh, b):
        gates = x @ wih + h @ whh + b
        i = jax.nn.sigmoid(gates[:, 0:H])
        f = jax.nn.sigmoid(gates[:, H:2 * H])
        g = jnp.tanh(gates[:, 2 * H:3 * H])
        o = jax.nn.sigmoid(gates[:, 3 * H:4 * H])
        c = f * c + i * g
        h = o * jnp.tanh(c)
        return h, c

    def run_dir(order, wih, whh, b):
        h = jnp.zeros((B, H), jnp.float32)
        c = jnp.zeros((B, H), jnp.float32)
        hs = []
        for t in order:
            h, c = cell(emb[t], h, c, wih, whh, b)
            hs.append(h)
        return hs

    hs_f = run_dir(range(T), params["wih_f"], params["whh_f"], params["b_f"])
    hs_b = run_dir(range(T - 1, -1, -1), params["wih_b"], params["whh_b"], params["b_b"])
    out0 = jnp.concatenate([hs_f[0], hs_b[-1]], axis=-1)
    outL = jnp.concatenate([hs_f[-1], hs_b[0]], axis=-1)
    enc = jnp.concatenate([out0, outL], axis=-1)                     # (B, 4H)
    return enc @ params["wd"] + params["bd"]


# ----------------------------------- main --------------------------------------

def make_params(key, vocab, embed, hidden):
    ks = jax.random.split(key, 9)
    s = 1.0 / jnp.sqrt(hidden)
    u = lambda k, shape: jax.random.uniform(k, shape, jnp.float32, -s, s)
    return {
        "embedding": jax.random.normal(ks[0], (vocab, embed), jnp.float32) * 0.1,
        "wih_f": u(ks[1], (embed, 4 * hidden)),
        "whh_f": u(ks[2], (hidden, 4 * hidden)),
        "b_f":   u(ks[3], (1, 4 * hidden)),          # b_ih + b_hh folded together
        "wih_b": u(ks[4], (embed, 4 * hidden)),
        "whh_b": u(ks[5], (hidden, 4 * hidden)),
        "b_b":   u(ks[6], (1, 4 * hidden)),
        "wd":    u(ks[7], (4 * hidden, 2)),
        "bd":    u(ks[8], (1, 2)),
    }


if __name__ == "__main__":
    VOCAB, EMBED, HIDDEN = 1000, 128, 128
    BATCH, SEQ = 8, 8

    key = jax.random.PRNGKey(0)
    k_tok, k_par = jax.random.split(key)
    tokens = jax.random.randint(k_tok, (BATCH, SEQ), 0, VOCAB, dtype=jnp.int32)
    params = make_params(k_par, VOCAB, EMBED, HIDDEN)
    packed = pack_params(params)     # one-time packing: gate table precompute + reorder + bf16

    out = birnn_forward(tokens, packed)
    out = jax.block_until_ready(out)

    ref = birnn_reference(tokens, params)
    assert out.shape == (BATCH, 2)
    # LSTM weights / precomputed gate table / decoder go through the MXU in bf16
    # (f32 accumulation), so tolerance is looser than pure f32; observed error ~1e-3.
    assert jnp.allclose(out, ref, rtol=2e-2, atol=2e-2), "kernel mismatch vs reference"

    print("KERNEL_OK")
</pallas_src>

<mosaic_0001>
module attributes {stable_mosaic.version = 11 : i64} {
  func.func @birnn_kernel(%arg0: memref<64x1xi32, #tpu.memory_space<vmem>>, %arg1: memref<1024x1024xbf16, #tpu.memory_space<vmem>>, %arg2: memref<1x1024xf32, #tpu.memory_space<vmem>>, %arg3: memref<256x1024xbf16, #tpu.memory_space<vmem>>, %arg4: memref<512x2xbf16, #tpu.memory_space<vmem>>, %arg5: memref<1x2xf32, #tpu.memory_space<vmem>>, %arg6: memref<8x2xf32, #tpu.memory_space<vmem>>, %arg7: memref<64x1024xf32, #tpu.memory_space<vmem>>) attributes {dimension_semantics = [], scalar_prefetch = 0 : i64, scratch_operands = 1 : i64, tpu.core_type = #tpu.core_type<tc>} {
    %0 = tpu.iota {dimensions = array<i32: 1>} : vector<64x1024xi32>
    %c0 = arith.constant 0 : index
    %c0_0 = arith.constant 0 : index
    %1 = vector.load %arg0[%c0, %c0_0] : memref<64x1xi32, #tpu.memory_space<vmem>>, vector<64x1xi32>
    %2 = vector.broadcast %1 : vector<64x1xi32> to vector<64x1024xi32>
    %3 = arith.cmpi eq, %0, %2 : vector<64x1024xi32>
    %4 = arith.extui %3 : vector<64x1024xi1> to vector<64x1024xi32>
    %5 = arith.sitofp %4 : vector<64x1024xi32> to vector<64x1024xf32>
    %6 = arith.truncf %5 : vector<64x1024xf32> to vector<64x1024xbf16>
    %c0_1 = arith.constant 0 : index
    %c0_2 = arith.constant 0 : index
    %7 = vector.load %arg1[%c0_1, %c0_2] : memref<1024x1024xbf16, #tpu.memory_space<vmem>>, vector<1024x1024xbf16>
    %cst = arith.constant dense<0.000000e+00> : vector<64x1024xf32>
    %8 = tpu.matmul %6, %7, %cst {dimension_numbers = #tpu.dot_dimension_numbers<[1], [0], [0], [1], [0, 0, 1, 1], [], []>} : vector<64x1024xbf16>, vector<1024x1024xbf16>, vector<64x1024xf32> -> vector<64x1024xf32>
    %c0_3 = arith.constant 0 : index
    %c0_4 = arith.constant 0 : index
    %9 = vector.load %arg2[%c0_3, %c0_4] : memref<1x1024xf32, #tpu.memory_space<vmem>>, vector<1x1024xf32>
    %10 = vector.broadcast %9 : vector<1x1024xf32> to vector<64x1024xf32>
    %11 = arith.addf %8, %10 : vector<64x1024xf32>
    %c0_5 = arith.constant 0 : index
    %c0_6 = arith.constant 0 : index
    %12 = vector.load %arg7[%c0_5, %c0_6] : memref<64x1024xf32, #tpu.memory_space<vmem>>, vector<64x1024xf32>
    tpu.vector_store %arg7[%c0_5, %c0_6], %11 {strides = array<i32>} : memref<64x1024xf32, #tpu.memory_space<vmem>>, vector<64x1024xf32>,
    %cst_7 = arith.constant 0.000000e+00 : f32
    %13 = vector.broadcast %cst_7 : f32 to vector<8x128xf32>
    %c0_8 = arith.constant 0 : index
    %c0_9 = arith.constant 0 : index
    %14 = vector.load %arg7[%c0_8, %c0_9] : memref<64x1024xf32, #tpu.memory_space<vmem>>, vector<8x512xf32>
    %15 = vector.extract_strided_slice %14 {offsets = [0, 0], sizes = [8, 384], strides = [1, 1]} : vector<8x512xf32> to vector<8x384xf32>
    %16 = arith.negf %15 : vector<8x384xf32>
    %17 = math.exp %16 : vector<8x384xf32>
    %cst_10 = arith.constant 1.000000e+00 : f32
    %18 = vector.broadcast %cst_10 : f32 to vector<8x384xf32>
    %19 = arith.addf %18, %17 : vector<8x384xf32>
    %20 = arith.divf %18, %19 : vector<8x384xf32>
    %21 = vector.extract_strided_slice %14 {offsets = [0, 384], sizes = [8, 128], strides = [1, 1]} : vector<8x512xf32> to vector<8x128xf32>
    %22 = math.tanh %21 : vector<8x128xf32>
    %23 = vector.extract_strided_slice %20 {offsets = [0, 128], sizes = [8, 128], strides = [1, 1]} : vector<8x384xf32> to vector<8x128xf32>
    %24 = arith.mulf %23, %13 : vector<8x128xf32>
    %25 = vector.extract_strided_slice %20 {offsets = [0, 0], sizes = [8, 128], strides = [1, 1]} : vector<8x384xf32> to vector<8x128xf32>
    %26 = arith.mulf %25, %22 : vector<8x128xf32>
    %27 = arith.addf %24, %26 : vector<8x128xf32>
    %28 = vector.extract_strided_slice %20 {offsets = [0, 256], sizes = [8, 128], strides = [1, 1]} : vector<8x384xf32> to vector<8x128xf32>
    %29 = math.tanh %27 : vector<8x128xf32>
    %30 = arith.mulf %28, %29 : vector<8x128xf32>
    %c56 = arith.constant 56 : index
    %c512 = arith.constant 512 : index
    %31 = vector.load %arg7[%c56, %c512] : memref<64x1024xf32, #tpu.memory_space<vmem>>, vector<8x512xf32>
    %32 = vector.extract_strided_slice %31 {offsets = [0, 0], sizes = [8, 384], strides = [1, 1]} : vector<8x512xf32> to vector<8x384xf32>
    %33 = arith.negf %32 : vector<8x384xf32>
    %34 = math.exp %33 : vector<8x384xf32>
    %cst_11 = arith.constant 1.000000e+00 : f32
    %35 = vector.broadcast %cst_11 : f32 to vector<8x384xf32>
    %36 = arith.addf %35, %34 : vector<8x384xf32>
    %37 = arith.divf %35, %36 : vector<8x384xf32>
    %38 = vector.extract_strided_slice %31 {offsets = [0, 384], sizes = [8, 128], strides = [1, 1]} : vector<8x512xf32> to vector<8x128xf32>
    %39 = math.tanh %38 : vector<8x128xf32>
    %40 = vector.extract_strided_slice %37 {offsets = [0, 128], sizes = [8, 128], strides = [1, 1]} : vector<8x384xf32> to vector<8x128xf32>
    %41 = arith.mulf %40, %13 : vector<8x128xf32>
    %42 = vector.extract_strided_slice %37 {offsets = [0, 0], sizes = [8, 128], strides = [1, 1]} : vector<8x384xf32> to vector<8x128xf32>
    %43 = arith.mulf %42, %39 : vector<8x128xf32>
    %44 = arith.addf %41, %43 : vector<8x128xf32>
    %45 = vector.extract_strided_slice %37 {offsets = [0, 256], sizes = [8, 128], strides = [1, 1]} : vector<8x384xf32> to vector<8x128xf32>
    %46 = math.tanh %44 : vector<8x128xf32>
    %47 = arith.mulf %45, %46 : vector<8x128xf32>
    %48 = tpu.concatenate %30, %47 in 1 : vector<8x128xf32>, vector<8x128xf32> -> vector<8x256xf32>
    %49 = arith.truncf %48 : vector<8x256xf32> to vector<8x256xbf16>
    %c0_12 = arith.constant 0 : index
    %c0_13 = arith.constant 0 : index
    %50 = vector.load %arg3[%c0_12, %c0_13] : memref<256x1024xbf16, #tpu.memory_space<vmem>>, vector<256x1024xbf16>
    %cst_14 = arith.constant dense<0.000000e+00> : vector<8x1024xf32>
    %51 = tpu.matmul %49, %50, %cst_14 {dimension_numbers = #tpu.dot_dimension_numbers<[1], [0], [0], [1], [0, 0, 1, 1], [], []>} : vector<8x256xbf16>, vector<256x1024xbf16>, vector<8x1024xf32> -> vector<8x1024xf32>
    %c8 = arith.constant 8 : index
    %c0_15 = arith.constant 0 : index
    %52 = vector.load %arg7[%c8, %c0_15] : memref<64x1024xf32, #tpu.memory_space<vmem>>, vector<8x512xf32>
    %53 = vector.extract_strided_slice %51 {offsets = [0, 0], sizes = [8, 512], strides = [1, 1]} : vector<8x1024xf32> to vector<8x512xf32>
    %54 = arith.addf %52, %53 : vector<8x512xf32>
    %c48 = arith.constant 48 : index
    %c512_16 = arith.constant 512 : index
    %55 = vector.load %arg7[%c48, %c512_16] : memref<64x1024xf32, #tpu.memory_space<vmem>>, vector<8x512xf32>
    %56 = vector.extract_strided_slice %51 {offsets = [0, 512], sizes = [8, 512], strides = [1, 1]} : vector<8x1024xf32> to vector<8x512xf32>
    %57 = arith.addf %55, %56 : vector<8x512xf32>
    %58 = vector.extract_strided_slice %54 {offsets = [0, 0], sizes = [8, 384], strides = [1, 1]} : vector<8x512xf32> to vector<8x384xf32>
    %59 = arith.negf %58 : vector<8x384xf32>
    %60 = math.exp %59 : vector<8x384xf32>
    %cst_17 = arith.constant 1.000000e+00 : f32
    %61 = vector.broadcast %cst_17 : f32 to vector<8x384xf32>
    %62 = arith.addf %61, %60 : vector<8x384xf32>
    %63 = arith.divf %61, %62 : vector<8x384xf32>
    %64 = vector.extract_strided_slice %54 {offsets = [0, 384], sizes = [8, 128], strides = [1, 1]} : vector<8x512xf32> to vector<8x128xf32>
    %65 = math.tanh %64 : vector<8x128xf32>
    %66 = vector.extract_strided_slice %63 {offsets = [0, 128], sizes = [8, 128], strides = [1, 1]} : vector<8x384xf32> to vector<8x128xf32>
    %67 = arith.mulf %66, %27 : vector<8x128xf32>
    %68 = vector.extract_strided_slice %63 {offsets = [0, 0], sizes = [8, 128], strides = [1, 1]} : vector<8x384xf32> to vector<8x128xf32>
    %69 = arith.mulf %68, %65 : vector<8x128xf32>
    %70 = arith.addf %67, %69 : vector<8x128xf32>
    %71 = vector.extract_strided_slice %63 {offsets = [0, 256], sizes = [8, 128], strides = [1, 1]} : vector<8x384xf32> to vector<8x128xf32>
    %72 = math.tanh %70 : vector<8x128xf32>
    %73 = arith.mulf %71, %72 : vector<8x128xf32>
    %74 = vector.extract_strided_slice %57 {offsets = [0, 0], sizes = [8, 384], strides = [1, 1]} : vector<8x512xf32> to vector<8x384xf32>
    %75 = arith.negf %74 : vector<8x384xf32>
    %76 = math.exp %75 : vector<8x384xf32>
    %cst_18 = arith.constant 1.000000e+00 : f32
    %77 = vector.broadcast %cst_18 : f32 to vector<8x384xf32>
    %78 = arith.addf %77, %76 : vector<8x384xf32>
    %79 = arith.divf %77, %78 : vector<8x384xf32>
    %80 = vector.extract_strided_slice %57 {offsets = [0, 384], sizes = [8, 128], strides = [1, 1]} : vector<8x512xf32> to vector<8x128xf32>
    %81 = math.tanh %80 : vector<8x128xf32>
    %82 = vector.extract_strided_slice %79 {offsets = [0, 128], sizes = [8, 128], strides = [1, 1]} : vector<8x384xf32> to vector<8x128xf32>
    %83 = arith.mulf %82, %44 : vector<8x128xf32>
    %84 = vector.extract_strided_slice %79 {offsets = [0, 0], sizes = [8, 128], strides = [1, 1]} : vector<8x384xf32> to vector<8x128xf32>
    %85 = arith.mulf %84, %81 : vector<8x128xf32>
    %86 = arith.addf %83, %85 : vector<8x128xf32>
    %87 = vector.extract_strided_slice %79 {offsets = [0, 256], sizes = [8, 128], strides = [1, 1]} : vector<8x384xf32> to vector<8x128xf32>
    %88 = math.tanh %86 : vector<8x128xf32>
    %89 = arith.mulf %87, %88 : vector<8x128xf32>
    %90 = tpu.concatenate %73, %89 in 1 : vector<8x128xf32>, vector<8x128xf32> -> vector<8x256xf32>
    %91 = arith.truncf %90 : vector<8x256xf32> to vector<8x256xbf16>
    %c0_19 = arith.constant 0 : index
    %c0_20 = arith.constant 0 : index
    %92 = vector.load %arg3[%c0_19, %c0_20] : memref<256x1024xbf16, #tpu.memory_space<vmem>>, vector<256x1024xbf16>
    %cst_21 = arith.constant dense<0.000000e+00> : vector<8x1024xf32>
    %93 = tpu.matmul %91, %92, %cst_21 {dimension_numbers = #tpu.dot_dimension_numbers<[1], [0], [0], [1], [0, 0, 1, 1], [], []>} : vector<8x256xbf16>, vector<256x1024xbf16>, vector<8x1024xf32> -> vector<8x1024xf32>
    %c16 = arith.constant 16 : index
    %c0_22 = arith.constant 0 : index
    %94 = vector.load %arg7[%c16, %c0_22] : memref<64x1024xf32, #tpu.memory_space<vmem>>, vector<8x512xf32>
    %95 = vector.extract_strided_slice %93 {offsets = [0, 0], sizes = [8, 512], strides = [1, 1]} : vector<8x1024xf32> to vector<8x512xf32>
    %96 = arith.addf %94, %95 : vector<8x512xf32>
    %c40 = arith.constant 40 : index
    %c512_23 = arith.constant 512 : index
    %97 = vector.load %arg7[%c40, %c512_23] : memref<64x1024xf32, #tpu.memory_space<vmem>>, vector<8x512xf32>
    %98 = vector.extract_strided_slice %93 {offsets = [0, 512], sizes = [8, 512], strides = [1, 1]} : vector<8x1024xf32> to vector<8x512xf32>
    %99 = arith.addf %97, %98 : vector<8x512xf32>
    %100 = vector.extract_strided_slice %96 {offsets = [0, 0], sizes = [8, 384], strides = [1, 1]} : vector<8x512xf32> to vector<8x384xf32>
    %101 = arith.negf %100 : vector<8x384xf32>
    %102 = math.exp %101 : vector<8x384xf32>
    %cst_24 = arith.constant 1.000000e+00 : f32
    %103 = vector.broadcast %cst_24 : f32 to vector<8x384xf32>
    %104 = arith.addf %103, %102 : vector<8x384xf32>
    %105 = arith.divf %103, %104 : vector<8x384xf32>
    %106 = vector.extract_strided_slice %96 {offsets = [0, 384], sizes = [8, 128], strides = [1, 1]} : vector<8x512xf32> to vector<8x128xf32>
    %107 = math.tanh %106 : vector<8x128xf32>
    %108 = vector.extract_strided_slice %105 {offsets = [0, 128], sizes = [8, 128], strides = [1, 1]} : vector<8x384xf32> to vector<8x128xf32>
    %109 = arith.mulf %108, %70 : vector<8x128xf32>
    %110 = vector.extract_strided_slice %105 {offsets = [0, 0], sizes = [8, 128], strides = [1, 1]} : vector<8x384xf32> to vector<8x128xf32>
    %111 = arith.mulf %110, %107 : vector<8x128xf32>
    %112 = arith.addf %109, %111 : vector<8x128xf32>
    %113 = vector.extract_strided_slice %105 {offsets = [0, 256], sizes = [8, 128], strides = [1, 1]} : vector<8x384xf32> to vector<8x128xf32>
    %114 = math.tanh %112 : vector<8x128xf32>
    %115 = arith.mulf %113, %114 : vector<8x128xf32>
    %116 = vector.extract_strided_slice %99 {offsets = [0, 0], sizes = [8, 384], strides = [1, 1]} : vector<8x512xf32> to vector<8x384xf32>
    %117 = arith.negf %116 : vector<8x384xf32>
    %118 = math.exp %117 : vector<8x384xf32>
    %cst_25 = arith.constant 1.000000e+00 : f32
    %119 = vector.broadcast %cst_25 : f32 to vector<8x384xf32>
    %120 = arith.addf %119, %118 : vector<8x384xf32>
    %121 = arith.divf %119, %120 : vector<8x384xf32>
    %122 = vector.extract_strided_slice %99 {offsets = [0, 384], sizes = [8, 128], strides = [1, 1]} : vector<8x512xf32> to vector<8x128xf32>
    %123 = math.tanh %122 : vector<8x128xf32>
    %124 = vector.extract_strided_slice %121 {offsets = [0, 128], sizes = [8, 128], strides = [1, 1]} : vector<8x384xf32> to vector<8x128xf32>
    %125 = arith.mulf %124, %86 : vector<8x128xf32>
    %126 = vector.extract_strided_slice %121 {offsets = [0, 0], sizes = [8, 128], strides = [1, 1]} : vector<8x384xf32> to vector<8x128xf32>
    %127 = arith.mulf %126, %123 : vector<8x128xf32>
    %128 = arith.addf %125, %127 : vector<8x128xf32>
    %129 = vector.extract_strided_slice %121 {offsets = [0, 256], sizes = [8, 128], strides = [1, 1]} : vector<8x384xf32> to vector<8x128xf32>
    %130 = math.tanh %128 : vector<8x128xf32>
    %131 = arith.mulf %129, %130 : vector<8x128xf32>
    %132 = tpu.concatenate %115, %131 in 1 : vector<8x128xf32>, vector<8x128xf32> -> vector<8x256xf32>
    %133 = arith.truncf %132 : vector<8x256xf32> to vector<8x256xbf16>
    %c0_26 = arith.constant 0 : index
    %c0_27 = arith.constant 0 : index
    %134 = vector.load %arg3[%c0_26, %c0_27] : memref<256x1024xbf16, #tpu.memory_space<vmem>>, vector<256x1024xbf16>
    %cst_28 = arith.constant dense<0.000000e+00> : vector<8x1024xf32>
    %135 = tpu.matmul %133, %134, %cst_28 {dimension_numbers = #tpu.dot_dimension_numbers<[1], [0], [0], [1], [0, 0, 1, 1], [], []>} : vector<8x256xbf16>, vector<256x1024xbf16>, vector<8x1024xf32> -> vector<8x1024xf32>
    %c24 = arith.constant 24 : index
    %c0_29 = arith.constant 0 : index
    %136 = vector.load %arg7[%c24, %c0_29] : memref<64x1024xf32, #tpu.memory_space<vmem>>, vector<8x512xf32>
    %137 = vector.extract_strided_slice %135 {offsets = [0, 0], sizes = [8, 512], strides = [1, 1]} : vector<8x1024xf32> to vector<8x512xf32>
    %138 = arith.addf %136, %137 : vector<8x512xf32>
    %c32 = arith.constant 32 : index
    %c512_30 = arith.constant 512 : index
    %139 = vector.load %arg7[%c32, %c512_30] : memref<64x1024xf32, #tpu.memory_space<vmem>>, vector<8x512xf32>
    %140 = vector.extract_strided_slice %135 {offsets = [0, 512], sizes = [8, 512], strides = [1, 1]} : vector<8x1024xf32> to vector<8x512xf32>
    %141 = arith.addf %139, %140 : vector<8x512xf32>
    %142 = vector.extract_strided_slice %138 {offsets = [0, 0], sizes = [8, 384], strides = [1, 1]} : vector<8x512xf32> to vector<8x384xf32>
    %143 = arith.negf %142 : vector<8x384xf32>
    %144 = math.exp %143 : vector<8x384xf32>
    %cst_31 = arith.constant 1.000000e+00 : f32
    %145 = vector.broadcast %cst_31 : f32 to vector<8x384xf32>
    %146 = arith.addf %145, %144 : vector<8x384xf32>
    %147 = arith.divf %145, %146 : vector<8x384xf32>
    %148 = vector.extract_strided_slice %138 {offsets = [0, 384], sizes = [8, 128], strides = [1, 1]} : vector<8x512xf32> to vector<8x128xf32>
    %149 = math.tanh %148 : vector<8x128xf32>
    %150 = vector.extract_strided_slice %147 {offsets = [0, 128], sizes = [8, 128], strides = [1, 1]} : vector<8x384xf32> to vector<8x128xf32>
    %151 = arith.mulf %150, %112 : vector<8x128xf32>
    %152 = vector.extract_strided_slice %147 {offsets = [0, 0], sizes = [8, 128], strides = [1, 1]} : vector<8x384xf32> to vector<8x128xf32>
    %153 = arith.mulf %152, %149 : vector<8x128xf32>
    %154 = arith.addf %151, %153 : vector<8x128xf32>
    %155 = vector.extract_strided_slice %147 {offsets = [0, 256], sizes = [8, 128], strides = [1, 1]} : vector<8x384xf32> to vector<8x128xf32>
    %156 = math.tanh %154 : vector<8x128xf32>
    %157 = arith.mulf %155, %156 : vector<8x128xf32>
    %158 = vector.extract_strided_slice %141 {offsets = [0, 0], sizes = [8, 384], strides = [1, 1]} : vector<8x512xf32> to vector<8x384xf32>
    %159 = arith.negf %158 : vector<8x384xf32>
    %160 = math.exp %159 : vector<8x384xf32>
    %cst_32 = arith.constant 1.000000e+00 : f32
    %161 = vector.broadcast %cst_32 : f32 to vector<8x384xf32>
    %162 = arith.addf %161, %160 : vector<8x384xf32>
    %163 = arith.divf %161, %162 : vector<8x384xf32>
    %164 = vector.extract_strided_slice %141 {offsets = [0, 384], sizes = [8, 128], strides = [1, 1]} : vector<8x512xf32> to vector<8x128xf32>
    %165 = math.tanh %164 : vector<8x128xf32>
    %166 = vector.extract_strided_slice %163 {offsets = [0, 128], sizes = [8, 128], strides = [1, 1]} : vector<8x384xf32> to vector<8x128xf32>
    %167 = arith.mulf %166, %128 : vector<8x128xf32>
    %168 = vector.extract_strided_slice %163 {offsets = [0, 0], sizes = [8, 128], strides = [1, 1]} : vector<8x384xf32> to vector<8x128xf32>
    %169 = arith.mulf %168, %165 : vector<8x128xf32>
    %170 = arith.addf %167, %169 : vector<8x128xf32>
    %171 = vector.extract_strided_slice %163 {offsets = [0, 256], sizes = [8, 128], strides = [1, 1]} : vector<8x384xf32> to vector<8x128xf32>
    %172 = math.tanh %170 : vector<8x128xf32>
    %173 = arith.mulf %171, %172 : vector<8x128xf32>
    %174 = tpu.concatenate %157, %173 in 1 : vector<8x128xf32>, vector<8x128xf32> -> vector<8x256xf32>
    %175 = arith.truncf %174 : vector<8x256xf32> to vector<8x256xbf16>
    %c0_33 = arith.constant 0 : index
    %c0_34 = arith.constant 0 : index
    %176 = vector.load %arg3[%c0_33, %c0_34] : memref<256x1024xbf16, #tpu.memory_space<vmem>>, vector<256x1024xbf16>
    %cst_35 = arith.constant dense<0.000000e+00> : vector<8x1024xf32>
    %177 = tpu.matmul %175, %176, %cst_35 {dimension_numbers = #tpu.dot_dimension_numbers<[1], [0], [0], [1], [0, 0, 1, 1], [], []>} : vector<8x256xbf16>, vector<256x1024xbf16>, vector<8x1024xf32> -> vector<8x1024xf32>
    %c32_36 = arith.constant 32 : index
    %c0_37 = arith.constant 0 : index
    %178 = vector.load %arg7[%c32_36, %c0_37] : memref<64x1024xf32, #tpu.memory_space<vmem>>, vector<8x512xf32>
    %179 = vector.extract_strided_slice %177 {offsets = [0, 0], sizes = [8, 512], strides = [1, 1]} : vector<8x1024xf32> to vector<8x512xf32>
    %180 = arith.addf %178, %179 : vector<8x512xf32>
    %c24_38 = arith.constant 24 : index
    %c512_39 = arith.constant 512 : index
    %181 = vector.load %arg7[%c24_38, %c512_39] : memref<64x1024xf32, #tpu.memory_space<vmem>>, vector<8x512xf32>
    %182 = vector.extract_strided_slice %177 {offsets = [0, 512], sizes = [8, 512], strides = [1, 1]} : vector<8x1024xf32> to vector<8x512xf32>
    %183 = arith.addf %181, %182 : vector<8x512xf32>
    %184 = vector.extract_strided_slice %180 {offsets = [0, 0], sizes = [8, 384], strides = [1, 1]} : vector<8x512xf32> to vector<8x384xf32>
    %185 = arith.negf %184 : vector<8x384xf32>
    %186 = math.exp %185 : vector<8x384xf32>
    %cst_40 = arith.constant 1.000000e+00 : f32
    %187 = vector.broadcast %cst_40 : f32 to vector<8x384xf32>
    %188 = arith.addf %187, %186 : vector<8x384xf32>
    %189 = arith.divf %187, %188 : vector<8x384xf32>
    %190 = vector.extract_strided_slice %180 {offsets = [0, 384], sizes = [8, 128], strides = [1, 1]} : vector<8x512xf32> to vector<8x128xf32>
    %191 = math.tanh %190 : vector<8x128xf32>
    %192 = vector.extract_strided_slice %189 {offsets = [0, 128], sizes = [8, 128], strides = [1, 1]} : vector<8x384xf32> to vector<8x128xf32>
    %193 = arith.mulf %192, %154 : vector<8x128xf32>
    %194 = vector.extract_strided_slice %189 {offsets = [0, 0], sizes = [8, 128], strides = [1, 1]} : vector<8x384xf32> to vector<8x128xf32>
    %195 = arith.mulf %194, %191 : vector<8x128xf32>
    %196 = arith.addf %193, %195 : vector<8x128xf32>
    %197 = vector.extract_strided_slice %189 {offsets = [0, 256], sizes = [8, 128], strides = [1, 1]} : vector<8x384xf32> to vector<8x128xf32>
    %198 = math.tanh %196 : vector<8x128xf32>
    %199 = arith.mulf %197, %198 : vector<8x128xf32>
    %200 = vector.extract_strided_slice %183 {offsets = [0, 0], sizes = [8, 384], strides = [1, 1]} : vector<8x512xf32> to vector<8x384xf32>
    %201 = arith.negf %200 : vector<8x384xf32>
    %202 = math.exp %201 : vector<8x384xf32>
    %cst_41 = arith.constant 1.000000e+00 : f32
    %203 = vector.broadcast %cst_41 : f32 to vector<8x384xf32>
    %204 = arith.addf %203, %202 : vector<8x384xf32>
    %205 = arith.divf %203, %204 : vector<8x384xf32>
    %206 = vector.extract_strided_slice %183 {offsets = [0, 384], sizes = [8, 128], strides = [1, 1]} : vector<8x512xf32> to vector<8x128xf32>
    %207 = math.tanh %206 : vector<8x128xf32>
    %208 = vector.extract_strided_slice %205 {offsets = [0, 128], sizes = [8, 128], strides = [1, 1]} : vector<8x384xf32> to vector<8x128xf32>
    %209 = arith.mulf %208, %170 : vector<8x128xf32>
    %210 = vector.extract_strided_slice %205 {offsets = [0, 0], sizes = [8, 128], strides = [1, 1]} : vector<8x384xf32> to vector<8x128xf32>
    %211 = arith.mulf %210, %207 : vector<8x128xf32>
    %212 = arith.addf %209, %211 : vector<8x128xf32>
    %213 = vector.extract_strided_slice %205 {offsets = [0, 256], sizes = [8, 128], strides = [1, 1]} : vector<8x384xf32> to vector<8x128xf32>
    %214 = math.tanh %212 : vector<8x128xf32>
    %215 = arith.mulf %213, %214 : vector<8x128xf32>
    %216 = tpu.concatenate %199, %215 in 1 : vector<8x128xf32>, vector<8x128xf32> -> vector<8x256xf32>
    %217 = arith.truncf %216 : vector<8x256xf32> to vector<8x256xbf16>
    %c0_42 = arith.constant 0 : index
    %c0_43 = arith.constant 0 : index
    %218 = vector.load %arg3[%c0_42, %c0_43] : memref<256x1024xbf16, #tpu.memory_space<vmem>>, vector<256x1024xbf16>
    %cst_44 = arith.constant dense<0.000000e+00> : vector<8x1024xf32>
    %219 = tpu.matmul %217, %218, %cst_44 {dimension_numbers = #tpu.dot_dimension_numbers<[1], [0], [0], [1], [0, 0, 1, 1], [], []>} : vector<8x256xbf16>, vector<256x1024xbf16>, vector<8x1024xf32> -> vector<8x1024xf32>
    %c40_45 = arith.constant 40 : index
    %c0_46 = arith.constant 0 : index
    %220 = vector.load %arg7[%c40_45, %c0_46] : memref<64x1024xf32, #tpu.memory_space<vmem>>, vector<8x512xf32>
    %221 = vector.extract_strided_slice %219 {offsets = [0, 0], sizes = [8, 512], strides = [1, 1]} : vector<8x1024xf32> to vector<8x512xf32>
    %222 = arith.addf %220, %221 : vector<8x512xf32>
    %c16_47 = arith.constant 16 : index
    %c512_48 = arith.constant 512 : index
    %223 = vector.load %arg7[%c16_47, %c512_48] : memref<64x1024xf32, #tpu.memory_space<vmem>>, vector<8x512xf32>
    %224 = vector.extract_strided_slice %219 {offsets = [0, 512], sizes = [8, 512], strides = [1, 1]} : vector<8x1024xf32> to vector<8x512xf32>
    %225 = arith.addf %223, %224 : vector<8x512xf32>
    %226 = vector.extract_strided_slice %222 {offsets = [0, 0], sizes = [8, 384], strides = [1, 1]} : vector<8x512xf32> to vector<8x384xf32>
    %227 = arith.negf %226 : vector<8x384xf32>
    %228 = math.exp %227 : vector<8x384xf32>
    %cst_49 = arith.constant 1.000000e+00 : f32
    %229 = vector.broadcast %cst_49 : f32 to vector<8x384xf32>
    %230 = arith.addf %229, %228 : vector<8x384xf32>
    %231 = arith.divf %229, %230 : vector<8x384xf32>
    %232 = vector.extract_strided_slice %222 {offsets = [0, 384], sizes = [8, 128], strides = [1, 1]} : vector<8x512xf32> to vector<8x128xf32>
    %233 = math.tanh %232 : vector<8x128xf32>
    %234 = vector.extract_strided_slice %231 {offsets = [0, 128], sizes = [8, 128], strides = [1, 1]} : vector<8x384xf32> to vector<8x128xf32>
    %235 = arith.mulf %234, %196 : vector<8x128xf32>
    %236 = vector.extract_strided_slice %231 {offsets = [0, 0], sizes = [8, 128], strides = [1, 1]} : vector<8x384xf32> to vector<8x128xf32>
    %237 = arith.mulf %236, %233 : vector<8x128xf32>
    %238 = arith.addf %235, %237 : vector<8x128xf32>
    %239 = vector.extract_strided_slice %231 {offsets = [0, 256], sizes = [8, 128], strides = [1, 1]} : vector<8x384xf32> to vector<8x128xf32>
    %240 = math.tanh %238 : vector<8x128xf32>
    %241 = arith.mulf %239, %240 : vector<8x128xf32>
    %242 = vector.extract_strided_slice %225 {offsets = [0, 0], sizes = [8, 384], strides = [1, 1]} : vector<8x512xf32> to vector<8x384xf32>
    %243 = arith.negf %242 : vector<8x384xf32>
    %244 = math.exp %243 : vector<8x384xf32>
    %cst_50 = arith.constant 1.000000e+00 : f32
    %245 = vector.broadcast %cst_50 : f32 to vector<8x384xf32>
    %246 = arith.addf %245, %244 : vector<8x384xf32>
    %247 = arith.divf %245, %246 : vector<8x384xf32>
    %248 = vector.extract_strided_slice %225 {offsets = [0, 384], sizes = [8, 128], strides = [1, 1]} : vector<8x512xf32> to vector<8x128xf32>
    %249 = math.tanh %248 : vector<8x128xf32>
    %250 = vector.extract_strided_slice %247 {offsets = [0, 128], sizes = [8, 128], strides = [1, 1]} : vector<8x384xf32> to vector<8x128xf32>
    %251 = arith.mulf %250, %212 : vector<8x128xf32>
    %252 = vector.extract_strided_slice %247 {offsets = [0, 0], sizes = [8, 128], strides = [1, 1]} : vector<8x384xf32> to vector<8x128xf32>
    %253 = arith.mulf %252, %249 : vector<8x128xf32>
    %254 = arith.addf %251, %253 : vector<8x128xf32>
    %255 = vector.extract_strided_slice %247 {offsets = [0, 256], sizes = [8, 128], strides = [1, 1]} : vector<8x384xf32> to vector<8x128xf32>
    %256 = math.tanh %254 : vector<8x128xf32>
    %257 = arith.mulf %255, %256 : vector<8x128xf32>
    %258 = tpu.concatenate %241, %257 in 1 : vector<8x128xf32>, vector<8x128xf32> -> vector<8x256xf32>
    %259 = arith.truncf %258 : vector<8x256xf32> to vector<8x256xbf16>
    %c0_51 = arith.constant 0 : index
    %c0_52 = arith.constant 0 : index
    %260 = vector.load %arg3[%c0_51, %c0_52] : memref<256x1024xbf16, #tpu.memory_space<vmem>>, vector<256x1024xbf16>
    %cst_53 = arith.constant dense<0.000000e+00> : vector<8x1024xf32>
    %261 = tpu.matmul %259, %260, %cst_53 {dimension_numbers = #tpu.dot_dimension_numbers<[1], [0], [0], [1], [0, 0, 1, 1], [], []>} : vector<8x256xbf16>, vector<256x1024xbf16>, vector<8x1024xf32> -> vector<8x1024xf32>
    %c48_54 = arith.constant 48 : index
    %c0_55 = arith.constant 0 : index
    %262 = vector.load %arg7[%c48_54, %c0_55] : memref<64x1024xf32, #tpu.memory_space<vmem>>, vector<8x512xf32>
    %263 = vector.extract_strided_slice %261 {offsets = [0, 0], sizes = [8, 512], strides = [1, 1]} : vector<8x1024xf32> to vector<8x512xf32>
    %264 = arith.addf %262, %263 : vector<8x512xf32>
    %c8_56 = arith.constant 8 : index
    %c512_57 = arith.constant 512 : index
    %265 = vector.load %arg7[%c8_56, %c512_57] : memref<64x1024xf32, #tpu.memory_space<vmem>>, vector<8x512xf32>
    %266 = vector.extract_strided_slice %261 {offsets = [0, 512], sizes = [8, 512], strides = [1, 1]} : vector<8x1024xf32> to vector<8x512xf32>
    %267 = arith.addf %265, %266 : vector<8x512xf32>
    %268 = vector.extract_strided_slice %264 {offsets = [0, 0], sizes = [8, 384], strides = [1, 1]} : vector<8x512xf32> to vector<8x384xf32>
    %269 = arith.negf %268 : vector<8x384xf32>
    %270 = math.exp %269 : vector<8x384xf32>
    %cst_58 = arith.constant 1.000000e+00 : f32
    %271 = vector.broadcast %cst_58 : f32 to vector<8x384xf32>
    %272 = arith.addf %271, %270 : vector<8x384xf32>
    %273 = arith.divf %271, %272 : vector<8x384xf32>
    %274 = vector.extract_strided_slice %264 {offsets = [0, 384], sizes = [8, 128], strides = [1, 1]} : vector<8x512xf32> to vector<8x128xf32>
    %275 = math.tanh %274 : vector<8x128xf32>
    %276 = vector.extract_strided_slice %273 {offsets = [0, 128], sizes = [8, 128], strides = [1, 1]} : vector<8x384xf32> to vector<8x128xf32>
    %277 = arith.mulf %276, %238 : vector<8x128xf32>
    %278 = vector.extract_strided_slice %273 {offsets = [0, 0], sizes = [8, 128], strides = [1, 1]} : vector<8x384xf32> to vector<8x128xf32>
    %279 = arith.mulf %278, %275 : vector<8x128xf32>
    %280 = arith.addf %277, %279 : vector<8x128xf32>
    %281 = vector.extract_strided_slice %273 {offsets = [0, 256], sizes = [8, 128], strides = [1, 1]} : vector<8x384xf32> to vector<8x128xf32>
    %282 = math.tanh %280 : vector<8x128xf32>
    %283 = arith.mulf %281, %282 : vector<8x128xf32>
    %284 = vector.extract_strided_slice %267 {offsets = [0, 0], sizes = [8, 384], strides = [1, 1]} : vector<8x512xf32> to vector<8x384xf32>
    %285 = arith.negf %284 : vector<8x384xf32>
    %286 = math.exp %285 : vector<8x384xf32>
    %cst_59 = arith.constant 1.000000e+00 : f32
    %287 = vector.broadcast %cst_59 : f32 to vector<8x384xf32>
    %288 = arith.addf %287, %286 : vector<8x384xf32>
    %289 = arith.divf %287, %288 : vector<8x384xf32>
    %290 = vector.extract_strided_slice %267 {offsets = [0, 384], sizes = [8, 128], strides = [1, 1]} : vector<8x512xf32> to vector<8x128xf32>
    %291 = math.tanh %290 : vector<8x128xf32>
    %292 = vector.extract_strided_slice %289 {offsets = [0, 128], sizes = [8, 128], strides = [1, 1]} : vector<8x384xf32> to vector<8x128xf32>
    %293 = arith.mulf %292, %254 : vector<8x128xf32>
    %294 = vector.extract_strided_slice %289 {offsets = [0, 0], sizes = [8, 128], strides = [1, 1]} : vector<8x384xf32> to vector<8x128xf32>
    %295 = arith.mulf %294, %291 : vector<8x128xf32>
    %296 = arith.addf %293, %295 : vector<8x128xf32>
    %297 = vector.extract_strided_slice %289 {offsets = [0, 256], sizes = [8, 128], strides = [1, 1]} : vector<8x384xf32> to vector<8x128xf32>
    %298 = math.tanh %296 : vector<8x128xf32>
    %299 = arith.mulf %297, %298 : vector<8x128xf32>
    %300 = tpu.concatenate %283, %299 in 1 : vector<8x128xf32>, vector<8x128xf32> -> vector<8x256xf32>
    %301 = arith.truncf %300 : vector<8x256xf32> to vector<8x256xbf16>
    %c0_60 = arith.constant 0 : index
    %c0_61 = arith.constant 0 : index
    %302 = vector.load %arg3[%c0_60, %c0_61] : memref<256x1024xbf16, #tpu.memory_space<vmem>>, vector<256x1024xbf16>
    %cst_62 = arith.constant dense<0.000000e+00> : vector<8x1024xf32>
    %303 = tpu.matmul %301, %302, %cst_62 {dimension_numbers = #tpu.dot_dimension_numbers<[1], [0], [0], [1], [0, 0, 1, 1], [], []>} : vector<8x256xbf16>, vector<256x1024xbf16>, vector<8x1024xf32> -> vector<8x1024xf32>
    %c56_63 = arith.constant 56 : index
    %c0_64 = arith.constant 0 : index
    %304 = vector.load %arg7[%c56_63, %c0_64] : memref<64x1024xf32, #tpu.memory_space<vmem>>, vector<8x512xf32>
    %305 = vector.extract_strided_slice %303 {offsets = [0, 0], sizes = [8, 512], strides = [1, 1]} : vector<8x1024xf32> to vector<8x512xf32>
    %306 = arith.addf %304, %305 : vector<8x512xf32>
    %c0_65 = arith.constant 0 : index
    %c512_66 = arith.constant 512 : index
    %307 = vector.load %arg7[%c0_65, %c512_66] : memref<64x1024xf32, #tpu.memory_space<vmem>>, vector<8x512xf32>
    %308 = vector.extract_strided_slice %303 {offsets = [0, 512], sizes = [8, 512], strides = [1, 1]} : vector<8x1024xf32> to vector<8x512xf32>
    %309 = arith.addf %307, %308 : vector<8x512xf32>
    %310 = vector.extract_strided_slice %306 {offsets = [0, 0], sizes = [8, 384], strides = [1, 1]} : vector<8x512xf32> to vector<8x384xf32>
    %311 = arith.negf %310 : vector<8x384xf32>
    %312 = math.exp %311 : vector<8x384xf32>
    %cst_67 = arith.constant 1.000000e+00 : f32
    %313 = vector.broadcast %cst_67 : f32 to vector<8x384xf32>
    %314 = arith.addf %313, %312 : vector<8x384xf32>
    %315 = arith.divf %313, %314 : vector<8x384xf32>
    %316 = vector.extract_strided_slice %306 {offsets = [0, 384], sizes = [8, 128], strides = [1, 1]} : vector<8x512xf32> to vector<8x128xf32>
    %317 = math.tanh %316 : vector<8x128xf32>
    %318 = vector.extract_strided_slice %315 {offsets = [0, 128], sizes = [8, 128], strides = [1, 1]} : vector<8x384xf32> to vector<8x128xf32>
    %319 = arith.mulf %318, %280 : vector<8x128xf32>
    %320 = vector.extract_strided_slice %315 {offsets = [0, 0], sizes = [8, 128], strides = [1, 1]} : vector<8x384xf32> to vector<8x128xf32>
    %321 = arith.mulf %320, %317 : vector<8x128xf32>
    %322 = arith.addf %319, %321 : vector<8x128xf32>
    %323 = vector.extract_strided_slice %315 {offsets = [0, 256], sizes = [8, 128], strides = [1, 1]} : vector<8x384xf32> to vector<8x128xf32>
    %324 = math.tanh %322 : vector<8x128xf32>
    %325 = arith.mulf %323, %324 : vector<8x128xf32>
    %326 = vector.extract_strided_slice %309 {offsets = [0, 0], sizes = [8, 384], strides = [1, 1]} : vector<8x512xf32> to vector<8x384xf32>
    %327 = arith.negf %326 : vector<8x384xf32>
    %328 = math.exp %327 : vector<8x384xf32>
    %cst_68 = arith.constant 1.000000e+00 : f32
    %329 = vector.broadcast %cst_68 : f32 to vector<8x384xf32>
    %330 = arith.addf %329, %328 : vector<8x384xf32>
    %331 = arith.divf %329, %330 : vector<8x384xf32>
    %332 = vector.extract_strided_slice %309 {offsets = [0, 384], sizes = [8, 128], strides = [1, 1]} : vector<8x512xf32> to vector<8x128xf32>
    %333 = math.tanh %332 : vector<8x128xf32>
    %334 = vector.extract_strided_slice %331 {offsets = [0, 128], sizes = [8, 128], strides = [1, 1]} : vector<8x384xf32> to vector<8x128xf32>
    %335 = arith.mulf %334, %296 : vector<8x128xf32>
    %336 = vector.extract_strided_slice %331 {offsets = [0, 0], sizes = [8, 128], strides = [1, 1]} : vector<8x384xf32> to vector<8x128xf32>
    %337 = arith.mulf %336, %333 : vector<8x128xf32>
    %338 = arith.addf %335, %337 : vector<8x128xf32>
    %339 = vector.extract_strided_slice %331 {offsets = [0, 256], sizes = [8, 128], strides = [1, 1]} : vector<8x384xf32> to vector<8x128xf32>
    %340 = math.tanh %338 : vector<8x128xf32>
    %341 = arith.mulf %339, %340 : vector<8x128xf32>
    %342 = tpu.concatenate %30, %341, %325, %47 in 1 : vector<8x128xf32>, vector<8x128xf32>, vector<8x128xf32>, vector<8x128xf32> -> vector<8x512xf32>
    %343 = arith.truncf %342 : vector<8x512xf32> to vector<8x512xbf16>
    %c0_69 = arith.constant 0 : index
    %c0_70 = arith.constant 0 : index
    %344 = vector.load %arg4[%c0_69, %c0_70] : memref<512x2xbf16, #tpu.memory_space<vmem>>, vector<512x2xbf16>
    %cst_71 = arith.constant dense<0.000000e+00> : vector<8x2xf32>
    %345 = tpu.matmul %343, %344, %cst_71 {dimension_numbers = #tpu.dot_dimension_numbers<[1], [0], [0], [1], [0, 0, 1, 1], [], []>} : vector<8x512xbf16>, vector<512x2xbf16>, vector<8x2xf32> -> vector<8x2xf32>
    %c0_72 = arith.constant 0 : index
    %c0_73 = arith.constant 0 : index
    %346 = vector.load %arg5[%c0_72, %c0_73] : memref<1x2xf32, #tpu.memory_space<vmem>>, vector<1x2xf32>
    %347 = vector.broadcast %346 : vector<1x2xf32> to vector<8x2xf32>
    %348 = arith.addf %345, %347 : vector<8x2xf32>
    %c0_74 = arith.constant 0 : index
    %c0_75 = arith.constant 0 : index
    %349 = vector.load %arg6[%c0_74, %c0_75] : memref<8x2xf32, #tpu.memory_space<vmem>>, vector<8x2xf32>
    tpu.vector_store %arg6[%c0_74, %c0_75], %348 {strides = array<i32>} : memref<8x2xf32, #tpu.memory_space<vmem>>, vector<8x2xf32>,
    return
  }
}

</mosaic_0001>

<llo_original>
// kernel: birnn_forward.1
$region0: #{birnn_forward.1}
  #allocation0 [shape = 'u32[]', space=smem, size = 0x4, offset = 0x4, fixed_abs, tag = 'smem constant byte address 0x4 - core index']
  #allocation1 [shape = 'u32[144,128]{1,0:T(1,128)}', space=vmem, size = 0x12000, scoped, tag = 'internal scratch']
  #allocation2 [shape = 'f32[64,1024]{1,0:T(8,128)}', space=vmem, size = 0x40000, scoped, tag = 'scratch operand']
  %s0 = inlined_call_operand.vmem [shape: s32[64,1], index: 0, kind: input, shape index: {}]
  %s1 = inlined_call_operand.hbm [shape: bf16[1024,1024], index: 1, kind: input, shape index: {}]
  %s2 = inlined_call_operand.hbm [shape: f32[1,1024], index: 2, kind: input, shape index: {}]
  %s3 = inlined_call_operand.hbm [shape: bf16[256,1024], index: 3, kind: input, shape index: {}]
  %s4 = inlined_call_operand.vmem [shape: bf16[512,2], index: 4, kind: input, shape index: {}]
  %s5 = inlined_call_operand.hbm [shape: f32[1,2], index: 5, kind: input, shape index: {}]
  %s6 = inlined_call_operand.vmem [shape: f32[8,2], index: 6, kind: output, shape index: {}]
  %s7 = sld [smem:[#allocation0]]
  $region50: #{birnn_forward.1} parent=0
    _
  %s9 = ssub.s32 1, %s7
  %s10 = scalar_select 0, %s9, %s7
  $region1: #{birnn_forward.1} parent=0
    #allocation3 [shape = 'u8[2097152]{0}', space=vmem, size = 0x200000, scoped, tag = 'input window, operand 1, single buffered']
    #allocation4 [shape = 's32[1]{0}', space=sflag, size = 0x4, scoped, tag = 'scoped memory for birnn_forward.1']
    #allocation5 [shape = 'u8[4096]{0}', space=vmem, size = 0x1000, scoped, tag = 'input window, operand 2, single buffered']
    #allocation6 [shape = 's32[1]{0}', space=sflag, size = 0x4, scoped, tag = 'scoped memory for birnn_forward.1']
    #allocation7 [shape = 'u8[524288]{0}', space=vmem, size = 0x80000, scoped, tag = 'input window, operand 3, single buffered']
    #allocation8 [shape = 'u8[512]{0}', space=vmem, size = 0x400, scoped, tag = 'input window, operand 5, single buffered']
    #allocation9 [shape = 's32[1]{0}', space=sflag, size = 0x4, scoped, tag = 'scoped memory for birnn_forward.1']
    %11 = vsyncpa [#allocation4], 0
    %12 = vsyncpa [#allocation6], 0
    %13 = vsyncpa [#allocation9], 0
    // Predicated region
    $region2: #{birnn_forward.1} parent=1 // pred_check
      _
    $region3: #{birnn_forward.1} parent=1 // pred_check_branch
      %15 = sbr.rel (0) target = $region5
    $region4: #{birnn_forward.1} parent=1 // pred_region
      _
    $region5: #{birnn_forward.1} parent=1 // pred_fallthru
      _
    // Predicated region
    $region6: #{birnn_forward.1} parent=1 // pred_check
      _
    $region7: #{birnn_forward.1} parent=1 // pred_check_branch
      %17 = sbr.rel (0) target = $region9
    $region8: #{birnn_forward.1} parent=1 // pred_region
      %s19 = ssub.s32 65536, 65536
      %20 = vsyncadd [#allocation4], %s19
      %s21 = sshll.u32 [#allocation3], 4
      %s22 = int_to_ptr.vmem [resolvable:$true] %s21
      %27 = dma.hbm_to_vmem [thread:$0]  %s1, 65536, %s22, [#allocation4], 512, 512, 32
    $region9: #{birnn_forward.1} parent=1 // pred_fallthru
      _
    // Predicated region
    $region10: #{birnn_forward.1} parent=1 // pred_check
      _
    $region11: #{birnn_forward.1} parent=1 // pred_check_branch
      %29 = sbr.rel (0) target = $region13
    $region12: #{birnn_forward.1} parent=1 // pred_region
      %s31 = ssub.s32 128, 128
      %32 = vsyncadd [#allocation6], %s31
      %s34 = sshll.u32 [#allocation5], 4
      %s35 = int_to_ptr.vmem [resolvable:$true] %s34
      %37 = dma.hbm_to_vmem [thread:$0]  %s2, 128, %s35, [#allocation6]
    $region13: #{birnn_forward.1} parent=1 // pred_fallthru
      _
    // Predicated region
    $region14: #{birnn_forward.1} parent=1 // pred_check
      _
    $region15: #{birnn_forward.1} parent=1 // pred_check_branch
      %39 = sbr.rel (0) target = $region17
    $region16: #{birnn_forward.1} parent=1 // pred_region
      %s41 = ssub.s32 16384, 16384
      %42 = vsyncadd [#allocation6], %s41
      %s43 = sshll.u32 [#allocation7], 4
      %s44 = int_to_ptr.vmem [resolvable:$true] %s43
      %49 = dma.hbm_to_vmem [thread:$0]  %s3, 16384, %s44, [#allocation6], 512, 512, 32
    $region17: #{birnn_forward.1} parent=1 // pred_fallthru
      _
    // Predicated region
    $region18: #{birnn_forward.1} parent=1 // pred_check
      _
    $region19: #{birnn_forward.1} parent=1 // pred_check_branch
      %51 = sbr.rel (0) target = $region21
    $region20: #{birnn_forward.1} parent=1 // pred_region
      _
    $region21: #{birnn_forward.1} parent=1 // pred_fallthru
      _
    // Predicated region
    $region22: #{birnn_forward.1} parent=1 // pred_check
      _
    $region23: #{birnn_forward.1} parent=1 // pred_check_branch
      %53 = sbr.rel (0) target = $region25
    $region24: #{birnn_forward.1} parent=1 // pred_region
      %s55 = ssub.s32 16, 16
      %56 = vsyncadd [#allocation9], %s55
      %s58 = sshll.u32 [#allocation8], 4
      %s59 = int_to_ptr.vmem [resolvable:$true] %s58
      %61 = dma.hbm_to_vmem [thread:$0]  %s5, 16, %s59, [#allocation9]
    $region25: #{birnn_forward.1} parent=1 // pred_fallthru
      _
    // Predicated region
    $region26: #{birnn_forward.1} parent=1 // pred_check
      _
    $region27: #{birnn_forward.1} parent=1 // pred_check_branch
      %63 = sbr.rel (0) target = $region29
    $region28: #{birnn_forward.1} parent=1 // pred_region
      %64 = dma.done [#allocation4], 65536
    $region29: #{birnn_forward.1} parent=1 // pred_fallthru
      _
    // Predicated region
    $region30: #{birnn_forward.1} parent=1 // pred_check
      _
    $region31: #{birnn_forward.1} parent=1 // pred_check_branch
      %66 = sbr.rel (0) target = $region33
    $region32: #{birnn_forward.1} parent=1 // pred_region
      %67 = dma.done [#allocation6], 128
    $region33: #{birnn_forward.1} parent=1 // pred_fallthru
      _
    // Predicated region
    $region34: #{birnn_forward.1} parent=1 // pred_check
      _
    $region35: #{birnn_forward.1} parent=1 // pred_check_branch
      %69 = sbr.rel (0) target = $region37
    $region36: #{birnn_forward.1} parent=1 // pred_region
      %70 = dma.done [#allocation6], 16384
    $region37: #{birnn_forward.1} parent=1 // pred_fallthru
      _
    // Predicated region
    $region38: #{birnn_forward.1} parent=1 // pred_check
      _
    $region39: #{birnn_forward.1} parent=1 // pred_check_branch
      %72 = sbr.rel (0) target = $region41
    $region40: #{birnn_forward.1} parent=1 // pred_region
      %73 = dma.done [#allocation9], 16
    $region41: #{birnn_forward.1} parent=1 // pred_fallthru
      _
    %v75 = vlaneseq
    %v76 = vand.u32 %v75, 127
    %v77 = vadd.s32 %v76, 128
    %v78 = vadd.s32 %v76, 256
    %v79 = vadd.s32 %v76, 384
    %v80 = vadd.s32 %v76, 512
    %v81 = vadd.s32 %v76, 640
    %v82 = vadd.s32 %v76, 768
    %v83 = vadd.s32 %v76, 896
    %v84 = vld [vmem:[%s0] sm:$0xff]
    %v85 = vld [vmem:[%s0 + $0x8] sm:$0xff]
    %v86 = vld [vmem:[%s0 + $0x10] sm:$0xff]
    %v87 = vld [vmem:[%s0 + $0x18] sm:$0xff]
    %v88 = vld [vmem:[%s0 + $0x20] sm:$0xff]
    %v89 = vld [vmem:[%s0 + $0x28] sm:$0xff]
    %v90 = vld [vmem:[%s0 + $0x30] sm:$0xff]
    %v91 = vld [vmem:[%s0 + $0x38] sm:$0xff]
    %92 = vset.pattern.permute.xlu0 0
    %93 = vperm.xlu0 %92, %v84
    %v94 = vpop.permute.xlu0 %93
    %95 = vset.pattern.permute.xlu0 0
    %96 = vperm.xlu0 %95, %v85
    %v97 = vpop.permute.xlu0 %96
    %98 = vset.pattern.permute.xlu0 0
    %99 = vperm.xlu0 %98, %v86
    %v100 = vpop.permute.xlu0 %99
    %101 = vset.pattern.permute.xlu0 0
    %102 = vperm.xlu0 %101, %v87
    %v103 = vpop.permute.xlu0 %102
    %104 = vset.pattern.permute.xlu0 0
    %105 = vperm.xlu0 %104, %v88
    %v106 = vpop.permute.xlu0 %105
    %107 = vset.pattern.permute.xlu0 0
    %108 = vperm.xlu0 %107, %v89
    %v109 = vpop.permute.xlu0 %108
    %110 = vset.pattern.permute.xlu0 0
    %111 = vperm.xlu0 %110, %v90
    %v112 = vpop.permute.xlu0 %111
    %113 = vset.pattern.permute.xlu0 0
    %114 = vperm.xlu0 %113, %v91
    %v115 = vpop.permute.xlu0 %114
    %vm116 = vcmp.eq.s32.totalorder %v76, %v94
    %vm117 = vcmp.eq.s32.totalorder %v77, %v94
    %vm118 = vcmp.eq.s32.totalorder %v78, %v94
    %vm119 = vcmp.eq.s32.totalorder %v79, %v94
    %vm120 = vcmp.eq.s32.totalorder %v80, %v94
    %vm121 = vcmp.eq.s32.totalorder %v81, %v94
    %vm122 = vcmp.eq.s32.totalorder %v82, %v94
    %vm123 = vcmp.eq.s32.totalorder %v83, %v94
    %vm124 = vcmp.eq.s32.totalorder %v76, %v97
    %vm125 = vcmp.eq.s32.totalorder %v77, %v97
    %vm126 = vcmp.eq.s32.totalorder %v78, %v97
    %vm127 = vcmp.eq.s32.totalorder %v79, %v97
    %vm128 = vcmp.eq.s32.totalorder %v80, %v97
    %vm129 = vcmp.eq.s32.totalorder %v81, %v97
    %vm130 = vcmp.eq.s32.totalorder %v82, %v97
    %vm131 = vcmp.eq.s32.totalorder %v83, %v97
    %vm132 = vcmp.eq.s32.totalorder %v76, %v100
    %vm133 = vcmp.eq.s32.totalorder %v77, %v100
    %vm134 = vcmp.eq.s32.totalorder %v78, %v100
    %vm135 = vcmp.eq.s32.totalorder %v79, %v100
    %vm136 = vcmp.eq.s32.totalorder %v80, %v100
    %vm137 = vcmp.eq.s32.totalorder %v81, %v100
    %vm138 = vcmp.eq.s32.totalorder %v82, %v100
    %vm139 = vcmp.eq.s32.totalorder %v83, %v100
    %vm140 = vcmp.eq.s32.totalorder %v76, %v103
    %vm141 = vcmp.eq.s32.totalorder %v77, %v103
    %vm142 = vcmp.eq.s32.totalorder %v78, %v103
    %vm143 = vcmp.eq.s32.totalorder %v79, %v103
    %vm144 = vcmp.eq.s32.totalorder %v80, %v103
    %vm145 = vcmp.eq.s32.totalorder %v81, %v103
    %vm146 = vcmp.eq.s32.totalorder %v82, %v103
    %vm147 = vcmp.eq.s32.totalorder %v83, %v103
    %vm148 = vcmp.eq.s32.totalorder %v76, %v106
    %vm149 = vcmp.eq.s32.totalorder %v77, %v106
    %vm150 = vcmp.eq.s32.totalorder %v78, %v106
    %vm151 = vcmp.eq.s32.totalorder %v79, %v106
    %vm152 = vcmp.eq.s32.totalorder %v80, %v106
    %vm153 = vcmp.eq.s32.totalorder %v81, %v106
    %vm154 = vcmp.eq.s32.totalorder %v82, %v106
    %vm155 = vcmp.eq.s32.totalorder %v83, %v106
    %vm156 = vcmp.eq.s32.totalorder %v76, %v109
    %vm157 = vcmp.eq.s32.totalorder %v77, %v109
    %vm158 = vcmp.eq.s32.totalorder %v78, %v109
    %vm159 = vcmp.eq.s32.totalorder %v79, %v109
    %vm160 = vcmp.eq.s32.totalorder %v80, %v109
    %vm161 = vcmp.eq.s32.totalorder %v81, %v109
    %vm162 = vcmp.eq.s32.totalorder %v82, %v109
    %vm163 = vcmp.eq.s32.totalorder %v83, %v109
    %vm164 = vcmp.eq.s32.totalorder %v76, %v112
    %vm165 = vcmp.eq.s32.totalorder %v77, %v112
    %vm166 = vcmp.eq.s32.totalorder %v78, %v112
    %vm167 = vcmp.eq.s32.totalorder %v79, %v112
    %vm168 = vcmp.eq.s32.totalorder %v80, %v112
    %vm169 = vcmp.eq.s32.totalorder %v81, %v112
    %vm170 = vcmp.eq.s32.totalorder %v82, %v112
    %vm171 = vcmp.eq.s32.totalorder %v83, %v112
    %vm172 = vcmp.eq.s32.totalorder %v76, %v115
    %vm173 = vcmp.eq.s32.totalorder %v77, %v115
    %vm174 = vcmp.eq.s32.totalorder %v78, %v115
    %vm175 = vcmp.eq.s32.totalorder %v79, %v115
    %vm176 = vcmp.eq.s32.totalorder %v80, %v115
    %vm177 = vcmp.eq.s32.totalorder %v81, %v115
    %vm178 = vcmp.eq.s32.totalorder %v82, %v115
    %vm179 = vcmp.eq.s32.totalorder %v83, %v115
    %v180 = vsel %vm116, 1, 0
    %v181 = vsel %vm117, 1, 0
    %v182 = vsel %vm118, 1, 0
    %v183 = vsel %vm119, 1, 0
    %v184 = vsel %vm120, 1, 0
    %v185 = vsel %vm121, 1, 0
    %v186 = vsel %vm122, 1, 0
    %v187 = vsel %vm123, 1, 0
    %v188 = vsel %vm124, 1, 0
    %v189 = vsel %vm125, 1, 0
    %v190 = vsel %vm126, 1, 0
    %v191 = vsel %vm127, 1, 0
    %v192 = vsel %vm128, 1, 0
    %v193 = vsel %vm129, 1, 0
    %v194 = vsel %vm130, 1, 0
    %v195 = vsel %vm131, 1, 0
    %v196 = vsel %vm132, 1, 0
    %v197 = vsel %vm133, 1, 0
    %v198 = vsel %vm134, 1, 0
    %v199 = vsel %vm135, 1, 0
    %v200 = vsel %vm136, 1, 0
    %v201 = vsel %vm137, 1, 0
    %v202 = vsel %vm138, 1, 0
    %v203 = vsel %vm139, 1, 0
    %v204 = vsel %vm140, 1, 0
    %v205 = vsel %vm141, 1, 0
    %v206 = vsel %vm142, 1, 0
    %v207 = vsel %vm143, 1, 0
    %v208 = vsel %vm144, 1, 0
    %v209 = vsel %vm145, 1, 0
    %v210 = vsel %vm146, 1, 0
    %v211 = vsel %vm147, 1, 0
    %v212 = vsel %vm148, 1, 0
    %v213 = vsel %vm149, 1, 0
    %v214 = vsel %vm150, 1, 0
    %v215 = vsel %vm151, 1, 0
    %v216 = vsel %vm152, 1, 0
    %v217 = vsel %vm153, 1, 0
    %v218 = vsel %vm154, 1, 0
    %v219 = vsel %vm155, 1, 0
    %v220 = vsel %vm156, 1, 0
    %v221 = vsel %vm157, 1, 0
    %v222 = vsel %vm158, 1, 0
    %v223 = vsel %vm159, 1, 0
    %v224 = vsel %vm160, 1, 0
    %v225 = vsel %vm161, 1, 0
    %v226 = vsel %vm162, 1, 0
    %v227 = vsel %vm163, 1, 0
    %v228 = vsel %vm164, 1, 0
    %v229 = vsel %vm165, 1, 0
    %v230 = vsel %vm166, 1, 0
    %v231 = vsel %vm167, 1, 0
    %v232 = vsel %vm168, 1, 0
    %v233 = vsel %vm169, 1, 0
    %v234 = vsel %vm170, 1, 0
    %v235 = vsel %vm171, 1, 0
    %v236 = vsel %vm172, 1, 0
    %v237 = vsel %vm173, 1, 0
    %v238 = vsel %vm174, 1, 0
    %v239 = vsel %vm175, 1, 0
    %v240 = vsel %vm176, 1, 0
    %v241 = vsel %vm177, 1, 0
    %v242 = vsel %vm178, 1, 0
    %v243 = vsel %vm179, 1, 0
    %v244 = vcvt.s32.f32 %v180
    %v245 = vcvt.s32.f32 %v181
    %v246 = vcvt.s32.f32 %v182
    %v247 = vcvt.s32.f32 %v183
    %v248 = vcvt.s32.f32 %v184
    %v249 = vcvt.s32.f32 %v185
    %v250 = vcvt.s32.f32 %v186
    %v251 = vcvt.s32.f32 %v187
    %v252 = vcvt.s32.f32 %v188
    %v253 = vcvt.s32.f32 %v189
    %v254 = vcvt.s32.f32 %v190
    %v255 = vcvt.s32.f32 %v191
    %v256 = vcvt.s32.f32 %v192
    %v257 = vcvt.s32.f32 %v193
    %v258 = vcvt.s32.f32 %v194
    %v259 = vcvt.s32.f32 %v195
    %v260 = vcvt.s32.f32 %v196
    %v261 = vcvt.s32.f32 %v197
    %v262 = vcvt.s32.f32 %v198
    %v263 = vcvt.s32.f32 %v199
    %v264 = vcvt.s32.f32 %v200
    %v265 = vcvt.s32.f32 %v201
    %v266 = vcvt.s32.f32 %v202
    %v267 = vcvt.s32.f32 %v203
    %v268 = vcvt.s32.f32 %v204
    %v269 = vcvt.s32.f32 %v205
    %v270 = vcvt.s32.f32 %v206
    %v271 = vcvt.s32.f32 %v207
    %v272 = vcvt.s32.f32 %v208
    %v273 = vcvt.s32.f32 %v209
    %v274 = vcvt.s32.f32 %v210
    %v275 = vcvt.s32.f32 %v211
    %v276 = vcvt.s32.f32 %v212
    %v277 = vcvt.s32.f32 %v213
    %v278 = vcvt.s32.f32 %v214
    %v279 = vcvt.s32.f32 %v215
    %v280 = vcvt.s32.f32 %v216
    %v281 = vcvt.s32.f32 %v217
    %v282 = vcvt.s32.f32 %v218
    %v283 = vcvt.s32.f32 %v219
    %v284 = vcvt.s32.f32 %v220
    %v285 = vcvt.s32.f32 %v221
    %v286 = vcvt.s32.f32 %v222
    %v287 = vcvt.s32.f32 %v223
    %v288 = vcvt.s32.f32 %v224
    %v289 = vcvt.s32.f32 %v225
    %v290 = vcvt.s32.f32 %v226
    %v291 = vcvt.s32.f32 %v227
    %v292 = vcvt.s32.f32 %v228
    %v293 = vcvt.s32.f32 %v229
    %v294 = vcvt.s32.f32 %v230
    %v295 = vcvt.s32.f32 %v231
    %v296 = vcvt.s32.f32 %v232
    %v297 = vcvt.s32.f32 %v233
    %v298 = vcvt.s32.f32 %v234
    %v299 = vcvt.s32.f32 %v235
    %v300 = vcvt.s32.f32 %v236
    %v301 = vcvt.s32.f32 %v237
    %v302 = vcvt.s32.f32 %v238
    %v303 = vcvt.s32.f32 %v239
    %v304 = vcvt.s32.f32 %v240
    %v305 = vcvt.s32.f32 %v241
    %v306 = vcvt.s32.f32 %v242
    %v307 = vcvt.s32.f32 %v243
    %v308 = vpack.c.bf16 %v252, %v244
    %v309 = vpack.c.bf16 %v253, %v245
    %v310 = vpack.c.bf16 %v254, %v246
    %v311 = vpack.c.bf16 %v255, %v247
    %v312 = vpack.c.bf16 %v256, %v248
    %v313 = vpack.c.bf16 %v257, %v249
    %v314 = vpack.c.bf16 %v258, %v250
    %v315 = vpack.c.bf16 %v259, %v251
    %v316 = vpack.c.bf16 %v268, %v260
    %v317 = vpack.c.bf16 %v269, %v261
    %v318 = vpack.c.bf16 %v270, %v262
    %v319 = vpack.c.bf16 %v271, %v263
    %v320 = vpack.c.bf16 %v272, %v264
    %v321 = vpack.c.bf16 %v273, %v265
    %v322 = vpack.c.bf16 %v274, %v266
    %v323 = vpack.c.bf16 %v275, %v267
    %v324 = vpack.c.bf16 %v284, %v276
    %v325 = vpack.c.bf16 %v285, %v277
    %v326 = vpack.c.bf16 %v286, %v278
    %v327 = vpack.c.bf16 %v287, %v279
    %v328 = vpack.c.bf16 %v288, %v280
    %v329 = vpack.c.bf16 %v289, %v281
    %v330 = vpack.c.bf16 %v290, %v282
    %v331 = vpack.c.bf16 %v291, %v283
    %v332 = vpack.c.bf16 %v300, %v292
    %v333 = vpack.c.bf16 %v301, %v293
    %v334 = vpack.c.bf16 %v302, %v294
    %v335 = vpack.c.bf16 %v303, %v295
    %v336 = vpack.c.bf16 %v304, %v296
    %v337 = vpack.c.bf16 %v305, %v297
    %v338 = vpack.c.bf16 %v306, %v298
    %v339 = vpack.c.bf16 %v307, %v299
    %v340 = vld [vmem:[#allocation3] sm:$0xff]
    %v341 = vld [vmem:[#allocation3 + $0x8] sm:$0xff]
    %v342 = vld [vmem:[#allocation3 + $0x10] sm:$0xff]
    %v343 = vld [vmem:[#allocation3 + $0x18] sm:$0xff]
    %v344 = vld [vmem:[#allocation3 + $0x20] sm:$0xff]
    %v345 = vld [vmem:[#allocation3 + $0x28] sm:$0xff]
    %v346 = vld [vmem:[#allocation3 + $0x30] sm:$0xff]
    %v347 = vld [vmem:[#allocation3 + $0x38] sm:$0xff]
    %v348 = vld [vmem:[#allocation3 + $0x40] sm:$0xff]
    %v349 = vld [vmem:[#allocation3 + $0x48] sm:$0xff]
    %v350 = vld [vmem:[#allocation3 + $0x50] sm:$0xff]
    %v351 = vld [vmem:[#allocation3 + $0x58] sm:$0xff]
    %v352 = vld [vmem:[#allocation3 + $0x60] sm:$0xff]
    %v353 = vld [vmem:[#allocation3 + $0x68] sm:$0xff]
    %v354 = vld [vmem:[#allocation3 + $0x70] sm:$0xff]
    %v355 = vld [vmem:[#allocation3 + $0x78] sm:$0xff]
    %v356 = vld [vmem:[#allocation3 + $0x80] sm:$0xff]
    %v357 = vld [vmem:[#allocation3 + $0x88] sm:$0xff]
    %v358 = vld [vmem:[#allocation3 + $0x90] sm:$0xff]
    %v359 = vld [vmem:[#allocation3 + $0x98] sm:$0xff]
    %v360 = vld [vmem:[#allocation3 + $0xa0] sm:$0xff]
    %v361 = vld [vmem:[#allocation3 + $0xa8] sm:$0xff]
    %v362 = vld [vmem:[#allocation3 + $0xb0] sm:$0xff]
    %v363 = vld [vmem:[#allocation3 + $0xb8] sm:$0xff]
    %v364 = vld [vmem:[#allocation3 + $0xc0] sm:$0xff]
    %v365 = vld [vmem:[#allocation3 + $0xc8] sm:$0xff]
    %v366 = vld [vmem:[#allocation3 + $0xd0] sm:$0xff]
    %v367 = vld [vmem:[#allocation3 + $0xd8] sm:$0xff]
    %v368 = vld [vmem:[#allocation3 + $0xe0] sm:$0xff]
    %v369 = vld [vmem:[#allocation3 + $0xe8] sm:$0xff]
    %v370 = vld [vmem:[#allocation3 + $0xf0] sm:$0xff]
    %v371 = vld [vmem:[#allocation3 + $0xf8] sm:$0xff]
    %v372 = vld [vmem:[#allocation3 + $0x100] sm:$0xff]
    %v373 = vld [vmem:[#allocation3 + $0x108] sm:$0xff]
    %v374 = vld [vmem:[#allocation3 + $0x110] sm:$0xff]
    %v375 = vld [vmem:[#allocation3 + $0x118] sm:$0xff]
    %v376 = vld [vmem:[#allocation3 + $0x120] sm:$0xff]
    %v377 = vld [vmem:[#allocation3 + $0x128] sm:$0xff]
    %v378 = vld [vmem:[#allocation3 + $0x130] sm:$0xff]
    %v379 = vld [vmem:[#allocation3 + $0x138] sm:$0xff]
    %v380 = vld [vmem:[#allocation3 + $0x140] sm:$0xff]
    %v381 = vld [vmem:[#allocation3 + $0x148] sm:$0xff]
    %v382 = vld [vmem:[#allocation3 + $0x150] sm:$0xff]
    %v383 = vld [vmem:[#allocation3 + $0x158] sm:$0xff]
    %v384 = vld [vmem:[#allocation3 + $0x160] sm:$0xff]
    %v385 = vld [vmem:[#allocation3 + $0x168] sm:$0xff]
    %v386 = vld [vmem:[#allocation3 + $0x170] sm:$0xff]
    %v387 = vld [vmem:[#allocation3 + $0x178] sm:$0xff]
    %v388 = vld [vmem:[#allocation3 + $0x180] sm:$0xff]
    %v389 = vld [vmem:[#allocation3 + $0x188] sm:$0xff]
    %v390 = vld [vmem:[#allocation3 + $0x190] sm:$0xff]
    %v391 = vld [vmem:[#allocation3 + $0x198] sm:$0xff]
    %v392 = vld [vmem:[#allocation3 + $0x1a0] sm:$0xff]
    %v393 = vld [vmem:[#allocation3 + $0x1a8] sm:$0xff]
    %v394 = vld [vmem:[#allocation3 + $0x1b0] sm:$0xff]
    %v395 = vld [vmem:[#allocation3 + $0x1b8] sm:$0xff]
    %v396 = vld [vmem:[#allocation3 + $0x1c0] sm:$0xff]
    %v397 = vld [vmem:[#allocation3 + $0x1c8] sm:$0xff]
    %v398 = vld [vmem:[#allocation3 + $0x1d0] sm:$0xff]
    %v399 = vld [vmem:[#allocation3 + $0x1d8] sm:$0xff]
    %v400 = vld [vmem:[#allocation3 + $0x1e0] sm:$0xff]
    %v401 = vld [vmem:[#allocation3 + $0x1e8] sm:$0xff]
    %v402 = vld [vmem:[#allocation3 + $0x1f0] sm:$0xff]
    %v403 = vld [vmem:[#allocation3 + $0x1f8] sm:$0xff]
    %v404 = vld [vmem:[#allocation3 + $0x200] sm:$0xff]
    %v405 = vld [vmem:[#allocation3 + $0x208] sm:$0xff]
    %v406 = vld [vmem:[#allocation3 + $0x210] sm:$0xff]
    %v407 = vld [vmem:[#allocation3 + $0x218] sm:$0xff]
    %v408 = vld [vmem:[#allocation3 + $0x220] sm:$0xff]
    %v409 = vld [vmem:[#allocation3 + $0x228] sm:$0xff]
    %v410 = vld [vmem:[#allocation3 + $0x230] sm:$0xff]
    %v411 = vld [vmem:[#allocation3 + $0x238] sm:$0xff]
    %v412 = vld [vmem:[#allocation3 + $0x240] sm:$0xff]
    %v413 = vld [vmem:[#allocation3 + $0x248] sm:$0xff]
    %v414 = vld [vmem:[#allocation3 + $0x250] sm:$0xff]
    %v415 = vld [vmem:[#allocation3 + $0x258] sm:$0xff]
    %v416 = vld [vmem:[#allocation3 + $0x260] sm:$0xff]
    %v417 = vld [vmem:[#allocation3 + $0x268] sm:$0xff]
    %v418 = vld [vmem:[#allocation3 + $0x270] sm:$0xff]
    %v419 = vld [vmem:[#allocation3 + $0x278] sm:$0xff]
    %v420 = vld [vmem:[#allocation3 + $0x280] sm:$0xff]
    %v421 = vld [vmem:[#allocation3 + $0x288] sm:$0xff]
    %v422 = vld [vmem:[#allocation3 + $0x290] sm:$0xff]
    %v423 = vld [vmem:[#allocation3 + $0x298] sm:$0xff]
    %v424 = vld [vmem:[#allocation3 + $0x2a0] sm:$0xff]
    %v425 = vld [vmem:[#allocation3 + $0x2a8] sm:$0xff]
    %v426 = vld [vmem:[#allocation3 + $0x2b0] sm:$0xff]
    %v427 = vld [vmem:[#allocation3 + $0x2b8] sm:$0xff]
    %v428 = vld [vmem:[#allocation3 + $0x2c0] sm:$0xff]
    %v429 = vld [vmem:[#allocation3 + $0x2c8] sm:$0xff]
    %v430 = vld [vmem:[#allocation3 + $0x2d0] sm:$0xff]
    %v431 = vld [vmem:[#allocation3 + $0x2d8] sm:$0xff]
    %v432 = vld [vmem:[#allocation3 + $0x2e0] sm:$0xff]
    %v433 = vld [vmem:[#allocation3 + $0x2e8] sm:$0xff]
    %v434 = vld [vmem:[#allocation3 + $0x2f0] sm:$0xff]
    %v435 = vld [vmem:[#allocation3 + $0x2f8] sm:$0xff]
    %v436 = vld [vmem:[#allocation3 + $0x300] sm:$0xff]
    %v437 = vld [vmem:[#allocation3 + $0x308] sm:$0xff]
    %v438 = vld [vmem:[#allocation3 + $0x310] sm:$0xff]
    %v439 = vld [vmem:[#allocation3 + $0x318] sm:$0xff]
    %v440 = vld [vmem:[#allocation3 + $0x320] sm:$0xff]
    %v441 = vld [vmem:[#allocation3 + $0x328] sm:$0xff]
    %v442 = vld [vmem:[#allocation3 + $0x330] sm:$0xff]
    %v443 = vld [vmem:[#allocation3 + $0x338] sm:$0xff]
    %v444 = vld [vmem:[#allocation3 + $0x340] sm:$0xff]
    %v445 = vld [vmem:[#allocation3 + $0x348] sm:$0xff]
    %v446 = vld [vmem:[#allocation3 + $0x350] sm:$0xff]
    %v447 = vld [vmem:[#allocation3 + $0x358] sm:$0xff]
    %v448 = vld [vmem:[#allocation3 + $0x360] sm:$0xff]
    %v449 = vld [vmem:[#allocation3 + $0x368] sm:$0xff]
    %v450 = vld [vmem:[#allocation3 + $0x370] sm:$0xff]
    %v451 = vld [vmem:[#allocation3 + $0x378] sm:$0xff]
    %v452 = vld [vmem:[#allocation3 + $0x380] sm:$0xff]
    %v453 = vld [vmem:[#allocation3 + $0x388] sm:$0xff]
    %v454 = vld [vmem:[#allocation3 + $0x390] sm:$0xff]
    %v455 = vld [vmem:[#allocation3 + $0x398] sm:$0xff]
    %v456 = vld [vmem:[#allocation3 + $0x3a0] sm:$0xff]
    %v457 = vld [vmem:[#allocation3 + $0x3a8] sm:$0xff]
    %v458 = vld [vmem:[#allocation3 + $0x3b0] sm:$0xff]
    %v459 = vld [vmem:[#allocation3 + $0x3b8] sm:$0xff]
    %v460 = vld [vmem:[#allocation3 + $0x3c0] sm:$0xff]
    %v461 = vld [vmem:[#allocation3 + $0x3c8] sm:$0xff]
    %v462 = vld [vmem:[#allocation3 + $0x3d0] sm:$0xff]
    %v463 = vld [vmem:[#allocation3 + $0x3d8] sm:$0xff]
    %v464 = vld [vmem:[#allocation3 + $0x3e0] sm:$0xff]
    %v465 = vld [vmem:[#allocation3 + $0x3e8] sm:$0xff]
    %v466 = vld [vmem:[#allocation3 + $0x3f0] sm:$0xff]
    %v467 = vld [vmem:[#allocation3 + $0x3f8] sm:$0xff]
    %v468 = vld [vmem:[#allocation3 + $0x400] sm:$0xff]
    %v469 = vld [vmem:[#allocation3 + $0x408] sm:$0xff]
    %v470 = vld [vmem:[#allocation3 + $0x410] sm:$0xff]
    %v471 = vld [vmem:[#allocation3 + $0x418] sm:$0xff]
    %v472 = vld [vmem:[#allocation3 + $0x420] sm:$0xff]
    %v473 = vld [vmem:[#allocation3 + $0x428] sm:$0xff]
    %v474 = vld [vmem:[#allocation3 + $0x430] sm:$0xff]
    %v475 = vld [vmem:[#allocation3 + $0x438] sm:$0xff]
    %v476 = vld [vmem:[#allocation3 + $0x440] sm:$0xff]
    %v477 = vld [vmem:[#allocation3 + $0x448] sm:$0xff]
    %v478 = vld [vmem:[#allocation3 + $0x450] sm:$0xff]
    %v479 = vld [vmem:[#allocation3 + $0x458] sm:$0xff]
    %v480 = vld [vmem:[#allocation3 + $0x460] sm:$0xff]
    %v481 = vld [vmem:[#allocation3 + $0x468] sm:$0xff]
    %v482 = vld [vmem:[#allocation3 + $0x470] sm:$0xff]
    %v483 = vld [vmem:[#allocation3 + $0x478] sm:$0xff]
    %v484 = vld [vmem:[#allocation3 + $0x480] sm:$0xff]
    %v485 = vld [vmem:[#allocation3 + $0x488] sm:$0xff]
    %v486 = vld [vmem:[#allocation3 + $0x490] sm:$0xff]
    %v487 = vld [vmem:[#allocation3 + $0x498] sm:$0xff]
    %v488 = vld [vmem:[#allocation3 + $0x4a0] sm:$0xff]
    %v489 = vld [vmem:[#allocation3 + $0x4a8] sm:$0xff]
    %v490 = vld [vmem:[#allocation3 + $0x4b0] sm:$0xff]
    %v491 = vld [vmem:[#allocation3 + $0x4b8] sm:$0xff]
    %v492 = vld [vmem:[#allocation3 + $0x4c0] sm:$0xff]
    %v493 = vld [vmem:[#allocation3 + $0x4c8] sm:$0xff]
    %v494 = vld [vmem:[#allocation3 + $0x4d0] sm:$0xff]
    %v495 = vld [vmem:[#allocation3 + $0x4d8] sm:$0xff]
    %v496 = vld [vmem:[#allocation3 + $0x4e0] sm:$0xff]
    %v497 = vld [vmem:[#allocation3 + $0x4e8] sm:$0xff]
    %v498 = vld [vmem:[#allocation3 + $0x4f0] sm:$0xff]
    %v499 = vld [vmem:[#allocation3 + $0x4f8] sm:$0xff]
    %v500 = vld [vmem:[#allocation3 + $0x500] sm:$0xff]
    %v501 = vld [vmem:[#allocation3 + $0x508] sm:$0xff]
    %v502 = vld [vmem:[#allocation3 + $0x510] sm:$0xff]
    %v503 = vld [vmem:[#allocation3 + $0x518] sm:$0xff]
    %v504 = vld [vmem:[#allocation3 + $0x520] sm:$0xff]
    %v505 = vld [vmem:[#allocation3 + $0x528] sm:$0xff]
    %v506 = vld [vmem:[#allocation3 + $0x530] sm:$0xff]
    %v507 = vld [vmem:[#allocation3 + $0x538] sm:$0xff]
    %v508 = vld [vmem:[#allocation3 + $0x540] sm:$0xff]
    %v509 = vld [vmem:[#allocation3 + $0x548] sm:$0xff]
    %v510 = vld [vmem:[#allocation3 + $0x550] sm:$0xff]
    %v511 = vld [vmem:[#allocation3 + $0x558] sm:$0xff]
    %v512 = vld [vmem:[#allocation3 + $0x560] sm:$0xff]
    %v513 = vld [vmem:[#allocation3 + $0x568] sm:$0xff]
    %v514 = vld [vmem:[#allocation3 + $0x570] sm:$0xff]
    %v515 = vld [vmem:[#allocation3 + $0x578] sm:$0xff]
    %v516 = vld [vmem:[#allocation3 + $0x580] sm:$0xff]
    %v517 = vld [vmem:[#allocation3 + $0x588] sm:$0xff]
    %v518 = vld [vmem:[#allocation3 + $0x590] sm:$0xff]
    %v519 = vld [vmem:[#allocation3 + $0x598] sm:$0xff]
    %v520 = vld [vmem:[#allocation3 + $0x5a0] sm:$0xff]
    %v521 = vld [vmem:[#allocation3 + $0x5a8] sm:$0xff]
    %v522 = vld [vmem:[#allocation3 + $0x5b0] sm:$0xff]
    %v523 = vld [vmem:[#allocation3 + $0x5b8] sm:$0xff]
    %v524 = vld [vmem:[#allocation3 + $0x5c0] sm:$0xff]
    %v525 = vld [vmem:[#allocation3 + $0x5c8] sm:$0xff]
    %v526 = vld [vmem:[#allocation3 + $0x5d0] sm:$0xff]
    %v527 = vld [vmem:[#allocation3 + $0x5d8] sm:$0xff]
    %v528 = vld [vmem:[#allocation3 + $0x5e0] sm:$0xff]
    %v529 = vld [vmem:[#allocation3 + $0x5e8] sm:$0xff]
    %v530 = vld [vmem:[#allocation3 + $0x5f0] sm:$0xff]
    %v531 = vld [vmem:[#allocation3 + $0x5f8] sm:$0xff]
    %v532 = vld [vmem:[#allocation3 + $0x600] sm:$0xff]
    %v533 = vld [vmem:[#allocation3 + $0x608] sm:$0xff]
    %v534 = vld [vmem:[#allocation3 + $0x610] sm:$0xff]
    %v535 = vld [vmem:[#allocation3 + $0x618] sm:$0xff]
    %v536 = vld [vmem:[#allocation3 + $0x620] sm:$0xff]
    %v537 = vld [vmem:[#allocation3 + $0x628] sm:$0xff]
    %v538 = vld [vmem:[#allocation3 + $0x630] sm:$0xff]
    %v539 = vld [vmem:[#allocation3 + $0x638] sm:$0xff]
    %v540 = vld [vmem:[#allocation3 + $0x640] sm:$0xff]
    %v541 = vld [vmem:[#allocation3 + $0x648] sm:$0xff]
    %v542 = vld [vmem:[#allocation3 + $0x650] sm:$0xff]
    %v543 = vld [vmem:[#allocation3 + $0x658] sm:$0xff]
    %v544 = vld [vmem:[#allocation3 + $0x660] sm:$0xff]
    %v545 = vld [vmem:[#allocation3 + $0x668] sm:$0xff]
    %v546 = vld [vmem:[#allocation3 + $0x670] sm:$0xff]
    %v547 = vld [vmem:[#allocation3 + $0x678] sm:$0xff]
    %v548 = vld [vmem:[#allocation3 + $0x680] sm:$0xff]
    %v549 = vld [vmem:[#allocation3 + $0x688] sm:$0xff]
    %v550 = vld [vmem:[#allocation3 + $0x690] sm:$0xff]
    %v551 = vld [vmem:[#allocation3 + $0x698] sm:$0xff]
    %v552 = vld [vmem:[#allocation3 + $0x6a0] sm:$0xff]
    %v553 = vld [vmem:[#allocation3 + $0x6a8] sm:$0xff]
    %v554 = vld [vmem:[#allocation3 + $0x6b0] sm:$0xff]
    %v555 = vld [vmem:[#allocation3 + $0x6b8] sm:$0xff]
    %v556 = vld [vmem:[#allocation3 + $0x6c0] sm:$0xff]
    %v557 = vld [vmem:[#allocation3 + $0x6c8] sm:$0xff]
    %v558 = vld [vmem:[#allocation3 + $0x6d0] sm:$0xff]
    %v559 = vld [vmem:[#allocation3 + $0x6d8] sm:$0xff]
    %v560 = vld [vmem:[#allocation3 + $0x6e0] sm:$0xff]
    %v561 = vld [vmem:[#allocation3 + $0x6e8] sm:$0xff]
    %v562 = vld [vmem:[#allocation3 + $0x6f0] sm:$0xff]
    %v563 = vld [vmem:[#allocation3 + $0x6f8] sm:$0xff]
    %v564 = vld [vmem:[#allocation3 + $0x700] sm:$0xff]
    %v565 = vld [vmem:[#allocation3 + $0x708] sm:$0xff]
    %v566 = vld [vmem:[#allocation3 + $0x710] sm:$0xff]
    %v567 = vld [vmem:[#allocation3 + $0x718] sm:$0xff]
    %v568 = vld [vmem:[#allocation3 + $0x720] sm:$0xff]
    %v569 = vld [vmem:[#allocation3 + $0x728] sm:$0xff]
    %v570 = vld [vmem:[#allocation3 + $0x730] sm:$0xff]
    %v571 = vld [vmem:[#allocation3 + $0x738] sm:$0xff]
    %v572 = vld [vmem:[#allocation3 + $0x740] sm:$0xff]
    %v573 = vld [vmem:[#allocation3 + $0x748] sm:$0xff]
    %v574 = vld [vmem:[#allocation3 + $0x750] sm:$0xff]
    %v575 = vld [vmem:[#allocation3 + $0x758] sm:$0xff]
    %v576 = vld [vmem:[#allocation3 + $0x760] sm:$0xff]
    %v577 = vld [vmem:[#allocation3 + $0x768] sm:$0xff]
    %v578 = vld [vmem:[#allocation3 + $0x770] sm:$0xff]
    %v579 = vld [vmem:[#allocation3 + $0x778] sm:$0xff]
    %v580 = vld [vmem:[#allocation3 + $0x780] sm:$0xff]
    %v581 = vld [vmem:[#allocation3 + $0x788] sm:$0xff]
    %v582 = vld [vmem:[#allocation3 + $0x790] sm:$0xff]
    %v583 = vld [vmem:[#allocation3 + $0x798] sm:$0xff]
    %v584 = vld [vmem:[#allocation3 + $0x7a0] sm:$0xff]
    %v585 = vld [vmem:[#allocation3 + $0x7a8] sm:$0xff]
    %v586 = vld [vmem:[#allocation3 + $0x7b0] sm:$0xff]
    %v587 = vld [vmem:[#allocation3 + $0x7b8] sm:$0xff]
    %v588 = vld [vmem:[#allocation3 + $0x7c0] sm:$0xff]
    %v589 = vld [vmem:[#allocation3 + $0x7c8] sm:$0xff]
    %v590 = vld [vmem:[#allocation3 + $0x7d0] sm:$0xff]
    %v591 = vld [vmem:[#allocation3 + $0x7d8] sm:$0xff]
    %v592 = vld [vmem:[#allocation3 + $0x7e0] sm:$0xff]
    %v593 = vld [vmem:[#allocation3 + $0x7e8] sm:$0xff]
    %v594 = vld [vmem:[#allocation3 + $0x7f0] sm:$0xff]
    %v595 = vld [vmem:[#allocation3 + $0x7f8] sm:$0xff]
    %v596 = vld [vmem:[#allocation3 + $0x800] sm:$0xff]
    %v597 = vld [vmem:[#allocation3 + $0x808] sm:$0xff]
    %v598 = vld [vmem:[#allocation3 + $0x810] sm:$0xff]
    %v599 = vld [vmem:[#allocation3 + $0x818] sm:$0xff]
    %v600 = vld [vmem:[#allocation3 + $0x820] sm:$0xff]
    %v601 = vld [vmem:[#allocation3 + $0x828] sm:$0xff]
    %v602 = vld [vmem:[#allocation3 + $0x830] sm:$0xff]
    %v603 = vld [vmem:[#allocation3 + $0x838] sm:$0xff]
    %v604 = vld [vmem:[#allocation3 + $0x840] sm:$0xff]
    %v605 = vld [vmem:[#allocation3 + $0x848] sm:$0xff]
    %v606 = vld [vmem:[#allocation3 + $0x850] sm:$0xff]
    %v607 = vld [vmem:[#allocation3 + $0x858] sm:$0xff]
    %v608 = vld [vmem:[#allocation3 + $0x860] sm:$0xff]
    %v609 = vld [vmem:[#allocation3 + $0x868] sm:$0xff]
    %v610 = vld [vmem:[#allocation3 + $0x870] sm:$0xff]
    %v611 = vld [vmem:[#allocation3 + $0x878] sm:$0xff]
    %v612 = vld [vmem:[#allocation3 + $0x880] sm:$0xff]
    %v613 = vld [vmem:[#allocation3 + $0x888] sm:$0xff]
    %v614 = vld [vmem:[#allocation3 + $0x890] sm:$0xff]
    %v615 = vld [vmem:[#allocation3 + $0x898] sm:$0xff]
    %v616 = vld [vmem:[#allocation3 + $0x8a0] sm:$0xff]
    %v617 = vld [vmem:[#allocation3 + $0x8a8] sm:$0xff]
    %v618 = vld [vmem:[#allocation3 + $0x8b0] sm:$0xff]
    %v619 = vld [vmem:[#allocation3 + $0x8b8] sm:$0xff]
    %v620 = vld [vmem:[#allocation3 + $0x8c0] sm:$0xff]
    %v621 = vld [vmem:[#allocation3 + $0x8c8] sm:$0xff]
    %v622 = vld [vmem:[#allocation3 + $0x8d0] sm:$0xff]
    %v623 = vld [vmem:[#allocation3 + $0x8d8] sm:$0xff]
    %v624 = vld [vmem:[#allocation3 + $0x8e0] sm:$0xff]
    %v625 = vld [vmem:[#allocation3 + $0x8e8] sm:$0xff]
    %v626 = vld [vmem:[#allocation3 + $0x8f0] sm:$0xff]
    %v627 = vld [vmem:[#allocation3 + $0x8f8] sm:$0xff]
    %v628 = vld [vmem:[#allocation3 + $0x900] sm:$0xff]
    %v629 = vld [vmem:[#allocation3 + $0x908] sm:$0xff]
    %v630 = vld [vmem:[#allocation3 + $0x910] sm:$0xff]
    %v631 = vld [vmem:[#allocation3 + $0x918] sm:$0xff]
    %v632 = vld [vmem:[#allocation3 + $0x920] sm:$0xff]
    %v633 = vld [vmem:[#allocation3 + $0x928] sm:$0xff]
    %v634 = vld [vmem:[#allocation3 + $0x930] sm:$0xff]
    %v635 = vld [vmem:[#allocation3 + $0x938] sm:$0xff]
    %v636 = vld [vmem:[#allocation3 + $0x940] sm:$0xff]
    %v637 = vld [vmem:[#allocation3 + $0x948] sm:$0xff]
    %v638 = vld [vmem:[#allocation3 + $0x950] sm:$0xff]
    %v639 = vld [vmem:[#allocation3 + $0x958] sm:$0xff]
    %v640 = vld [vmem:[#allocation3 + $0x960] sm:$0xff]
    %v641 = vld [vmem:[#allocation3 + $0x968] sm:$0xff]
    %v642 = vld [vmem:[#allocation3 + $0x970] sm:$0xff]
    %v643 = vld [vmem:[#allocation3 + $0x978] sm:$0xff]
    %v644 = vld [vmem:[#allocation3 + $0x980] sm:$0xff]
    %v645 = vld [vmem:[#allocation3 + $0x988] sm:$0xff]
    %v646 = vld [vmem:[#allocation3 + $0x990] sm:$0xff]
    %v647 = vld [vmem:[#allocation3 + $0x998] sm:$0xff]
    %v648 = vld [vmem:[#allocation3 + $0x9a0] sm:$0xff]
    %v649 = vld [vmem:[#allocation3 + $0x9a8] sm:$0xff]
    %v650 = vld [vmem:[#allocation3 + $0x9b0] sm:$0xff]
    %v651 = vld [vmem:[#allocation3 + $0x9b8] sm:$0xff]
    %v652 = vld [vmem:[#allocation3 + $0x9c0] sm:$0xff]
    %v653 = vld [vmem:[#allocation3 + $0x9c8] sm:$0xff]
    %v654 = vld [vmem:[#allocation3 + $0x9d0] sm:$0xff]
    %v655 = vld [vmem:[#allocation3 + $0x9d8] sm:$0xff]
    %v656 = vld [vmem:[#allocation3 + $0x9e0] sm:$0xff]
    %v657 = vld [vmem:[#allocation3 + $0x9e8] sm:$0xff]
    %v658 = vld [vmem:[#allocation3 + $0x9f0] sm:$0xff]
    %v659 = vld [vmem:[#allocation3 + $0x9f8] sm:$0xff]
    %v660 = vld [vmem:[#allocation3 + $0xa00] sm:$0xff]
    %v661 = vld [vmem:[#allocation3 + $0xa08] sm:$0xff]
    %v662 = vld [vmem:[#allocation3 + $0xa10] sm:$0xff]
    %v663 = vld [vmem:[#allocation3 + $0xa18] sm:$0xff]
    %v664 = vld [vmem:[#allocation3 + $0xa20] sm:$0xff]
    %v665 = vld [vmem:[#allocation3 + $0xa28] sm:$0xff]
    %v666 = vld [vmem:[#allocation3 + $0xa30] sm:$0xff]
    %v667 = vld [vmem:[#allocation3 + $0xa38] sm:$0xff]
    %v668 = vld [vmem:[#allocation3 + $0xa40] sm:$0xff]
    %v669 = vld [vmem:[#allocation3 + $0xa48] sm:$0xff]
    %v670 = vld [vmem:[#allocation3 + $0xa50] sm:$0xff]
    %v671 = vld [vmem:[#allocation3 + $0xa58] sm:$0xff]
    %v672 = vld [vmem:[#allocation3 + $0xa60] sm:$0xff]
    %v673 = vld [vmem:[#allocation3 + $0xa68] sm:$0xff]
    %v674 = vld [vmem:[#allocation3 + $0xa70] sm:$0xff]
    %v675 = vld [vmem:[#allocation3 + $0xa78] sm:$0xff]
    %v676 = vld [vmem:[#allocation3 + $0xa80] sm:$0xff]
    %v677 = vld [vmem:[#allocation3 + $0xa88] sm:$0xff]
    %v678 = vld [vmem:[#allocation3 + $0xa90] sm:$0xff]
    %v679 = vld [vmem:[#allocation3 + $0xa98] sm:$0xff]
    %v680 = vld [vmem:[#allocation3 + $0xaa0] sm:$0xff]
    %v681 = vld [vmem:[#allocation3 + $0xaa8] sm:$0xff]
    %v682 = vld [vmem:[#allocation3 + $0xab0] sm:$0xff]
    %v683 = vld [vmem:[#allocation3 + $0xab8] sm:$0xff]
    %v684 = vld [vmem:[#allocation3 + $0xac0] sm:$0xff]
    %v685 = vld [vmem:[#allocation3 + $0xac8] sm:$0xff]
    %v686 = vld [vmem:[#allocation3 + $0xad0] sm:$0xff]
    %v687 = vld [vmem:[#allocation3 + $0xad8] sm:$0xff]
    %v688 = vld [vmem:[#allocation3 + $0xae0] sm:$0xff]
    %v689 = vld [vmem:[#allocation3 + $0xae8] sm:$0xff]
    %v690 = vld [vmem:[#allocation3 + $0xaf0] sm:$0xff]
    %v691 = vld [vmem:[#allocation3 + $0xaf8] sm:$0xff]
    %v692 = vld [vmem:[#allocation3 + $0xb00] sm:$0xff]
    %v693 = vld [vmem:[#allocation3 + $0xb08] sm:$0xff]
    %v694 = vld [vmem:[#allocation3 + $0xb10] sm:$0xff]
    %v695 = vld [vmem:[#allocation3 + $0xb18] sm:$0xff]
    %v696 = vld [vmem:[#allocation3 + $0xb20] sm:$0xff]
    %v697 = vld [vmem:[#allocation3 + $0xb28] sm:$0xff]
    %v698 = vld [vmem:[#allocation3 + $0xb30] sm:$0xff]
    %v699 = vld [vmem:[#allocation3 + $0xb38] sm:$0xff]
    %v700 = vld [vmem:[#allocation3 + $0xb40] sm:$0xff]
    %v701 = vld [vmem:[#allocation3 + $0xb48] sm:$0xff]
    %v702 = vld [vmem:[#allocation3 + $0xb50] sm:$0xff]
    %v703 = vld [vmem:[#allocation3 + $0xb58] sm:$0xff]
    %v704 = vld [vmem:[#allocation3 + $0xb60] sm:$0xff]
    %v705 = vld [vmem:[#allocation3 + $0xb68] sm:$0xff]
    %v706 = vld [vmem:[#allocation3 + $0xb70] sm:$0xff]
    %v707 = vld [vmem:[#allocation3 + $0xb78] sm:$0xff]
    %v708 = vld [vmem:[#allocation3 + $0xb80] sm:$0xff]
    %v709 = vld [vmem:[#allocation3 + $0xb88] sm:$0xff]
    %v710 = vld [vmem:[#allocation3 + $0xb90] sm:$0xff]
    %v711 = vld [vmem:[#allocation3 + $0xb98] sm:$0xff]
    %v712 = vld [vmem:[#allocation3 + $0xba0] sm:$0xff]
    %v713 = vld [vmem:[#allocation3 + $0xba8] sm:$0xff]
    %v714 = vld [vmem:[#allocation3 + $0xbb0] sm:$0xff]
    %v715 = vld [vmem:[#allocation3 + $0xbb8] sm:$0xff]
    %v716 = vld [vmem:[#allocation3 + $0xbc0] sm:$0xff]
    %v717 = vld [vmem:[#allocation3 + $0xbc8] sm:$0xff]
    %v718 = vld [vmem:[#allocation3 + $0xbd0] sm:$0xff]
    %v719 = vld [vmem:[#allocation3 + $0xbd8] sm:$0xff]
    %v720 = vld [vmem:[#allocation3 + $0xbe0] sm:$0xff]
    %v721 = vld [vmem:[#allocation3 + $0xbe8] sm:$0xff]
    %v722 = vld [vmem:[#allocation3 + $0xbf0] sm:$0xff]
    %v723 = vld [vmem:[#allocation3 + $0xbf8] sm:$0xff]
    %v724 = vld [vmem:[#allocation3 + $0xc00] sm:$0xff]
    %v725 = vld [vmem:[#allocation3 + $0xc08] sm:$0xff]
    %v726 = vld [vmem:[#allocation3 + $0xc10] sm:$0xff]
    %v727 = vld [vmem:[#allocation3 + $0xc18] sm:$0xff]
    %v728 = vld [vmem:[#allocation3 + $0xc20] sm:$0xff]
    %v729 = vld [vmem:[#allocation3 + $0xc28] sm:$0xff]
    %v730 = vld [vmem:[#allocation3 + $0xc30] sm:$0xff]
    %v731 = vld [vmem:[#allocation3 + $0xc38] sm:$0xff]
    %v732 = vld [vmem:[#allocation3 + $0xc40] sm:$0xff]
    %v733 = vld [vmem:[#allocation3 + $0xc48] sm:$0xff]
    %v734 = vld [vmem:[#allocation3 + $0xc50] sm:$0xff]
    %v735 = vld [vmem:[#allocation3 + $0xc58] sm:$0xff]
    %v736 = vld [vmem:[#allocation3 + $0xc60] sm:$0xff]
    %v737 = vld [vmem:[#allocation3 + $0xc68] sm:$0xff]
    %v738 = vld [vmem:[#allocation3 + $0xc70] sm:$0xff]
    %v739 = vld [vmem:[#allocation3 + $0xc78] sm:$0xff]
    %v740 = vld [vmem:[#allocation3 + $0xc80] sm:$0xff]
    %v741 = vld [vmem:[#allocation3 + $0xc88] sm:$0xff]
    %v742 = vld [vmem:[#allocation3 + $0xc90] sm:$0xff]
    %v743 = vld [vmem:[#allocation3 + $0xc98] sm:$0xff]
    %v744 = vld [vmem:[#allocation3 + $0xca0] sm:$0xff]
    %v745 = vld [vmem:[#allocation3 + $0xca8] sm:$0xff]
    %v746 = vld [vmem:[#allocation3 + $0xcb0] sm:$0xff]
    %v747 = vld [vmem:[#allocation3 + $0xcb8] sm:$0xff]
    %v748 = vld [vmem:[#allocation3 + $0xcc0] sm:$0xff]
    %v749 = vld [vmem:[#allocation3 + $0xcc8] sm:$0xff]
    %v750 = vld [vmem:[#allocation3 + $0xcd0] sm:$0xff]
    %v751 = vld [vmem:[#allocation3 + $0xcd8] sm:$0xff]
    %v752 = vld [vmem:[#allocation3 + $0xce0] sm:$0xff]
    %v753 = vld [vmem:[#allocation3 + $0xce8] sm:$0xff]
    %v754 = vld [vmem:[#allocation3 + $0xcf0] sm:$0xff]
    %v755 = vld [vmem:[#allocation3 + $0xcf8] sm:$0xff]
    %v756 = vld [vmem:[#allocation3 + $0xd00] sm:$0xff]
    %v757 = vld [vmem:[#allocation3 + $0xd08] sm:$0xff]
    %v758 = vld [vmem:[#allocation3 + $0xd10] sm:$0xff]
    %v759 = vld [vmem:[#allocation3 + $0xd18] sm:$0xff]
    %v760 = vld [vmem:[#allocation3 + $0xd20] sm:$0xff]
    %v761 = vld [vmem:[#allocation3 + $0xd28] sm:$0xff]
    %v762 = vld [vmem:[#allocation3 + $0xd30] sm:$0xff]
    %v763 = vld [vmem:[#allocation3 + $0xd38] sm:$0xff]
    %v764 = vld [vmem:[#allocation3 + $0xd40] sm:$0xff]
    %v765 = vld [vmem:[#allocation3 + $0xd48] sm:$0xff]
    %v766 = vld [vmem:[#allocation3 + $0xd50] sm:$0xff]
    %v767 = vld [vmem:[#allocation3 + $0xd58] sm:$0xff]
    %v768 = vld [vmem:[#allocation3 + $0xd60] sm:$0xff]
    %v769 = vld [vmem:[#allocation3 + $0xd68] sm:$0xff]
    %v770 = vld [vmem:[#allocation3 + $0xd70] sm:$0xff]
    %v771 = vld [vmem:[#allocation3 + $0xd78] sm:$0xff]
    %v772 = vld [vmem:[#allocation3 + $0xd80] sm:$0xff]
    %v773 = vld [vmem:[#allocation3 + $0xd88] sm:$0xff]
    %v774 = vld [vmem:[#allocation3 + $0xd90] sm:$0xff]
    %v775 = vld [vmem:[#allocation3 + $0xd98] sm:$0xff]
    %v776 = vld [vmem:[#allocation3 + $0xda0] sm:$0xff]
    %v777 = vld [vmem:[#allocation3 + $0xda8] sm:$0xff]
    %v778 = vld [vmem:[#allocation3 + $0xdb0] sm:$0xff]
    %v779 = vld [vmem:[#allocation3 + $0xdb8] sm:$0xff]
    %v780 = vld [vmem:[#allocation3 + $0xdc0] sm:$0xff]
    %v781 = vld [vmem:[#allocation3 + $0xdc8] sm:$0xff]
    %v782 = vld [vmem:[#allocation3 + $0xdd0] sm:$0xff]
    %v783 = vld [vmem:[#allocation3 + $0xdd8] sm:$0xff]
    %v784 = vld [vmem:[#allocation3 + $0xde0] sm:$0xff]
    %v785 = vld [vmem:[#allocation3 + $0xde8] sm:$0xff]
    %v786 = vld [vmem:[#allocation3 + $0xdf0] sm:$0xff]
    %v787 = vld [vmem:[#allocation3 + $0xdf8] sm:$0xff]
    %v788 = vld [vmem:[#allocation3 + $0xe00] sm:$0xff]
    %v789 = vld [vmem:[#allocation3 + $0xe08] sm:$0xff]
    %v790 = vld [vmem:[#allocation3 + $0xe10] sm:$0xff]
    %v791 = vld [vmem:[#allocation3 + $0xe18] sm:$0xff]
    %v792 = vld [vmem:[#allocation3 + $0xe20] sm:$0xff]
    %v793 = vld [vmem:[#allocation3 + $0xe28] sm:$0xff]
    %v794 = vld [vmem:[#allocation3 + $0xe30] sm:$0xff]
    %v795 = vld [vmem:[#allocation3 + $0xe38] sm:$0xff]
    %v796 = vld [vmem:[#allocation3 + $0xe40] sm:$0xff]
    %v797 = vld [vmem:[#allocation3 + $0xe48] sm:$0xff]
    %v798 = vld [vmem:[#allocation3 + $0xe50] sm:$0xff]
    %v799 = vld [vmem:[#allocation3 + $0xe58] sm:$0xff]
    %v800 = vld [vmem:[#allocation3 + $0xe60] sm:$0xff]
    %v801 = vld [vmem:[#allocation3 + $0xe68] sm:$0xff]
    %v802 = vld [vmem:[#allocation3 + $0xe70] sm:$0xff]
    %v803 = vld [vmem:[#allocation3 + $0xe78] sm:$0xff]
    %v804 = vld [vmem:[#allocation3 + $0xe80] sm:$0xff]
    %v805 = vld [vmem:[#allocation3 + $0xe88] sm:$0xff]
    %v806 = vld [vmem:[#allocation3 + $0xe90] sm:$0xff]
    %v807 = vld [vmem:[#allocation3 + $0xe98] sm:$0xff]
    %v808 = vld [vmem:[#allocation3 + $0xea0] sm:$0xff]
    %v809 = vld [vmem:[#allocation3 + $0xea8] sm:$0xff]
    %v810 = vld [vmem:[#allocation3 + $0xeb0] sm:$0xff]
    %v811 = vld [vmem:[#allocation3 + $0xeb8] sm:$0xff]
    %v812 = vld [vmem:[#allocation3 + $0xec0] sm:$0xff]
    %v813 = vld [vmem:[#allocation3 + $0xec8] sm:$0xff]
    %v814 = vld [vmem:[#allocation3 + $0xed0] sm:$0xff]
    %v815 = vld [vmem:[#allocation3 + $0xed8] sm:$0xff]
    %v816 = vld [vmem:[#allocation3 + $0xee0] sm:$0xff]
    %v817 = vld [vmem:[#allocation3 + $0xee8] sm:$0xff]
    %v818 = vld [vmem:[#allocation3 + $0xef0] sm:$0xff]
    %v819 = vld [vmem:[#allocation3 + $0xef8] sm:$0xff]
    %v820 = vld [vmem:[#allocation3 + $0xf00] sm:$0xff]
    %v821 = vld [vmem:[#allocation3 + $0xf08] sm:$0xff]
    %v822 = vld [vmem:[#allocation3 + $0xf10] sm:$0xff]
    %v823 = vld [vmem:[#allocation3 + $0xf18] sm:$0xff]
    %v824 = vld [vmem:[#allocation3 + $0xf20] sm:$0xff]
    %v825 = vld [vmem:[#allocation3 + $0xf28] sm:$0xff]
    %v826 = vld [vmem:[#allocation3 + $0xf30] sm:$0xff]
    %v827 = vld [vmem:[#allocation3 + $0xf38] sm:$0xff]
    %v828 = vld [vmem:[#allocation3 + $0xf40] sm:$0xff]
    %v829 = vld [vmem:[#allocation3 + $0xf48] sm:$0xff]
    %v830 = vld [vmem:[#allocation3 + $0xf50] sm:$0xff]
    %v831 = vld [vmem:[#allocation3 + $0xf58] sm:$0xff]
    %v832 = vld [vmem:[#allocation3 + $0xf60] sm:$0xff]
    %v833 = vld [vmem:[#allocation3 + $0xf68] sm:$0xff]
    %v834 = vld [vmem:[#allocation3 + $0xf70] sm:$0xff]
    %v835 = vld [vmem:[#allocation3 + $0xf78] sm:$0xff]
    %v836 = vld [vmem:[#allocation3 + $0xf80] sm:$0xff]
    %v837 = vld [vmem:[#allocation3 + $0xf88] sm:$0xff]
    %v838 = vld [vmem:[#allocation3 + $0xf90] sm:$0xff]
    %v839 = vld [vmem:[#allocation3 + $0xf98] sm:$0xff]
    %v840 = vld [vmem:[#allocation3 + $0xfa0] sm:$0xff]
    %v841 = vld [vmem:[#allocation3 + $0xfa8] sm:$0xff]
    %v842 = vld [vmem:[#allocation3 + $0xfb0] sm:$0xff]
    %v843 = vld [vmem:[#allocation3 + $0xfb8] sm:$0xff]
    %v844 = vld [vmem:[#allocation3 + $0xfc0] sm:$0xff]
    %v845 = vld [vmem:[#allocation3 + $0xfc8] sm:$0xff]
    %v846 = vld [vmem:[#allocation3 + $0xfd0] sm:$0xff]
    %v847 = vld [vmem:[#allocation3 + $0xfd8] sm:$0xff]
    %v848 = vld [vmem:[#allocation3 + $0xfe0] sm:$0xff]
    %v849 = vld [vmem:[#allocation3 + $0xfe8] sm:$0xff]
    %v850 = vld [vmem:[#allocation3 + $0xff0] sm:$0xff]
    %v851 = vld [vmem:[#allocation3 + $0xff8] sm:$0xff]
    %v852 = vld [vmem:[#allocation5] sm:$0xff]
    %v854 = vlaneseq
    %v855 = vshrl.u32 %v854, 7
    %v856 = vsub.s32 0, %v855
    %v857 = vrot.slane %v852, %v856
    %v858 = vlaneseq
    %v859 = vshrl.u32 %v858, 7
    %v860 = vsub.s32 1, %v859
    %v861 = vrot.slane %v852, %v860
    %v862 = vlaneseq
    %v863 = vshrl.u32 %v862, 7
    %v864 = vsub.s32 2, %v863
    %v865 = vrot.slane %v852, %v864
    %v866 = vlaneseq
    %v867 = vshrl.u32 %v866, 7
    %v868 = vsub.s32 3, %v867
    %v869 = vrot.slane %v852, %v868
    %v870 = vlaneseq
    %v871 = vshrl.u32 %v870, 7
    %v872 = vsub.s32 4, %v871
    %v873 = vrot.slane %v852, %v872
    %v874 = vlaneseq
    %v875 = vshrl.u32 %v874, 7
    %v876 = vsub.s32 5, %v875
    %v877 = vrot.slane %v852, %v876
    %v878 = vlaneseq
    %v879 = vshrl.u32 %v878, 7
    %v880 = vsub.s32 6, %v879
    %v881 = vrot.slane %v852, %v880
    %v882 = vlaneseq
    %v883 = vshrl.u32 %v882, 7
    %v884 = vsub.s32 7, %v883
    %v885 = vrot.slane %v852, %v884
    %v1406 = vunpack.c.l.b16 %v340
    %v1407 = vunpack.c.h.b16 %v340
    %v1408 = vunpack.c.l.b16 %v341
    %v1409 = vunpack.c.h.b16 %v341
    %v1410 = vunpack.c.l.b16 %v342
    %v1411 = vunpack.c.h.b16 %v342
    %v1412 = vunpack.c.l.b16 %v343
    %v1413 = vunpack.c.h.b16 %v343
    %v1414 = vunpack.c.l.b16 %v344
    %v1415 = vunpack.c.h.b16 %v344
    %v1416 = vunpack.c.l.b16 %v345
    %v1417 = vunpack.c.h.b16 %v345
    %v1418 = vunpack.c.l.b16 %v346
    %v1419 = vunpack.c.h.b16 %v346
    %v1420 = vunpack.c.l.b16 %v347
    %v1421 = vunpack.c.h.b16 %v347
    %v1422 = vunpack.c.l.b16 %v348
    %v1423 = vunpack.c.h.b16 %v348
    %v1424 = vunpack.c.l.b16 %v349
    %v1425 = vunpack.c.h.b16 %v349
    %v1426 = vunpack.c.l.b16 %v350
    %v1427 = vunpack.c.h.b16 %v350
    %v1428 = vunpack.c.l.b16 %v351
    %v1429 = vunpack.c.h.b16 %v351
    %v1430 = vunpack.c.l.b16 %v352
    %v1431 = vunpack.c.h.b16 %v352
    %v1432 = vunpack.c.l.b16 %v353
    %v1433 = vunpack.c.h.b16 %v353
    %v1434 = vunpack.c.l.b16 %v354
    %v1435 = vunpack.c.h.b16 %v354
    %v1436 = vunpack.c.l.b16 %v355
    %v1437 = vunpack.c.h.b16 %v355
    %v1438 = vunpack.c.l.b16 %v356
    %v1439 = vunpack.c.h.b16 %v356
    %v1440 = vunpack.c.l.b16 %v357
    %v1441 = vunpack.c.h.b16 %v357
    %v1442 = vunpack.c.l.b16 %v358
    %v1443 = vunpack.c.h.b16 %v358
    %v1444 = vunpack.c.l.b16 %v359
    %v1445 = vunpack.c.h.b16 %v359
    %v1446 = vunpack.c.l.b16 %v360
    %v1447 = vunpack.c.h.b16 %v360
    %v1448 = vunpack.c.l.b16 %v361
    %v1449 = vunpack.c.h.b16 %v361
    %v1450 = vunpack.c.l.b16 %v362
    %v1451 = vunpack.c.h.b16 %v362
    %v1452 = vunpack.c.l.b16 %v363
    %v1453 = vunpack.c.h.b16 %v363
    %v1454 = vunpack.c.l.b16 %v364
    %v1455 = vunpack.c.h.b16 %v364
    %v1456 = vunpack.c.l.b16 %v365
    %v1457 = vunpack.c.h.b16 %v365
    %v1458 = vunpack.c.l.b16 %v366
    %v1459 = vunpack.c.h.b16 %v366
    %v1460 = vunpack.c.l.b16 %v367
    %v1461 = vunpack.c.h.b16 %v367
    %v1462 = vunpack.c.l.b16 %v368
    %v1463 = vunpack.c.h.b16 %v368
    %v1464 = vunpack.c.l.b16 %v369
    %v1465 = vunpack.c.h.b16 %v369
    %v1466 = vunpack.c.l.b16 %v370
    %v1467 = vunpack.c.h.b16 %v370
    %v1468 = vunpack.c.l.b16 %v371
    %v1469 = vunpack.c.h.b16 %v371
    %v1470 = vunpack.c.l.b16 %v372
    %v1471 = vunpack.c.h.b16 %v372
    %v1472 = vunpack.c.l.b16 %v373
    %v1473 = vunpack.c.h.b16 %v373
    %v1474 = vunpack.c.l.b16 %v374
    %v1475 = vunpack.c.h.b16 %v374
    %v1476 = vunpack.c.l.b16 %v375
    %v1477 = vunpack.c.h.b16 %v375
    %v1478 = vunpack.c.l.b16 %v376
    %v1479 = vunpack.c.h.b16 %v376
    %v1480 = vunpack.c.l.b16 %v377
    %v1481 = vunpack.c.h.b16 %v377
    %v1482 = vunpack.c.l.b16 %v378
    %v1483 = vunpack.c.h.b16 %v378
    %v1484 = vunpack.c.l.b16 %v379
    %v1485 = vunpack.c.h.b16 %v379
    %v1486 = vunpack.c.l.b16 %v380
    %v1487 = vunpack.c.h.b16 %v380
    %v1488 = vunpack.c.l.b16 %v381
    %v1489 = vunpack.c.h.b16 %v381
    %v1490 = vunpack.c.l.b16 %v382
    %v1491 = vunpack.c.h.b16 %v382
    %v1492 = vunpack.c.l.b16 %v383
    %v1493 = vunpack.c.h.b16 %v383
    %v1494 = vunpack.c.l.b16 %v384
    %v1495 = vunpack.c.h.b16 %v384
    %v1496 = vunpack.c.l.b16 %v385
    %v1497 = vunpack.c.h.b16 %v385
    %v1498 = vunpack.c.l.b16 %v386
    %v1499 = vunpack.c.h.b16 %v386
    %v1500 = vunpack.c.l.b16 %v387
    %v1501 = vunpack.c.h.b16 %v387
    %v1502 = vunpack.c.l.b16 %v388
    %v1503 = vunpack.c.h.b16 %v388
    %v1504 = vunpack.c.l.b16 %v389
    %v1505 = vunpack.c.h.b16 %v389
    %v1506 = vunpack.c.l.b16 %v390
    %v1507 = vunpack.c.h.b16 %v390
    %v1508 = vunpack.c.l.b16 %v391
    %v1509 = vunpack.c.h.b16 %v391
    %v1510 = vunpack.c.l.b16 %v392
    %v1511 = vunpack.c.h.b16 %v392
    %v1512 = vunpack.c.l.b16 %v393
    %v1513 = vunpack.c.h.b16 %v393
    %v1514 = vunpack.c.l.b16 %v394
    %v1515 = vunpack.c.h.b16 %v394
    %v1516 = vunpack.c.l.b16 %v395
    %v1517 = vunpack.c.h.b16 %v395
    %v1518 = vunpack.c.l.b16 %v396
    %v1519 = vunpack.c.h.b16 %v396
    %v1520 = vunpack.c.l.b16 %v397
    %v1521 = vunpack.c.h.b16 %v397
    %v1522 = vunpack.c.l.b16 %v398
    %v1523 = vunpack.c.h.b16 %v398
    %v1524 = vunpack.c.l.b16 %v399
    %v1525 = vunpack.c.h.b16 %v399
    %v1526 = vunpack.c.l.b16 %v400
    %v1527 = vunpack.c.h.b16 %v400
    %v1528 = vunpack.c.l.b16 %v401
    %v1529 = vunpack.c.h.b16 %v401
    %v1530 = vunpack.c.l.b16 %v402
    %v1531 = vunpack.c.h.b16 %v402
    %v1532 = vunpack.c.l.b16 %v403
    %v1533 = vunpack.c.h.b16 %v403
    %v1534 = vunpack.c.l.b16 %v404
    %v1535 = vunpack.c.h.b16 %v404
    %v1536 = vunpack.c.l.b16 %v405
    %v1537 = vunpack.c.h.b16 %v405
    %v1538 = vunpack.c.l.b16 %v406
    %v1539 = vunpack.c.h.b16 %v406
    %v1540 = vunpack.c.l.b16 %v407
    %v1541 = vunpack.c.h.b16 %v407
    %v1542 = vunpack.c.l.b16 %v408
    %v1543 = vunpack.c.h.b16 %v408
    %v1544 = vunpack.c.l.b16 %v409
    %v1545 = vunpack.c.h.b16 %v409
    %v1546 = vunpack.c.l.b16 %v410
    %v1547 = vunpack.c.h.b16 %v410
    %v1548 = vunpack.c.l.b16 %v411
    %v1549 = vunpack.c.h.b16 %v411
    %v1550 = vunpack.c.l.b16 %v412
    %v1551 = vunpack.c.h.b16 %v412
    %v1552 = vunpack.c.l.b16 %v413
    %v1553 = vunpack.c.h.b16 %v413
    %v1554 = vunpack.c.l.b16 %v414
    %v1555 = vunpack.c.h.b16 %v414
    %v1556 = vunpack.c.l.b16 %v415
    %v1557 = vunpack.c.h.b16 %v415
    %v1558 = vunpack.c.l.b16 %v416
    %v1559 = vunpack.c.h.b16 %v416
    %v1560 = vunpack.c.l.b16 %v417
    %v1561 = vunpack.c.h.b16 %v417
    %v1562 = vunpack.c.l.b16 %v418
    %v1563 = vunpack.c.h.b16 %v418
    %v1564 = vunpack.c.l.b16 %v419
    %v1565 = vunpack.c.h.b16 %v419
    %v1566 = vunpack.c.l.b16 %v420
    %v1567 = vunpack.c.h.b16 %v420
    %v1568 = vunpack.c.l.b16 %v421
    %v1569 = vunpack.c.h.b16 %v421
    %v1570 = vunpack.c.l.b16 %v422
    %v1571 = vunpack.c.h.b16 %v422
    %v1572 = vunpack.c.l.b16 %v423
    %v1573 = vunpack.c.h.b16 %v423
    %v1574 = vunpack.c.l.b16 %v424
    %v1575 = vunpack.c.h.b16 %v424
    %v1576 = vunpack.c.l.b16 %v425
    %v1577 = vunpack.c.h.b16 %v425
    %v1578 = vunpack.c.l.b16 %v426
    %v1579 = vunpack.c.h.b16 %v426
    %v1580 = vunpack.c.l.b16 %v427
    %v1581 = vunpack.c.h.b16 %v427
    %v1582 = vunpack.c.l.b16 %v428
    %v1583 = vunpack.c.h.b16 %v428
    %v1584 = vunpack.c.l.b16 %v429
    %v1585 = vunpack.c.h.b16 %v429
    %v1586 = vunpack.c.l.b16 %v430
    %v1587 = vunpack.c.h.b16 %v430
    %v1588 = vunpack.c.l.b16 %v431
    %v1589 = vunpack.c.h.b16 %v431
    %v1590 = vunpack.c.l.b16 %v432
    %v1591 = vunpack.c.h.b16 %v432
    %v1592 = vunpack.c.l.b16 %v433
    %v1593 = vunpack.c.h.b16 %v433
    %v1594 = vunpack.c.l.b16 %v434
    %v1595 = vunpack.c.h.b16 %v434
    %v1596 = vunpack.c.l.b16 %v435
    %v1597 = vunpack.c.h.b16 %v435
    %v1598 = vunpack.c.l.b16 %v436
    %v1599 = vunpack.c.h.b16 %v436
    %v1600 = vunpack.c.l.b16 %v437
    %v1601 = vunpack.c.h.b16 %v437
    %v1602 = vunpack.c.l.b16 %v438
    %v1603 = vunpack.c.h.b16 %v438
    %v1604 = vunpack.c.l.b16 %v439
    %v1605 = vunpack.c.h.b16 %v439
    %v1606 = vunpack.c.l.b16 %v440
    %v1607 = vunpack.c.h.b16 %v440
    %v1608 = vunpack.c.l.b16 %v441
    %v1609 = vunpack.c.h.b16 %v441
    %v1610 = vunpack.c.l.b16 %v442
    %v1611 = vunpack.c.h.b16 %v442
    %v1612 = vunpack.c.l.b16 %v443
    %v1613 = vunpack.c.h.b16 %v443
    %v1614 = vunpack.c.l.b16 %v444
    %v1615 = vunpack.c.h.b16 %v444
    %v1616 = vunpack.c.l.b16 %v445
    %v1617 = vunpack.c.h.b16 %v445
    %v1618 = vunpack.c.l.b16 %v446
    %v1619 = vunpack.c.h.b16 %v446
    %v1620 = vunpack.c.l.b16 %v447
    %v1621 = vunpack.c.h.b16 %v447
    %v1622 = vunpack.c.l.b16 %v448
    %v1623 = vunpack.c.h.b16 %v448
    %v1624 = vunpack.c.l.b16 %v449
    %v1625 = vunpack.c.h.b16 %v449
    %v1626 = vunpack.c.l.b16 %v450
    %v1627 = vunpack.c.h.b16 %v450
    %v1628 = vunpack.c.l.b16 %v451
    %v1629 = vunpack.c.h.b16 %v451
    %v1630 = vunpack.c.l.b16 %v452
    %v1631 = vunpack.c.h.b16 %v452
    %v1632 = vunpack.c.l.b16 %v453
    %v1633 = vunpack.c.h.b16 %v453
    %v1634 = vunpack.c.l.b16 %v454
    %v1635 = vunpack.c.h.b16 %v454
    %v1636 = vunpack.c.l.b16 %v455
    %v1637 = vunpack.c.h.b16 %v455
    %v1638 = vunpack.c.l.b16 %v456
    %v1639 = vunpack.c.h.b16 %v456
    %v1640 = vunpack.c.l.b16 %v457
    %v1641 = vunpack.c.h.b16 %v457
    %v1642 = vunpack.c.l.b16 %v458
    %v1643 = vunpack.c.h.b16 %v458
    %v1644 = vunpack.c.l.b16 %v459
    %v1645 = vunpack.c.h.b16 %v459
    %v1646 = vunpack.c.l.b16 %v460
    %v1647 = vunpack.c.h.b16 %v460
    %v1648 = vunpack.c.l.b16 %v461
    %v1649 = vunpack.c.h.b16 %v461
    %v1650 = vunpack.c.l.b16 %v462
    %v1651 = vunpack.c.h.b16 %v462
    %v1652 = vunpack.c.l.b16 %v463
    %v1653 = vunpack.c.h.b16 %v463
    %v1654 = vunpack.c.l.b16 %v464
    %v1655 = vunpack.c.h.b16 %v464
    %v1656 = vunpack.c.l.b16 %v465
    %v1657 = vunpack.c.h.b16 %v465
    %v1658 = vunpack.c.l.b16 %v466
    %v1659 = vunpack.c.h.b16 %v466
    %v1660 = vunpack.c.l.b16 %v467
    %v1661 = vunpack.c.h.b16 %v467
    %v1662 = vunpack.c.l.b16 %v468
    %v1663 = vunpack.c.h.b16 %v468
    %v1664 = vunpack.c.l.b16 %v469
    %v1665 = vunpack.c.h.b16 %v469
    %v1666 = vunpack.c.l.b16 %v470
    %v1667 = vunpack.c.h.b16 %v470
    %v1668 = vunpack.c.l.b16 %v471
    %v1669 = vunpack.c.h.b16 %v471
    %v1670 = vunpack.c.l.b16 %v472
    %v1671 = vunpack.c.h.b16 %v472
    %v1672 = vunpack.c.l.b16 %v473
    %v1673 = vunpack.c.h.b16 %v473
    %v1674 = vunpack.c.l.b16 %v474
    %v1675 = vunpack.c.h.b16 %v474
    %v1676 = vunpack.c.l.b16 %v475
    %v1677 = vunpack.c.h.b16 %v475
    %v1678 = vunpack.c.l.b16 %v476
    %v1679 = vunpack.c.h.b16 %v476
    %v1680 = vunpack.c.l.b16 %v477
    %v1681 = vunpack.c.h.b16 %v477
    %v1682 = vunpack.c.l.b16 %v478
    %v1683 = vunpack.c.h.b16 %v478
    %v1684 = vunpack.c.l.b16 %v479
    %v1685 = vunpack.c.h.b16 %v479
    %v1686 = vunpack.c.l.b16 %v480
    %v1687 = vunpack.c.h.b16 %v480
    %v1688 = vunpack.c.l.b16 %v481
    %v1689 = vunpack.c.h.b16 %v481
    %v1690 = vunpack.c.l.b16 %v482
    %v1691 = vunpack.c.h.b16 %v482
    %v1692 = vunpack.c.l.b16 %v483
    %v1693 = vunpack.c.h.b16 %v483
    %v1694 = vunpack.c.l.b16 %v484
    %v1695 = vunpack.c.h.b16 %v484
    %v1696 = vunpack.c.l.b16 %v485
    %v1697 = vunpack.c.h.b16 %v485
    %v1698 = vunpack.c.l.b16 %v486
    %v1699 = vunpack.c.h.b16 %v486
    %v1700 = vunpack.c.l.b16 %v487
    %v1701 = vunpack.c.h.b16 %v487
    %v1702 = vunpack.c.l.b16 %v488
    %v1703 = vunpack.c.h.b16 %v488
    %v1704 = vunpack.c.l.b16 %v489
    %v1705 = vunpack.c.h.b16 %v489
    %v1706 = vunpack.c.l.b16 %v490
    %v1707 = vunpack.c.h.b16 %v490
    %v1708 = vunpack.c.l.b16 %v491
    %v1709 = vunpack.c.h.b16 %v491
    %v1710 = vunpack.c.l.b16 %v492
    %v1711 = vunpack.c.h.b16 %v492
    %v1712 = vunpack.c.l.b16 %v493
    %v1713 = vunpack.c.h.b16 %v493
    %v1714 = vunpack.c.l.b16 %v494
    %v1715 = vunpack.c.h.b16 %v494
    %v1716 = vunpack.c.l.b16 %v495
    %v1717 = vunpack.c.h.b16 %v495
    %v1718 = vunpack.c.l.b16 %v496
    %v1719 = vunpack.c.h.b16 %v496
    %v1720 = vunpack.c.l.b16 %v497
    %v1721 = vunpack.c.h.b16 %v497
    %v1722 = vunpack.c.l.b16 %v498
    %v1723 = vunpack.c.h.b16 %v498
    %v1724 = vunpack.c.l.b16 %v499
    %v1725 = vunpack.c.h.b16 %v499
    %v1726 = vunpack.c.l.b16 %v500
    %v1727 = vunpack.c.h.b16 %v500
    %v1728 = vunpack.c.l.b16 %v501
    %v1729 = vunpack.c.h.b16 %v501
    %v1730 = vunpack.c.l.b16 %v502
    %v1731 = vunpack.c.h.b16 %v502
    %v1732 = vunpack.c.l.b16 %v503
    %v1733 = vunpack.c.h.b16 %v503
    %v1734 = vunpack.c.l.b16 %v504
    %v1735 = vunpack.c.h.b16 %v504
    %v1736 = vunpack.c.l.b16 %v505
    %v1737 = vunpack.c.h.b16 %v505
    %v1738 = vunpack.c.l.b16 %v506
    %v1739 = vunpack.c.h.b16 %v506
    %v1740 = vunpack.c.l.b16 %v507
    %v1741 = vunpack.c.h.b16 %v507
    %v1742 = vunpack.c.l.b16 %v508
    %v1743 = vunpack.c.h.b16 %v508
    %v1744 = vunpack.c.l.b16 %v509
    %v1745 = vunpack.c.h.b16 %v509
    %v1746 = vunpack.c.l.b16 %v510
    %v1747 = vunpack.c.h.b16 %v510
    %v1748 = vunpack.c.l.b16 %v511
    %v1749 = vunpack.c.h.b16 %v511
    %v1750 = vunpack.c.l.b16 %v512
    %v1751 = vunpack.c.h.b16 %v512
    %v1752 = vunpack.c.l.b16 %v513
    %v1753 = vunpack.c.h.b16 %v513
    %v1754 = vunpack.c.l.b16 %v514
    %v1755 = vunpack.c.h.b16 %v514
    %v1756 = vunpack.c.l.b16 %v515
    %v1757 = vunpack.c.h.b16 %v515
    %v1758 = vunpack.c.l.b16 %v516
    %v1759 = vunpack.c.h.b16 %v516
    %v1760 = vunpack.c.l.b16 %v517
    %v1761 = vunpack.c.h.b16 %v517
    %v1762 = vunpack.c.l.b16 %v518
    %v1763 = vunpack.c.h.b16 %v518
    %v1764 = vunpack.c.l.b16 %v519
    %v1765 = vunpack.c.h.b16 %v519
    %v1766 = vunpack.c.l.b16 %v520
    %v1767 = vunpack.c.h.b16 %v520
    %v1768 = vunpack.c.l.b16 %v521
    %v1769 = vunpack.c.h.b16 %v521
    %v1770 = vunpack.c.l.b16 %v522
    %v1771 = vunpack.c.h.b16 %v522
    %v1772 = vunpack.c.l.b16 %v523
    %v1773 = vunpack.c.h.b16 %v523
    %v1774 = vunpack.c.l.b16 %v524
    %v1775 = vunpack.c.h.b16 %v524
    %v1776 = vunpack.c.l.b16 %v525
    %v1777 = vunpack.c.h.b16 %v525
    %v1778 = vunpack.c.l.b16 %v526
    %v1779 = vunpack.c.h.b16 %v526
    %v1780 = vunpack.c.l.b16 %v527
    %v1781 = vunpack.c.h.b16 %v527
    %v1782 = vunpack.c.l.b16 %v528
    %v1783 = vunpack.c.h.b16 %v528
    %v1784 = vunpack.c.l.b16 %v529
    %v1785 = vunpack.c.h.b16 %v529
    %v1786 = vunpack.c.l.b16 %v530
    %v1787 = vunpack.c.h.b16 %v530
    %v1788 = vunpack.c.l.b16 %v531
    %v1789 = vunpack.c.h.b16 %v531
    %v1790 = vunpack.c.l.b16 %v532
    %v1791 = vunpack.c.h.b16 %v532
    %v1792 = vunpack.c.l.b16 %v533
    %v1793 = vunpack.c.h.b16 %v533
    %v1794 = vunpack.c.l.b16 %v534
    %v1795 = vunpack.c.h.b16 %v534
    %v1796 = vunpack.c.l.b16 %v535
    %v1797 = vunpack.c.h.b16 %v535
    %v1798 = vunpack.c.l.b16 %v536
    %v1799 = vunpack.c.h.b16 %v536
    %v1800 = vunpack.c.l.b16 %v537
    %v1801 = vunpack.c.h.b16 %v537
    %v1802 = vunpack.c.l.b16 %v538
    %v1803 = vunpack.c.h.b16 %v538
    %v1804 = vunpack.c.l.b16 %v539
    %v1805 = vunpack.c.h.b16 %v539
    %v1806 = vunpack.c.l.b16 %v540
    %v1807 = vunpack.c.h.b16 %v540
    %v1808 = vunpack.c.l.b16 %v541
    %v1809 = vunpack.c.h.b16 %v541
    %v1810 = vunpack.c.l.b16 %v542
    %v1811 = vunpack.c.h.b16 %v542
    %v1812 = vunpack.c.l.b16 %v543
    %v1813 = vunpack.c.h.b16 %v543
    %v1814 = vunpack.c.l.b16 %v544
    %v1815 = vunpack.c.h.b16 %v544
    %v1816 = vunpack.c.l.b16 %v545
    %v1817 = vunpack.c.h.b16 %v545
    %v1818 = vunpack.c.l.b16 %v546
    %v1819 = vunpack.c.h.b16 %v546
    %v1820 = vunpack.c.l.b16 %v547
    %v1821 = vunpack.c.h.b16 %v547
    %v1822 = vunpack.c.l.b16 %v548
    %v1823 = vunpack.c.h.b16 %v548
    %v1824 = vunpack.c.l.b16 %v549
    %v1825 = vunpack.c.h.b16 %v549
    %v1826 = vunpack.c.l.b16 %v550
    %v1827 = vunpack.c.h.b16 %v550
    %v1828 = vunpack.c.l.b16 %v551
    %v1829 = vunpack.c.h.b16 %v551
    %v1830 = vunpack.c.l.b16 %v552
    %v1831 = vunpack.c.h.b16 %v552
    %v1832 = vunpack.c.l.b16 %v553
    %v1833 = vunpack.c.h.b16 %v553
    %v1834 = vunpack.c.l.b16 %v554
    %v1835 = vunpack.c.h.b16 %v554
    %v1836 = vunpack.c.l.b16 %v555
    %v1837 = vunpack.c.h.b16 %v555
    %v1838 = vunpack.c.l.b16 %v556
    %v1839 = vunpack.c.h.b16 %v556
    %v1840 = vunpack.c.l.b16 %v557
    %v1841 = vunpack.c.h.b16 %v557
    %v1842 = vunpack.c.l.b16 %v558
    %v1843 = vunpack.c.h.b16 %v558
    %v1844 = vunpack.c.l.b16 %v559
    %v1845 = vunpack.c.h.b16 %v559
    %v1846 = vunpack.c.l.b16 %v560
    %v1847 = vunpack.c.h.b16 %v560
    %v1848 = vunpack.c.l.b16 %v561
    %v1849 = vunpack.c.h.b16 %v561
    %v1850 = vunpack.c.l.b16 %v562
    %v1851 = vunpack.c.h.b16 %v562
    %v1852 = vunpack.c.l.b16 %v563
    %v1853 = vunpack.c.h.b16 %v563
    %v1854 = vunpack.c.l.b16 %v564
    %v1855 = vunpack.c.h.b16 %v564
    %v1856 = vunpack.c.l.b16 %v565
    %v1857 = vunpack.c.h.b16 %v565
    %v1858 = vunpack.c.l.b16 %v566
    %v1859 = vunpack.c.h.b16 %v566
    %v1860 = vunpack.c.l.b16 %v567
    %v1861 = vunpack.c.h.b16 %v567
    %v1862 = vunpack.c.l.b16 %v568
    %v1863 = vunpack.c.h.b16 %v568
    %v1864 = vunpack.c.l.b16 %v569
    %v1865 = vunpack.c.h.b16 %v569
    %v1866 = vunpack.c.l.b16 %v570
    %v1867 = vunpack.c.h.b16 %v570
    %v1868 = vunpack.c.l.b16 %v571
    %v1869 = vunpack.c.h.b16 %v571
    %v1870 = vunpack.c.l.b16 %v572
    %v1871 = vunpack.c.h.b16 %v572
    %v1872 = vunpack.c.l.b16 %v573
    %v1873 = vunpack.c.h.b16 %v573
    %v1874 = vunpack.c.l.b16 %v574
    %v1875 = vunpack.c.h.b16 %v574
    %v1876 = vunpack.c.l.b16 %v575
    %v1877 = vunpack.c.h.b16 %v575
    %v1878 = vunpack.c.l.b16 %v576
    %v1879 = vunpack.c.h.b16 %v576
    %v1880 = vunpack.c.l.b16 %v577
    %v1881 = vunpack.c.h.b16 %v577
    %v1882 = vunpack.c.l.b16 %v578
    %v1883 = vunpack.c.h.b16 %v578
    %v1884 = vunpack.c.l.b16 %v579
    %v1885 = vunpack.c.h.b16 %v579
    %v1886 = vunpack.c.l.b16 %v580
    %v1887 = vunpack.c.h.b16 %v580
    %v1888 = vunpack.c.l.b16 %v581
    %v1889 = vunpack.c.h.b16 %v581
    %v1890 = vunpack.c.l.b16 %v582
    %v1891 = vunpack.c.h.b16 %v582
    %v1892 = vunpack.c.l.b16 %v583
    %v1893 = vunpack.c.h.b16 %v583
    %v1894 = vunpack.c.l.b16 %v584
    %v1895 = vunpack.c.h.b16 %v584
    %v1896 = vunpack.c.l.b16 %v585
    %v1897 = vunpack.c.h.b16 %v585
    %v1898 = vunpack.c.l.b16 %v586
    %v1899 = vunpack.c.h.b16 %v586
    %v1900 = vunpack.c.l.b16 %v587
    %v1901 = vunpack.c.h.b16 %v587
    %v1902 = vunpack.c.l.b16 %v588
    %v1903 = vunpack.c.h.b16 %v588
    %v1904 = vunpack.c.l.b16 %v589
    %v1905 = vunpack.c.h.b16 %v589
    %v1906 = vunpack.c.l.b16 %v590
    %v1907 = vunpack.c.h.b16 %v590
    %v1908 = vunpack.c.l.b16 %v591
    %v1909 = vunpack.c.h.b16 %v591
    %v1910 = vunpack.c.l.b16 %v592
    %v1911 = vunpack.c.h.b16 %v592
    %v1912 = vunpack.c.l.b16 %v593
    %v1913 = vunpack.c.h.b16 %v593
    %v1914 = vunpack.c.l.b16 %v594
    %v1915 = vunpack.c.h.b16 %v594
    %v1916 = vunpack.c.l.b16 %v595
    %v1917 = vunpack.c.h.b16 %v595
    %v1918 = vunpack.c.l.b16 %v596
    %v1919 = vunpack.c.h.b16 %v596
    %v1920 = vunpack.c.l.b16 %v597
    %v1921 = vunpack.c.h.b16 %v597
    %v1922 = vunpack.c.l.b16 %v598
    %v1923 = vunpack.c.h.b16 %v598
    %v1924 = vunpack.c.l.b16 %v599
    %v1925 = vunpack.c.h.b16 %v599
    %v1926 = vunpack.c.l.b16 %v600
    %v1927 = vunpack.c.h.b16 %v600
    %v1928 = vunpack.c.l.b16 %v601
    %v1929 = vunpack.c.h.b16 %v601
    %v1930 = vunpack.c.l.b16 %v602
    %v1931 = vunpack.c.h.b16 %v602
    %v1932 = vunpack.c.l.b16 %v603
    %v1933 = vunpack.c.h.b16 %v603
    %v1934 = vunpack.c.l.b16 %v604
    %v1935 = vunpack.c.h.b16 %v604
    %v1936 = vunpack.c.l.b16 %v605
    %v1937 = vunpack.c.h.b16 %v605
    %v1938 = vunpack.c.l.b16 %v606
    %v1939 = vunpack.c.h.b16 %v606
    %v1940 = vunpack.c.l.b16 %v607
    %v1941 = vunpack.c.h.b16 %v607
    %v1942 = vunpack.c.l.b16 %v608
    %v1943 = vunpack.c.h.b16 %v608
    %v1944 = vunpack.c.l.b16 %v609
    %v1945 = vunpack.c.h.b16 %v609
    %v1946 = vunpack.c.l.b16 %v610
    %v1947 = vunpack.c.h.b16 %v610
    %v1948 = vunpack.c.l.b16 %v611
    %v1949 = vunpack.c.h.b16 %v611
    %v1950 = vunpack.c.l.b16 %v612
    %v1951 = vunpack.c.h.b16 %v612
    %v1952 = vunpack.c.l.b16 %v613
    %v1953 = vunpack.c.h.b16 %v613
    %v1954 = vunpack.c.l.b16 %v614
    %v1955 = vunpack.c.h.b16 %v614
    %v1956 = vunpack.c.l.b16 %v615
    %v1957 = vunpack.c.h.b16 %v615
    %v1958 = vunpack.c.l.b16 %v616
    %v1959 = vunpack.c.h.b16 %v616
    %v1960 = vunpack.c.l.b16 %v617
    %v1961 = vunpack.c.h.b16 %v617
    %v1962 = vunpack.c.l.b16 %v618
    %v1963 = vunpack.c.h.b16 %v618
    %v1964 = vunpack.c.l.b16 %v619
    %v1965 = vunpack.c.h.b16 %v619
    %v1966 = vunpack.c.l.b16 %v620
    %v1967 = vunpack.c.h.b16 %v620
    %v1968 = vunpack.c.l.b16 %v621
    %v1969 = vunpack.c.h.b16 %v621
    %v1970 = vunpack.c.l.b16 %v622
    %v1971 = vunpack.c.h.b16 %v622
    %v1972 = vunpack.c.l.b16 %v623
    %v1973 = vunpack.c.h.b16 %v623
    %v1974 = vunpack.c.l.b16 %v624
    %v1975 = vunpack.c.h.b16 %v624
    %v1976 = vunpack.c.l.b16 %v625
    %v1977 = vunpack.c.h.b16 %v625
    %v1978 = vunpack.c.l.b16 %v626
    %v1979 = vunpack.c.h.b16 %v626
    %v1980 = vunpack.c.l.b16 %v627
    %v1981 = vunpack.c.h.b16 %v627
    %v1982 = vunpack.c.l.b16 %v628
    %v1983 = vunpack.c.h.b16 %v628
    %v1984 = vunpack.c.l.b16 %v629
    %v1985 = vunpack.c.h.b16 %v629
    %v1986 = vunpack.c.l.b16 %v630
    %v1987 = vunpack.c.h.b16 %v630
    %v1988 = vunpack.c.l.b16 %v631
    %v1989 = vunpack.c.h.b16 %v631
    %v1990 = vunpack.c.l.b16 %v632
    %v1991 = vunpack.c.h.b16 %v632
    %v1992 = vunpack.c.l.b16 %v633
    %v1993 = vunpack.c.h.b16 %v633
    %v1994 = vunpack.c.l.b16 %v634
    %v1995 = vunpack.c.h.b16 %v634
    %v1996 = vunpack.c.l.b16 %v635
    %v1997 = vunpack.c.h.b16 %v635
    %v1998 = vunpack.c.l.b16 %v636
    %v1999 = vunpack.c.h.b16 %v636
    %v2000 = vunpack.c.l.b16 %v637
    %v2001 = vunpack.c.h.b16 %v637
    %v2002 = vunpack.c.l.b16 %v638
    %v2003 = vunpack.c.h.b16 %v638
    %v2004 = vunpack.c.l.b16 %v639
    %v2005 = vunpack.c.h.b16 %v639
    %v2006 = vunpack.c.l.b16 %v640
    %v2007 = vunpack.c.h.b16 %v640
    %v2008 = vunpack.c.l.b16 %v641
    %v2009 = vunpack.c.h.b16 %v641
    %v2010 = vunpack.c.l.b16 %v642
    %v2011 = vunpack.c.h.b16 %v642
    %v2012 = vunpack.c.l.b16 %v643
    %v2013 = vunpack.c.h.b16 %v643
    %v2014 = vunpack.c.l.b16 %v644
    %v2015 = vunpack.c.h.b16 %v644
    %v2016 = vunpack.c.l.b16 %v645
    %v2017 = vunpack.c.h.b16 %v645
    %v2018 = vunpack.c.l.b16 %v646
    %v2019 = vunpack.c.h.b16 %v646
    %v2020 = vunpack.c.l.b16 %v647
    %v2021 = vunpack.c.h.b16 %v647
    %v2022 = vunpack.c.l.b16 %v648
    %v2023 = vunpack.c.h.b16 %v648
    %v2024 = vunpack.c.l.b16 %v649
    %v2025 = vunpack.c.h.b16 %v649
    %v2026 = vunpack.c.l.b16 %v650
    %v2027 = vunpack.c.h.b16 %v650
    %v2028 = vunpack.c.l.b16 %v651
    %v2029 = vunpack.c.h.b16 %v651
    %v2030 = vunpack.c.l.b16 %v652
    %v2031 = vunpack.c.h.b16 %v652
    %v2032 = vunpack.c.l.b16 %v653
    %v2033 = vunpack.c.h.b16 %v653
    %v2034 = vunpack.c.l.b16 %v654
    %v2035 = vunpack.c.h.b16 %v654
    %v2036 = vunpack.c.l.b16 %v655
    %v2037 = vunpack.c.h.b16 %v655
    %v2038 = vunpack.c.l.b16 %v656
    %v2039 = vunpack.c.h.b16 %v656
    %v2040 = vunpack.c.l.b16 %v657
    %v2041 = vunpack.c.h.b16 %v657
    %v2042 = vunpack.c.l.b16 %v658
    %v2043 = vunpack.c.h.b16 %v658
    %v2044 = vunpack.c.l.b16 %v659
    %v2045 = vunpack.c.h.b16 %v659
    %v2046 = vunpack.c.l.b16 %v660
    %v2047 = vunpack.c.h.b16 %v660
    %v2048 = vunpack.c.l.b16 %v661
    %v2049 = vunpack.c.h.b16 %v661
    %v2050 = vunpack.c.l.b16 %v662
    %v2051 = vunpack.c.h.b16 %v662
    %v2052 = vunpack.c.l.b16 %v663
    %v2053 = vunpack.c.h.b16 %v663
    %v2054 = vunpack.c.l.b16 %v664
    %v2055 = vunpack.c.h.b16 %v664
    %v2056 = vunpack.c.l.b16 %v665
    %v2057 = vunpack.c.h.b16 %v665
    %v2058 = vunpack.c.l.b16 %v666
    %v2059 = vunpack.c.h.b16 %v666
    %v2060 = vunpack.c.l.b16 %v667
    %v2061 = vunpack.c.h.b16 %v667
    %v2062 = vunpack.c.l.b16 %v668
    %v2063 = vunpack.c.h.b16 %v668
    %v2064 = vunpack.c.l.b16 %v669
    %v2065 = vunpack.c.h.b16 %v669
    %v2066 = vunpack.c.l.b16 %v670
    %v2067 = vunpack.c.h.b16 %v670
    %v2068 = vunpack.c.l.b16 %v671
    %v2069 = vunpack.c.h.b16 %v671
    %v2070 = vunpack.c.l.b16 %v672
    %v2071 = vunpack.c.h.b16 %v672
    %v2072 = vunpack.c.l.b16 %v673
    %v2073 = vunpack.c.h.b16 %v673
    %v2074 = vunpack.c.l.b16 %v674
    %v2075 = vunpack.c.h.b16 %v674
    %v2076 = vunpack.c.l.b16 %v675
    %v2077 = vunpack.c.h.b16 %v675
    %v2078 = vunpack.c.l.b16 %v676
    %v2079 = vunpack.c.h.b16 %v676
    %v2080 = vunpack.c.l.b16 %v677
    %v2081 = vunpack.c.h.b16 %v677
    %v2082 = vunpack.c.l.b16 %v678
    %v2083 = vunpack.c.h.b16 %v678
    %v2084 = vunpack.c.l.b16 %v679
    %v2085 = vunpack.c.h.b16 %v679
    %v2086 = vunpack.c.l.b16 %v680
    %v2087 = vunpack.c.h.b16 %v680
    %v2088 = vunpack.c.l.b16 %v681
    %v2089 = vunpack.c.h.b16 %v681
    %v2090 = vunpack.c.l.b16 %v682
    %v2091 = vunpack.c.h.b16 %v682
    %v2092 = vunpack.c.l.b16 %v683
    %v2093 = vunpack.c.h.b16 %v683
    %v2094 = vunpack.c.l.b16 %v684
    %v2095 = vunpack.c.h.b16 %v684
    %v2096 = vunpack.c.l.b16 %v685
    %v2097 = vunpack.c.h.b16 %v685
    %v2098 = vunpack.c.l.b16 %v686
    %v2099 = vunpack.c.h.b16 %v686
    %v2100 = vunpack.c.l.b16 %v687
    %v2101 = vunpack.c.h.b16 %v687
    %v2102 = vunpack.c.l.b16 %v688
    %v2103 = vunpack.c.h.b16 %v688
    %v2104 = vunpack.c.l.b16 %v689
    %v2105 = vunpack.c.h.b16 %v689
    %v2106 = vunpack.c.l.b16 %v690
    %v2107 = vunpack.c.h.b16 %v690
    %v2108 = vunpack.c.l.b16 %v691
    %v2109 = vunpack.c.h.b16 %v691
    %v2110 = vunpack.c.l.b16 %v692
    %v2111 = vunpack.c.h.b16 %v692
    %v2112 = vunpack.c.l.b16 %v693
    %v2113 = vunpack.c.h.b16 %v693
    %v2114 = vunpack.c.l.b16 %v694
    %v2115 = vunpack.c.h.b16 %v694
    %v2116 = vunpack.c.l.b16 %v695
    %v2117 = vunpack.c.h.b16 %v695
    %v2118 = vunpack.c.l.b16 %v696
    %v2119 = vunpack.c.h.b16 %v696
    %v2120 = vunpack.c.l.b16 %v697
    %v2121 = vunpack.c.h.b16 %v697
    %v2122 = vunpack.c.l.b16 %v698
    %v2123 = vunpack.c.h.b16 %v698
    %v2124 = vunpack.c.l.b16 %v699
    %v2125 = vunpack.c.h.b16 %v699
    %v2126 = vunpack.c.l.b16 %v700
    %v2127 = vunpack.c.h.b16 %v700
    %v2128 = vunpack.c.l.b16 %v701
    %v2129 = vunpack.c.h.b16 %v701
    %v2130 = vunpack.c.l.b16 %v702
    %v2131 = vunpack.c.h.b16 %v702
    %v2132 = vunpack.c.l.b16 %v703
    %v2133 = vunpack.c.h.b16 %v703
    %v2134 = vunpack.c.l.b16 %v704
    %v2135 = vunpack.c.h.b16 %v704
    %v2136 = vunpack.c.l.b16 %v705
    %v2137 = vunpack.c.h.b16 %v705
    %v2138 = vunpack.c.l.b16 %v706
    %v2139 = vunpack.c.h.b16 %v706
    %v2140 = vunpack.c.l.b16 %v707
    %v2141 = vunpack.c.h.b16 %v707
    %v2142 = vunpack.c.l.b16 %v708
    %v2143 = vunpack.c.h.b16 %v708
    %v2144 = vunpack.c.l.b16 %v709
    %v2145 = vunpack.c.h.b16 %v709
    %v2146 = vunpack.c.l.b16 %v710
    %v2147 = vunpack.c.h.b16 %v710
    %v2148 = vunpack.c.l.b16 %v711
    %v2149 = vunpack.c.h.b16 %v711
    %v2150 = vunpack.c.l.b16 %v712
    %v2151 = vunpack.c.h.b16 %v712
    %v2152 = vunpack.c.l.b16 %v713
    %v2153 = vunpack.c.h.b16 %v713
    %v2154 = vunpack.c.l.b16 %v714
    %v2155 = vunpack.c.h.b16 %v714
    %v2156 = vunpack.c.l.b16 %v715
    %v2157 = vunpack.c.h.b16 %v715
    %v2158 = vunpack.c.l.b16 %v716
    %v2159 = vunpack.c.h.b16 %v716
    %v2160 = vunpack.c.l.b16 %v717
    %v2161 = vunpack.c.h.b16 %v717
    %v2162 = vunpack.c.l.b16 %v718
    %v2163 = vunpack.c.h.b16 %v718
    %v2164 = vunpack.c.l.b16 %v719
    %v2165 = vunpack.c.h.b16 %v719
    %v2166 = vunpack.c.l.b16 %v720
    %v2167 = vunpack.c.h.b16 %v720
    %v2168 = vunpack.c.l.b16 %v721
    %v2169 = vunpack.c.h.b16 %v721
    %v2170 = vunpack.c.l.b16 %v722
    %v2171 = vunpack.c.h.b16 %v722
    %v2172 = vunpack.c.l.b16 %v723
    %v2173 = vunpack.c.h.b16 %v723
    %v2174 = vunpack.c.l.b16 %v724
    %v2175 = vunpack.c.h.b16 %v724
    %v2176 = vunpack.c.l.b16 %v725
    %v2177 = vunpack.c.h.b16 %v725
    %v2178 = vunpack.c.l.b16 %v726
    %v2179 = vunpack.c.h.b16 %v726
    %v2180 = vunpack.c.l.b16 %v727
    %v2181 = vunpack.c.h.b16 %v727
    %v2182 = vunpack.c.l.b16 %v728
    %v2183 = vunpack.c.h.b16 %v728
    %v2184 = vunpack.c.l.b16 %v729
    %v2185 = vunpack.c.h.b16 %v729
    %v2186 = vunpack.c.l.b16 %v730
    %v2187 = vunpack.c.h.b16 %v730
    %v2188 = vunpack.c.l.b16 %v731
    %v2189 = vunpack.c.h.b16 %v731
    %v2190 = vunpack.c.l.b16 %v732
    %v2191 = vunpack.c.h.b16 %v732
    %v2192 = vunpack.c.l.b16 %v733
    %v2193 = vunpack.c.h.b16 %v733
    %v2194 = vunpack.c.l.b16 %v734
    %v2195 = vunpack.c.h.b16 %v734
    %v2196 = vunpack.c.l.b16 %v735
    %v2197 = vunpack.c.h.b16 %v735
    %v2198 = vunpack.c.l.b16 %v736
    %v2199 = vunpack.c.h.b16 %v736
    %v2200 = vunpack.c.l.b16 %v737
    %v2201 = vunpack.c.h.b16 %v737
    %v2202 = vunpack.c.l.b16 %v738
    %v2203 = vunpack.c.h.b16 %v738
    %v2204 = vunpack.c.l.b16 %v739
    %v2205 = vunpack.c.h.b16 %v739
    %v2206 = vunpack.c.l.b16 %v740
    %v2207 = vunpack.c.h.b16 %v740
    %v2208 = vunpack.c.l.b16 %v741
    %v2209 = vunpack.c.h.b16 %v741
    %v2210 = vunpack.c.l.b16 %v742
    %v2211 = vunpack.c.h.b16 %v742
    %v2212 = vunpack.c.l.b16 %v743
    %v2213 = vunpack.c.h.b16 %v743
    %v2214 = vunpack.c.l.b16 %v744
    %v2215 = vunpack.c.h.b16 %v744
    %v2216 = vunpack.c.l.b16 %v745
    %v2217 = vunpack.c.h.b16 %v745
    %v2218 = vunpack.c.l.b16 %v746
    %v2219 = vunpack.c.h.b16 %v746
    %v2220 = vunpack.c.l.b16 %v747
    %v2221 = vunpack.c.h.b16 %v747
    %v2222 = vunpack.c.l.b16 %v748
    %v2223 = vunpack.c.h.b16 %v748
    %v2224 = vunpack.c.l.b16 %v749
    %v2225 = vunpack.c.h.b16 %v749
    %v2226 = vunpack.c.l.b16 %v750
    %v2227 = vunpack.c.h.b16 %v750
    %v2228 = vunpack.c.l.b16 %v751
    %v2229 = vunpack.c.h.b16 %v751
    %v2230 = vunpack.c.l.b16 %v752
    %v2231 = vunpack.c.h.b16 %v752
    %v2232 = vunpack.c.l.b16 %v753
    %v2233 = vunpack.c.h.b16 %v753
    %v2234 = vunpack.c.l.b16 %v754
    %v2235 = vunpack.c.h.b16 %v754
    %v2236 = vunpack.c.l.b16 %v755
    %v2237 = vunpack.c.h.b16 %v755
    %v2238 = vunpack.c.l.b16 %v756
    %v2239 = vunpack.c.h.b16 %v756
    %v2240 = vunpack.c.l.b16 %v757
    %v2241 = vunpack.c.h.b16 %v757
    %v2242 = vunpack.c.l.b16 %v758
    %v2243 = vunpack.c.h.b16 %v758
    %v2244 = vunpack.c.l.b16 %v759
    %v2245 = vunpack.c.h.b16 %v759
    %v2246 = vunpack.c.l.b16 %v760
    %v2247 = vunpack.c.h.b16 %v760
    %v2248 = vunpack.c.l.b16 %v761
    %v2249 = vunpack.c.h.b16 %v761
    %v2250 = vunpack.c.l.b16 %v762
    %v2251 = vunpack.c.h.b16 %v762
    %v2252 = vunpack.c.l.b16 %v763
    %v2253 = vunpack.c.h.b16 %v763
    %v2254 = vunpack.c.l.b16 %v764
    %v2255 = vunpack.c.h.b16 %v764
    %v2256 = vunpack.c.l.b16 %v765
    %v2257 = vunpack.c.h.b16 %v765
    %v2258 = vunpack.c.l.b16 %v766
    %v2259 = vunpack.c.h.b16 %v766
    %v2260 = vunpack.c.l.b16 %v767
    %v2261 = vunpack.c.h.b16 %v767
    %v2262 = vunpack.c.l.b16 %v768
    %v2263 = vunpack.c.h.b16 %v768
    %v2264 = vunpack.c.l.b16 %v769
    %v2265 = vunpack.c.h.b16 %v769
    %v2266 = vunpack.c.l.b16 %v770
    %v2267 = vunpack.c.h.b16 %v770
    %v2268 = vunpack.c.l.b16 %v771
    %v2269 = vunpack.c.h.b16 %v771
    %v2270 = vunpack.c.l.b16 %v772
    %v2271 = vunpack.c.h.b16 %v772
    %v2272 = vunpack.c.l.b16 %v773
    %v2273 = vunpack.c.h.b16 %v773
    %v2274 = vunpack.c.l.b16 %v774
    %v2275 = vunpack.c.h.b16 %v774
    %v2276 = vunpack.c.l.b16 %v775
    %v2277 = vunpack.c.h.b16 %v775
    %v2278 = vunpack.c.l.b16 %v776
    %v2279 = vunpack.c.h.b16 %v776
    %v2280 = vunpack.c.l.b16 %v777
    %v2281 = vunpack.c.h.b16 %v777
    %v2282 = vunpack.c.l.b16 %v778
    %v2283 = vunpack.c.h.b16 %v778
    %v2284 = vunpack.c.l.b16 %v779
    %v2285 = vunpack.c.h.b16 %v779
    %v2286 = vunpack.c.l.b16 %v780
    %v2287 = vunpack.c.h.b16 %v780
    %v2288 = vunpack.c.l.b16 %v781
    %v2289 = vunpack.c.h.b16 %v781
    %v2290 = vunpack.c.l.b16 %v782
    %v2291 = vunpack.c.h.b16 %v782
    %v2292 = vunpack.c.l.b16 %v783
    %v2293 = vunpack.c.h.b16 %v783
    %v2294 = vunpack.c.l.b16 %v784
    %v2295 = vunpack.c.h.b16 %v784
    %v2296 = vunpack.c.l.b16 %v785
    %v2297 = vunpack.c.h.b16 %v785
    %v2298 = vunpack.c.l.b16 %v786
    %v2299 = vunpack.c.h.b16 %v786
    %v2300 = vunpack.c.l.b16 %v787
    %v2301 = vunpack.c.h.b16 %v787
    %v2302 = vunpack.c.l.b16 %v788
    %v2303 = vunpack.c.h.b16 %v788
    %v2304 = vunpack.c.l.b16 %v789
    %v2305 = vunpack.c.h.b16 %v789
    %v2306 = vunpack.c.l.b16 %v790
    %v2307 = vunpack.c.h.b16 %v790
    %v2308 = vunpack.c.l.b16 %v791
    %v2309 = vunpack.c.h.b16 %v791
    %v2310 = vunpack.c.l.b16 %v792
    %v2311 = vunpack.c.h.b16 %v792
    %v2312 = vunpack.c.l.b16 %v793
    %v2313 = vunpack.c.h.b16 %v793
    %v2314 = vunpack.c.l.b16 %v794
    %v2315 = vunpack.c.h.b16 %v794
    %v2316 = vunpack.c.l.b16 %v795
    %v2317 = vunpack.c.h.b16 %v795
    %v2318 = vunpack.c.l.b16 %v796
    %v2319 = vunpack.c.h.b16 %v796
    %v2320 = vunpack.c.l.b16 %v797
    %v2321 = vunpack.c.h.b16 %v797
    %v2322 = vunpack.c.l.b16 %v798
    %v2323 = vunpack.c.h.b16 %v798
    %v2324 = vunpack.c.l.b16 %v799
    %v2325 = vunpack.c.h.b16 %v799
    %v2326 = vunpack.c.l.b16 %v800
    %v2327 = vunpack.c.h.b16 %v800
    %v2328 = vunpack.c.l.b16 %v801
    %v2329 = vunpack.c.h.b16 %v801
    %v2330 = vunpack.c.l.b16 %v802
    %v2331 = vunpack.c.h.b16 %v802
    %v2332 = vunpack.c.l.b16 %v803
    %v2333 = vunpack.c.h.b16 %v803
    %v2334 = vunpack.c.l.b16 %v804
    %v2335 = vunpack.c.h.b16 %v804
    %v2336 = vunpack.c.l.b16 %v805
    %v2337 = vunpack.c.h.b16 %v805
    %v2338 = vunpack.c.l.b16 %v806
    %v2339 = vunpack.c.h.b16 %v806
    %v2340 = vunpack.c.l.b16 %v807
    %v2341 = vunpack.c.h.b16 %v807
    %v2342 = vunpack.c.l.b16 %v808
    %v2343 = vunpack.c.h.b16 %v808
    %v2344 = vunpack.c.l.b16 %v809
    %v2345 = vunpack.c.h.b16 %v809
    %v2346 = vunpack.c.l.b16 %v810
    %v2347 = vunpack.c.h.b16 %v810
    %v2348 = vunpack.c.l.b16 %v811
    %v2349 = vunpack.c.h.b16 %v811
    %v2350 = vunpack.c.l.b16 %v812
    %v2351 = vunpack.c.h.b16 %v812
    %v2352 = vunpack.c.l.b16 %v813
    %v2353 = vunpack.c.h.b16 %v813
    %v2354 = vunpack.c.l.b16 %v814
    %v2355 = vunpack.c.h.b16 %v814
    %v2356 = vunpack.c.l.b16 %v815
    %v2357 = vunpack.c.h.b16 %v815
    %v2358 = vunpack.c.l.b16 %v816
    %v2359 = vunpack.c.h.b16 %v816
    %v2360 = vunpack.c.l.b16 %v817
    %v2361 = vunpack.c.h.b16 %v817
    %v2362 = vunpack.c.l.b16 %v818
    %v2363 = vunpack.c.h.b16 %v818
    %v2364 = vunpack.c.l.b16 %v819
    %v2365 = vunpack.c.h.b16 %v819
    %v2366 = vunpack.c.l.b16 %v820
    %v2367 = vunpack.c.h.b16 %v820
    %v2368 = vunpack.c.l.b16 %v821
    %v2369 = vunpack.c.h.b16 %v821
    %v2370 = vunpack.c.l.b16 %v822
    %v2371 = vunpack.c.h.b16 %v822
    %v2372 = vunpack.c.l.b16 %v823
    %v2373 = vunpack.c.h.b16 %v823
    %v2374 = vunpack.c.l.b16 %v824
    %v2375 = vunpack.c.h.b16 %v824
    %v2376 = vunpack.c.l.b16 %v825
    %v2377 = vunpack.c.h.b16 %v825
    %v2378 = vunpack.c.l.b16 %v826
    %v2379 = vunpack.c.h.b16 %v826
    %v2380 = vunpack.c.l.b16 %v827
    %v2381 = vunpack.c.h.b16 %v827
    %v2382 = vunpack.c.l.b16 %v828
    %v2383 = vunpack.c.h.b16 %v828
    %v2384 = vunpack.c.l.b16 %v829
    %v2385 = vunpack.c.h.b16 %v829
    %v2386 = vunpack.c.l.b16 %v830
    %v2387 = vunpack.c.h.b16 %v830
    %v2388 = vunpack.c.l.b16 %v831
    %v2389 = vunpack.c.h.b16 %v831
    %v2390 = vunpack.c.l.b16 %v832
    %v2391 = vunpack.c.h.b16 %v832
    %v2392 = vunpack.c.l.b16 %v833
    %v2393 = vunpack.c.h.b16 %v833
    %v2394 = vunpack.c.l.b16 %v834
    %v2395 = vunpack.c.h.b16 %v834
    %v2396 = vunpack.c.l.b16 %v835
    %v2397 = vunpack.c.h.b16 %v835
    %v2398 = vunpack.c.l.b16 %v836
    %v2399 = vunpack.c.h.b16 %v836
    %v2400 = vunpack.c.l.b16 %v837
    %v2401 = vunpack.c.h.b16 %v837
    %v2402 = vunpack.c.l.b16 %v838
    %v2403 = vunpack.c.h.b16 %v838
    %v2404 = vunpack.c.l.b16 %v839
    %v2405 = vunpack.c.h.b16 %v839
    %v2406 = vunpack.c.l.b16 %v840
    %v2407 = vunpack.c.h.b16 %v840
    %v2408 = vunpack.c.l.b16 %v841
    %v2409 = vunpack.c.h.b16 %v841
    %v2410 = vunpack.c.l.b16 %v842
    %v2411 = vunpack.c.h.b16 %v842
    %v2412 = vunpack.c.l.b16 %v843
    %v2413 = vunpack.c.h.b16 %v843
    %v2414 = vunpack.c.l.b16 %v844
    %v2415 = vunpack.c.h.b16 %v844
    %v2416 = vunpack.c.l.b16 %v845
    %v2417 = vunpack.c.h.b16 %v845
    %v2418 = vunpack.c.l.b16 %v846
    %v2419 = vunpack.c.h.b16 %v846
    %v2420 = vunpack.c.l.b16 %v847
    %v2421 = vunpack.c.h.b16 %v847
    %v2422 = vunpack.c.l.b16 %v848
    %v2423 = vunpack.c.h.b16 %v848
    %v2424 = vunpack.c.l.b16 %v849
    %v2425 = vunpack.c.h.b16 %v849
    %v2426 = vunpack.c.l.b16 %v850
    %v2427 = vunpack.c.h.b16 %v850
    %v2428 = vunpack.c.l.b16 %v851
    %v2429 = vunpack.c.h.b16 %v851
    %v2430 = vpack.c.b16 %v1414, %v1406
    %v2431 = vpack.c.b16 %v1415, %v1407
    %v2432 = vpack.c.b16 %v1416, %v1408
    %v2433 = vpack.c.b16 %v1417, %v1409
    %v2434 = vpack.c.b16 %v1418, %v1410
    %v2435 = vpack.c.b16 %v1419, %v1411
    %v2436 = vpack.c.b16 %v1420, %v1412
    %v2437 = vpack.c.b16 %v1421, %v1413
    %v2438 = vpack.c.b16 %v1430, %v1422
    %v2439 = vpack.c.b16 %v1431, %v1423
    %v2440 = vpack.c.b16 %v1432, %v1424
    %v2441 = vpack.c.b16 %v1433, %v1425
    %v2442 = vpack.c.b16 %v1434, %v1426
    %v2443 = vpack.c.b16 %v1435, %v1427
    %v2444 = vpack.c.b16 %v1436, %v1428
    %v2445 = vpack.c.b16 %v1437, %v1429
    %v2446 = vpack.c.b16 %v1446, %v1438
    %v2447 = vpack.c.b16 %v1447, %v1439
    %v2448 = vpack.c.b16 %v1448, %v1440
    %v2449 = vpack.c.b16 %v1449, %v1441
    %v2450 = vpack.c.b16 %v1450, %v1442
    %v2451 = vpack.c.b16 %v1451, %v1443
    %v2452 = vpack.c.b16 %v1452, %v1444
    %v2453 = vpack.c.b16 %v1453, %v1445
    %v2454 = vpack.c.b16 %v1462, %v1454
    %v2455 = vpack.c.b16 %v1463, %v1455
    %v2456 = vpack.c.b16 %v1464, %v1456
    %v2457 = vpack.c.b16 %v1465, %v1457
    %v2458 = vpack.c.b16 %v1466, %v1458
    %v2459 = vpack.c.b16 %v1467, %v1459
    %v2460 = vpack.c.b16 %v1468, %v1460
    %v2461 = vpack.c.b16 %v1469, %v1461
    %v2462 = vpack.c.b16 %v1478, %v1470
    %v2463 = vpack.c.b16 %v1479, %v1471
    %v2464 = vpack.c.b16 %v1480, %v1472
    %v2465 = vpack.c.b16 %v1481, %v1473
    %v2466 = vpack.c.b16 %v1482, %v1474
    %v2467 = vpack.c.b16 %v1483, %v1475
    %v2468 = vpack.c.b16 %v1484, %v1476
    %v2469 = vpack.c.b16 %v1485, %v1477
    %v2470 = vpack.c.b16 %v1494, %v1486
    %v2471 = vpack.c.b16 %v1495, %v1487
    %v2472 = vpack.c.b16 %v1496, %v1488
    %v2473 = vpack.c.b16 %v1497, %v1489
    %v2474 = vpack.c.b16 %v1498, %v1490
    %v2475 = vpack.c.b16 %v1499, %v1491
    %v2476 = vpack.c.b16 %v1500, %v1492
    %v2477 = vpack.c.b16 %v1501, %v1493
    %v2478 = vpack.c.b16 %v1510, %v1502
    %v2479 = vpack.c.b16 %v1511, %v1503
    %v2480 = vpack.c.b16 %v1512, %v1504
    %v2481 = vpack.c.b16 %v1513, %v1505
    %v2482 = vpack.c.b16 %v1514, %v1506
    %v2483 = vpack.c.b16 %v1515, %v1507
    %v2484 = vpack.c.b16 %v1516, %v1508
    %v2485 = vpack.c.b16 %v1517, %v1509
    %v2486 = vpack.c.b16 %v1526, %v1518
    %v2487 = vpack.c.b16 %v1527, %v1519
    %v2488 = vpack.c.b16 %v1528, %v1520
    %v2489 = vpack.c.b16 %v1529, %v1521
    %v2490 = vpack.c.b16 %v1530, %v1522
    %v2491 = vpack.c.b16 %v1531, %v1523
    %v2492 = vpack.c.b16 %v1532, %v1524
    %v2493 = vpack.c.b16 %v1533, %v1525
    %v2494 = vpack.c.b16 %v1542, %v1534
    %v2495 = vpack.c.b16 %v1543, %v1535
    %v2496 = vpack.c.b16 %v1544, %v1536
    %v2497 = vpack.c.b16 %v1545, %v1537
    %v2498 = vpack.c.b16 %v1546, %v1538
    %v2499 = vpack.c.b16 %v1547, %v1539
    %v2500 = vpack.c.b16 %v1548, %v1540
    %v2501 = vpack.c.b16 %v1549, %v1541
    %v2502 = vpack.c.b16 %v1558, %v1550
    %v2503 = vpack.c.b16 %v1559, %v1551
    %v2504 = vpack.c.b16 %v1560, %v1552
    %v2505 = vpack.c.b16 %v1561, %v1553
    %v2506 = vpack.c.b16 %v1562, %v1554
    %v2507 = vpack.c.b16 %v1563, %v1555
    %v2508 = vpack.c.b16 %v1564, %v1556
    %v2509 = vpack.c.b16 %v1565, %v1557
    %v2510 = vpack.c.b16 %v1574, %v1566
    %v2511 = vpack.c.b16 %v1575, %v1567
    %v2512 = vpack.c.b16 %v1576, %v1568
    %v2513 = vpack.c.b16 %v1577, %v1569
    %v2514 = vpack.c.b16 %v1578, %v1570
    %v2515 = vpack.c.b16 %v1579, %v1571
    %v2516 = vpack.c.b16 %v1580, %v1572
    %v2517 = vpack.c.b16 %v1581, %v1573
    %v2518 = vpack.c.b16 %v1590, %v1582
    %v2519 = vpack.c.b16 %v1591, %v1583
    %v2520 = vpack.c.b16 %v1592, %v1584
    %v2521 = vpack.c.b16 %v1593, %v1585
    %v2522 = vpack.c.b16 %v1594, %v1586
    %v2523 = vpack.c.b16 %v1595, %v1587
    %v2524 = vpack.c.b16 %v1596, %v1588
    %v2525 = vpack.c.b16 %v1597, %v1589
    %v2526 = vpack.c.b16 %v1606, %v1598
    %v2527 = vpack.c.b16 %v1607, %v1599
    %v2528 = vpack.c.b16 %v1608, %v1600
    %v2529 = vpack.c.b16 %v1609, %v1601
    %v2530 = vpack.c.b16 %v1610, %v1602
    %v2531 = vpack.c.b16 %v1611, %v1603
    %v2532 = vpack.c.b16 %v1612, %v1604
    %v2533 = vpack.c.b16 %v1613, %v1605
    %v2534 = vpack.c.b16 %v1622, %v1614
    %v2535 = vpack.c.b16 %v1623, %v1615
    %v2536 = vpack.c.b16 %v1624, %v1616
    %v2537 = vpack.c.b16 %v1625, %v1617
    %v2538 = vpack.c.b16 %v1626, %v1618
    %v2539 = vpack.c.b16 %v1627, %v1619
    %v2540 = vpack.c.b16 %v1628, %v1620
    %v2541 = vpack.c.b16 %v1629, %v1621
    %v2542 = vpack.c.b16 %v1638, %v1630
    %v2543 = vpack.c.b16 %v1639, %v1631
    %v2544 = vpack.c.b16 %v1640, %v1632
    %v2545 = vpack.c.b16 %v1641, %v1633
    %v2546 = vpack.c.b16 %v1642, %v1634
    %v2547 = vpack.c.b16 %v1643, %v1635
    %v2548 = vpack.c.b16 %v1644, %v1636
    %v2549 = vpack.c.b16 %v1645, %v1637
    %v2550 = vpack.c.b16 %v1654, %v1646
    %v2551 = vpack.c.b16 %v1655, %v1647
    %v2552 = vpack.c.b16 %v1656, %v1648
    %v2553 = vpack.c.b16 %v1657, %v1649
    %v2554 = vpack.c.b16 %v1658, %v1650
    %v2555 = vpack.c.b16 %v1659, %v1651
    %v2556 = vpack.c.b16 %v1660, %v1652
    %v2557 = vpack.c.b16 %v1661, %v1653
    %v2558 = vpack.c.b16 %v1670, %v1662
    %v2559 = vpack.c.b16 %v1671, %v1663
    %v2560 = vpack.c.b16 %v1672, %v1664
    %v2561 = vpack.c.b16 %v1673, %v1665
    %v2562 = vpack.c.b16 %v1674, %v1666
    %v2563 = vpack.c.b16 %v1675, %v1667
    %v2564 = vpack.c.b16 %v1676, %v1668
    %v2565 = vpack.c.b16 %v1677, %v1669
    %v2566 = vpack.c.b16 %v1686, %v1678
    %v2567 = vpack.c.b16 %v1687, %v1679
    %v2568 = vpack.c.b16 %v1688, %v1680
    %v2569 = vpack.c.b16 %v1689, %v1681
    %v2570 = vpack.c.b16 %v1690, %v1682
    %v2571 = vpack.c.b16 %v1691, %v1683
    %v2572 = vpack.c.b16 %v1692, %v1684
    %v2573 = vpack.c.b16 %v1693, %v1685
    %v2574 = vpack.c.b16 %v1702, %v1694
    %v2575 = vpack.c.b16 %v1703, %v1695
    %v2576 = vpack.c.b16 %v1704, %v1696
    %v2577 = vpack.c.b16 %v1705, %v1697
    %v2578 = vpack.c.b16 %v1706, %v1698
    %v2579 = vpack.c.b16 %v1707, %v1699
    %v2580 = vpack.c.b16 %v1708, %v1700
    %v2581 = vpack.c.b16 %v1709, %v1701
    %v2582 = vpack.c.b16 %v1718, %v1710
    %v2583 = vpack.c.b16 %v1719, %v1711
    %v2584 = vpack.c.b16 %v1720, %v1712
    %v2585 = vpack.c.b16 %v1721, %v1713
    %v2586 = vpack.c.b16 %v1722, %v1714
    %v2587 = vpack.c.b16 %v1723, %v1715
    %v2588 = vpack.c.b16 %v1724, %v1716
    %v2589 = vpack.c.b16 %v1725, %v1717
    %v2590 = vpack.c.b16 %v1734, %v1726
    %v2591 = vpack.c.b16 %v1735, %v1727
    %v2592 = vpack.c.b16 %v1736, %v1728
    %v2593 = vpack.c.b16 %v1737, %v1729
    %v2594 = vpack.c.b16 %v1738, %v1730
    %v2595 = vpack.c.b16 %v1739, %v1731
    %v2596 = vpack.c.b16 %v1740, %v1732
    %v2597 = vpack.c.b16 %v1741, %v1733
    %v2598 = vpack.c.b16 %v1750, %v1742
    %v2599 = vpack.c.b16 %v1751, %v1743
    %v2600 = vpack.c.b16 %v1752, %v1744
    %v2601 = vpack.c.b16 %v1753, %v1745
    %v2602 = vpack.c.b16 %v1754, %v1746
    %v2603 = vpack.c.b16 %v1755, %v1747
    %v2604 = vpack.c.b16 %v1756, %v1748
    %v2605 = vpack.c.b16 %v1757, %v1749
    %v2606 = vpack.c.b16 %v1766, %v1758
    %v2607 = vpack.c.b16 %v1767, %v1759
    %v2608 = vpack.c.b16 %v1768, %v1760
    %v2609 = vpack.c.b16 %v1769, %v1761
    %v2610 = vpack.c.b16 %v1770, %v1762
    %v2611 = vpack.c.b16 %v1771, %v1763
    %v2612 = vpack.c.b16 %v1772, %v1764
    %v2613 = vpack.c.b16 %v1773, %v1765
    %v2614 = vpack.c.b16 %v1782, %v1774
    %v2615 = vpack.c.b16 %v1783, %v1775
    %v2616 = vpack.c.b16 %v1784, %v1776
    %v2617 = vpack.c.b16 %v1785, %v1777
    %v2618 = vpack.c.b16 %v1786, %v1778
    %v2619 = vpack.c.b16 %v1787, %v1779
    %v2620 = vpack.c.b16 %v1788, %v1780
    %v2621 = vpack.c.b16 %v1789, %v1781
    %v2622 = vpack.c.b16 %v1798, %v1790
    %v2623 = vpack.c.b16 %v1799, %v1791
    %v2624 = vpack.c.b16 %v1800, %v1792
    %v2625 = vpack.c.b16 %v1801, %v1793
    %v2626 = vpack.c.b16 %v1802, %v1794
    %v2627 = vpack.c.b16 %v1803, %v1795
    %v2628 = vpack.c.b16 %v1804, %v1796
    %v2629 = vpack.c.b16 %v1805, %v1797
    %v2630 = vpack.c.b16 %v1814, %v1806
    %v2631 = vpack.c.b16 %v1815, %v1807
    %v2632 = vpack.c.b16 %v1816, %v1808
    %v2633 = vpack.c.b16 %v1817, %v1809
    %v2634 = vpack.c.b16 %v1818, %v1810
    %v2635 = vpack.c.b16 %v1819, %v1811
    %v2636 = vpack.c.b16 %v1820, %v1812
    %v2637 = vpack.c.b16 %v1821, %v1813
    %v2638 = vpack.c.b16 %v1830, %v1822
    %v2639 = vpack.c.b16 %v1831, %v1823
    %v2640 = vpack.c.b16 %v1832, %v1824
    %v2641 = vpack.c.b16 %v1833, %v1825
    %v2642 = vpack.c.b16 %v1834, %v1826
    %v2643 = vpack.c.b16 %v1835, %v1827
    %v2644 = vpack.c.b16 %v1836, %v1828
    %v2645 = vpack.c.b16 %v1837, %v1829
    %v2646 = vpack.c.b16 %v1846, %v1838
    %v2647 = vpack.c.b16 %v1847, %v1839
    %v2648 = vpack.c.b16 %v1848, %v1840
    %v2649 = vpack.c.b16 %v1849, %v1841
    %v2650 = vpack.c.b16 %v1850, %v1842
    %v2651 = vpack.c.b16 %v1851, %v1843
    %v2652 = vpack.c.b16 %v1852, %v1844
    %v2653 = vpack.c.b16 %v1853, %v1845
    %v2654 = vpack.c.b16 %v1862, %v1854
    %v2655 = vpack.c.b16 %v1863, %v1855
    %v2656 = vpack.c.b16 %v1864, %v1856
    %v2657 = vpack.c.b16 %v1865, %v1857
    %v2658 = vpack.c.b16 %v1866, %v1858
    %v2659 = vpack.c.b16 %v1867, %v1859
    %v2660 = vpack.c.b16 %v1868, %v1860
    %v2661 = vpack.c.b16 %v1869, %v1861
    %v2662 = vpack.c.b16 %v1878, %v1870
    %v2663 = vpack.c.b16 %v1879, %v1871
    %v2664 = vpack.c.b16 %v1880, %v1872
    %v2665 = vpack.c.b16 %v1881, %v1873
    %v2666 = vpack.c.b16 %v1882, %v1874
    %v2667 = vpack.c.b16 %v1883, %v1875
    %v2668 = vpack.c.b16 %v1884, %v1876
    %v2669 = vpack.c.b16 %v1885, %v1877
    %v2670 = vpack.c.b16 %v1894, %v1886
    %v2671 = vpack.c.b16 %v1895, %v1887
    %v2672 = vpack.c.b16 %v1896, %v1888
    %v2673 = vpack.c.b16 %v1897, %v1889
    %v2674 = vpack.c.b16 %v1898, %v1890
    %v2675 = vpack.c.b16 %v1899, %v1891
    %v2676 = vpack.c.b16 %v1900, %v1892
    %v2677 = vpack.c.b16 %v1901, %v1893
    %v2678 = vpack.c.b16 %v1910, %v1902
    %v2679 = vpack.c.b16 %v1911, %v1903
    %v2680 = vpack.c.b16 %v1912, %v1904
    %v2681 = vpack.c.b16 %v1913, %v1905
    %v2682 = vpack.c.b16 %v1914, %v1906
    %v2683 = vpack.c.b16 %v1915, %v1907
    %v2684 = vpack.c.b16 %v1916, %v1908
    %v2685 = vpack.c.b16 %v1917, %v1909
    %v2686 = vpack.c.b16 %v1926, %v1918
    %v2687 = vpack.c.b16 %v1927, %v1919
    %v2688 = vpack.c.b16 %v1928, %v1920
    %v2689 = vpack.c.b16 %v1929, %v1921
    %v2690 = vpack.c.b16 %v1930, %v1922
    %v2691 = vpack.c.b16 %v1931, %v1923
    %v2692 = vpack.c.b16 %v1932, %v1924
    %v2693 = vpack.c.b16 %v1933, %v1925
    %v2694 = vpack.c.b16 %v1942, %v1934
    %v2695 = vpack.c.b16 %v1943, %v1935
    %v2696 = vpack.c.b16 %v1944, %v1936
    %v2697 = vpack.c.b16 %v1945, %v1937
    %v2698 = vpack.c.b16 %v1946, %v1938
    %v2699 = vpack.c.b16 %v1947, %v1939
    %v2700 = vpack.c.b16 %v1948, %v1940
    %v2701 = vpack.c.b16 %v1949, %v1941
    %v2702 = vpack.c.b16 %v1958, %v1950
    %v2703 = vpack.c.b16 %v1959, %v1951
    %v2704 = vpack.c.b16 %v1960, %v1952
    %v2705 = vpack.c.b16 %v1961, %v1953
    %v2706 = vpack.c.b16 %v1962, %v1954
    %v2707 = vpack.c.b16 %v1963, %v1955
    %v2708 = vpack.c.b16 %v1964, %v1956
    %v2709 = vpack.c.b16 %v1965, %v1957
    %v2710 = vpack.c.b16 %v1974, %v1966
    %v2711 = vpack.c.b16 %v1975, %v1967
    %v2712 = vpack.c.b16 %v1976, %v1968
    %v2713 = vpack.c.b16 %v1977, %v1969
    %v2714 = vpack.c.b16 %v1978, %v1970
    %v2715 = vpack.c.b16 %v1979, %v1971
    %v2716 = vpack.c.b16 %v1980, %v1972
    %v2717 = vpack.c.b16 %v1981, %v1973
    %v2718 = vpack.c.b16 %v1990, %v1982
    %v2719 = vpack.c.b16 %v1991, %v1983
    %v2720 = vpack.c.b16 %v1992, %v1984
    %v2721 = vpack.c.b16 %v1993, %v1985
    %v2722 = vpack.c.b16 %v1994, %v1986
    %v2723 = vpack.c.b16 %v1995, %v1987
    %v2724 = vpack.c.b16 %v1996, %v1988
    %v2725 = vpack.c.b16 %v1997, %v1989
    %v2726 = vpack.c.b16 %v2006, %v1998
    %v2727 = vpack.c.b16 %v2007, %v1999
    %v2728 = vpack.c.b16 %v2008, %v2000
    %v2729 = vpack.c.b16 %v2009, %v2001
    %v2730 = vpack.c.b16 %v2010, %v2002
    %v2731 = vpack.c.b16 %v2011, %v2003
    %v2732 = vpack.c.b16 %v2012, %v2004
    %v2733 = vpack.c.b16 %v2013, %v2005
    %v2734 = vpack.c.b16 %v2022, %v2014
    %v2735 = vpack.c.b16 %v2023, %v2015
    %v2736 = vpack.c.b16 %v2024, %v2016
    %v2737 = vpack.c.b16 %v2025, %v2017
    %v2738 = vpack.c.b16 %v2026, %v2018
    %v2739 = vpack.c.b16 %v2027, %v2019
    %v2740 = vpack.c.b16 %v2028, %v2020
    %v2741 = vpack.c.b16 %v2029, %v2021
    %v2742 = vpack.c.b16 %v2038, %v2030
    %v2743 = vpack.c.b16 %v2039, %v2031
    %v2744 = vpack.c.b16 %v2040, %v2032
    %v2745 = vpack.c.b16 %v2041, %v2033
    %v2746 = vpack.c.b16 %v2042, %v2034
    %v2747 = vpack.c.b16 %v2043, %v2035
    %v2748 = vpack.c.b16 %v2044, %v2036
    %v2749 = vpack.c.b16 %v2045, %v2037
    %v2750 = vpack.c.b16 %v2054, %v2046
    %v2751 = vpack.c.b16 %v2055, %v2047
    %v2752 = vpack.c.b16 %v2056, %v2048
    %v2753 = vpack.c.b16 %v2057, %v2049
    %v2754 = vpack.c.b16 %v2058, %v2050
    %v2755 = vpack.c.b16 %v2059, %v2051
    %v2756 = vpack.c.b16 %v2060, %v2052
    %v2757 = vpack.c.b16 %v2061, %v2053
    %v2758 = vpack.c.b16 %v2070, %v2062
    %v2759 = vpack.c.b16 %v2071, %v2063
    %v2760 = vpack.c.b16 %v2072, %v2064
    %v2761 = vpack.c.b16 %v2073, %v2065
    %v2762 = vpack.c.b16 %v2074, %v2066
    %v2763 = vpack.c.b16 %v2075, %v2067
    %v2764 = vpack.c.b16 %v2076, %v2068
    %v2765 = vpack.c.b16 %v2077, %v2069
    %v2766 = vpack.c.b16 %v2086, %v2078
    %v2767 = vpack.c.b16 %v2087, %v2079
    %v2768 = vpack.c.b16 %v2088, %v2080
    %v2769 = vpack.c.b16 %v2089, %v2081
    %v2770 = vpack.c.b16 %v2090, %v2082
    %v2771 = vpack.c.b16 %v2091, %v2083
    %v2772 = vpack.c.b16 %v2092, %v2084
    %v2773 = vpack.c.b16 %v2093, %v2085
    %v2774 = vpack.c.b16 %v2102, %v2094
    %v2775 = vpack.c.b16 %v2103, %v2095
    %v2776 = vpack.c.b16 %v2104, %v2096
    %v2777 = vpack.c.b16 %v2105, %v2097
    %v2778 = vpack.c.b16 %v2106, %v2098
    %v2779 = vpack.c.b16 %v2107, %v2099
    %v2780 = vpack.c.b16 %v2108, %v2100
    %v2781 = vpack.c.b16 %v2109, %v2101
    %v2782 = vpack.c.b16 %v2118, %v2110
    %v2783 = vpack.c.b16 %v2119, %v2111
    %v2784 = vpack.c.b16 %v2120, %v2112
    %v2785 = vpack.c.b16 %v2121, %v2113
    %v2786 = vpack.c.b16 %v2122, %v2114
    %v2787 = vpack.c.b16 %v2123, %v2115
    %v2788 = vpack.c.b16 %v2124, %v2116
    %v2789 = vpack.c.b16 %v2125, %v2117
    %v2790 = vpack.c.b16 %v2134, %v2126
    %v2791 = vpack.c.b16 %v2135, %v2127
    %v2792 = vpack.c.b16 %v2136, %v2128
    %v2793 = vpack.c.b16 %v2137, %v2129
    %v2794 = vpack.c.b16 %v2138, %v2130
    %v2795 = vpack.c.b16 %v2139, %v2131
    %v2796 = vpack.c.b16 %v2140, %v2132
    %v2797 = vpack.c.b16 %v2141, %v2133
    %v2798 = vpack.c.b16 %v2150, %v2142
    %v2799 = vpack.c.b16 %v2151, %v2143
    %v2800 = vpack.c.b16 %v2152, %v2144
    %v2801 = vpack.c.b16 %v2153, %v2145
    %v2802 = vpack.c.b16 %v2154, %v2146
    %v2803 = vpack.c.b16 %v2155, %v2147
    %v2804 = vpack.c.b16 %v2156, %v2148
    %v2805 = vpack.c.b16 %v2157, %v2149
    %v2806 = vpack.c.b16 %v2166, %v2158
    %v2807 = vpack.c.b16 %v2167, %v2159
    %v2808 = vpack.c.b16 %v2168, %v2160
    %v2809 = vpack.c.b16 %v2169, %v2161
    %v2810 = vpack.c.b16 %v2170, %v2162
    %v2811 = vpack.c.b16 %v2171, %v2163
    %v2812 = vpack.c.b16 %v2172, %v2164
    %v2813 = vpack.c.b16 %v2173, %v2165
    %v2814 = vpack.c.b16 %v2182, %v2174
    %v2815 = vpack.c.b16 %v2183, %v2175
    %v2816 = vpack.c.b16 %v2184, %v2176
    %v2817 = vpack.c.b16 %v2185, %v2177
    %v2818 = vpack.c.b16 %v2186, %v2178
    %v2819 = vpack.c.b16 %v2187, %v2179
    %v2820 = vpack.c.b16 %v2188, %v2180
    %v2821 = vpack.c.b16 %v2189, %v2181
    %v2822 = vpack.c.b16 %v2198, %v2190
    %v2823 = vpack.c.b16 %v2199, %v2191
    %v2824 = vpack.c.b16 %v2200, %v2192
    %v2825 = vpack.c.b16 %v2201, %v2193
    %v2826 = vpack.c.b16 %v2202, %v2194
    %v2827 = vpack.c.b16 %v2203, %v2195
    %v2828 = vpack.c.b16 %v2204, %v2196
    %v2829 = vpack.c.b16 %v2205, %v2197
    %v2830 = vpack.c.b16 %v2214, %v2206
    %v2831 = vpack.c.b16 %v2215, %v2207
    %v2832 = vpack.c.b16 %v2216, %v2208
    %v2833 = vpack.c.b16 %v2217, %v2209
    %v2834 = vpack.c.b16 %v2218, %v2210
    %v2835 = vpack.c.b16 %v2219, %v2211
    %v2836 = vpack.c.b16 %v2220, %v2212
    %v2837 = vpack.c.b16 %v2221, %v2213
    %v2838 = vpack.c.b16 %v2230, %v2222
    %v2839 = vpack.c.b16 %v2231, %v2223
    %v2840 = vpack.c.b16 %v2232, %v2224
    %v2841 = vpack.c.b16 %v2233, %v2225
    %v2842 = vpack.c.b16 %v2234, %v2226
    %v2843 = vpack.c.b16 %v2235, %v2227
    %v2844 = vpack.c.b16 %v2236, %v2228
    %v2845 = vpack.c.b16 %v2237, %v2229
    %v2846 = vpack.c.b16 %v2246, %v2238
    %v2847 = vpack.c.b16 %v2247, %v2239
    %v2848 = vpack.c.b16 %v2248, %v2240
    %v2849 = vpack.c.b16 %v2249, %v2241
    %v2850 = vpack.c.b16 %v2250, %v2242
    %v2851 = vpack.c.b16 %v2251, %v2243
    %v2852 = vpack.c.b16 %v2252, %v2244
    %v2853 = vpack.c.b16 %v2253, %v2245
    %v2854 = vpack.c.b16 %v2262, %v2254
    %v2855 = vpack.c.b16 %v2263, %v2255
    %v2856 = vpack.c.b16 %v2264, %v2256
    %v2857 = vpack.c.b16 %v2265, %v2257
    %v2858 = vpack.c.b16 %v2266, %v2258
    %v2859 = vpack.c.b16 %v2267, %v2259
    %v2860 = vpack.c.b16 %v2268, %v2260
    %v2861 = vpack.c.b16 %v2269, %v2261
    %v2862 = vpack.c.b16 %v2278, %v2270
    %v2863 = vpack.c.b16 %v2279, %v2271
    %v2864 = vpack.c.b16 %v2280, %v2272
    %v2865 = vpack.c.b16 %v2281, %v2273
    %v2866 = vpack.c.b16 %v2282, %v2274
    %v2867 = vpack.c.b16 %v2283, %v2275
    %v2868 = vpack.c.b16 %v2284, %v2276
    %v2869 = vpack.c.b16 %v2285, %v2277
    %v2870 = vpack.c.b16 %v2294, %v2286
    %v2871 = vpack.c.b16 %v2295, %v2287
    %v2872 = vpack.c.b16 %v2296, %v2288
    %v2873 = vpack.c.b16 %v2297, %v2289
    %v2874 = vpack.c.b16 %v2298, %v2290
    %v2875 = vpack.c.b16 %v2299, %v2291
    %v2876 = vpack.c.b16 %v2300, %v2292
    %v2877 = vpack.c.b16 %v2301, %v2293
    %v2878 = vpack.c.b16 %v2310, %v2302
    %v2879 = vpack.c.b16 %v2311, %v2303
    %v2880 = vpack.c.b16 %v2312, %v2304
    %v2881 = vpack.c.b16 %v2313, %v2305
    %v2882 = vpack.c.b16 %v2314, %v2306
    %v2883 = vpack.c.b16 %v2315, %v2307
    %v2884 = vpack.c.b16 %v2316, %v2308
    %v2885 = vpack.c.b16 %v2317, %v2309
    %v2886 = vpack.c.b16 %v2326, %v2318
    %v2887 = vpack.c.b16 %v2327, %v2319
    %v2888 = vpack.c.b16 %v2328, %v2320
    %v2889 = vpack.c.b16 %v2329, %v2321
    %v2890 = vpack.c.b16 %v2330, %v2322
    %v2891 = vpack.c.b16 %v2331, %v2323
    %v2892 = vpack.c.b16 %v2332, %v2324
    %v2893 = vpack.c.b16 %v2333, %v2325
    %v2894 = vpack.c.b16 %v2342, %v2334
    %v2895 = vpack.c.b16 %v2343, %v2335
    %v2896 = vpack.c.b16 %v2344, %v2336
    %v2897 = vpack.c.b16 %v2345, %v2337
    %v2898 = vpack.c.b16 %v2346, %v2338
    %v2899 = vpack.c.b16 %v2347, %v2339
    %v2900 = vpack.c.b16 %v2348, %v2340
    %v2901 = vpack.c.b16 %v2349, %v2341
    %v2902 = vpack.c.b16 %v2358, %v2350
    %v2903 = vpack.c.b16 %v2359, %v2351
    %v2904 = vpack.c.b16 %v2360, %v2352
    %v2905 = vpack.c.b16 %v2361, %v2353
    %v2906 = vpack.c.b16 %v2362, %v2354
    %v2907 = vpack.c.b16 %v2363, %v2355
    %v2908 = vpack.c.b16 %v2364, %v2356
    %v2909 = vpack.c.b16 %v2365, %v2357
    %v2910 = vpack.c.b16 %v2374, %v2366
    %v2911 = vpack.c.b16 %v2375, %v2367
    %v2912 = vpack.c.b16 %v2376, %v2368
    %v2913 = vpack.c.b16 %v2377, %v2369
    %v2914 = vpack.c.b16 %v2378, %v2370
    %v2915 = vpack.c.b16 %v2379, %v2371
    %v2916 = vpack.c.b16 %v2380, %v2372
    %v2917 = vpack.c.b16 %v2381, %v2373
    %v2918 = vpack.c.b16 %v2390, %v2382
    %v2919 = vpack.c.b16 %v2391, %v2383
    %v2920 = vpack.c.b16 %v2392, %v2384
    %v2921 = vpack.c.b16 %v2393, %v2385
    %v2922 = vpack.c.b16 %v2394, %v2386
    %v2923 = vpack.c.b16 %v2395, %v2387
    %v2924 = vpack.c.b16 %v2396, %v2388
    %v2925 = vpack.c.b16 %v2397, %v2389
    %v2926 = vpack.c.b16 %v2406, %v2398
    %v2927 = vpack.c.b16 %v2407, %v2399
    %v2928 = vpack.c.b16 %v2408, %v2400
    %v2929 = vpack.c.b16 %v2409, %v2401
    %v2930 = vpack.c.b16 %v2410, %v2402
    %v2931 = vpack.c.b16 %v2411, %v2403
    %v2932 = vpack.c.b16 %v2412, %v2404
    %v2933 = vpack.c.b16 %v2413, %v2405
    %v2934 = vpack.c.b16 %v2422, %v2414
    %v2935 = vpack.c.b16 %v2423, %v2415
    %v2936 = vpack.c.b16 %v2424, %v2416
    %v2937 = vpack.c.b16 %v2425, %v2417
    %v2938 = vpack.c.b16 %v2426, %v2418
    %v2939 = vpack.c.b16 %v2427, %v2419
    %v2940 = vpack.c.b16 %v2428, %v2420
    %v2941 = vpack.c.b16 %v2429, %v2421
    %3454 = vmatprep.subr.bf16.mxu0 %v2487
    %3455 = vmatpush1.bf16.msra.mxu0 %v2486
    %3456 = vmatprep.subr.bf16.mxu0 %v2479
    %3457 = vmatpush1.bf16.msra.mxu0 %v2478
    %3458 = vmatprep.subr.bf16.mxu0 %v2471
    %3459 = vmatpush1.bf16.msra.mxu0 %v2470
    %3460 = vmatprep.subr.bf16.mxu0 %v2463
    %3461 = vmatpush1.bf16.msra.mxu0 %v2462
    %3462 = vmatprep.subr.bf16.mxu0 %v2455
    %3463 = vmatpush1.bf16.msra.mxu0 %v2454
    %3464 = vmatprep.subr.bf16.mxu0 %v2447
    %3465 = vmatpush1.bf16.msra.mxu0 %v2446
    %3466 = vmatprep.subr.bf16.mxu0 %v2439
    %3467 = vmatpush1.bf16.msra.mxu0 %v2438
    %3468 = vmatprep.subr.bf16.mxu0 %v2431
    %3469 = vmatpush1.bf16.msra.mxu0 %v2430
    %3470 = vmatprep.subr.bf16.mxu0 %v2551
    %3471 = vmatpush2.bf16.msra.mxu0 %v2550
    %3472 = vmatprep.subr.bf16.mxu0 %v2543
    %3473 = vmatpush2.bf16.msra.mxu0 %v2542
    %3474 = vmatprep.subr.bf16.mxu0 %v2535
    %3475 = vmatpush2.bf16.msra.mxu0 %v2534
    %3476 = vmatprep.subr.bf16.mxu0 %v2527
    %3477 = vmatpush2.bf16.msra.mxu0 %v2526
    %3478 = vmatprep.subr.bf16.mxu0 %v2519
    %3479 = vmatpush2.bf16.msra.mxu0 %v2518
    %3480 = vmatprep.subr.bf16.mxu0 %v2511
    %3481 = vmatpush2.bf16.msra.mxu0 %v2510
    %3482 = vmatprep.subr.bf16.mxu0 %v2503
    %3483 = vmatpush2.bf16.msra.mxu0 %v2502
    %3484 = vmatprep.subr.bf16.mxu0 %v2495
    %3485 = vmatpush2.bf16.msra.mxu0 %v2494
    %3486 = vmatprep.mubr.bf16.mxu0 %v309
    %3487 = vmatmul.mubr.bf16.gmra.mxu0 %v308
    %v3488 = vpop.f32.mrf.mxu0
    %v3489 = vadd.f32 %v857, %v3488
    %v3490 = vpop.f32.mrf.mxu0
    %v3491 = vadd.f32 %v861, %v3490
    %v3492 = vpop.f32.mrf.mxu0
    %v3493 = vadd.f32 %v857, %v3492
    %v3494 = vpop.f32.mrf.mxu0
    %v3495 = vadd.f32 %v861, %v3494
    %3496 = vmatprep.mubr.bf16.mxu0 %v317
    %3497 = vmatmul.mubr.bf16.gmra.mxu0 %v316
    %v3498 = vpop.f32.mrf.mxu0
    %v3499 = vadd.f32 %v857, %v3498
    %v3500 = vpop.f32.mrf.mxu0
    %v3501 = vadd.f32 %v861, %v3500
    %v3502 = vpop.f32.mrf.mxu0
    %v3503 = vadd.f32 %v857, %v3502
    %v3504 = vpop.f32.mrf.mxu0
    %v3505 = vadd.f32 %v861, %v3504
    %3506 = vmatprep.mubr.bf16.mxu0 %v325
    %3507 = vmatmul.mubr.bf16.gmra.mxu0 %v324
    %v3508 = vpop.f32.mrf.mxu0
    %v3509 = vadd.f32 %v857, %v3508
    %v3510 = vpop.f32.mrf.mxu0
    %v3511 = vadd.f32 %v861, %v3510
    %v3512 = vpop.f32.mrf.mxu0
    %v3513 = vadd.f32 %v857, %v3512
    %v3514 = vpop.f32.mrf.mxu0
    %v3515 = vadd.f32 %v861, %v3514
    %3516 = vmatprep.mubr.bf16.mxu0 %v333
    %3517 = vmatmul.mubr.bf16.gmra.mxu0 %v332
    %v3518 = vpop.f32.mrf.mxu0
    %v3519 = vadd.f32 %v857, %v3518
    %v3520 = vpop.f32.mrf.mxu0
    %v3521 = vadd.f32 %v861, %v3520
    %v3522 = vpop.f32.mrf.mxu0
    %v3523 = vadd.f32 %v857, %v3522
    %v3524 = vpop.f32.mrf.mxu0
    %v3525 = vadd.f32 %v861, %v3524
    %3526 = vdwg.mxu0
    %3527 = vmatprep.subr.bf16.mxu0 %v2615
    %3528 = vmatpush1.bf16.msra.mxu0 %v2614
    %3529 = vmatprep.subr.bf16.mxu0 %v2607
    %3530 = vmatpush1.bf16.msra.mxu0 %v2606
    %3531 = vmatprep.subr.bf16.mxu0 %v2599
    %3532 = vmatpush1.bf16.msra.mxu0 %v2598
    %3533 = vmatprep.subr.bf16.mxu0 %v2591
    %3534 = vmatpush1.bf16.msra.mxu0 %v2590
    %3535 = vmatprep.subr.bf16.mxu0 %v2583
    %3536 = vmatpush1.bf16.msra.mxu0 %v2582
    %3537 = vmatprep.subr.bf16.mxu0 %v2575
    %3538 = vmatpush1.bf16.msra.mxu0 %v2574
    %3539 = vmatprep.subr.bf16.mxu0 %v2567
    %3540 = vmatpush1.bf16.msra.mxu0 %v2566
    %3541 = vmatprep.subr.bf16.mxu0 %v2559
    %3542 = vmatpush1.bf16.msra.mxu0 %v2558
    %3543 = vmatprep.subr.bf16.mxu0 %v2679
    %3544 = vmatpush2.bf16.msra.mxu0 %v2678
    %3545 = vmatprep.subr.bf16.mxu0 %v2671
    %3546 = vmatpush2.bf16.msra.mxu0 %v2670
    %3547 = vmatprep.subr.bf16.mxu0 %v2663
    %3548 = vmatpush2.bf16.msra.mxu0 %v2662
    %3549 = vmatprep.subr.bf16.mxu0 %v2655
    %3550 = vmatpush2.bf16.msra.mxu0 %v2654
    %3551 = vmatprep.subr.bf16.mxu0 %v2647
    %3552 = vmatpush2.bf16.msra.mxu0 %v2646
    %3553 = vmatprep.subr.bf16.mxu0 %v2639
    %3554 = vmatpush2.bf16.msra.mxu0 %v2638
    %3555 = vmatprep.subr.bf16.mxu0 %v2631
    %3556 = vmatpush2.bf16.msra.mxu0 %v2630
    %3557 = vmatprep.subr.bf16.mxu0 %v2623
    %3558 = vmatpush2.bf16.msra.mxu0 %v2622
    %3559 = vmatprep.mubr.bf16.mxu0 %v311
    %3560 = vmatmul.mubr.bf16.gmra.mxu0 %v310
    %v3561 = vpop.f32.mrf.mxu0
    %v3562 = vadd.f32 %v3489, %v3561
    %v3563 = vpop.f32.mrf.mxu0
    %v3564 = vadd.f32 %v3491, %v3563
    %v3565 = vpop.f32.mrf.mxu0
    %v3566 = vadd.f32 %v3493, %v3565
    %v3567 = vpop.f32.mrf.mxu0
    %v3568 = vadd.f32 %v3495, %v3567
    %3569 = vmatprep.mubr.bf16.mxu0 %v319
    %3570 = vmatmul.mubr.bf16.gmra.mxu0 %v318
    %v3571 = vpop.f32.mrf.mxu0
    %v3572 = vadd.f32 %v3499, %v3571
    %v3573 = vpop.f32.mrf.mxu0
    %v3574 = vadd.f32 %v3501, %v3573
    %v3575 = vpop.f32.mrf.mxu0
    %v3576 = vadd.f32 %v3503, %v3575
    %v3577 = vpop.f32.mrf.mxu0
    %v3578 = vadd.f32 %v3505, %v3577
    %3579 = vmatprep.mubr.bf16.mxu0 %v327
    %3580 = vmatmul.mubr.bf16.gmra.mxu0 %v326
    %v3581 = vpop.f32.mrf.mxu0
    %v3582 = vadd.f32 %v3509, %v3581
    %v3583 = vpop.f32.mrf.mxu0
    %v3584 = vadd.f32 %v3511, %v3583
    %v3585 = vpop.f32.mrf.mxu0
    %v3586 = vadd.f32 %v3513, %v3585
    %v3587 = vpop.f32.mrf.mxu0
    %v3588 = vadd.f32 %v3515, %v3587
    %3589 = vmatprep.mubr.bf16.mxu0 %v335
    %3590 = vmatmul.mubr.bf16.gmra.mxu0 %v334
    %v3591 = vpop.f32.mrf.mxu0
    %v3592 = vadd.f32 %v3519, %v3591
    %v3593 = vpop.f32.mrf.mxu0
    %v3594 = vadd.f32 %v3521, %v3593
    %v3595 = vpop.f32.mrf.mxu0
    %v3596 = vadd.f32 %v3523, %v3595
    %v3597 = vpop.f32.mrf.mxu0
    %v3598 = vadd.f32 %v3525, %v3597
    %3599 = vdwg.mxu0
    %3600 = vmatprep.subr.bf16.mxu0 %v2743
    %3601 = vmatpush1.bf16.msra.mxu0 %v2742
    %3602 = vmatprep.subr.bf16.mxu0 %v2735
    %3603 = vmatpush1.bf16.msra.mxu0 %v2734
    %3604 = vmatprep.subr.bf16.mxu0 %v2727
    %3605 = vmatpush1.bf16.msra.mxu0 %v2726
    %3606 = vmatprep.subr.bf16.mxu0 %v2719
    %3607 = vmatpush1.bf16.msra.mxu0 %v2718
    %3608 = vmatprep.subr.bf16.mxu0 %v2711
    %3609 = vmatpush1.bf16.msra.mxu0 %v2710
    %3610 = vmatprep.subr.bf16.mxu0 %v2703
    %3611 = vmatpush1.bf16.msra.mxu0 %v2702
    %3612 = vmatprep.subr.bf16.mxu0 %v2695
    %3613 = vmatpush1.bf16.msra.mxu0 %v2694
    %3614 = vmatprep.subr.bf16.mxu0 %v2687
    %3615 = vmatpush1.bf16.msra.mxu0 %v2686
    %3616 = vmatprep.subr.bf16.mxu0 %v2807
    %3617 = vmatpush2.bf16.msra.mxu0 %v2806
    %3618 = vmatprep.subr.bf16.mxu0 %v2799
    %3619 = vmatpush2.bf16.msra.mxu0 %v2798
    %3620 = vmatprep.subr.bf16.mxu0 %v2791
    %3621 = vmatpush2.bf16.msra.mxu0 %v2790
    %3622 = vmatprep.subr.bf16.mxu0 %v2783
    %3623 = vmatpush2.bf16.msra.mxu0 %v2782
    %3624 = vmatprep.subr.bf16.mxu0 %v2775
    %3625 = vmatpush2.bf16.msra.mxu0 %v2774
    %3626 = vmatprep.subr.bf16.mxu0 %v2767
    %3627 = vmatpush2.bf16.msra.mxu0 %v2766
    %3628 = vmatprep.subr.bf16.mxu0 %v2759
    %3629 = vmatpush2.bf16.msra.mxu0 %v2758
    %3630 = vmatprep.subr.bf16.mxu0 %v2751
    %3631 = vmatpush2.bf16.msra.mxu0 %v2750
    %3632 = vmatprep.mubr.bf16.mxu0 %v313
    %3633 = vmatmul.mubr.bf16.gmra.mxu0 %v312
    %v3634 = vpop.f32.mrf.mxu0
    %v3635 = vadd.f32 %v3562, %v3634
    %v3636 = vpop.f32.mrf.mxu0
    %v3637 = vadd.f32 %v3564, %v3636
    %v3638 = vpop.f32.mrf.mxu0
    %v3639 = vadd.f32 %v3566, %v3638
    %v3640 = vpop.f32.mrf.mxu0
    %v3641 = vadd.f32 %v3568, %v3640
    %3642 = vmatprep.mubr.bf16.mxu0 %v321
    %3643 = vmatmul.mubr.bf16.gmra.mxu0 %v320
    %v3644 = vpop.f32.mrf.mxu0
    %v3645 = vadd.f32 %v3572, %v3644
    %v3646 = vpop.f32.mrf.mxu0
    %v3647 = vadd.f32 %v3574, %v3646
    %v3648 = vpop.f32.mrf.mxu0
    %v3649 = vadd.f32 %v3576, %v3648
    %v3650 = vpop.f32.mrf.mxu0
    %v3651 = vadd.f32 %v3578, %v3650
    %3652 = vmatprep.mubr.bf16.mxu0 %v329
    %3653 = vmatmul.mubr.bf16.gmra.mxu0 %v328
    %v3654 = vpop.f32.mrf.mxu0
    %v3655 = vadd.f32 %v3582, %v3654
    %v3656 = vpop.f32.mrf.mxu0
    %v3657 = vadd.f32 %v3584, %v3656
    %v3658 = vpop.f32.mrf.mxu0
    %v3659 = vadd.f32 %v3586, %v3658
    %v3660 = vpop.f32.mrf.mxu0
    %v3661 = vadd.f32 %v3588, %v3660
    %3662 = vmatprep.mubr.bf16.mxu0 %v337
    %3663 = vmatmul.mubr.bf16.gmra.mxu0 %v336
    %v3664 = vpop.f32.mrf.mxu0
    %v3665 = vadd.f32 %v3592, %v3664
    %v3666 = vpop.f32.mrf.mxu0
    %v3667 = vadd.f32 %v3594, %v3666
    %v3668 = vpop.f32.mrf.mxu0
    %v3669 = vadd.f32 %v3596, %v3668
    %v3670 = vpop.f32.mrf.mxu0
    %v3671 = vadd.f32 %v3598, %v3670
    %3672 = vdwg.mxu0
    %3673 = vmatprep.subr.bf16.mxu0 %v2871
    %3674 = vmatpush1.bf16.msra.mxu0 %v2870
    %3675 = vmatprep.subr.bf16.mxu0 %v2863
    %3676 = vmatpush1.bf16.msra.mxu0 %v2862
    %3677 = vmatprep.subr.bf16.mxu0 %v2855
    %3678 = vmatpush1.bf16.msra.mxu0 %v2854
    %3679 = vmatprep.subr.bf16.mxu0 %v2847
    %3680 = vmatpush1.bf16.msra.mxu0 %v2846
    %3681 = vmatprep.subr.bf16.mxu0 %v2839
    %3682 = vmatpush1.bf16.msra.mxu0 %v2838
    %3683 = vmatprep.subr.bf16.mxu0 %v2831
    %3684 = vmatpush1.bf16.msra.mxu0 %v2830
    %3685 = vmatprep.subr.bf16.mxu0 %v2823
    %3686 = vmatpush1.bf16.msra.mxu0 %v2822
    %3687 = vmatprep.subr.bf16.mxu0 %v2815
    %3688 = vmatpush1.bf16.msra.mxu0 %v2814
    %3689 = vmatprep.subr.bf16.mxu0 %v2935
    %3690 = vmatpush2.bf16.msra.mxu0 %v2934
    %3691 = vmatprep.subr.bf16.mxu0 %v2927
    %3692 = vmatpush2.bf16.msra.mxu0 %v2926
    %3693 = vmatprep.subr.bf16.mxu0 %v2919
    %3694 = vmatpush2.bf16.msra.mxu0 %v2918
    %3695 = vmatprep.subr.bf16.mxu0 %v2911
    %3696 = vmatpush2.bf16.msra.mxu0 %v2910
    %3697 = vmatprep.subr.bf16.mxu0 %v2903
    %3698 = vmatpush2.bf16.msra.mxu0 %v2902
    %3699 = vmatprep.subr.bf16.mxu0 %v2895
    %3700 = vmatpush2.bf16.msra.mxu0 %v2894
    %3701 = vmatprep.subr.bf16.mxu0 %v2887
    %3702 = vmatpush2.bf16.msra.mxu0 %v2886
    %3703 = vmatprep.subr.bf16.mxu0 %v2879
    %3704 = vmatpush2.bf16.msra.mxu0 %v2878
    %3705 = vmatprep.mubr.bf16.mxu0 %v315
    %3706 = vmatmul.mubr.bf16.gmra.mxu0 %v314
    %v3707 = vpop.f32.mrf.mxu0
    %v3708 = vadd.f32 %v3635, %v3707
    %v3709 = vpop.f32.mrf.mxu0
    %v3710 = vadd.f32 %v3637, %v3709
    %v3711 = vpop.f32.mrf.mxu0
    %v3712 = vadd.f32 %v3639, %v3711
    %v3713 = vpop.f32.mrf.mxu0
    %v3714 = vadd.f32 %v3641, %v3713
    %3715 = vmatprep.mubr.bf16.mxu0 %v323
    %3716 = vmatmul.mubr.bf16.gmra.mxu0 %v322
    %v3717 = vpop.f32.mrf.mxu0
    %v3718 = vadd.f32 %v3645, %v3717
    %v3719 = vpop.f32.mrf.mxu0
    %v3720 = vadd.f32 %v3647, %v3719
    %v3721 = vpop.f32.mrf.mxu0
    %v3722 = vadd.f32 %v3649, %v3721
    %v3723 = vpop.f32.mrf.mxu0
    %v3724 = vadd.f32 %v3651, %v3723
    %3725 = vmatprep.mubr.bf16.mxu0 %v331
    %3726 = vmatmul.mubr.bf16.gmra.mxu0 %v330
    %v3727 = vpop.f32.mrf.mxu0
    %v3728 = vadd.f32 %v3655, %v3727
    %v3729 = vpop.f32.mrf.mxu0
    %v3730 = vadd.f32 %v3657, %v3729
    %v3731 = vpop.f32.mrf.mxu0
    %v3732 = vadd.f32 %v3659, %v3731
    %v3733 = vpop.f32.mrf.mxu0
    %v3734 = vadd.f32 %v3661, %v3733
    %3735 = vmatprep.mubr.bf16.mxu0 %v339
    %3736 = vmatmul.mubr.bf16.gmra.mxu0 %v338
    %v3737 = vpop.f32.mrf.mxu0
    %v3738 = vadd.f32 %v3665, %v3737
    %v3739 = vpop.f32.mrf.mxu0
    %v3740 = vadd.f32 %v3667, %v3739
    %v3741 = vpop.f32.mrf.mxu0
    %v3742 = vadd.f32 %v3669, %v3741
    %v3743 = vpop.f32.mrf.mxu0
    %v3744 = vadd.f32 %v3671, %v3743
    %3745 = vdwg.mxu0
    %3746 = vmatprep.subr.bf16.mxu0 %v2489
    %3747 = vmatpush1.bf16.msra.mxu0 %v2488
    %3748 = vmatprep.subr.bf16.mxu0 %v2481
    %3749 = vmatpush1.bf16.msra.mxu0 %v2480
    %3750 = vmatprep.subr.bf16.mxu0 %v2473
    %3751 = vmatpush1.bf16.msra.mxu0 %v2472
    %3752 = vmatprep.subr.bf16.mxu0 %v2465
    %3753 = vmatpush1.bf16.msra.mxu0 %v2464
    %3754 = vmatprep.subr.bf16.mxu0 %v2457
    %3755 = vmatpush1.bf16.msra.mxu0 %v2456
    %3756 = vmatprep.subr.bf16.mxu0 %v2449
    %3757 = vmatpush1.bf16.msra.mxu0 %v2448
    %3758 = vmatprep.subr.bf16.mxu0 %v2441
    %3759 = vmatpush1.bf16.msra.mxu0 %v2440
    %3760 = vmatprep.subr.bf16.mxu0 %v2433
    %3761 = vmatpush1.bf16.msra.mxu0 %v2432
    %3762 = vmatprep.subr.bf16.mxu0 %v2553
    %3763 = vmatpush2.bf16.msra.mxu0 %v2552
    %3764 = vmatprep.subr.bf16.mxu0 %v2545
    %3765 = vmatpush2.bf16.msra.mxu0 %v2544
    %3766 = vmatprep.subr.bf16.mxu0 %v2537
    %3767 = vmatpush2.bf16.msra.mxu0 %v2536
    %3768 = vmatprep.subr.bf16.mxu0 %v2529
    %3769 = vmatpush2.bf16.msra.mxu0 %v2528
    %3770 = vmatprep.subr.bf16.mxu0 %v2521
    %3771 = vmatpush2.bf16.msra.mxu0 %v2520
    %3772 = vmatprep.subr.bf16.mxu0 %v2513
    %3773 = vmatpush2.bf16.msra.mxu0 %v2512
    %3774 = vmatprep.subr.bf16.mxu0 %v2505
    %3775 = vmatpush2.bf16.msra.mxu0 %v2504
    %3776 = vmatprep.subr.bf16.mxu0 %v2497
    %3777 = vmatpush2.bf16.msra.mxu0 %v2496
    %3778 = vmatprep.mubr.bf16.mxu0 %v309
    %3779 = vmatmul.mubr.bf16.gmra.mxu0 %v308
    %v3780 = vpop.f32.mrf.mxu0
    %v3781 = vadd.f32 %v865, %v3780
    %v3782 = vpop.f32.mrf.mxu0
    %v3783 = vadd.f32 %v869, %v3782
    %v3784 = vpop.f32.mrf.mxu0
    %v3785 = vadd.f32 %v865, %v3784
    %v3786 = vpop.f32.mrf.mxu0
    %v3787 = vadd.f32 %v869, %v3786
    %3788 = vmatprep.mubr.bf16.mxu0 %v317
    %3789 = vmatmul.mubr.bf16.gmra.mxu0 %v316
    %v3790 = vpop.f32.mrf.mxu0
    %v3791 = vadd.f32 %v865, %v3790
    %v3792 = vpop.f32.mrf.mxu0
    %v3793 = vadd.f32 %v869, %v3792
    %v3794 = vpop.f32.mrf.mxu0
    %v3795 = vadd.f32 %v865, %v3794
    %v3796 = vpop.f32.mrf.mxu0
    %v3797 = vadd.f32 %v869, %v3796
    %3798 = vmatprep.mubr.bf16.mxu0 %v325
    %3799 = vmatmul.mubr.bf16.gmra.mxu0 %v324
    %v3800 = vpop.f32.mrf.mxu0
    %v3801 = vadd.f32 %v865, %v3800
    %v3802 = vpop.f32.mrf.mxu0
    %v3803 = vadd.f32 %v869, %v3802
    %v3804 = vpop.f32.mrf.mxu0
    %v3805 = vadd.f32 %v865, %v3804
    %v3806 = vpop.f32.mrf.mxu0
    %v3807 = vadd.f32 %v869, %v3806
    %3808 = vmatprep.mubr.bf16.mxu0 %v333
    %3809 = vmatmul.mubr.bf16.gmra.mxu0 %v332
    %v3810 = vpop.f32.mrf.mxu0
    %v3811 = vadd.f32 %v865, %v3810
    %v3812 = vpop.f32.mrf.mxu0
    %v3813 = vadd.f32 %v869, %v3812
    %v3814 = vpop.f32.mrf.mxu0
    %v3815 = vadd.f32 %v865, %v3814
    %v3816 = vpop.f32.mrf.mxu0
    %v3817 = vadd.f32 %v869, %v3816
    %3818 = vdwg.mxu0
    %3819 = vmatprep.subr.bf16.mxu0 %v2617
    %3820 = vmatpush1.bf16.msra.mxu0 %v2616
    %3821 = vmatprep.subr.bf16.mxu0 %v2609
    %3822 = vmatpush1.bf16.msra.mxu0 %v2608
    %3823 = vmatprep.subr.bf16.mxu0 %v2601
    %3824 = vmatpush1.bf16.msra.mxu0 %v2600
    %3825 = vmatprep.subr.bf16.mxu0 %v2593
    %3826 = vmatpush1.bf16.msra.mxu0 %v2592
    %3827 = vmatprep.subr.bf16.mxu0 %v2585
    %3828 = vmatpush1.bf16.msra.mxu0 %v2584
    %3829 = vmatprep.subr.bf16.mxu0 %v2577
    %3830 = vmatpush1.bf16.msra.mxu0 %v2576
    %3831 = vmatprep.subr.bf16.mxu0 %v2569
    %3832 = vmatpush1.bf16.msra.mxu0 %v2568
    %3833 = vmatprep.subr.bf16.mxu0 %v2561
    %3834 = vmatpush1.bf16.msra.mxu0 %v2560
    %3835 = vmatprep.subr.bf16.mxu0 %v2681
    %3836 = vmatpush2.bf16.msra.mxu0 %v2680
    %3837 = vmatprep.subr.bf16.mxu0 %v2673
    %3838 = vmatpush2.bf16.msra.mxu0 %v2672
    %3839 = vmatprep.subr.bf16.mxu0 %v2665
    %3840 = vmatpush2.bf16.msra.mxu0 %v2664
    %3841 = vmatprep.subr.bf16.mxu0 %v2657
    %3842 = vmatpush2.bf16.msra.mxu0 %v2656
    %3843 = vmatprep.subr.bf16.mxu0 %v2649
    %3844 = vmatpush2.bf16.msra.mxu0 %v2648
    %3845 = vmatprep.subr.bf16.mxu0 %v2641
    %3846 = vmatpush2.bf16.msra.mxu0 %v2640
    %3847 = vmatprep.subr.bf16.mxu0 %v2633
    %3848 = vmatpush2.bf16.msra.mxu0 %v2632
    %3849 = vmatprep.subr.bf16.mxu0 %v2625
    %3850 = vmatpush2.bf16.msra.mxu0 %v2624
    %3851 = vmatprep.mubr.bf16.mxu0 %v311
    %3852 = vmatmul.mubr.bf16.gmra.mxu0 %v310
    %v3853 = vpop.f32.mrf.mxu0
    %v3854 = vadd.f32 %v3781, %v3853
    %v3855 = vpop.f32.mrf.mxu0
    %v3856 = vadd.f32 %v3783, %v3855
    %v3857 = vpop.f32.mrf.mxu0
    %v3858 = vadd.f32 %v3785, %v3857
    %v3859 = vpop.f32.mrf.mxu0
    %v3860 = vadd.f32 %v3787, %v3859
    %3861 = vmatprep.mubr.bf16.mxu0 %v319
    %3862 = vmatmul.mubr.bf16.gmra.mxu0 %v318
    %v3863 = vpop.f32.mrf.mxu0
    %v3864 = vadd.f32 %v3791, %v3863
    %v3865 = vpop.f32.mrf.mxu0
    %v3866 = vadd.f32 %v3793, %v3865
    %v3867 = vpop.f32.mrf.mxu0
    %v3868 = vadd.f32 %v3795, %v3867
    %v3869 = vpop.f32.mrf.mxu0
    %v3870 = vadd.f32 %v3797, %v3869
    %3871 = vmatprep.mubr.bf16.mxu0 %v327
    %3872 = vmatmul.mubr.bf16.gmra.mxu0 %v326
    %v3873 = vpop.f32.mrf.mxu0
    %v3874 = vadd.f32 %v3801, %v3873
    %v3875 = vpop.f32.mrf.mxu0
    %v3876 = vadd.f32 %v3803, %v3875
    %v3877 = vpop.f32.mrf.mxu0
    %v3878 = vadd.f32 %v3805, %v3877
    %v3879 = vpop.f32.mrf.mxu0
    %v3880 = vadd.f32 %v3807, %v3879
    %3881 = vmatprep.mubr.bf16.mxu0 %v335
    %3882 = vmatmul.mubr.bf16.gmra.mxu0 %v334
    %v3883 = vpop.f32.mrf.mxu0
    %v3884 = vadd.f32 %v3811, %v3883
    %v3885 = vpop.f32.mrf.mxu0
    %v3886 = vadd.f32 %v3813, %v3885
    %v3887 = vpop.f32.mrf.mxu0
    %v3888 = vadd.f32 %v3815, %v3887
    %v3889 = vpop.f32.mrf.mxu0
    %v3890 = vadd.f32 %v3817, %v3889
    %3891 = vdwg.mxu0
    %3892 = vmatprep.subr.bf16.mxu0 %v2745
    %3893 = vmatpush1.bf16.msra.mxu0 %v2744
    %3894 = vmatprep.subr.bf16.mxu0 %v2737
    %3895 = vmatpush1.bf16.msra.mxu0 %v2736
    %3896 = vmatprep.subr.bf16.mxu0 %v2729
    %3897 = vmatpush1.bf16.msra.mxu0 %v2728
    %3898 = vmatprep.subr.bf16.mxu0 %v2721
    %3899 = vmatpush1.bf16.msra.mxu0 %v2720
    %3900 = vmatprep.subr.bf16.mxu0 %v2713
    %3901 = vmatpush1.bf16.msra.mxu0 %v2712
    %3902 = vmatprep.subr.bf16.mxu0 %v2705
    %3903 = vmatpush1.bf16.msra.mxu0 %v2704
    %3904 = vmatprep.subr.bf16.mxu0 %v2697
    %3905 = vmatpush1.bf16.msra.mxu0 %v2696
    %3906 = vmatprep.subr.bf16.mxu0 %v2689
    %3907 = vmatpush1.bf16.msra.mxu0 %v2688
    %3908 = vmatprep.subr.bf16.mxu0 %v2809
    %3909 = vmatpush2.bf16.msra.mxu0 %v2808
    %3910 = vmatprep.subr.bf16.mxu0 %v2801
    %3911 = vmatpush2.bf16.msra.mxu0 %v2800
    %3912 = vmatprep.subr.bf16.mxu0 %v2793
    %3913 = vmatpush2.bf16.msra.mxu0 %v2792
    %3914 = vmatprep.subr.bf16.mxu0 %v2785
    %3915 = vmatpush2.bf16.msra.mxu0 %v2784
    %3916 = vmatprep.subr.bf16.mxu0 %v2777
    %3917 = vmatpush2.bf16.msra.mxu0 %v2776
    %3918 = vmatprep.subr.bf16.mxu0 %v2769
    %3919 = vmatpush2.bf16.msra.mxu0 %v2768
    %3920 = vmatprep.subr.bf16.mxu0 %v2761
    %3921 = vmatpush2.bf16.msra.mxu0 %v2760
    %3922 = vmatprep.subr.bf16.mxu0 %v2753
    %3923 = vmatpush2.bf16.msra.mxu0 %v2752
    %3924 = vmatprep.mubr.bf16.mxu0 %v313
    %3925 = vmatmul.mubr.bf16.gmra.mxu0 %v312
    %v3926 = vpop.f32.mrf.mxu0
    %v3927 = vadd.f32 %v3854, %v3926
    %v3928 = vpop.f32.mrf.mxu0
    %v3929 = vadd.f32 %v3856, %v3928
    %v3930 = vpop.f32.mrf.mxu0
    %v3931 = vadd.f32 %v3858, %v3930
    %v3932 = vpop.f32.mrf.mxu0
    %v3933 = vadd.f32 %v3860, %v3932
    %3934 = vmatprep.mubr.bf16.mxu0 %v321
    %3935 = vmatmul.mubr.bf16.gmra.mxu0 %v320
    %v3936 = vpop.f32.mrf.mxu0
    %v3937 = vadd.f32 %v3864, %v3936
    %v3938 = vpop.f32.mrf.mxu0
    %v3939 = vadd.f32 %v3866, %v3938
    %v3940 = vpop.f32.mrf.mxu0
    %v3941 = vadd.f32 %v3868, %v3940
    %v3942 = vpop.f32.mrf.mxu0
    %v3943 = vadd.f32 %v3870, %v3942
    %3944 = vmatprep.mubr.bf16.mxu0 %v329
    %3945 = vmatmul.mubr.bf16.gmra.mxu0 %v328
    %v3946 = vpop.f32.mrf.mxu0
    %v3947 = vadd.f32 %v3874, %v3946
    %v3948 = vpop.f32.mrf.mxu0
    %v3949 = vadd.f32 %v3876, %v3948
    %v3950 = vpop.f32.mrf.mxu0
    %v3951 = vadd.f32 %v3878, %v3950
    %v3952 = vpop.f32.mrf.mxu0
    %v3953 = vadd.f32 %v3880, %v3952
    %3954 = vmatprep.mubr.bf16.mxu0 %v337
    %3955 = vmatmul.mubr.bf16.gmra.mxu0 %v336
    %v3956 = vpop.f32.mrf.mxu0
    %v3957 = vadd.f32 %v3884, %v3956
    %v3958 = vpop.f32.mrf.mxu0
    %v3959 = vadd.f32 %v3886, %v3958
    %v3960 = vpop.f32.mrf.mxu0
    %v3961 = vadd.f32 %v3888, %v3960
    %v3962 = vpop.f32.mrf.mxu0
    %v3963 = vadd.f32 %v3890, %v3962
    %3964 = vdwg.mxu0
    %3965 = vmatprep.subr.bf16.mxu0 %v2873
    %3966 = vmatpush1.bf16.msra.mxu0 %v2872
    %3967 = vmatprep.subr.bf16.mxu0 %v2865
    %3968 = vmatpush1.bf16.msra.mxu0 %v2864
    %3969 = vmatprep.subr.bf16.mxu0 %v2857
    %3970 = vmatpush1.bf16.msra.mxu0 %v2856
    %3971 = vmatprep.subr.bf16.mxu0 %v2849
    %3972 = vmatpush1.bf16.msra.mxu0 %v2848
    %3973 = vmatprep.subr.bf16.mxu0 %v2841
    %3974 = vmatpush1.bf16.msra.mxu0 %v2840
    %3975 = vmatprep.subr.bf16.mxu0 %v2833
    %3976 = vmatpush1.bf16.msra.mxu0 %v2832
    %3977 = vmatprep.subr.bf16.mxu0 %v2825
    %3978 = vmatpush1.bf16.msra.mxu0 %v2824
    %3979 = vmatprep.subr.bf16.mxu0 %v2817
    %3980 = vmatpush1.bf16.msra.mxu0 %v2816
    %3981 = vmatprep.subr.bf16.mxu0 %v2937
    %3982 = vmatpush2.bf16.msra.mxu0 %v2936
    %3983 = vmatprep.subr.bf16.mxu0 %v2929
    %3984 = vmatpush2.bf16.msra.mxu0 %v2928
    %3985 = vmatprep.subr.bf16.mxu0 %v2921
    %3986 = vmatpush2.bf16.msra.mxu0 %v2920
    %3987 = vmatprep.subr.bf16.mxu0 %v2913
    %3988 = vmatpush2.bf16.msra.mxu0 %v2912
    %3989 = vmatprep.subr.bf16.mxu0 %v2905
    %3990 = vmatpush2.bf16.msra.mxu0 %v2904
    %3991 = vmatprep.subr.bf16.mxu0 %v2897
    %3992 = vmatpush2.bf16.msra.mxu0 %v2896
    %3993 = vmatprep.subr.bf16.mxu0 %v2889
    %3994 = vmatpush2.bf16.msra.mxu0 %v2888
    %3995 = vmatprep.subr.bf16.mxu0 %v2881
    %3996 = vmatpush2.bf16.msra.mxu0 %v2880
    %3997 = vmatprep.mubr.bf16.mxu0 %v315
    %3998 = vmatmul.mubr.bf16.gmra.mxu0 %v314
    %v3999 = vpop.f32.mrf.mxu0
    %v4000 = vadd.f32 %v3927, %v3999
    %v4001 = vpop.f32.mrf.mxu0
    %v4002 = vadd.f32 %v3929, %v4001
    %v4003 = vpop.f32.mrf.mxu0
    %v4004 = vadd.f32 %v3931, %v4003
    %v4005 = vpop.f32.mrf.mxu0
    %v4006 = vadd.f32 %v3933, %v4005
    %4007 = vmatprep.mubr.bf16.mxu0 %v323
    %4008 = vmatmul.mubr.bf16.gmra.mxu0 %v322
    %v4009 = vpop.f32.mrf.mxu0
    %v4010 = vadd.f32 %v3937, %v4009
    %v4011 = vpop.f32.mrf.mxu0
    %v4012 = vadd.f32 %v3939, %v4011
    %v4013 = vpop.f32.mrf.mxu0
    %v4014 = vadd.f32 %v3941, %v4013
    %v4015 = vpop.f32.mrf.mxu0
    %v4016 = vadd.f32 %v3943, %v4015
    %4017 = vmatprep.mubr.bf16.mxu0 %v331
    %4018 = vmatmul.mubr.bf16.gmra.mxu0 %v330
    %v4019 = vpop.f32.mrf.mxu0
    %v4020 = vadd.f32 %v3947, %v4019
    %v4021 = vpop.f32.mrf.mxu0
    %v4022 = vadd.f32 %v3949, %v4021
    %v4023 = vpop.f32.mrf.mxu0
    %v4024 = vadd.f32 %v3951, %v4023
    %v4025 = vpop.f32.mrf.mxu0
    %v4026 = vadd.f32 %v3953, %v4025
    %4027 = vmatprep.mubr.bf16.mxu0 %v339
    %4028 = vmatmul.mubr.bf16.gmra.mxu0 %v338
    %v4029 = vpop.f32.mrf.mxu0
    %v4030 = vadd.f32 %v3957, %v4029
    %v4031 = vpop.f32.mrf.mxu0
    %v4032 = vadd.f32 %v3959, %v4031
    %v4033 = vpop.f32.mrf.mxu0
    %v4034 = vadd.f32 %v3961, %v4033
    %v4035 = vpop.f32.mrf.mxu0
    %v4036 = vadd.f32 %v3963, %v4035
    %4037 = vdwg.mxu0
    %4038 = vmatprep.subr.bf16.mxu0 %v2491
    %4039 = vmatpush1.bf16.msra.mxu0 %v2490
    %4040 = vmatprep.subr.bf16.mxu0 %v2483
    %4041 = vmatpush1.bf16.msra.mxu0 %v2482
    %4042 = vmatprep.subr.bf16.mxu0 %v2475
    %4043 = vmatpush1.bf16.msra.mxu0 %v2474
    %4044 = vmatprep.subr.bf16.mxu0 %v2467
    %4045 = vmatpush1.bf16.msra.mxu0 %v2466
    %4046 = vmatprep.subr.bf16.mxu0 %v2459
    %4047 = vmatpush1.bf16.msra.mxu0 %v2458
    %4048 = vmatprep.subr.bf16.mxu0 %v2451
    %4049 = vmatpush1.bf16.msra.mxu0 %v2450
    %4050 = vmatprep.subr.bf16.mxu0 %v2443
    %4051 = vmatpush1.bf16.msra.mxu0 %v2442
    %4052 = vmatprep.subr.bf16.mxu0 %v2435
    %4053 = vmatpush1.bf16.msra.mxu0 %v2434
    %4054 = vmatprep.subr.bf16.mxu0 %v2555
    %4055 = vmatpush2.bf16.msra.mxu0 %v2554
    %4056 = vmatprep.subr.bf16.mxu0 %v2547
    %4057 = vmatpush2.bf16.msra.mxu0 %v2546
    %4058 = vmatprep.subr.bf16.mxu0 %v2539
    %4059 = vmatpush2.bf16.msra.mxu0 %v2538
    %4060 = vmatprep.subr.bf16.mxu0 %v2531
    %4061 = vmatpush2.bf16.msra.mxu0 %v2530
    %4062 = vmatprep.subr.bf16.mxu0 %v2523
    %4063 = vmatpush2.bf16.msra.mxu0 %v2522
    %4064 = vmatprep.subr.bf16.mxu0 %v2515
    %4065 = vmatpush2.bf16.msra.mxu0 %v2514
    %4066 = vmatprep.subr.bf16.mxu0 %v2507
    %4067 = vmatpush2.bf16.msra.mxu0 %v2506
    %4068 = vmatprep.subr.bf16.mxu0 %v2499
    %4069 = vmatpush2.bf16.msra.mxu0 %v2498
    %4070 = vmatprep.mubr.bf16.mxu0 %v309
    %4071 = vmatmul.mubr.bf16.gmra.mxu0 %v308
    %v4072 = vpop.f32.mrf.mxu0
    %v4073 = vadd.f32 %v873, %v4072
    %v4074 = vpop.f32.mrf.mxu0
    %v4075 = vadd.f32 %v877, %v4074
    %v4076 = vpop.f32.mrf.mxu0
    %v4077 = vadd.f32 %v873, %v4076
    %v4078 = vpop.f32.mrf.mxu0
    %v4079 = vadd.f32 %v877, %v4078
    %4080 = vmatprep.mubr.bf16.mxu0 %v317
    %4081 = vmatmul.mubr.bf16.gmra.mxu0 %v316
    %v4082 = vpop.f32.mrf.mxu0
    %v4083 = vadd.f32 %v873, %v4082
    %v4084 = vpop.f32.mrf.mxu0
    %v4085 = vadd.f32 %v877, %v4084
    %v4086 = vpop.f32.mrf.mxu0
    %v4087 = vadd.f32 %v873, %v4086
    %v4088 = vpop.f32.mrf.mxu0
    %v4089 = vadd.f32 %v877, %v4088
    %4090 = vmatprep.mubr.bf16.mxu0 %v325
    %4091 = vmatmul.mubr.bf16.gmra.mxu0 %v324
    %v4092 = vpop.f32.mrf.mxu0
    %v4093 = vadd.f32 %v873, %v4092
    %v4094 = vpop.f32.mrf.mxu0
    %v4095 = vadd.f32 %v877, %v4094
    %v4096 = vpop.f32.mrf.mxu0
    %v4097 = vadd.f32 %v873, %v4096
    %v4098 = vpop.f32.mrf.mxu0
    %v4099 = vadd.f32 %v877, %v4098
    %4100 = vmatprep.mubr.bf16.mxu0 %v333
    %4101 = vmatmul.mubr.bf16.gmra.mxu0 %v332
    %v4102 = vpop.f32.mrf.mxu0
    %v4103 = vadd.f32 %v873, %v4102
    %v4104 = vpop.f32.mrf.mxu0
    %v4105 = vadd.f32 %v877, %v4104
    %v4106 = vpop.f32.mrf.mxu0
    %v4107 = vadd.f32 %v873, %v4106
    %v4108 = vpop.f32.mrf.mxu0
    %v4109 = vadd.f32 %v877, %v4108
    %4110 = vdwg.mxu0
    %4111 = vmatprep.subr.bf16.mxu0 %v2619
    %4112 = vmatpush1.bf16.msra.mxu0 %v2618
    %4113 = vmatprep.subr.bf16.mxu0 %v2611
    %4114 = vmatpush1.bf16.msra.mxu0 %v2610
    %4115 = vmatprep.subr.bf16.mxu0 %v2603
    %4116 = vmatpush1.bf16.msra.mxu0 %v2602
    %4117 = vmatprep.subr.bf16.mxu0 %v2595
    %4118 = vmatpush1.bf16.msra.mxu0 %v2594
    %4119 = vmatprep.subr.bf16.mxu0 %v2587
    %4120 = vmatpush1.bf16.msra.mxu0 %v2586
    %4121 = vmatprep.subr.bf16.mxu0 %v2579
    %4122 = vmatpush1.bf16.msra.mxu0 %v2578
    %4123 = vmatprep.subr.bf16.mxu0 %v2571
    %4124 = vmatpush1.bf16.msra.mxu0 %v2570
    %4125 = vmatprep.subr.bf16.mxu0 %v2563
    %4126 = vmatpush1.bf16.msra.mxu0 %v2562
    %4127 = vmatprep.subr.bf16.mxu0 %v2683
    %4128 = vmatpush2.bf16.msra.mxu0 %v2682
    %4129 = vmatprep.subr.bf16.mxu0 %v2675
    %4130 = vmatpush2.bf16.msra.mxu0 %v2674
    %4131 = vmatprep.subr.bf16.mxu0 %v2667
    %4132 = vmatpush2.bf16.msra.mxu0 %v2666
    %4133 = vmatprep.subr.bf16.mxu0 %v2659
    %4134 = vmatpush2.bf16.msra.mxu0 %v2658
    %4135 = vmatprep.subr.bf16.mxu0 %v2651
    %4136 = vmatpush2.bf16.msra.mxu0 %v2650
    %4137 = vmatprep.subr.bf16.mxu0 %v2643
    %4138 = vmatpush2.bf16.msra.mxu0 %v2642
    %4139 = vmatprep.subr.bf16.mxu0 %v2635
    %4140 = vmatpush2.bf16.msra.mxu0 %v2634
    %4141 = vmatprep.subr.bf16.mxu0 %v2627
    %4142 = vmatpush2.bf16.msra.mxu0 %v2626
    %4143 = vmatprep.mubr.bf16.mxu0 %v311
    %4144 = vmatmul.mubr.bf16.gmra.mxu0 %v310
    %v4145 = vpop.f32.mrf.mxu0
    %v4146 = vadd.f32 %v4073, %v4145
    %v4147 = vpop.f32.mrf.mxu0
    %v4148 = vadd.f32 %v4075, %v4147
    %v4149 = vpop.f32.mrf.mxu0
    %v4150 = vadd.f32 %v4077, %v4149
    %v4151 = vpop.f32.mrf.mxu0
    %v4152 = vadd.f32 %v4079, %v4151
    %4153 = vmatprep.mubr.bf16.mxu0 %v319
    %4154 = vmatmul.mubr.bf16.gmra.mxu0 %v318
    %v4155 = vpop.f32.mrf.mxu0
    %v4156 = vadd.f32 %v4083, %v4155
    %v4157 = vpop.f32.mrf.mxu0
    %v4158 = vadd.f32 %v4085, %v4157
    %v4159 = vpop.f32.mrf.mxu0
    %v4160 = vadd.f32 %v4087, %v4159
    %v4161 = vpop.f32.mrf.mxu0
    %v4162 = vadd.f32 %v4089, %v4161
    %4163 = vmatprep.mubr.bf16.mxu0 %v327
    %4164 = vmatmul.mubr.bf16.gmra.mxu0 %v326
    %v4165 = vpop.f32.mrf.mxu0
    %v4166 = vadd.f32 %v4093, %v4165
    %v4167 = vpop.f32.mrf.mxu0
    %v4168 = vadd.f32 %v4095, %v4167
    %v4169 = vpop.f32.mrf.mxu0
    %v4170 = vadd.f32 %v4097, %v4169
    %v4171 = vpop.f32.mrf.mxu0
    %v4172 = vadd.f32 %v4099, %v4171
    %4173 = vmatprep.mubr.bf16.mxu0 %v335
    %4174 = vmatmul.mubr.bf16.gmra.mxu0 %v334
    %v4175 = vpop.f32.mrf.mxu0
    %v4176 = vadd.f32 %v4103, %v4175
    %v4177 = vpop.f32.mrf.mxu0
    %v4178 = vadd.f32 %v4105, %v4177
    %v4179 = vpop.f32.mrf.mxu0
    %v4180 = vadd.f32 %v4107, %v4179
    %v4181 = vpop.f32.mrf.mxu0
    %v4182 = vadd.f32 %v4109, %v4181
    %4183 = vdwg.mxu0
    %4184 = vmatprep.subr.bf16.mxu0 %v2747
    %4185 = vmatpush1.bf16.msra.mxu0 %v2746
    %4186 = vmatprep.subr.bf16.mxu0 %v2739
    %4187 = vmatpush1.bf16.msra.mxu0 %v2738
    %4188 = vmatprep.subr.bf16.mxu0 %v2731
    %4189 = vmatpush1.bf16.msra.mxu0 %v2730
    %4190 = vmatprep.subr.bf16.mxu0 %v2723
    %4191 = vmatpush1.bf16.msra.mxu0 %v2722
    %4192 = vmatprep.subr.bf16.mxu0 %v2715
    %4193 = vmatpush1.bf16.msra.mxu0 %v2714
    %4194 = vmatprep.subr.bf16.mxu0 %v2707
    %4195 = vmatpush1.bf16.msra.mxu0 %v2706
    %4196 = vmatprep.subr.bf16.mxu0 %v2699
    %4197 = vmatpush1.bf16.msra.mxu0 %v2698
    %4198 = vmatprep.subr.bf16.mxu0 %v2691
    %4199 = vmatpush1.bf16.msra.mxu0 %v2690
    %4200 = vmatprep.subr.bf16.mxu0 %v2811
    %4201 = vmatpush2.bf16.msra.mxu0 %v2810
    %4202 = vmatprep.subr.bf16.mxu0 %v2803
    %4203 = vmatpush2.bf16.msra.mxu0 %v2802
    %4204 = vmatprep.subr.bf16.mxu0 %v2795
    %4205 = vmatpush2.bf16.msra.mxu0 %v2794
    %4206 = vmatprep.subr.bf16.mxu0 %v2787
    %4207 = vmatpush2.bf16.msra.mxu0 %v2786
    %4208 = vmatprep.subr.bf16.mxu0 %v2779
    %4209 = vmatpush2.bf16.msra.mxu0 %v2778
    %4210 = vmatprep.subr.bf16.mxu0 %v2771
    %4211 = vmatpush2.bf16.msra.mxu0 %v2770
    %4212 = vmatprep.subr.bf16.mxu0 %v2763
    %4213 = vmatpush2.bf16.msra.mxu0 %v2762
    %4214 = vmatprep.subr.bf16.mxu0 %v2755
    %4215 = vmatpush2.bf16.msra.mxu0 %v2754
    %4216 = vmatprep.mubr.bf16.mxu0 %v313
    %4217 = vmatmul.mubr.bf16.gmra.mxu0 %v312
    %v4218 = vpop.f32.mrf.mxu0
    %v4219 = vadd.f32 %v4146, %v4218
    %v4220 = vpop.f32.mrf.mxu0
    %v4221 = vadd.f32 %v4148, %v4220
    %v4222 = vpop.f32.mrf.mxu0
    %v4223 = vadd.f32 %v4150, %v4222
    %v4224 = vpop.f32.mrf.mxu0
    %v4225 = vadd.f32 %v4152, %v4224
    %4226 = vmatprep.mubr.bf16.mxu0 %v321
    %4227 = vmatmul.mubr.bf16.gmra.mxu0 %v320
    %v4228 = vpop.f32.mrf.mxu0
    %v4229 = vadd.f32 %v4156, %v4228
    %v4230 = vpop.f32.mrf.mxu0
    %v4231 = vadd.f32 %v4158, %v4230
    %v4232 = vpop.f32.mrf.mxu0
    %v4233 = vadd.f32 %v4160, %v4232
    %v4234 = vpop.f32.mrf.mxu0
    %v4235 = vadd.f32 %v4162, %v4234
    %4236 = vmatprep.mubr.bf16.mxu0 %v329
    %4237 = vmatmul.mubr.bf16.gmra.mxu0 %v328
    %v4238 = vpop.f32.mrf.mxu0
    %v4239 = vadd.f32 %v4166, %v4238
    %v4240 = vpop.f32.mrf.mxu0
    %v4241 = vadd.f32 %v4168, %v4240
    %v4242 = vpop.f32.mrf.mxu0
    %v4243 = vadd.f32 %v4170, %v4242
    %v4244 = vpop.f32.mrf.mxu0
    %v4245 = vadd.f32 %v4172, %v4244
    %4246 = vmatprep.mubr.bf16.mxu0 %v337
    %4247 = vmatmul.mubr.bf16.gmra.mxu0 %v336
    %v4248 = vpop.f32.mrf.mxu0
    %v4249 = vadd.f32 %v4176, %v4248
    %v4250 = vpop.f32.mrf.mxu0
    %v4251 = vadd.f32 %v4178, %v4250
    %v4252 = vpop.f32.mrf.mxu0
    %v4253 = vadd.f32 %v4180, %v4252
    %v4254 = vpop.f32.mrf.mxu0
    %v4255 = vadd.f32 %v4182, %v4254
    %4256 = vdwg.mxu0
    %4257 = vmatprep.subr.bf16.mxu0 %v2875
    %4258 = vmatpush1.bf16.msra.mxu0 %v2874
    %4259 = vmatprep.subr.bf16.mxu0 %v2867
    %4260 = vmatpush1.bf16.msra.mxu0 %v2866
    %4261 = vmatprep.subr.bf16.mxu0 %v2859
    %4262 = vmatpush1.bf16.msra.mxu0 %v2858
    %4263 = vmatprep.subr.bf16.mxu0 %v2851
    %4264 = vmatpush1.bf16.msra.mxu0 %v2850
    %4265 = vmatprep.subr.bf16.mxu0 %v2843
    %4266 = vmatpush1.bf16.msra.mxu0 %v2842
    %4267 = vmatprep.subr.bf16.mxu0 %v2835
    %4268 = vmatpush1.bf16.msra.mxu0 %v2834
    %4269 = vmatprep.subr.bf16.mxu0 %v2827
    %4270 = vmatpush1.bf16.msra.mxu0 %v2826
    %4271 = vmatprep.subr.bf16.mxu0 %v2819
    %4272 = vmatpush1.bf16.msra.mxu0 %v2818
    %4273 = vmatprep.subr.bf16.mxu0 %v2939
    %4274 = vmatpush2.bf16.msra.mxu0 %v2938
    %4275 = vmatprep.subr.bf16.mxu0 %v2931
    %4276 = vmatpush2.bf16.msra.mxu0 %v2930
    %4277 = vmatprep.subr.bf16.mxu0 %v2923
    %4278 = vmatpush2.bf16.msra.mxu0 %v2922
    %4279 = vmatprep.subr.bf16.mxu0 %v2915
    %4280 = vmatpush2.bf16.msra.mxu0 %v2914
    %4281 = vmatprep.subr.bf16.mxu0 %v2907
    %4282 = vmatpush2.bf16.msra.mxu0 %v2906
    %4283 = vmatprep.subr.bf16.mxu0 %v2899
    %4284 = vmatpush2.bf16.msra.mxu0 %v2898
    %4285 = vmatprep.subr.bf16.mxu0 %v2891
    %4286 = vmatpush2.bf16.msra.mxu0 %v2890
    %4287 = vmatprep.subr.bf16.mxu0 %v2883
    %4288 = vmatpush2.bf16.msra.mxu0 %v2882
    %4289 = vmatprep.mubr.bf16.mxu0 %v315
    %4290 = vmatmul.mubr.bf16.gmra.mxu0 %v314
    %v4291 = vpop.f32.mrf.mxu0
    %v4292 = vadd.f32 %v4219, %v4291
    %v4293 = vpop.f32.mrf.mxu0
    %v4294 = vadd.f32 %v4221, %v4293
    %v4295 = vpop.f32.mrf.mxu0
    %v4296 = vadd.f32 %v4223, %v4295
    %v4297 = vpop.f32.mrf.mxu0
    %v4298 = vadd.f32 %v4225, %v4297
    %4299 = vmatprep.mubr.bf16.mxu0 %v323
    %4300 = vmatmul.mubr.bf16.gmra.mxu0 %v322
    %v4301 = vpop.f32.mrf.mxu0
    %v4302 = vadd.f32 %v4229, %v4301
    %v4303 = vpop.f32.mrf.mxu0
    %v4304 = vadd.f32 %v4231, %v4303
    %v4305 = vpop.f32.mrf.mxu0
    %v4306 = vadd.f32 %v4233, %v4305
    %v4307 = vpop.f32.mrf.mxu0
    %v4308 = vadd.f32 %v4235, %v4307
    %4309 = vmatprep.mubr.bf16.mxu0 %v331
    %4310 = vmatmul.mubr.bf16.gmra.mxu0 %v330
    %v4311 = vpop.f32.mrf.mxu0
    %v4312 = vadd.f32 %v4239, %v4311
    %v4313 = vpop.f32.mrf.mxu0
    %v4314 = vadd.f32 %v4241, %v4313
    %v4315 = vpop.f32.mrf.mxu0
    %v4316 = vadd.f32 %v4243, %v4315
    %v4317 = vpop.f32.mrf.mxu0
    %v4318 = vadd.f32 %v4245, %v4317
    %4319 = vmatprep.mubr.bf16.mxu0 %v339
    %4320 = vmatmul.mubr.bf16.gmra.mxu0 %v338
    %v4321 = vpop.f32.mrf.mxu0
    %v4322 = vadd.f32 %v4249, %v4321
    %v4323 = vpop.f32.mrf.mxu0
    %v4324 = vadd.f32 %v4251, %v4323
    %v4325 = vpop.f32.mrf.mxu0
    %v4326 = vadd.f32 %v4253, %v4325
    %v4327 = vpop.f32.mrf.mxu0
    %v4328 = vadd.f32 %v4255, %v4327
    %4329 = vdwg.mxu0
    %4330 = vmatprep.subr.bf16.mxu0 %v2493
    %4331 = vmatpush1.bf16.msra.mxu0 %v2492
    %4332 = vmatprep.subr.bf16.mxu0 %v2485
    %4333 = vmatpush1.bf16.msra.mxu0 %v2484
    %4334 = vmatprep.subr.bf16.mxu0 %v2477
    %4335 = vmatpush1.bf16.msra.mxu0 %v2476
    %4336 = vmatprep.subr.bf16.mxu0 %v2469
    %4337 = vmatpush1.bf16.msra.mxu0 %v2468
    %4338 = vmatprep.subr.bf16.mxu0 %v2461
    %4339 = vmatpush1.bf16.msra.mxu0 %v2460
    %4340 = vmatprep.subr.bf16.mxu0 %v2453
    %4341 = vmatpush1.bf16.msra.mxu0 %v2452
    %4342 = vmatprep.subr.bf16.mxu0 %v2445
    %4343 = vmatpush1.bf16.msra.mxu0 %v2444
    %4344 = vmatprep.subr.bf16.mxu0 %v2437
    %4345 = vmatpush1.bf16.msra.mxu0 %v2436
    %4346 = vmatprep.subr.bf16.mxu0 %v2557
    %4347 = vmatpush2.bf16.msra.mxu0 %v2556
    %4348 = vmatprep.subr.bf16.mxu0 %v2549
    %4349 = vmatpush2.bf16.msra.mxu0 %v2548
    %4350 = vmatprep.subr.bf16.mxu0 %v2541
    %4351 = vmatpush2.bf16.msra.mxu0 %v2540
    %4352 = vmatprep.subr.bf16.mxu0 %v2533
    %4353 = vmatpush2.bf16.msra.mxu0 %v2532
    %4354 = vmatprep.subr.bf16.mxu0 %v2525
    %4355 = vmatpush2.bf16.msra.mxu0 %v2524
    %4356 = vmatprep.subr.bf16.mxu0 %v2517
    %4357 = vmatpush2.bf16.msra.mxu0 %v2516
    %4358 = vmatprep.subr.bf16.mxu0 %v2509
    %4359 = vmatpush2.bf16.msra.mxu0 %v2508
    %4360 = vmatprep.subr.bf16.mxu0 %v2501
    %4361 = vmatpush2.bf16.msra.mxu0 %v2500
    %4362 = vmatprep.mubr.bf16.mxu0 %v309
    %4363 = vmatmul.mubr.bf16.gmra.mxu0 %v308
    %v4364 = vpop.f32.mrf.mxu0
    %v4365 = vadd.f32 %v881, %v4364
    %v4366 = vpop.f32.mrf.mxu0
    %v4367 = vadd.f32 %v885, %v4366
    %v4368 = vpop.f32.mrf.mxu0
    %v4369 = vadd.f32 %v881, %v4368
    %v4370 = vpop.f32.mrf.mxu0
    %v4371 = vadd.f32 %v885, %v4370
    %4372 = vmatprep.mubr.bf16.mxu0 %v317
    %4373 = vmatmul.mubr.bf16.gmra.mxu0 %v316
    %v4374 = vpop.f32.mrf.mxu0
    %v4375 = vadd.f32 %v881, %v4374
    %v4376 = vpop.f32.mrf.mxu0
    %v4377 = vadd.f32 %v885, %v4376
    %v4378 = vpop.f32.mrf.mxu0
    %v4379 = vadd.f32 %v881, %v4378
    %v4380 = vpop.f32.mrf.mxu0
    %v4381 = vadd.f32 %v885, %v4380
    %4382 = vmatprep.mubr.bf16.mxu0 %v325
    %4383 = vmatmul.mubr.bf16.gmra.mxu0 %v324
    %v4384 = vpop.f32.mrf.mxu0
    %v4385 = vadd.f32 %v881, %v4384
    %v4386 = vpop.f32.mrf.mxu0
    %v4387 = vadd.f32 %v885, %v4386
    %v4388 = vpop.f32.mrf.mxu0
    %v4389 = vadd.f32 %v881, %v4388
    %v4390 = vpop.f32.mrf.mxu0
    %v4391 = vadd.f32 %v885, %v4390
    %4392 = vmatprep.mubr.bf16.mxu0 %v333
    %4393 = vmatmul.mubr.bf16.gmra.mxu0 %v332
    %v4394 = vpop.f32.mrf.mxu0
    %v4395 = vadd.f32 %v881, %v4394
    %v4396 = vpop.f32.mrf.mxu0
    %v4397 = vadd.f32 %v885, %v4396
    %v4398 = vpop.f32.mrf.mxu0
    %v4399 = vadd.f32 %v881, %v4398
    %v4400 = vpop.f32.mrf.mxu0
    %v4401 = vadd.f32 %v885, %v4400
    %4402 = vdwg.mxu0
    %4403 = vmatprep.subr.bf16.mxu0 %v2621
    %4404 = vmatpush1.bf16.msra.mxu0 %v2620
    %4405 = vmatprep.subr.bf16.mxu0 %v2613
    %4406 = vmatpush1.bf16.msra.mxu0 %v2612
    %4407 = vmatprep.subr.bf16.mxu0 %v2605
    %4408 = vmatpush1.bf16.msra.mxu0 %v2604
    %4409 = vmatprep.subr.bf16.mxu0 %v2597
    %4410 = vmatpush1.bf16.msra.mxu0 %v2596
    %4411 = vmatprep.subr.bf16.mxu0 %v2589
    %4412 = vmatpush1.bf16.msra.mxu0 %v2588
    %4413 = vmatprep.subr.bf16.mxu0 %v2581
    %4414 = vmatpush1.bf16.msra.mxu0 %v2580
    %4415 = vmatprep.subr.bf16.mxu0 %v2573
    %4416 = vmatpush1.bf16.msra.mxu0 %v2572
    %4417 = vmatprep.subr.bf16.mxu0 %v2565
    %4418 = vmatpush1.bf16.msra.mxu0 %v2564
    %4419 = vmatprep.subr.bf16.mxu0 %v2685
    %4420 = vmatpush2.bf16.msra.mxu0 %v2684
    %4421 = vmatprep.subr.bf16.mxu0 %v2677
    %4422 = vmatpush2.bf16.msra.mxu0 %v2676
    %4423 = vmatprep.subr.bf16.mxu0 %v2669
    %4424 = vmatpush2.bf16.msra.mxu0 %v2668
    %4425 = vmatprep.subr.bf16.mxu0 %v2661
    %4426 = vmatpush2.bf16.msra.mxu0 %v2660
    %4427 = vmatprep.subr.bf16.mxu0 %v2653
    %4428 = vmatpush2.bf16.msra.mxu0 %v2652
    %4429 = vmatprep.subr.bf16.mxu0 %v2645
    %4430 = vmatpush2.bf16.msra.mxu0 %v2644
    %4431 = vmatprep.subr.bf16.mxu0 %v2637
    %4432 = vmatpush2.bf16.msra.mxu0 %v2636
    %4433 = vmatprep.subr.bf16.mxu0 %v2629
    %4434 = vmatpush2.bf16.msra.mxu0 %v2628
    %4435 = vmatprep.mubr.bf16.mxu0 %v311
    %4436 = vmatmul.mubr.bf16.gmra.mxu0 %v310
    %v4437 = vpop.f32.mrf.mxu0
    %v4438 = vadd.f32 %v4365, %v4437
    %v4439 = vpop.f32.mrf.mxu0
    %v4440 = vadd.f32 %v4367, %v4439
    %v4441 = vpop.f32.mrf.mxu0
    %v4442 = vadd.f32 %v4369, %v4441
    %v4443 = vpop.f32.mrf.mxu0
    %v4444 = vadd.f32 %v4371, %v4443
    %4445 = vmatprep.mubr.bf16.mxu0 %v319
    %4446 = vmatmul.mubr.bf16.gmra.mxu0 %v318
    %v4447 = vpop.f32.mrf.mxu0
    %v4448 = vadd.f32 %v4375, %v4447
    %v4449 = vpop.f32.mrf.mxu0
    %v4450 = vadd.f32 %v4377, %v4449
    %v4451 = vpop.f32.mrf.mxu0
    %v4452 = vadd.f32 %v4379, %v4451
    %v4453 = vpop.f32.mrf.mxu0
    %v4454 = vadd.f32 %v4381, %v4453
    %4455 = vmatprep.mubr.bf16.mxu0 %v327
    %4456 = vmatmul.mubr.bf16.gmra.mxu0 %v326
    %v4457 = vpop.f32.mrf.mxu0
    %v4458 = vadd.f32 %v4385, %v4457
    %v4459 = vpop.f32.mrf.mxu0
    %v4460 = vadd.f32 %v4387, %v4459
    %v4461 = vpop.f32.mrf.mxu0
    %v4462 = vadd.f32 %v4389, %v4461
    %v4463 = vpop.f32.mrf.mxu0
    %v4464 = vadd.f32 %v4391, %v4463
    %4465 = vmatprep.mubr.bf16.mxu0 %v335
    %4466 = vmatmul.mubr.bf16.gmra.mxu0 %v334
    %v4467 = vpop.f32.mrf.mxu0
    %v4468 = vadd.f32 %v4395, %v4467
    %v4469 = vpop.f32.mrf.mxu0
    %v4470 = vadd.f32 %v4397, %v4469
    %v4471 = vpop.f32.mrf.mxu0
    %v4472 = vadd.f32 %v4399, %v4471
    %v4473 = vpop.f32.mrf.mxu0
    %v4474 = vadd.f32 %v4401, %v4473
    %4475 = vdwg.mxu0
    %4476 = vmatprep.subr.bf16.mxu0 %v2749
    %4477 = vmatpush1.bf16.msra.mxu0 %v2748
    %4478 = vmatprep.subr.bf16.mxu0 %v2741
    %4479 = vmatpush1.bf16.msra.mxu0 %v2740
    %4480 = vmatprep.subr.bf16.mxu0 %v2733
    %4481 = vmatpush1.bf16.msra.mxu0 %v2732
    %4482 = vmatprep.subr.bf16.mxu0 %v2725
    %4483 = vmatpush1.bf16.msra.mxu0 %v2724
    %4484 = vmatprep.subr.bf16.mxu0 %v2717
    %4485 = vmatpush1.bf16.msra.mxu0 %v2716
    %4486 = vmatprep.subr.bf16.mxu0 %v2709
    %4487 = vmatpush1.bf16.msra.mxu0 %v2708
    %4488 = vmatprep.subr.bf16.mxu0 %v2701
    %4489 = vmatpush1.bf16.msra.mxu0 %v2700
    %4490 = vmatprep.subr.bf16.mxu0 %v2693
    %4491 = vmatpush1.bf16.msra.mxu0 %v2692
    %4492 = vmatprep.subr.bf16.mxu0 %v2813
    %4493 = vmatpush2.bf16.msra.mxu0 %v2812
    %4494 = vmatprep.subr.bf16.mxu0 %v2805
    %4495 = vmatpush2.bf16.msra.mxu0 %v2804
    %4496 = vmatprep.subr.bf16.mxu0 %v2797
    %4497 = vmatpush2.bf16.msra.mxu0 %v2796
    %4498 = vmatprep.subr.bf16.mxu0 %v2789
    %4499 = vmatpush2.bf16.msra.mxu0 %v2788
    %4500 = vmatprep.subr.bf16.mxu0 %v2781
    %4501 = vmatpush2.bf16.msra.mxu0 %v2780
    %4502 = vmatprep.subr.bf16.mxu0 %v2773
    %4503 = vmatpush2.bf16.msra.mxu0 %v2772
    %4504 = vmatprep.subr.bf16.mxu0 %v2765
    %4505 = vmatpush2.bf16.msra.mxu0 %v2764
    %4506 = vmatprep.subr.bf16.mxu0 %v2757
    %4507 = vmatpush2.bf16.msra.mxu0 %v2756
    %4508 = vmatprep.mubr.bf16.mxu0 %v313
    %4509 = vmatmul.mubr.bf16.gmra.mxu0 %v312
    %v4510 = vpop.f32.mrf.mxu0
    %v4511 = vadd.f32 %v4438, %v4510
    %v4512 = vpop.f32.mrf.mxu0
    %v4513 = vadd.f32 %v4440, %v4512
    %v4514 = vpop.f32.mrf.mxu0
    %v4515 = vadd.f32 %v4442, %v4514
    %v4516 = vpop.f32.mrf.mxu0
    %v4517 = vadd.f32 %v4444, %v4516
    %4518 = vmatprep.mubr.bf16.mxu0 %v321
    %4519 = vmatmul.mubr.bf16.gmra.mxu0 %v320
    %v4520 = vpop.f32.mrf.mxu0
    %v4521 = vadd.f32 %v4448, %v4520
    %v4522 = vpop.f32.mrf.mxu0
    %v4523 = vadd.f32 %v4450, %v4522
    %v4524 = vpop.f32.mrf.mxu0
    %v4525 = vadd.f32 %v4452, %v4524
    %v4526 = vpop.f32.mrf.mxu0
    %v4527 = vadd.f32 %v4454, %v4526
    %4528 = vmatprep.mubr.bf16.mxu0 %v329
    %4529 = vmatmul.mubr.bf16.gmra.mxu0 %v328
    %v4530 = vpop.f32.mrf.mxu0
    %v4531 = vadd.f32 %v4458, %v4530
    %v4532 = vpop.f32.mrf.mxu0
    %v4533 = vadd.f32 %v4460, %v4532
    %v4534 = vpop.f32.mrf.mxu0
    %v4535 = vadd.f32 %v4462, %v4534
    %v4536 = vpop.f32.mrf.mxu0
    %v4537 = vadd.f32 %v4464, %v4536
    %4538 = vmatprep.mubr.bf16.mxu0 %v337
    %4539 = vmatmul.mubr.bf16.gmra.mxu0 %v336
    %v4540 = vpop.f32.mrf.mxu0
    %v4541 = vadd.f32 %v4468, %v4540
    %v4542 = vpop.f32.mrf.mxu0
    %v4543 = vadd.f32 %v4470, %v4542
    %v4544 = vpop.f32.mrf.mxu0
    %v4545 = vadd.f32 %v4472, %v4544
    %v4546 = vpop.f32.mrf.mxu0
    %v4547 = vadd.f32 %v4474, %v4546
    %4548 = vdwg.mxu0
    %4549 = vmatprep.subr.bf16.mxu0 %v2877
    %4550 = vmatpush1.bf16.msra.mxu0 %v2876
    %4551 = vmatprep.subr.bf16.mxu0 %v2869
    %4552 = vmatpush1.bf16.msra.mxu0 %v2868
    %4553 = vmatprep.subr.bf16.mxu0 %v2861
    %4554 = vmatpush1.bf16.msra.mxu0 %v2860
    %4555 = vmatprep.subr.bf16.mxu0 %v2853
    %4556 = vmatpush1.bf16.msra.mxu0 %v2852
    %4557 = vmatprep.subr.bf16.mxu0 %v2845
    %4558 = vmatpush1.bf16.msra.mxu0 %v2844
    %4559 = vmatprep.subr.bf16.mxu0 %v2837
    %4560 = vmatpush1.bf16.msra.mxu0 %v2836
    %4561 = vmatprep.subr.bf16.mxu0 %v2829
    %4562 = vmatpush1.bf16.msra.mxu0 %v2828
    %4563 = vmatprep.subr.bf16.mxu0 %v2821
    %4564 = vmatpush1.bf16.msra.mxu0 %v2820
    %4565 = vmatprep.subr.bf16.mxu0 %v2941
    %4566 = vmatpush2.bf16.msra.mxu0 %v2940
    %4567 = vmatprep.subr.bf16.mxu0 %v2933
    %4568 = vmatpush2.bf16.msra.mxu0 %v2932
    %4569 = vmatprep.subr.bf16.mxu0 %v2925
    %4570 = vmatpush2.bf16.msra.mxu0 %v2924
    %4571 = vmatprep.subr.bf16.mxu0 %v2917
    %4572 = vmatpush2.bf16.msra.mxu0 %v2916
    %4573 = vmatprep.subr.bf16.mxu0 %v2909
    %4574 = vmatpush2.bf16.msra.mxu0 %v2908
    %4575 = vmatprep.subr.bf16.mxu0 %v2901
    %4576 = vmatpush2.bf16.msra.mxu0 %v2900
    %4577 = vmatprep.subr.bf16.mxu0 %v2893
    %4578 = vmatpush2.bf16.msra.mxu0 %v2892
    %4579 = vmatprep.subr.bf16.mxu0 %v2885
    %4580 = vmatpush2.bf16.msra.mxu0 %v2884
    %4581 = vmatprep.mubr.bf16.mxu0 %v315
    %4582 = vmatmul.mubr.bf16.gmra.mxu0 %v314
    %v4583 = vpop.f32.mrf.mxu0
    %v4584 = vadd.f32 %v4511, %v4583
    %v4585 = vpop.f32.mrf.mxu0
    %v4586 = vadd.f32 %v4513, %v4585
    %v4587 = vpop.f32.mrf.mxu0
    %v4588 = vadd.f32 %v4515, %v4587
    %v4589 = vpop.f32.mrf.mxu0
    %v4590 = vadd.f32 %v4517, %v4589
    %4591 = vmatprep.mubr.bf16.mxu0 %v323
    %4592 = vmatmul.mubr.bf16.gmra.mxu0 %v322
    %v4593 = vpop.f32.mrf.mxu0
    %v4594 = vadd.f32 %v4521, %v4593
    %v4595 = vpop.f32.mrf.mxu0
    %v4596 = vadd.f32 %v4523, %v4595
    %v4597 = vpop.f32.mrf.mxu0
    %v4598 = vadd.f32 %v4525, %v4597
    %v4599 = vpop.f32.mrf.mxu0
    %v4600 = vadd.f32 %v4527, %v4599
    %4601 = vmatprep.mubr.bf16.mxu0 %v331
    %4602 = vmatmul.mubr.bf16.gmra.mxu0 %v330
    %v4603 = vpop.f32.mrf.mxu0
    %v4604 = vadd.f32 %v4531, %v4603
    %v4605 = vpop.f32.mrf.mxu0
    %v4606 = vadd.f32 %v4533, %v4605
    %v4607 = vpop.f32.mrf.mxu0
    %v4608 = vadd.f32 %v4535, %v4607
    %v4609 = vpop.f32.mrf.mxu0
    %v4610 = vadd.f32 %v4537, %v4609
    %4611 = vmatprep.mubr.bf16.mxu0 %v339
    %4612 = vmatmul.mubr.bf16.gmra.mxu0 %v338
    %v4613 = vpop.f32.mrf.mxu0
    %v4614 = vadd.f32 %v4541, %v4613
    %v4615 = vpop.f32.mrf.mxu0
    %v4616 = vadd.f32 %v4543, %v4615
    %v4617 = vpop.f32.mrf.mxu0
    %v4618 = vadd.f32 %v4545, %v4617
    %v4619 = vpop.f32.mrf.mxu0
    %v4620 = vadd.f32 %v4547, %v4619
    %4621 = vdwg.mxu0
    %4622 = vst [vmem:[#allocation2] sm:$0xff] %v3708
    %4623 = vst [vmem:[#allocation2 + $0x8] sm:$0xff] %v3710
    %4624 = vst [vmem:[#allocation2 + $0x10] sm:$0xff] %v4000
    %4625 = vst [vmem:[#allocation2 + $0x18] sm:$0xff] %v4002
    %4626 = vst [vmem:[#allocation2 + $0x20] sm:$0xff] %v4292
    %4627 = vst [vmem:[#allocation2 + $0x28] sm:$0xff] %v4294
    %4628 = vst [vmem:[#allocation2 + $0x30] sm:$0xff] %v4584
    %4629 = vst [vmem:[#allocation2 + $0x38] sm:$0xff] %v4586
    %4630 = vst [vmem:[#allocation2 + $0x40] sm:$0xff] %v3712
    %4631 = vst [vmem:[#allocation2 + $0x48] sm:$0xff] %v3714
    %4632 = vst [vmem:[#allocation2 + $0x50] sm:$0xff] %v4004
    %4633 = vst [vmem:[#allocation2 + $0x58] sm:$0xff] %v4006
    %4634 = vst [vmem:[#allocation2 + $0x60] sm:$0xff] %v4296
    %4635 = vst [vmem:[#allocation2 + $0x68] sm:$0xff] %v4298
    %4636 = vst [vmem:[#allocation2 + $0x70] sm:$0xff] %v4588
    %4637 = vst [vmem:[#allocation2 + $0x78] sm:$0xff] %v4590
    %4638 = vst [vmem:[#allocation2 + $0x80] sm:$0xff] %v3718
    %4639 = vst [vmem:[#allocation2 + $0x88] sm:$0xff] %v3720
    %4640 = vst [vmem:[#allocation2 + $0x90] sm:$0xff] %v4010
    %4641 = vst [vmem:[#allocation2 + $0x98] sm:$0xff] %v4012
    %4642 = vst [vmem:[#allocation2 + $0xa0] sm:$0xff] %v4302
    %4643 = vst [vmem:[#allocation2 + $0xa8] sm:$0xff] %v4304
    %4644 = vst [vmem:[#allocation2 + $0xb0] sm:$0xff] %v4594
    %4645 = vst [vmem:[#allocation2 + $0xb8] sm:$0xff] %v4596
    %4646 = vst [vmem:[#allocation2 + $0xc0] sm:$0xff] %v3722
    %4647 = vst [vmem:[#allocation2 + $0xc8] sm:$0xff] %v3724
    %4648 = vst [vmem:[#allocation2 + $0xd0] sm:$0xff] %v4014
    %4649 = vst [vmem:[#allocation2 + $0xd8] sm:$0xff] %v4016
    %4650 = vst [vmem:[#allocation2 + $0xe0] sm:$0xff] %v4306
    %4651 = vst [vmem:[#allocation2 + $0xe8] sm:$0xff] %v4308
    %4652 = vst [vmem:[#allocation2 + $0xf0] sm:$0xff] %v4598
    %4653 = vst [vmem:[#allocation2 + $0xf8] sm:$0xff] %v4600
    %4654 = vst [vmem:[#allocation2 + $0x100] sm:$0xff] %v3728
    %4655 = vst [vmem:[#allocation2 + $0x108] sm:$0xff] %v3730
    %4656 = vst [vmem:[#allocation2 + $0x110] sm:$0xff] %v4020
    %4657 = vst [vmem:[#allocation2 + $0x118] sm:$0xff] %v4022
    %4658 = vst [vmem:[#allocation2 + $0x120] sm:$0xff] %v4312
    %4659 = vst [vmem:[#allocation2 + $0x128] sm:$0xff] %v4314
    %4660 = vst [vmem:[#allocation2 + $0x130] sm:$0xff] %v4604
    %4661 = vst [vmem:[#allocation2 + $0x138] sm:$0xff] %v4606
    %4662 = vst [vmem:[#allocation2 + $0x140] sm:$0xff] %v3732
    %4663 = vst [vmem:[#allocation2 + $0x148] sm:$0xff] %v3734
    %4664 = vst [vmem:[#allocation2 + $0x150] sm:$0xff] %v4024
    %4665 = vst [vmem:[#allocation2 + $0x158] sm:$0xff] %v4026
    %4666 = vst [vmem:[#allocation2 + $0x160] sm:$0xff] %v4316
    %4667 = vst [vmem:[#allocation2 + $0x168] sm:$0xff] %v4318
    %4668 = vst [vmem:[#allocation2 + $0x170] sm:$0xff] %v4608
    %4669 = vst [vmem:[#allocation2 + $0x178] sm:$0xff] %v4610
    %4670 = vst [vmem:[#allocation2 + $0x180] sm:$0xff] %v3738
    %4671 = vst [vmem:[#allocation2 + $0x188] sm:$0xff] %v3740
    %4672 = vst [vmem:[#allocation2 + $0x190] sm:$0xff] %v4030
    %4673 = vst [vmem:[#allocation2 + $0x198] sm:$0xff] %v4032
    %4674 = vst [vmem:[#allocation2 + $0x1a0] sm:$0xff] %v4322
    %4675 = vst [vmem:[#allocation2 + $0x1a8] sm:$0xff] %v4324
    %4676 = vst [vmem:[#allocation2 + $0x1b0] sm:$0xff] %v4614
    %4677 = vst [vmem:[#allocation2 + $0x1b8] sm:$0xff] %v4616
    %4678 = vst [vmem:[#allocation2 + $0x1c0] sm:$0xff] %v3742
    %4679 = vst [vmem:[#allocation2 + $0x1c8] sm:$0xff] %v3744
    %4680 = vst [vmem:[#allocation2 + $0x1d0] sm:$0xff] %v4034
    %4681 = vst [vmem:[#allocation2 + $0x1d8] sm:$0xff] %v4036
    %4682 = vst [vmem:[#allocation2 + $0x1e0] sm:$0xff] %v4326
    %4683 = vst [vmem:[#allocation2 + $0x1e8] sm:$0xff] %v4328
    %4684 = vst [vmem:[#allocation2 + $0x1f0] sm:$0xff] %v4618
    %4685 = vst [vmem:[#allocation2 + $0x1f8] sm:$0xff] %v4620
    %v4686 = vld [vmem:[#allocation2] sm:$0xff]
    %v4687 = vld [vmem:[#allocation2 + $0x8] sm:$0xff]
    %v4688 = vld [vmem:[#allocation2 + $0x10] sm:$0xff]
    %v4689 = vld [vmem:[#allocation2 + $0x18] sm:$0xff]
    %v4690 = vxor.u32 %v4686, 2147483648
    %v4691 = vxor.u32 %v4687, 2147483648
    %v4692 = vxor.u32 %v4688, 2147483648
    %v4693 = vmul.f32 %v4690, 1.442695
    %v4694 = vpow.pop %v4693
    %v4695 = vmul.f32 %v4691, 1.442695
    %v4696 = vpow.pop %v4695
    %v4697 = vmul.f32 %v4692, 1.442695
    %v4698 = vpow.pop %v4697
    %v4699 = vadd.f32 %v4694, 1.0
    %v4700 = vadd.f32 %v4696, 1.0
    %v4701 = vadd.f32 %v4698, 1.0
    %v4702 = vrcp.pop %v4699
    %v4703 = vmul.f32 1.0, %v4702
    %v4704 = vrcp.pop %v4700
    %v4705 = vmul.f32 1.0, %v4704
    %v4706 = vrcp.pop %v4701
    %v4707 = vmul.f32 1.0, %v4706
    %v4708 = vtanh.pop %v4689
    %v4709 = vmul.f32 %v4705, 0.0
    %v4710 = vmul.f32 %v4703, %v4708
    %v4711 = vadd.f32 %v4709, %v4710
    %v4712 = vtanh.pop %v4711
    %v4713 = vmul.f32 %v4707, %v4712
    %v4714 = vld [vmem:[#allocation2 + $0x1e0] sm:$0xff]
    %v4715 = vld [vmem:[#allocation2 + $0x1e8] sm:$0xff]
    %v4716 = vld [vmem:[#allocation2 + $0x1f0] sm:$0xff]
    %v4717 = vld [vmem:[#allocation2 + $0x1f8] sm:$0xff]
    %v4718 = vxor.u32 %v4714, 2147483648
    %v4719 = vxor.u32 %v4715, 2147483648
    %v4720 = vxor.u32 %v4716, 2147483648
    %v4721 = vmul.f32 %v4718, 1.442695
    %v4722 = vpow.pop %v4721
    %v4723 = vmul.f32 %v4719, 1.442695
    %v4724 = vpow.pop %v4723
    %v4725 = vmul.f32 %v4720, 1.442695
    %v4726 = vpow.pop %v4725
    %v4727 = vadd.f32 %v4722, 1.0
    %v4728 = vadd.f32 %v4724, 1.0
    %v4729 = vadd.f32 %v4726, 1.0
    %v4730 = vrcp.pop %v4727
    %v4731 = vmul.f32 1.0, %v4730
    %v4732 = vrcp.pop %v4728
    %v4733 = vmul.f32 1.0, %v4732
    %v4734 = vrcp.pop %v4729
    %v4735 = vmul.f32 1.0, %v4734
    %v4736 = vtanh.pop %v4717
    %v4737 = vmul.f32 %v4733, 0.0
    %v4738 = vmul.f32 %v4731, %v4736
    %v4739 = vadd.f32 %v4737, %v4738
    %v4740 = vtanh.pop %v4739
    %v4741 = vmul.f32 %v4735, %v4740
    %v4742 = vpack.c.bf16 %v4713, %v4713
    %v4743 = vpack.c.bf16 %v4741, %v4741
    %v4744 = vld [vmem:[#allocation7] sm:$0xff]
    %v4745 = vld [vmem:[#allocation7 + $0x8] sm:$0xff]
    %v4746 = vld [vmem:[#allocation7 + $0x10] sm:$0xff]
    %v4747 = vld [vmem:[#allocation7 + $0x18] sm:$0xff]
    %v4748 = vld [vmem:[#allocation7 + $0x20] sm:$0xff]
    %v4749 = vld [vmem:[#allocation7 + $0x28] sm:$0xff]
    %v4750 = vld [vmem:[#allocation7 + $0x30] sm:$0xff]
    %v4751 = vld [vmem:[#allocation7 + $0x38] sm:$0xff]
    %v4752 = vld [vmem:[#allocation7 + $0x40] sm:$0xff]
    %v4753 = vld [vmem:[#allocation7 + $0x48] sm:$0xff]
    %v4754 = vld [vmem:[#allocation7 + $0x50] sm:$0xff]
    %v4755 = vld [vmem:[#allocation7 + $0x58] sm:$0xff]
    %v4756 = vld [vmem:[#allocation7 + $0x60] sm:$0xff]
    %v4757 = vld [vmem:[#allocation7 + $0x68] sm:$0xff]
    %v4758 = vld [vmem:[#allocation7 + $0x70] sm:$0xff]
    %v4759 = vld [vmem:[#allocation7 + $0x78] sm:$0xff]
    %v4760 = vld [vmem:[#allocation7 + $0x80] sm:$0xff]
    %v4761 = vld [vmem:[#allocation7 + $0x88] sm:$0xff]
    %v4762 = vld [vmem:[#allocation7 + $0x90] sm:$0xff]
    %v4763 = vld [vmem:[#allocation7 + $0x98] sm:$0xff]
    %v4764 = vld [vmem:[#allocation7 + $0xa0] sm:$0xff]
    %v4765 = vld [vmem:[#allocation7 + $0xa8] sm:$0xff]
    %v4766 = vld [vmem:[#allocation7 + $0xb0] sm:$0xff]
    %v4767 = vld [vmem:[#allocation7 + $0xb8] sm:$0xff]
    %v4768 = vld [vmem:[#allocation7 + $0xc0] sm:$0xff]
    %v4769 = vld [vmem:[#allocation7 + $0xc8] sm:$0xff]
    %v4770 = vld [vmem:[#allocation7 + $0xd0] sm:$0xff]
    %v4771 = vld [vmem:[#allocation7 + $0xd8] sm:$0xff]
    %v4772 = vld [vmem:[#allocation7 + $0xe0] sm:$0xff]
    %v4773 = vld [vmem:[#allocation7 + $0xe8] sm:$0xff]
    %v4774 = vld [vmem:[#allocation7 + $0xf0] sm:$0xff]
    %v4775 = vld [vmem:[#allocation7 + $0xf8] sm:$0xff]
    %v4776 = vld [vmem:[#allocation7 + $0x100] sm:$0xff]
    %v4777 = vld [vmem:[#allocation7 + $0x108] sm:$0xff]
    %v4778 = vld [vmem:[#allocation7 + $0x110] sm:$0xff]
    %v4779 = vld [vmem:[#allocation7 + $0x118] sm:$0xff]
    %v4780 = vld [vmem:[#allocation7 + $0x120] sm:$0xff]
    %v4781 = vld [vmem:[#allocation7 + $0x128] sm:$0xff]
    %v4782 = vld [vmem:[#allocation7 + $0x130] sm:$0xff]
    %v4783 = vld [vmem:[#allocation7 + $0x138] sm:$0xff]
    %v4784 = vld [vmem:[#allocation7 + $0x140] sm:$0xff]
    %v4785 = vld [vmem:[#allocation7 + $0x148] sm:$0xff]
    %v4786 = vld [vmem:[#allocation7 + $0x150] sm:$0xff]
    %v4787 = vld [vmem:[#allocation7 + $0x158] sm:$0xff]
    %v4788 = vld [vmem:[#allocation7 + $0x160] sm:$0xff]
    %v4789 = vld [vmem:[#allocation7 + $0x168] sm:$0xff]
    %v4790 = vld [vmem:[#allocation7 + $0x170] sm:$0xff]
    %v4791 = vld [vmem:[#allocation7 + $0x178] sm:$0xff]
    %v4792 = vld [vmem:[#allocation7 + $0x180] sm:$0xff]
    %v4793 = vld [vmem:[#allocation7 + $0x188] sm:$0xff]
    %v4794 = vld [vmem:[#allocation7 + $0x190] sm:$0xff]
    %v4795 = vld [vmem:[#allocation7 + $0x198] sm:$0xff]
    %v4796 = vld [vmem:[#allocation7 + $0x1a0] sm:$0xff]
    %v4797 = vld [vmem:[#allocation7 + $0x1a8] sm:$0xff]
    %v4798 = vld [vmem:[#allocation7 + $0x1b0] sm:$0xff]
    %v4799 = vld [vmem:[#allocation7 + $0x1b8] sm:$0xff]
    %v4800 = vld [vmem:[#allocation7 + $0x1c0] sm:$0xff]
    %v4801 = vld [vmem:[#allocation7 + $0x1c8] sm:$0xff]
    %v4802 = vld [vmem:[#allocation7 + $0x1d0] sm:$0xff]
    %v4803 = vld [vmem:[#allocation7 + $0x1d8] sm:$0xff]
    %v4804 = vld [vmem:[#allocation7 + $0x1e0] sm:$0xff]
    %v4805 = vld [vmem:[#allocation7 + $0x1e8] sm:$0xff]
    %v4806 = vld [vmem:[#allocation7 + $0x1f0] sm:$0xff]
    %v4807 = vld [vmem:[#allocation7 + $0x1f8] sm:$0xff]
    %v4808 = vld [vmem:[#allocation7 + $0x200] sm:$0xff]
    %v4809 = vld [vmem:[#allocation7 + $0x208] sm:$0xff]
    %v4810 = vld [vmem:[#allocation7 + $0x210] sm:$0xff]
    %v4811 = vld [vmem:[#allocation7 + $0x218] sm:$0xff]
    %v4812 = vld [vmem:[#allocation7 + $0x220] sm:$0xff]
    %v4813 = vld [vmem:[#allocation7 + $0x228] sm:$0xff]
    %v4814 = vld [vmem:[#allocation7 + $0x230] sm:$0xff]
    %v4815 = vld [vmem:[#allocation7 + $0x238] sm:$0xff]
    %v4816 = vld [vmem:[#allocation7 + $0x240] sm:$0xff]
    %v4817 = vld [vmem:[#allocation7 + $0x248] sm:$0xff]
    %v4818 = vld [vmem:[#allocation7 + $0x250] sm:$0xff]
    %v4819 = vld [vmem:[#allocation7 + $0x258] sm:$0xff]
    %v4820 = vld [vmem:[#allocation7 + $0x260] sm:$0xff]
    %v4821 = vld [vmem:[#allocation7 + $0x268] sm:$0xff]
    %v4822 = vld [vmem:[#allocation7 + $0x270] sm:$0xff]
    %v4823 = vld [vmem:[#allocation7 + $0x278] sm:$0xff]
    %v4824 = vld [vmem:[#allocation7 + $0x280] sm:$0xff]
    %v4825 = vld [vmem:[#allocation7 + $0x288] sm:$0xff]
    %v4826 = vld [vmem:[#allocation7 + $0x290] sm:$0xff]
    %v4827 = vld [vmem:[#allocation7 + $0x298] sm:$0xff]
    %v4828 = vld [vmem:[#allocation7 + $0x2a0] sm:$0xff]
    %v4829 = vld [vmem:[#allocation7 + $0x2a8] sm:$0xff]
    %v4830 = vld [vmem:[#allocation7 + $0x2b0] sm:$0xff]
    %v4831 = vld [vmem:[#allocation7 + $0x2b8] sm:$0xff]
    %v4832 = vld [vmem:[#allocation7 + $0x2c0] sm:$0xff]
    %v4833 = vld [vmem:[#allocation7 + $0x2c8] sm:$0xff]
    %v4834 = vld [vmem:[#allocation7 + $0x2d0] sm:$0xff]
    %v4835 = vld [vmem:[#allocation7 + $0x2d8] sm:$0xff]
    %v4836 = vld [vmem:[#allocation7 + $0x2e0] sm:$0xff]
    %v4837 = vld [vmem:[#allocation7 + $0x2e8] sm:$0xff]
    %v4838 = vld [vmem:[#allocation7 + $0x2f0] sm:$0xff]
    %v4839 = vld [vmem:[#allocation7 + $0x2f8] sm:$0xff]
    %v4840 = vld [vmem:[#allocation7 + $0x300] sm:$0xff]
    %v4841 = vld [vmem:[#allocation7 + $0x308] sm:$0xff]
    %v4842 = vld [vmem:[#allocation7 + $0x310] sm:$0xff]
    %v4843 = vld [vmem:[#allocation7 + $0x318] sm:$0xff]
    %v4844 = vld [vmem:[#allocation7 + $0x320] sm:$0xff]
    %v4845 = vld [vmem:[#allocation7 + $0x328] sm:$0xff]
    %v4846 = vld [vmem:[#allocation7 + $0x330] sm:$0xff]
    %v4847 = vld [vmem:[#allocation7 + $0x338] sm:$0xff]
    %v4848 = vld [vmem:[#allocation7 + $0x340] sm:$0xff]
    %v4849 = vld [vmem:[#allocation7 + $0x348] sm:$0xff]
    %v4850 = vld [vmem:[#allocation7 + $0x350] sm:$0xff]
    %v4851 = vld [vmem:[#allocation7 + $0x358] sm:$0xff]
    %v4852 = vld [vmem:[#allocation7 + $0x360] sm:$0xff]
    %v4853 = vld [vmem:[#allocation7 + $0x368] sm:$0xff]
    %v4854 = vld [vmem:[#allocation7 + $0x370] sm:$0xff]
    %v4855 = vld [vmem:[#allocation7 + $0x378] sm:$0xff]
    %v4856 = vld [vmem:[#allocation7 + $0x380] sm:$0xff]
    %v4857 = vld [vmem:[#allocation7 + $0x388] sm:$0xff]
    %v4858 = vld [vmem:[#allocation7 + $0x390] sm:$0xff]
    %v4859 = vld [vmem:[#allocation7 + $0x398] sm:$0xff]
    %v4860 = vld [vmem:[#allocation7 + $0x3a0] sm:$0xff]
    %v4861 = vld [vmem:[#allocation7 + $0x3a8] sm:$0xff]
    %v4862 = vld [vmem:[#allocation7 + $0x3b0] sm:$0xff]
    %v4863 = vld [vmem:[#allocation7 + $0x3b8] sm:$0xff]
    %v4864 = vld [vmem:[#allocation7 + $0x3c0] sm:$0xff]
    %v4865 = vld [vmem:[#allocation7 + $0x3c8] sm:$0xff]
    %v4866 = vld [vmem:[#allocation7 + $0x3d0] sm:$0xff]
    %v4867 = vld [vmem:[#allocation7 + $0x3d8] sm:$0xff]
    %v4868 = vld [vmem:[#allocation7 + $0x3e0] sm:$0xff]
    %v4869 = vld [vmem:[#allocation7 + $0x3e8] sm:$0xff]
    %v4870 = vld [vmem:[#allocation7 + $0x3f0] sm:$0xff]
    %v4871 = vld [vmem:[#allocation7 + $0x3f8] sm:$0xff]
    %v5000 = vunpack.c.l.b16 %v4744
    %v5001 = vunpack.c.h.b16 %v4744
    %v5002 = vunpack.c.l.b16 %v4745
    %v5003 = vunpack.c.h.b16 %v4745
    %v5004 = vunpack.c.l.b16 %v4746
    %v5005 = vunpack.c.h.b16 %v4746
    %v5006 = vunpack.c.l.b16 %v4747
    %v5007 = vunpack.c.h.b16 %v4747
    %v5008 = vunpack.c.l.b16 %v4748
    %v5009 = vunpack.c.h.b16 %v4748
    %v5010 = vunpack.c.l.b16 %v4749
    %v5011 = vunpack.c.h.b16 %v4749
    %v5012 = vunpack.c.l.b16 %v4750
    %v5013 = vunpack.c.h.b16 %v4750
    %v5014 = vunpack.c.l.b16 %v4751
    %v5015 = vunpack.c.h.b16 %v4751
    %v5016 = vunpack.c.l.b16 %v4752
    %v5017 = vunpack.c.h.b16 %v4752
    %v5018 = vunpack.c.l.b16 %v4753
    %v5019 = vunpack.c.h.b16 %v4753
    %v5020 = vunpack.c.l.b16 %v4754
    %v5021 = vunpack.c.h.b16 %v4754
    %v5022 = vunpack.c.l.b16 %v4755
    %v5023 = vunpack.c.h.b16 %v4755
    %v5024 = vunpack.c.l.b16 %v4756
    %v5025 = vunpack.c.h.b16 %v4756
    %v5026 = vunpack.c.l.b16 %v4757
    %v5027 = vunpack.c.h.b16 %v4757
    %v5028 = vunpack.c.l.b16 %v4758
    %v5029 = vunpack.c.h.b16 %v4758
    %v5030 = vunpack.c.l.b16 %v4759
    %v5031 = vunpack.c.h.b16 %v4759
    %v5032 = vunpack.c.l.b16 %v4760
    %v5033 = vunpack.c.h.b16 %v4760
    %v5034 = vunpack.c.l.b16 %v4761
    %v5035 = vunpack.c.h.b16 %v4761
    %v5036 = vunpack.c.l.b16 %v4762
    %v5037 = vunpack.c.h.b16 %v4762
    %v5038 = vunpack.c.l.b16 %v4763
    %v5039 = vunpack.c.h.b16 %v4763
    %v5040 = vunpack.c.l.b16 %v4764
    %v5041 = vunpack.c.h.b16 %v4764
    %v5042 = vunpack.c.l.b16 %v4765
    %v5043 = vunpack.c.h.b16 %v4765
    %v5044 = vunpack.c.l.b16 %v4766
    %v5045 = vunpack.c.h.b16 %v4766
    %v5046 = vunpack.c.l.b16 %v4767
    %v5047 = vunpack.c.h.b16 %v4767
    %v5048 = vunpack.c.l.b16 %v4768
    %v5049 = vunpack.c.h.b16 %v4768
    %v5050 = vunpack.c.l.b16 %v4769
    %v5051 = vunpack.c.h.b16 %v4769
    %v5052 = vunpack.c.l.b16 %v4770
    %v5053 = vunpack.c.h.b16 %v4770
    %v5054 = vunpack.c.l.b16 %v4771
    %v5055 = vunpack.c.h.b16 %v4771
    %v5056 = vunpack.c.l.b16 %v4772
    %v5057 = vunpack.c.h.b16 %v4772
    %v5058 = vunpack.c.l.b16 %v4773
    %v5059 = vunpack.c.h.b16 %v4773
    %v5060 = vunpack.c.l.b16 %v4774
    %v5061 = vunpack.c.h.b16 %v4774
    %v5062 = vunpack.c.l.b16 %v4775
    %v5063 = vunpack.c.h.b16 %v4775
    %v5064 = vunpack.c.l.b16 %v4776
    %v5065 = vunpack.c.h.b16 %v4776
    %v5066 = vunpack.c.l.b16 %v4777
    %v5067 = vunpack.c.h.b16 %v4777
    %v5068 = vunpack.c.l.b16 %v4778
    %v5069 = vunpack.c.h.b16 %v4778
    %v5070 = vunpack.c.l.b16 %v4779
    %v5071 = vunpack.c.h.b16 %v4779
    %v5072 = vunpack.c.l.b16 %v4780
    %v5073 = vunpack.c.h.b16 %v4780
    %v5074 = vunpack.c.l.b16 %v4781
    %v5075 = vunpack.c.h.b16 %v4781
    %v5076 = vunpack.c.l.b16 %v4782
    %v5077 = vunpack.c.h.b16 %v4782
    %v5078 = vunpack.c.l.b16 %v4783
    %v5079 = vunpack.c.h.b16 %v4783
    %v5080 = vunpack.c.l.b16 %v4784
    %v5081 = vunpack.c.h.b16 %v4784
    %v5082 = vunpack.c.l.b16 %v4785
    %v5083 = vunpack.c.h.b16 %v4785
    %v5084 = vunpack.c.l.b16 %v4786
    %v5085 = vunpack.c.h.b16 %v4786
    %v5086 = vunpack.c.l.b16 %v4787
    %v5087 = vunpack.c.h.b16 %v4787
    %v5088 = vunpack.c.l.b16 %v4788
    %v5089 = vunpack.c.h.b16 %v4788
    %v5090 = vunpack.c.l.b16 %v4789
    %v5091 = vunpack.c.h.b16 %v4789
    %v5092 = vunpack.c.l.b16 %v4790
    %v5093 = vunpack.c.h.b16 %v4790
    %v5094 = vunpack.c.l.b16 %v4791
    %v5095 = vunpack.c.h.b16 %v4791
    %v5096 = vunpack.c.l.b16 %v4792
    %v5097 = vunpack.c.h.b16 %v4792
    %v5098 = vunpack.c.l.b16 %v4793
    %v5099 = vunpack.c.h.b16 %v4793
    %v5100 = vunpack.c.l.b16 %v4794
    %v5101 = vunpack.c.h.b16 %v4794
    %v5102 = vunpack.c.l.b16 %v4795
    %v5103 = vunpack.c.h.b16 %v4795
    %v5104 = vunpack.c.l.b16 %v4796
    %v5105 = vunpack.c.h.b16 %v4796
    %v5106 = vunpack.c.l.b16 %v4797
    %v5107 = vunpack.c.h.b16 %v4797
    %v5108 = vunpack.c.l.b16 %v4798
    %v5109 = vunpack.c.h.b16 %v4798
    %v5110 = vunpack.c.l.b16 %v4799
    %v5111 = vunpack.c.h.b16 %v4799
    %v5112 = vunpack.c.l.b16 %v4800
    %v5113 = vunpack.c.h.b16 %v4800
    %v5114 = vunpack.c.l.b16 %v4801
    %v5115 = vunpack.c.h.b16 %v4801
    %v5116 = vunpack.c.l.b16 %v4802
    %v5117 = vunpack.c.h.b16 %v4802
    %v5118 = vunpack.c.l.b16 %v4803
    %v5119 = vunpack.c.h.b16 %v4803
    %v5120 = vunpack.c.l.b16 %v4804
    %v5121 = vunpack.c.h.b16 %v4804
    %v5122 = vunpack.c.l.b16 %v4805
    %v5123 = vunpack.c.h.b16 %v4805
    %v5124 = vunpack.c.l.b16 %v4806
    %v5125 = vunpack.c.h.b16 %v4806
    %v5126 = vunpack.c.l.b16 %v4807
    %v5127 = vunpack.c.h.b16 %v4807
    %v5128 = vunpack.c.l.b16 %v4808
    %v5129 = vunpack.c.h.b16 %v4808
    %v5130 = vunpack.c.l.b16 %v4809
    %v5131 = vunpack.c.h.b16 %v4809
    %v5132 = vunpack.c.l.b16 %v4810
    %v5133 = vunpack.c.h.b16 %v4810
    %v5134 = vunpack.c.l.b16 %v4811
    %v5135 = vunpack.c.h.b16 %v4811
    %v5136 = vunpack.c.l.b16 %v4812
    %v5137 = vunpack.c.h.b16 %v4812
    %v5138 = vunpack.c.l.b16 %v4813
    %v5139 = vunpack.c.h.b16 %v4813
    %v5140 = vunpack.c.l.b16 %v4814
    %v5141 = vunpack.c.h.b16 %v4814
    %v5142 = vunpack.c.l.b16 %v4815
    %v5143 = vunpack.c.h.b16 %v4815
    %v5144 = vunpack.c.l.b16 %v4816
    %v5145 = vunpack.c.h.b16 %v4816
    %v5146 = vunpack.c.l.b16 %v4817
    %v5147 = vunpack.c.h.b16 %v4817
    %v5148 = vunpack.c.l.b16 %v4818
    %v5149 = vunpack.c.h.b16 %v4818
    %v5150 = vunpack.c.l.b16 %v4819
    %v5151 = vunpack.c.h.b16 %v4819
    %v5152 = vunpack.c.l.b16 %v4820
    %v5153 = vunpack.c.h.b16 %v4820
    %v5154 = vunpack.c.l.b16 %v4821
    %v5155 = vunpack.c.h.b16 %v4821
    %v5156 = vunpack.c.l.b16 %v4822
    %v5157 = vunpack.c.h.b16 %v4822
    %v5158 = vunpack.c.l.b16 %v4823
    %v5159 = vunpack.c.h.b16 %v4823
    %v5160 = vunpack.c.l.b16 %v4824
    %v5161 = vunpack.c.h.b16 %v4824
    %v5162 = vunpack.c.l.b16 %v4825
    %v5163 = vunpack.c.h.b16 %v4825
    %v5164 = vunpack.c.l.b16 %v4826
    %v5165 = vunpack.c.h.b16 %v4826
    %v5166 = vunpack.c.l.b16 %v4827
    %v5167 = vunpack.c.h.b16 %v4827
    %v5168 = vunpack.c.l.b16 %v4828
    %v5169 = vunpack.c.h.b16 %v4828
    %v5170 = vunpack.c.l.b16 %v4829
    %v5171 = vunpack.c.h.b16 %v4829
    %v5172 = vunpack.c.l.b16 %v4830
    %v5173 = vunpack.c.h.b16 %v4830
    %v5174 = vunpack.c.l.b16 %v4831
    %v5175 = vunpack.c.h.b16 %v4831
    %v5176 = vunpack.c.l.b16 %v4832
    %v5177 = vunpack.c.h.b16 %v4832
    %v5178 = vunpack.c.l.b16 %v4833
    %v5179 = vunpack.c.h.b16 %v4833
    %v5180 = vunpack.c.l.b16 %v4834
    %v5181 = vunpack.c.h.b16 %v4834
    %v5182 = vunpack.c.l.b16 %v4835
    %v5183 = vunpack.c.h.b16 %v4835
    %v5184 = vunpack.c.l.b16 %v4836
    %v5185 = vunpack.c.h.b16 %v4836
    %v5186 = vunpack.c.l.b16 %v4837
    %v5187 = vunpack.c.h.b16 %v4837
    %v5188 = vunpack.c.l.b16 %v4838
    %v5189 = vunpack.c.h.b16 %v4838
    %v5190 = vunpack.c.l.b16 %v4839
    %v5191 = vunpack.c.h.b16 %v4839
    %v5192 = vunpack.c.l.b16 %v4840
    %v5193 = vunpack.c.h.b16 %v4840
    %v5194 = vunpack.c.l.b16 %v4841
    %v5195 = vunpack.c.h.b16 %v4841
    %v5196 = vunpack.c.l.b16 %v4842
    %v5197 = vunpack.c.h.b16 %v4842
    %v5198 = vunpack.c.l.b16 %v4843
    %v5199 = vunpack.c.h.b16 %v4843
    %v5200 = vunpack.c.l.b16 %v4844
    %v5201 = vunpack.c.h.b16 %v4844
    %v5202 = vunpack.c.l.b16 %v4845
    %v5203 = vunpack.c.h.b16 %v4845
    %v5204 = vunpack.c.l.b16 %v4846
    %v5205 = vunpack.c.h.b16 %v4846
    %v5206 = vunpack.c.l.b16 %v4847
    %v5207 = vunpack.c.h.b16 %v4847
    %v5208 = vunpack.c.l.b16 %v4848
    %v5209 = vunpack.c.h.b16 %v4848
    %v5210 = vunpack.c.l.b16 %v4849
    %v5211 = vunpack.c.h.b16 %v4849
    %v5212 = vunpack.c.l.b16 %v4850
    %v5213 = vunpack.c.h.b16 %v4850
    %v5214 = vunpack.c.l.b16 %v4851
    %v5215 = vunpack.c.h.b16 %v4851
    %v5216 = vunpack.c.l.b16 %v4852
    %v5217 = vunpack.c.h.b16 %v4852
    %v5218 = vunpack.c.l.b16 %v4853
    %v5219 = vunpack.c.h.b16 %v4853
    %v5220 = vunpack.c.l.b16 %v4854
    %v5221 = vunpack.c.h.b16 %v4854
    %v5222 = vunpack.c.l.b16 %v4855
    %v5223 = vunpack.c.h.b16 %v4855
    %v5224 = vunpack.c.l.b16 %v4856
    %v5225 = vunpack.c.h.b16 %v4856
    %v5226 = vunpack.c.l.b16 %v4857
    %v5227 = vunpack.c.h.b16 %v4857
    %v5228 = vunpack.c.l.b16 %v4858
    %v5229 = vunpack.c.h.b16 %v4858
    %v5230 = vunpack.c.l.b16 %v4859
    %v5231 = vunpack.c.h.b16 %v4859
    %v5232 = vunpack.c.l.b16 %v4860
    %v5233 = vunpack.c.h.b16 %v4860
    %v5234 = vunpack.c.l.b16 %v4861
    %v5235 = vunpack.c.h.b16 %v4861
    %v5236 = vunpack.c.l.b16 %v4862
    %v5237 = vunpack.c.h.b16 %v4862
    %v5238 = vunpack.c.l.b16 %v4863
    %v5239 = vunpack.c.h.b16 %v4863
    %v5240 = vunpack.c.l.b16 %v4864
    %v5241 = vunpack.c.h.b16 %v4864
    %v5242 = vunpack.c.l.b16 %v4865
    %v5243 = vunpack.c.h.b16 %v4865
    %v5244 = vunpack.c.l.b16 %v4866
    %v5245 = vunpack.c.h.b16 %v4866
    %v5246 = vunpack.c.l.b16 %v4867
    %v5247 = vunpack.c.h.b16 %v4867
    %v5248 = vunpack.c.l.b16 %v4868
    %v5249 = vunpack.c.h.b16 %v4868
    %v5250 = vunpack.c.l.b16 %v4869
    %v5251 = vunpack.c.h.b16 %v4869
    %v5252 = vunpack.c.l.b16 %v4870
    %v5253 = vunpack.c.h.b16 %v4870
    %v5254 = vunpack.c.l.b16 %v4871
    %v5255 = vunpack.c.h.b16 %v4871
    %v5256 = vpack.c.b16 %v5008, %v5000
    %v5257 = vpack.c.b16 %v5009, %v5001
    %v5258 = vpack.c.b16 %v5010, %v5002
    %v5259 = vpack.c.b16 %v5011, %v5003
    %v5260 = vpack.c.b16 %v5012, %v5004
    %v5261 = vpack.c.b16 %v5013, %v5005
    %v5262 = vpack.c.b16 %v5014, %v5006
    %v5263 = vpack.c.b16 %v5015, %v5007
    %v5264 = vpack.c.b16 %v5024, %v5016
    %v5265 = vpack.c.b16 %v5025, %v5017
    %v5266 = vpack.c.b16 %v5026, %v5018
    %v5267 = vpack.c.b16 %v5027, %v5019
    %v5268 = vpack.c.b16 %v5028, %v5020
    %v5269 = vpack.c.b16 %v5029, %v5021
    %v5270 = vpack.c.b16 %v5030, %v5022
    %v5271 = vpack.c.b16 %v5031, %v5023
    %v5272 = vpack.c.b16 %v5040, %v5032
    %v5273 = vpack.c.b16 %v5041, %v5033
    %v5274 = vpack.c.b16 %v5042, %v5034
    %v5275 = vpack.c.b16 %v5043, %v5035
    %v5276 = vpack.c.b16 %v5044, %v5036
    %v5277 = vpack.c.b16 %v5045, %v5037
    %v5278 = vpack.c.b16 %v5046, %v5038
    %v5279 = vpack.c.b16 %v5047, %v5039
    %v5280 = vpack.c.b16 %v5056, %v5048
    %v5281 = vpack.c.b16 %v5057, %v5049
    %v5282 = vpack.c.b16 %v5058, %v5050
    %v5283 = vpack.c.b16 %v5059, %v5051
    %v5284 = vpack.c.b16 %v5060, %v5052
    %v5285 = vpack.c.b16 %v5061, %v5053
    %v5286 = vpack.c.b16 %v5062, %v5054
    %v5287 = vpack.c.b16 %v5063, %v5055
    %v5288 = vpack.c.b16 %v5072, %v5064
    %v5289 = vpack.c.b16 %v5073, %v5065
    %v5290 = vpack.c.b16 %v5074, %v5066
    %v5291 = vpack.c.b16 %v5075, %v5067
    %v5292 = vpack.c.b16 %v5076, %v5068
    %v5293 = vpack.c.b16 %v5077, %v5069
    %v5294 = vpack.c.b16 %v5078, %v5070
    %v5295 = vpack.c.b16 %v5079, %v5071
    %v5296 = vpack.c.b16 %v5088, %v5080
    %v5297 = vpack.c.b16 %v5089, %v5081
    %v5298 = vpack.c.b16 %v5090, %v5082
    %v5299 = vpack.c.b16 %v5091, %v5083
    %v5300 = vpack.c.b16 %v5092, %v5084
    %v5301 = vpack.c.b16 %v5093, %v5085
    %v5302 = vpack.c.b16 %v5094, %v5086
    %v5303 = vpack.c.b16 %v5095, %v5087
    %v5304 = vpack.c.b16 %v5104, %v5096
    %v5305 = vpack.c.b16 %v5105, %v5097
    %v5306 = vpack.c.b16 %v5106, %v5098
    %v5307 = vpack.c.b16 %v5107, %v5099
    %v5308 = vpack.c.b16 %v5108, %v5100
    %v5309 = vpack.c.b16 %v5109, %v5101
    %v5310 = vpack.c.b16 %v5110, %v5102
    %v5311 = vpack.c.b16 %v5111, %v5103
    %v5312 = vpack.c.b16 %v5120, %v5112
    %v5313 = vpack.c.b16 %v5121, %v5113
    %v5314 = vpack.c.b16 %v5122, %v5114
    %v5315 = vpack.c.b16 %v5123, %v5115
    %v5316 = vpack.c.b16 %v5124, %v5116
    %v5317 = vpack.c.b16 %v5125, %v5117
    %v5318 = vpack.c.b16 %v5126, %v5118
    %v5319 = vpack.c.b16 %v5127, %v5119
    %v5320 = vpack.c.b16 %v5136, %v5128
    %v5321 = vpack.c.b16 %v5137, %v5129
    %v5322 = vpack.c.b16 %v5138, %v5130
    %v5323 = vpack.c.b16 %v5139, %v5131
    %v5324 = vpack.c.b16 %v5140, %v5132
    %v5325 = vpack.c.b16 %v5141, %v5133
    %v5326 = vpack.c.b16 %v5142, %v5134
    %v5327 = vpack.c.b16 %v5143, %v5135
    %v5328 = vpack.c.b16 %v5152, %v5144
    %v5329 = vpack.c.b16 %v5153, %v5145
    %v5330 = vpack.c.b16 %v5154, %v5146
    %v5331 = vpack.c.b16 %v5155, %v5147
    %v5332 = vpack.c.b16 %v5156, %v5148
    %v5333 = vpack.c.b16 %v5157, %v5149
    %v5334 = vpack.c.b16 %v5158, %v5150
    %v5335 = vpack.c.b16 %v5159, %v5151
    %v5336 = vpack.c.b16 %v5168, %v5160
    %v5337 = vpack.c.b16 %v5169, %v5161
    %v5338 = vpack.c.b16 %v5170, %v5162
    %v5339 = vpack.c.b16 %v5171, %v5163
    %v5340 = vpack.c.b16 %v5172, %v5164
    %v5341 = vpack.c.b16 %v5173, %v5165
    %v5342 = vpack.c.b16 %v5174, %v5166
    %v5343 = vpack.c.b16 %v5175, %v5167
    %v5344 = vpack.c.b16 %v5184, %v5176
    %v5345 = vpack.c.b16 %v5185, %v5177
    %v5346 = vpack.c.b16 %v5186, %v5178
    %v5347 = vpack.c.b16 %v5187, %v5179
    %v5348 = vpack.c.b16 %v5188, %v5180
    %v5349 = vpack.c.b16 %v5189, %v5181
    %v5350 = vpack.c.b16 %v5190, %v5182
    %v5351 = vpack.c.b16 %v5191, %v5183
    %v5352 = vpack.c.b16 %v5200, %v5192
    %v5353 = vpack.c.b16 %v5201, %v5193
    %v5354 = vpack.c.b16 %v5202, %v5194
    %v5355 = vpack.c.b16 %v5203, %v5195
    %v5356 = vpack.c.b16 %v5204, %v5196
    %v5357 = vpack.c.b16 %v5205, %v5197
    %v5358 = vpack.c.b16 %v5206, %v5198
    %v5359 = vpack.c.b16 %v5207, %v5199
    %v5360 = vpack.c.b16 %v5216, %v5208
    %v5361 = vpack.c.b16 %v5217, %v5209
    %v5362 = vpack.c.b16 %v5218, %v5210
    %v5363 = vpack.c.b16 %v5219, %v5211
    %v5364 = vpack.c.b16 %v5220, %v5212
    %v5365 = vpack.c.b16 %v5221, %v5213
    %v5366 = vpack.c.b16 %v5222, %v5214
    %v5367 = vpack.c.b16 %v5223, %v5215
    %v5368 = vpack.c.b16 %v5232, %v5224
    %v5369 = vpack.c.b16 %v5233, %v5225
    %v5370 = vpack.c.b16 %v5234, %v5226
    %v5371 = vpack.c.b16 %v5235, %v5227
    %v5372 = vpack.c.b16 %v5236, %v5228
    %v5373 = vpack.c.b16 %v5237, %v5229
    %v5374 = vpack.c.b16 %v5238, %v5230
    %v5375 = vpack.c.b16 %v5239, %v5231
    %v5376 = vpack.c.b16 %v5248, %v5240
    %v5377 = vpack.c.b16 %v5249, %v5241
    %v5378 = vpack.c.b16 %v5250, %v5242
    %v5379 = vpack.c.b16 %v5251, %v5243
    %v5380 = vpack.c.b16 %v5252, %v5244
    %v5381 = vpack.c.b16 %v5253, %v5245
    %v5382 = vpack.c.b16 %v5254, %v5246
    %v5383 = vpack.c.b16 %v5255, %v5247
    %5512 = vmatprep.subr.bf16.mxu0 %v5313
    %5513 = vmatpush1.bf16.msra.mxu0 %v5312
    %5514 = vmatprep.subr.bf16.mxu0 %v5305
    %5515 = vmatpush1.bf16.msra.mxu0 %v5304
    %5516 = vmatprep.subr.bf16.mxu0 %v5297
    %5517 = vmatpush1.bf16.msra.mxu0 %v5296
    %5518 = vmatprep.subr.bf16.mxu0 %v5289
    %5519 = vmatpush1.bf16.msra.mxu0 %v5288
    %5520 = vmatprep.subr.bf16.mxu0 %v5281
    %5521 = vmatpush1.bf16.msra.mxu0 %v5280
    %5522 = vmatprep.subr.bf16.mxu0 %v5273
    %5523 = vmatpush1.bf16.msra.mxu0 %v5272
    %5524 = vmatprep.subr.bf16.mxu0 %v5265
    %5525 = vmatpush1.bf16.msra.mxu0 %v5264
    %5526 = vmatprep.subr.bf16.mxu0 %v5257
    %5527 = vmatpush1.bf16.msra.mxu0 %v5256
    %5528 = vmatprep.subr.bf16.mxu0 %v5377
    %5529 = vmatpush2.bf16.msra.mxu0 %v5376
    %5530 = vmatprep.subr.bf16.mxu0 %v5369
    %5531 = vmatpush2.bf16.msra.mxu0 %v5368
    %5532 = vmatprep.subr.bf16.mxu0 %v5361
    %5533 = vmatpush2.bf16.msra.mxu0 %v5360
    %5534 = vmatprep.subr.bf16.mxu0 %v5353
    %5535 = vmatpush2.bf16.msra.mxu0 %v5352
    %5536 = vmatprep.subr.bf16.mxu0 %v5345
    %5537 = vmatpush2.bf16.msra.mxu0 %v5344
    %5538 = vmatprep.subr.bf16.mxu0 %v5337
    %5539 = vmatpush2.bf16.msra.mxu0 %v5336
    %5540 = vmatprep.subr.bf16.mxu0 %v5329
    %5541 = vmatpush2.bf16.msra.mxu0 %v5328
    %5542 = vmatprep.subr.bf16.mxu0 %v5321
    %5543 = vmatpush2.bf16.msra.mxu0 %v5320
    %5544 = vmatprep.mubr.bf16.mxu0 %v4743
    %5545 = vmatmul.mubr.bf16.gmra.mxu0 %v4742
    %v5546 = vpop.f32.mrf.mxu0
    %v5547 = vadd.f32 0.0, %v5546
    %v5548 = vpop.f32.mrf.mxu0
    %v5549 = vadd.f32 0.0, %v5548
    %v5550 = vpop.f32.mrf.mxu0
    %v5551 = vpop.f32.mrf.mxu0
    %5552 = vdwg.mxu0
    %5553 = vmatprep.subr.bf16.mxu0 %v5315
    %5554 = vmatpush1.bf16.msra.mxu0 %v5314
    %5555 = vmatprep.subr.bf16.mxu0 %v5307
    %5556 = vmatpush1.bf16.msra.mxu0 %v5306
    %5557 = vmatprep.subr.bf16.mxu0 %v5299
    %5558 = vmatpush1.bf16.msra.mxu0 %v5298
    %5559 = vmatprep.subr.bf16.mxu0 %v5291
    %5560 = vmatpush1.bf16.msra.mxu0 %v5290
    %5561 = vmatprep.subr.bf16.mxu0 %v5283
    %5562 = vmatpush1.bf16.msra.mxu0 %v5282
    %5563 = vmatprep.subr.bf16.mxu0 %v5275
    %5564 = vmatpush1.bf16.msra.mxu0 %v5274
    %5565 = vmatprep.subr.bf16.mxu0 %v5267
    %5566 = vmatpush1.bf16.msra.mxu0 %v5266
    %5567 = vmatprep.subr.bf16.mxu0 %v5259
    %5568 = vmatpush1.bf16.msra.mxu0 %v5258
    %5569 = vmatprep.subr.bf16.mxu0 %v5379
    %5570 = vmatpush2.bf16.msra.mxu0 %v5378
    %5571 = vmatprep.subr.bf16.mxu0 %v5371
    %5572 = vmatpush2.bf16.msra.mxu0 %v5370
    %5573 = vmatprep.subr.bf16.mxu0 %v5363
    %5574 = vmatpush2.bf16.msra.mxu0 %v5362
    %5575 = vmatprep.subr.bf16.mxu0 %v5355
    %5576 = vmatpush2.bf16.msra.mxu0 %v5354
    %5577 = vmatprep.subr.bf16.mxu0 %v5347
    %5578 = vmatpush2.bf16.msra.mxu0 %v5346
    %5579 = vmatprep.subr.bf16.mxu0 %v5339
    %5580 = vmatpush2.bf16.msra.mxu0 %v5338
    %5581 = vmatprep.subr.bf16.mxu0 %v5331
    %5582 = vmatpush2.bf16.msra.mxu0 %v5330
    %5583 = vmatprep.subr.bf16.mxu0 %v5323
    %5584 = vmatpush2.bf16.msra.mxu0 %v5322
    %5585 = vmatprep.mubr.bf16.mxu0 %v4743
    %5586 = vmatmul.mubr.bf16.gmra.mxu0 %v4742
    %v5587 = vpop.f32.mrf.mxu0
    %v5588 = vadd.f32 0.0, %v5587
    %v5589 = vpop.f32.mrf.mxu0
    %v5590 = vadd.f32 0.0, %v5589
    %v5591 = vpop.f32.mrf.mxu0
    %v5592 = vpop.f32.mrf.mxu0
    %5593 = vdwg.mxu0
    %5594 = vmatprep.subr.bf16.mxu0 %v5317
    %5595 = vmatpush1.bf16.msra.mxu0 %v5316
    %5596 = vmatprep.subr.bf16.mxu0 %v5309
    %5597 = vmatpush1.bf16.msra.mxu0 %v5308
    %5598 = vmatprep.subr.bf16.mxu0 %v5301
    %5599 = vmatpush1.bf16.msra.mxu0 %v5300
    %5600 = vmatprep.subr.bf16.mxu0 %v5293
    %5601 = vmatpush1.bf16.msra.mxu0 %v5292
    %5602 = vmatprep.subr.bf16.mxu0 %v5285
    %5603 = vmatpush1.bf16.msra.mxu0 %v5284
    %5604 = vmatprep.subr.bf16.mxu0 %v5277
    %5605 = vmatpush1.bf16.msra.mxu0 %v5276
    %5606 = vmatprep.subr.bf16.mxu0 %v5269
    %5607 = vmatpush1.bf16.msra.mxu0 %v5268
    %5608 = vmatprep.subr.bf16.mxu0 %v5261
    %5609 = vmatpush1.bf16.msra.mxu0 %v5260
    %5610 = vmatprep.subr.bf16.mxu0 %v5381
    %5611 = vmatpush2.bf16.msra.mxu0 %v5380
    %5612 = vmatprep.subr.bf16.mxu0 %v5373
    %5613 = vmatpush2.bf16.msra.mxu0 %v5372
    %5614 = vmatprep.subr.bf16.mxu0 %v5365
    %5615 = vmatpush2.bf16.msra.mxu0 %v5364
    %5616 = vmatprep.subr.bf16.mxu0 %v5357
    %5617 = vmatpush2.bf16.msra.mxu0 %v5356
    %5618 = vmatprep.subr.bf16.mxu0 %v5349
    %5619 = vmatpush2.bf16.msra.mxu0 %v5348
    %5620 = vmatprep.subr.bf16.mxu0 %v5341
    %5621 = vmatpush2.bf16.msra.mxu0 %v5340
    %5622 = vmatprep.subr.bf16.mxu0 %v5333
    %5623 = vmatpush2.bf16.msra.mxu0 %v5332
    %5624 = vmatprep.subr.bf16.mxu0 %v5325
    %5625 = vmatpush2.bf16.msra.mxu0 %v5324
    %5626 = vmatprep.mubr.bf16.mxu0 %v4743
    %5627 = vmatmul.mubr.bf16.gmra.mxu0 %v4742
    %v5628 = vpop.f32.mrf.mxu0
    %v5629 = vadd.f32 0.0, %v5628
    %v5630 = vpop.f32.mrf.mxu0
    %v5631 = vadd.f32 0.0, %v5630
    %v5632 = vpop.f32.mrf.mxu0
    %v5633 = vpop.f32.mrf.mxu0
    %5634 = vdwg.mxu0
    %5635 = vmatprep.subr.bf16.mxu0 %v5319
    %5636 = vmatpush1.bf16.msra.mxu0 %v5318
    %5637 = vmatprep.subr.bf16.mxu0 %v5311
    %5638 = vmatpush1.bf16.msra.mxu0 %v5310
    %5639 = vmatprep.subr.bf16.mxu0 %v5303
    %5640 = vmatpush1.bf16.msra.mxu0 %v5302
    %5641 = vmatprep.subr.bf16.mxu0 %v5295
    %5642 = vmatpush1.bf16.msra.mxu0 %v5294
    %5643 = vmatprep.subr.bf16.mxu0 %v5287
    %5644 = vmatpush1.bf16.msra.mxu0 %v5286
    %5645 = vmatprep.subr.bf16.mxu0 %v5279
    %5646 = vmatpush1.bf16.msra.mxu0 %v5278
    %5647 = vmatprep.subr.bf16.mxu0 %v5271
    %5648 = vmatpush1.bf16.msra.mxu0 %v5270
    %5649 = vmatprep.subr.bf16.mxu0 %v5263
    %5650 = vmatpush1.bf16.msra.mxu0 %v5262
    %5651 = vmatprep.subr.bf16.mxu0 %v5383
    %5652 = vmatpush2.bf16.msra.mxu0 %v5382
    %5653 = vmatprep.subr.bf16.mxu0 %v5375
    %5654 = vmatpush2.bf16.msra.mxu0 %v5374
    %5655 = vmatprep.subr.bf16.mxu0 %v5367
    %5656 = vmatpush2.bf16.msra.mxu0 %v5366
    %5657 = vmatprep.subr.bf16.mxu0 %v5359
    %5658 = vmatpush2.bf16.msra.mxu0 %v5358
    %5659 = vmatprep.subr.bf16.mxu0 %v5351
    %5660 = vmatpush2.bf16.msra.mxu0 %v5350
    %5661 = vmatprep.subr.bf16.mxu0 %v5343
    %5662 = vmatpush2.bf16.msra.mxu0 %v5342
    %5663 = vmatprep.subr.bf16.mxu0 %v5335
    %5664 = vmatpush2.bf16.msra.mxu0 %v5334
    %5665 = vmatprep.subr.bf16.mxu0 %v5327
    %5666 = vmatpush2.bf16.msra.mxu0 %v5326
    %5667 = vmatprep.mubr.bf16.mxu0 %v4743
    %5668 = vmatmul.mubr.bf16.gmra.mxu0 %v4742
    %v5669 = vpop.f32.mrf.mxu0
    %v5670 = vadd.f32 0.0, %v5669
    %v5671 = vpop.f32.mrf.mxu0
    %v5672 = vadd.f32 0.0, %v5671
    %v5673 = vpop.f32.mrf.mxu0
    %v5674 = vpop.f32.mrf.mxu0
    %5675 = vdwg.mxu0
    %v5676 = vld [vmem:[#allocation2 + $0x40] sm:$0xff]
    %v5677 = vld [vmem:[#allocation2 + $0x48] sm:$0xff]
    %v5678 = vld [vmem:[#allocation2 + $0x50] sm:$0xff]
    %v5679 = vld [vmem:[#allocation2 + $0x58] sm:$0xff]
    %v5680 = vadd.f32 %v5676, %v5547
    %v5681 = vadd.f32 %v5677, %v5549
    %v5682 = vadd.f32 %v5678, %v5588
    %v5683 = vadd.f32 %v5679, %v5590
    %v5684 = vld [vmem:[#allocation2 + $0x1a0] sm:$0xff]
    %v5685 = vld [vmem:[#allocation2 + $0x1a8] sm:$0xff]
    %v5686 = vld [vmem:[#allocation2 + $0x1b0] sm:$0xff]
    %v5687 = vld [vmem:[#allocation2 + $0x1b8] sm:$0xff]
    %v5688 = vadd.f32 %v5684, %v5629
    %v5689 = vadd.f32 %v5685, %v5631
    %v5690 = vadd.f32 %v5686, %v5670
    %v5691 = vadd.f32 %v5687, %v5672
    %v5692 = vxor.u32 %v5680, 2147483648
    %v5693 = vxor.u32 %v5681, 2147483648
    %v5694 = vxor.u32 %v5682, 2147483648
    %v5695 = vmul.f32 %v5692, 1.442695
    %v5696 = vpow.pop %v5695
    %v5697 = vmul.f32 %v5693, 1.442695
    %v5698 = vpow.pop %v5697
    %v5699 = vmul.f32 %v5694, 1.442695
    %v5700 = vpow.pop %v5699
    %v5701 = vadd.f32 %v5696, 1.0
    %v5702 = vadd.f32 %v5698, 1.0
    %v5703 = vadd.f32 %v5700, 1.0
    %v5704 = vrcp.pop %v5701
    %v5705 = vmul.f32 1.0, %v5704
    %v5706 = vrcp.pop %v5702
    %v5707 = vmul.f32 1.0, %v5706
    %v5708 = vrcp.pop %v5703
    %v5709 = vmul.f32 1.0, %v5708
    %v5710 = vtanh.pop %v5683
    %v5711 = vmul.f32 %v5707, %v4711
    %v5712 = vmul.f32 %v5705, %v5710
    %v5713 = vadd.f32 %v5711, %v5712
    %v5714 = vtanh.pop %v5713
    %v5715 = vmul.f32 %v5709, %v5714
    %v5716 = vxor.u32 %v5688, 2147483648
    %v5717 = vxor.u32 %v5689, 2147483648
    %v5718 = vxor.u32 %v5690, 2147483648
    %v5719 = vmul.f32 %v5716, 1.442695
    %v5720 = vpow.pop %v5719
    %v5721 = vmul.f32 %v5717, 1.442695
    %v5722 = vpow.pop %v5721
    %v5723 = vmul.f32 %v5718, 1.442695
    %v5724 = vpow.pop %v5723
    %v5725 = vadd.f32 %v5720, 1.0
    %v5726 = vadd.f32 %v5722, 1.0
    %v5727 = vadd.f32 %v5724, 1.0
    %v5728 = vrcp.pop %v5725
    %v5729 = vmul.f32 1.0, %v5728
    %v5730 = vrcp.pop %v5726
    %v5731 = vmul.f32 1.0, %v5730
    %v5732 = vrcp.pop %v5727
    %v5733 = vmul.f32 1.0, %v5732
    %v5734 = vtanh.pop %v5691
    %v5735 = vmul.f32 %v5731, %v4739
    %v5736 = vmul.f32 %v5729, %v5734
    %v5737 = vadd.f32 %v5735, %v5736
    %v5738 = vtanh.pop %v5737
    %v5739 = vmul.f32 %v5733, %v5738
    %v5740 = vpack.c.bf16 %v5715, %v5715
    %v5741 = vpack.c.bf16 %v5739, %v5739
    %5742 = vmatprep.subr.bf16.mxu0 %v5313
    %5743 = vmatpush1.bf16.msra.mxu0 %v5312
    %5744 = vmatprep.subr.bf16.mxu0 %v5305
    %5745 = vmatpush1.bf16.msra.mxu0 %v5304
    %5746 = vmatprep.subr.bf16.mxu0 %v5297
    %5747 = vmatpush1.bf16.msra.mxu0 %v5296
    %5748 = vmatprep.subr.bf16.mxu0 %v5289
    %5749 = vmatpush1.bf16.msra.mxu0 %v5288
    %5750 = vmatprep.subr.bf16.mxu0 %v5281
    %5751 = vmatpush1.bf16.msra.mxu0 %v5280
    %5752 = vmatprep.subr.bf16.mxu0 %v5273
    %5753 = vmatpush1.bf16.msra.mxu0 %v5272
    %5754 = vmatprep.subr.bf16.mxu0 %v5265
    %5755 = vmatpush1.bf16.msra.mxu0 %v5264
    %5756 = vmatprep.subr.bf16.mxu0 %v5257
    %5757 = vmatpush1.bf16.msra.mxu0 %v5256
    %5758 = vmatprep.subr.bf16.mxu0 %v5377
    %5759 = vmatpush2.bf16.msra.mxu0 %v5376
    %5760 = vmatprep.subr.bf16.mxu0 %v5369
    %5761 = vmatpush2.bf16.msra.mxu0 %v5368
    %5762 = vmatprep.subr.bf16.mxu0 %v5361
    %5763 = vmatpush2.bf16.msra.mxu0 %v5360
    %5764 = vmatprep.subr.bf16.mxu0 %v5353
    %5765 = vmatpush2.bf16.msra.mxu0 %v5352
    %5766 = vmatprep.subr.bf16.mxu0 %v5345
    %5767 = vmatpush2.bf16.msra.mxu0 %v5344
    %5768 = vmatprep.subr.bf16.mxu0 %v5337
    %5769 = vmatpush2.bf16.msra.mxu0 %v5336
    %5770 = vmatprep.subr.bf16.mxu0 %v5329
    %5771 = vmatpush2.bf16.msra.mxu0 %v5328
    %5772 = vmatprep.subr.bf16.mxu0 %v5321
    %5773 = vmatpush2.bf16.msra.mxu0 %v5320
    %5774 = vmatprep.mubr.bf16.mxu0 %v5741
    %5775 = vmatmul.mubr.bf16.gmra.mxu0 %v5740
    %v5776 = vpop.f32.mrf.mxu0
    %v5777 = vadd.f32 0.0, %v5776
    %v5778 = vpop.f32.mrf.mxu0
    %v5779 = vadd.f32 0.0, %v5778
    %v5780 = vpop.f32.mrf.mxu0
    %v5781 = vpop.f32.mrf.mxu0
    %5782 = vdwg.mxu0
    %5783 = vmatprep.subr.bf16.mxu0 %v5315
    %5784 = vmatpush1.bf16.msra.mxu0 %v5314
    %5785 = vmatprep.subr.bf16.mxu0 %v5307
    %5786 = vmatpush1.bf16.msra.mxu0 %v5306
    %5787 = vmatprep.subr.bf16.mxu0 %v5299
    %5788 = vmatpush1.bf16.msra.mxu0 %v5298
    %5789 = vmatprep.subr.bf16.mxu0 %v5291
    %5790 = vmatpush1.bf16.msra.mxu0 %v5290
    %5791 = vmatprep.subr.bf16.mxu0 %v5283
    %5792 = vmatpush1.bf16.msra.mxu0 %v5282
    %5793 = vmatprep.subr.bf16.mxu0 %v5275
    %5794 = vmatpush1.bf16.msra.mxu0 %v5274
    %5795 = vmatprep.subr.bf16.mxu0 %v5267
    %5796 = vmatpush1.bf16.msra.mxu0 %v5266
    %5797 = vmatprep.subr.bf16.mxu0 %v5259
    %5798 = vmatpush1.bf16.msra.mxu0 %v5258
    %5799 = vmatprep.subr.bf16.mxu0 %v5379
    %5800 = vmatpush2.bf16.msra.mxu0 %v5378
    %5801 = vmatprep.subr.bf16.mxu0 %v5371
    %5802 = vmatpush2.bf16.msra.mxu0 %v5370
    %5803 = vmatprep.subr.bf16.mxu0 %v5363
    %5804 = vmatpush2.bf16.msra.mxu0 %v5362
    %5805 = vmatprep.subr.bf16.mxu0 %v5355
    %5806 = vmatpush2.bf16.msra.mxu0 %v5354
    %5807 = vmatprep.subr.bf16.mxu0 %v5347
    %5808 = vmatpush2.bf16.msra.mxu0 %v5346
    %5809 = vmatprep.subr.bf16.mxu0 %v5339
    %5810 = vmatpush2.bf16.msra.mxu0 %v5338
    %5811 = vmatprep.subr.bf16.mxu0 %v5331
    %5812 = vmatpush2.bf16.msra.mxu0 %v5330
    %5813 = vmatprep.subr.bf16.mxu0 %v5323
    %5814 = vmatpush2.bf16.msra.mxu0 %v5322
    %5815 = vmatprep.mubr.bf16.mxu0 %v5741
    %5816 = vmatmul.mubr.bf16.gmra.mxu0 %v5740
    %v5817 = vpop.f32.mrf.mxu0
    %v5818 = vadd.f32 0.0, %v5817
    %v5819 = vpop.f32.mrf.mxu0
    %v5820 = vadd.f32 0.0, %v5819
    %v5821 = vpop.f32.mrf.mxu0
    %v5822 = vpop.f32.mrf.mxu0
    %5823 = vdwg.mxu0
    %5824 = vmatprep.subr.bf16.mxu0 %v5317
    %5825 = vmatpush1.bf16.msra.mxu0 %v5316
    %5826 = vmatprep.subr.bf16.mxu0 %v5309
    %5827 = vmatpush1.bf16.msra.mxu0 %v5308
    %5828 = vmatprep.subr.bf16.mxu0 %v5301
    %5829 = vmatpush1.bf16.msra.mxu0 %v5300
    %5830 = vmatprep.subr.bf16.mxu0 %v5293
    %5831 = vmatpush1.bf16.msra.mxu0 %v5292
    %5832 = vmatprep.subr.bf16.mxu0 %v5285
    %5833 = vmatpush1.bf16.msra.mxu0 %v5284
    %5834 = vmatprep.subr.bf16.mxu0 %v5277
    %5835 = vmatpush1.bf16.msra.mxu0 %v5276
    %5836 = vmatprep.subr.bf16.mxu0 %v5269
    %5837 = vmatpush1.bf16.msra.mxu0 %v5268
    %5838 = vmatprep.subr.bf16.mxu0 %v5261
    %5839 = vmatpush1.bf16.msra.mxu0 %v5260
    %5840 = vmatprep.subr.bf16.mxu0 %v5381
    %5841 = vmatpush2.bf16.msra.mxu0 %v5380
    %5842 = vmatprep.subr.bf16.mxu0 %v5373
    %5843 = vmatpush2.bf16.msra.mxu0 %v5372
    %5844 = vmatprep.subr.bf16.mxu0 %v5365
    %5845 = vmatpush2.bf16.msra.mxu0 %v5364
    %5846 = vmatprep.subr.bf16.mxu0 %v5357
    %5847 = vmatpush2.bf16.msra.mxu0 %v5356
    %5848 = vmatprep.subr.bf16.mxu0 %v5349
    %5849 = vmatpush2.bf16.msra.mxu0 %v5348
    %5850 = vmatprep.subr.bf16.mxu0 %v5341
    %5851 = vmatpush2.bf16.msra.mxu0 %v5340
    %5852 = vmatprep.subr.bf16.mxu0 %v5333
    %5853 = vmatpush2.bf16.msra.mxu0 %v5332
    %5854 = vmatprep.subr.bf16.mxu0 %v5325
    %5855 = vmatpush2.bf16.msra.mxu0 %v5324
    %5856 = vmatprep.mubr.bf16.mxu0 %v5741
    %5857 = vmatmul.mubr.bf16.gmra.mxu0 %v5740
    %v5858 = vpop.f32.mrf.mxu0
    %v5859 = vadd.f32 0.0, %v5858
    %v5860 = vpop.f32.mrf.mxu0
    %v5861 = vadd.f32 0.0, %v5860
    %v5862 = vpop.f32.mrf.mxu0
    %v5863 = vpop.f32.mrf.mxu0
    %5864 = vdwg.mxu0
    %5865 = vmatprep.subr.bf16.mxu0 %v5319
    %5866 = vmatpush1.bf16.msra.mxu0 %v5318
    %5867 = vmatprep.subr.bf16.mxu0 %v5311
    %5868 = vmatpush1.bf16.msra.mxu0 %v5310
    %5869 = vmatprep.subr.bf16.mxu0 %v5303
    %5870 = vmatpush1.bf16.msra.mxu0 %v5302
    %5871 = vmatprep.subr.bf16.mxu0 %v5295
    %5872 = vmatpush1.bf16.msra.mxu0 %v5294
    %5873 = vmatprep.subr.bf16.mxu0 %v5287
    %5874 = vmatpush1.bf16.msra.mxu0 %v5286
    %5875 = vmatprep.subr.bf16.mxu0 %v5279
    %5876 = vmatpush1.bf16.msra.mxu0 %v5278
    %5877 = vmatprep.subr.bf16.mxu0 %v5271
    %5878 = vmatpush1.bf16.msra.mxu0 %v5270
    %5879 = vmatprep.subr.bf16.mxu0 %v5263
    %5880 = vmatpush1.bf16.msra.mxu0 %v5262
    %5881 = vmatprep.subr.bf16.mxu0 %v5383
    %5882 = vmatpush2.bf16.msra.mxu0 %v5382
    %5883 = vmatprep.subr.bf16.mxu0 %v5375
    %5884 = vmatpush2.bf16.msra.mxu0 %v5374
    %5885 = vmatprep.subr.bf16.mxu0 %v5367
    %5886 = vmatpush2.bf16.msra.mxu0 %v5366
    %5887 = vmatprep.subr.bf16.mxu0 %v5359
    %5888 = vmatpush2.bf16.msra.mxu0 %v5358
    %5889 = vmatprep.subr.bf16.mxu0 %v5351
    %5890 = vmatpush2.bf16.msra.mxu0 %v5350
    %5891 = vmatprep.subr.bf16.mxu0 %v5343
    %5892 = vmatpush2.bf16.msra.mxu0 %v5342
    %5893 = vmatprep.subr.bf16.mxu0 %v5335
    %5894 = vmatpush2.bf16.msra.mxu0 %v5334
    %5895 = vmatprep.subr.bf16.mxu0 %v5327
    %5896 = vmatpush2.bf16.msra.mxu0 %v5326
    %5897 = vmatprep.mubr.bf16.mxu0 %v5741
    %5898 = vmatmul.mubr.bf16.gmra.mxu0 %v5740
    %v5899 = vpop.f32.mrf.mxu0
    %v5900 = vadd.f32 0.0, %v5899
    %v5901 = vpop.f32.mrf.mxu0
    %v5902 = vadd.f32 0.0, %v5901
    %v5903 = vpop.f32.mrf.mxu0
    %v5904 = vpop.f32.mrf.mxu0
    %5905 = vdwg.mxu0
    %v5906 = vld [vmem:[#allocation2 + $0x80] sm:$0xff]
    %v5907 = vld [vmem:[#allocation2 + $0x88] sm:$0xff]
    %v5908 = vld [vmem:[#allocation2 + $0x90] sm:$0xff]
    %v5909 = vld [vmem:[#allocation2 + $0x98] sm:$0xff]
    %v5910 = vadd.f32 %v5906, %v5777
    %v5911 = vadd.f32 %v5907, %v5779
    %v5912 = vadd.f32 %v5908, %v5818
    %v5913 = vadd.f32 %v5909, %v5820
    %v5914 = vld [vmem:[#allocation2 + $0x160] sm:$0xff]
    %v5915 = vld [vmem:[#allocation2 + $0x168] sm:$0xff]
    %v5916 = vld [vmem:[#allocation2 + $0x170] sm:$0xff]
    %v5917 = vld [vmem:[#allocation2 + $0x178] sm:$0xff]
    %v5918 = vadd.f32 %v5914, %v5859
    %v5919 = vadd.f32 %v5915, %v5861
    %v5920 = vadd.f32 %v5916, %v5900
    %v5921 = vadd.f32 %v5917, %v5902
    %v5922 = vxor.u32 %v5910, 2147483648
    %v5923 = vxor.u32 %v5911, 2147483648
    %v5924 = vxor.u32 %v5912, 2147483648
    %v5925 = vmul.f32 %v5922, 1.442695
    %v5926 = vpow.pop %v5925
    %v5927 = vmul.f32 %v5923, 1.442695
    %v5928 = vpow.pop %v5927
    %v5929 = vmul.f32 %v5924, 1.442695
    %v5930 = vpow.pop %v5929
    %v5931 = vadd.f32 %v5926, 1.0
    %v5932 = vadd.f32 %v5928, 1.0
    %v5933 = vadd.f32 %v5930, 1.0
    %v5934 = vrcp.pop %v5931
    %v5935 = vmul.f32 1.0, %v5934
    %v5936 = vrcp.pop %v5932
    %v5937 = vmul.f32 1.0, %v5936
    %v5938 = vrcp.pop %v5933
    %v5939 = vmul.f32 1.0, %v5938
    %v5940 = vtanh.pop %v5913
    %v5941 = vmul.f32 %v5937, %v5713
    %v5942 = vmul.f32 %v5935, %v5940
    %v5943 = vadd.f32 %v5941, %v5942
    %v5944 = vtanh.pop %v5943
    %v5945 = vmul.f32 %v5939, %v5944
    %v5946 = vxor.u32 %v5918, 2147483648
    %v5947 = vxor.u32 %v5919, 2147483648
    %v5948 = vxor.u32 %v5920, 2147483648
    %v5949 = vmul.f32 %v5946, 1.442695
    %v5950 = vpow.pop %v5949
    %v5951 = vmul.f32 %v5947, 1.442695
    %v5952 = vpow.pop %v5951
    %v5953 = vmul.f32 %v5948, 1.442695
    %v5954 = vpow.pop %v5953
    %v5955 = vadd.f32 %v5950, 1.0
    %v5956 = vadd.f32 %v5952, 1.0
    %v5957 = vadd.f32 %v5954, 1.0
    %v5958 = vrcp.pop %v5955
    %v5959 = vmul.f32 1.0, %v5958
    %v5960 = vrcp.pop %v5956
    %v5961 = vmul.f32 1.0, %v5960
    %v5962 = vrcp.pop %v5957
    %v5963 = vmul.f32 1.0, %v5962
    %v5964 = vtanh.pop %v5921
    %v5965 = vmul.f32 %v5961, %v5737
    %v5966 = vmul.f32 %v5959, %v5964
    %v5967 = vadd.f32 %v5965, %v5966
    %v5968 = vtanh.pop %v5967
    %v5969 = vmul.f32 %v5963, %v5968
    %v5970 = vpack.c.bf16 %v5945, %v5945
    %v5971 = vpack.c.bf16 %v5969, %v5969
    %5972 = vmatprep.subr.bf16.mxu0 %v5313
    %5973 = vmatpush1.bf16.msra.mxu0 %v5312
    %5974 = vmatprep.subr.bf16.mxu0 %v5305
    %5975 = vmatpush1.bf16.msra.mxu0 %v5304
    %5976 = vmatprep.subr.bf16.mxu0 %v5297
    %5977 = vmatpush1.bf16.msra.mxu0 %v5296
    %5978 = vmatprep.subr.bf16.mxu0 %v5289
    %5979 = vmatpush1.bf16.msra.mxu0 %v5288
    %5980 = vmatprep.subr.bf16.mxu0 %v5281
    %5981 = vmatpush1.bf16.msra.mxu0 %v5280
    %5982 = vmatprep.subr.bf16.mxu0 %v5273
    %5983 = vmatpush1.bf16.msra.mxu0 %v5272
    %5984 = vmatprep.subr.bf16.mxu0 %v5265
    %5985 = vmatpush1.bf16.msra.mxu0 %v5264
    %5986 = vmatprep.subr.bf16.mxu0 %v5257
    %5987 = vmatpush1.bf16.msra.mxu0 %v5256
    %5988 = vmatprep.subr.bf16.mxu0 %v5377
    %5989 = vmatpush2.bf16.msra.mxu0 %v5376
    %5990 = vmatprep.subr.bf16.mxu0 %v5369
    %5991 = vmatpush2.bf16.msra.mxu0 %v5368
    %5992 = vmatprep.subr.bf16.mxu0 %v5361
    %5993 = vmatpush2.bf16.msra.mxu0 %v5360
    %5994 = vmatprep.subr.bf16.mxu0 %v5353
    %5995 = vmatpush2.bf16.msra.mxu0 %v5352
    %5996 = vmatprep.subr.bf16.mxu0 %v5345
    %5997 = vmatpush2.bf16.msra.mxu0 %v5344
    %5998 = vmatprep.subr.bf16.mxu0 %v5337
    %5999 = vmatpush2.bf16.msra.mxu0 %v5336
    %6000 = vmatprep.subr.bf16.mxu0 %v5329
    %6001 = vmatpush2.bf16.msra.mxu0 %v5328
    %6002 = vmatprep.subr.bf16.mxu0 %v5321
    %6003 = vmatpush2.bf16.msra.mxu0 %v5320
    %6004 = vmatprep.mubr.bf16.mxu0 %v5971
    %6005 = vmatmul.mubr.bf16.gmra.mxu0 %v5970
    %v6006 = vpop.f32.mrf.mxu0
    %v6007 = vadd.f32 0.0, %v6006
    %v6008 = vpop.f32.mrf.mxu0
    %v6009 = vadd.f32 0.0, %v6008
    %v6010 = vpop.f32.mrf.mxu0
    %v6011 = vpop.f32.mrf.mxu0
    %6012 = vdwg.mxu0
    %6013 = vmatprep.subr.bf16.mxu0 %v5315
    %6014 = vmatpush1.bf16.msra.mxu0 %v5314
    %6015 = vmatprep.subr.bf16.mxu0 %v5307
    %6016 = vmatpush1.bf16.msra.mxu0 %v5306
    %6017 = vmatprep.subr.bf16.mxu0 %v5299
    %6018 = vmatpush1.bf16.msra.mxu0 %v5298
    %6019 = vmatprep.subr.bf16.mxu0 %v5291
    %6020 = vmatpush1.bf16.msra.mxu0 %v5290
    %6021 = vmatprep.subr.bf16.mxu0 %v5283
    %6022 = vmatpush1.bf16.msra.mxu0 %v5282
    %6023 = vmatprep.subr.bf16.mxu0 %v5275
    %6024 = vmatpush1.bf16.msra.mxu0 %v5274
    %6025 = vmatprep.subr.bf16.mxu0 %v5267
    %6026 = vmatpush1.bf16.msra.mxu0 %v5266
    %6027 = vmatprep.subr.bf16.mxu0 %v5259
    %6028 = vmatpush1.bf16.msra.mxu0 %v5258
    %6029 = vmatprep.subr.bf16.mxu0 %v5379
    %6030 = vmatpush2.bf16.msra.mxu0 %v5378
    %6031 = vmatprep.subr.bf16.mxu0 %v5371
    %6032 = vmatpush2.bf16.msra.mxu0 %v5370
    %6033 = vmatprep.subr.bf16.mxu0 %v5363
    %6034 = vmatpush2.bf16.msra.mxu0 %v5362
    %6035 = vmatprep.subr.bf16.mxu0 %v5355
    %6036 = vmatpush2.bf16.msra.mxu0 %v5354
    %6037 = vmatprep.subr.bf16.mxu0 %v5347
    %6038 = vmatpush2.bf16.msra.mxu0 %v5346
    %6039 = vmatprep.subr.bf16.mxu0 %v5339
    %6040 = vmatpush2.bf16.msra.mxu0 %v5338
    %6041 = vmatprep.subr.bf16.mxu0 %v5331
    %6042 = vmatpush2.bf16.msra.mxu0 %v5330
    %6043 = vmatprep.subr.bf16.mxu0 %v5323
    %6044 = vmatpush2.bf16.msra.mxu0 %v5322
    %6045 = vmatprep.mubr.bf16.mxu0 %v5971
    %6046 = vmatmul.mubr.bf16.gmra.mxu0 %v5970
    %v6047 = vpop.f32.mrf.mxu0
    %v6048 = vadd.f32 0.0, %v6047
    %v6049 = vpop.f32.mrf.mxu0
    %v6050 = vadd.f32 0.0, %v6049
    %v6051 = vpop.f32.mrf.mxu0
    %v6052 = vpop.f32.mrf.mxu0
    %6053 = vdwg.mxu0
    %6054 = vmatprep.subr.bf16.mxu0 %v5317
    %6055 = vmatpush1.bf16.msra.mxu0 %v5316
    %6056 = vmatprep.subr.bf16.mxu0 %v5309
    %6057 = vmatpush1.bf16.msra.mxu0 %v5308
    %6058 = vmatprep.subr.bf16.mxu0 %v5301
    %6059 = vmatpush1.bf16.msra.mxu0 %v5300
    %6060 = vmatprep.subr.bf16.mxu0 %v5293
    %6061 = vmatpush1.bf16.msra.mxu0 %v5292
    %6062 = vmatprep.subr.bf16.mxu0 %v5285
    %6063 = vmatpush1.bf16.msra.mxu0 %v5284
    %6064 = vmatprep.subr.bf16.mxu0 %v5277
    %6065 = vmatpush1.bf16.msra.mxu0 %v5276
    %6066 = vmatprep.subr.bf16.mxu0 %v5269
    %6067 = vmatpush1.bf16.msra.mxu0 %v5268
    %6068 = vmatprep.subr.bf16.mxu0 %v5261
    %6069 = vmatpush1.bf16.msra.mxu0 %v5260
    %6070 = vmatprep.subr.bf16.mxu0 %v5381
    %6071 = vmatpush2.bf16.msra.mxu0 %v5380
    %6072 = vmatprep.subr.bf16.mxu0 %v5373
    %6073 = vmatpush2.bf16.msra.mxu0 %v5372
    %6074 = vmatprep.subr.bf16.mxu0 %v5365
    %6075 = vmatpush2.bf16.msra.mxu0 %v5364
    %6076 = vmatprep.subr.bf16.mxu0 %v5357
    %6077 = vmatpush2.bf16.msra.mxu0 %v5356
    %6078 = vmatprep.subr.bf16.mxu0 %v5349
    %6079 = vmatpush2.bf16.msra.mxu0 %v5348
    %6080 = vmatprep.subr.bf16.mxu0 %v5341
    %6081 = vmatpush2.bf16.msra.mxu0 %v5340
    %6082 = vmatprep.subr.bf16.mxu0 %v5333
    %6083 = vmatpush2.bf16.msra.mxu0 %v5332
    %6084 = vmatprep.subr.bf16.mxu0 %v5325
    %6085 = vmatpush2.bf16.msra.mxu0 %v5324
    %6086 = vmatprep.mubr.bf16.mxu0 %v5971
    %6087 = vmatmul.mubr.bf16.gmra.mxu0 %v5970
    %v6088 = vpop.f32.mrf.mxu0
    %v6089 = vadd.f32 0.0, %v6088
    %v6090 = vpop.f32.mrf.mxu0
    %v6091 = vadd.f32 0.0, %v6090
    %v6092 = vpop.f32.mrf.mxu0
    %v6093 = vpop.f32.mrf.mxu0
    %6094 = vdwg.mxu0
    %6095 = vmatprep.subr.bf16.mxu0 %v5319
    %6096 = vmatpush1.bf16.msra.mxu0 %v5318
    %6097 = vmatprep.subr.bf16.mxu0 %v5311
    %6098 = vmatpush1.bf16.msra.mxu0 %v5310
    %6099 = vmatprep.subr.bf16.mxu0 %v5303
    %6100 = vmatpush1.bf16.msra.mxu0 %v5302
    %6101 = vmatprep.subr.bf16.mxu0 %v5295
    %6102 = vmatpush1.bf16.msra.mxu0 %v5294
    %6103 = vmatprep.subr.bf16.mxu0 %v5287
    %6104 = vmatpush1.bf16.msra.mxu0 %v5286
    %6105 = vmatprep.subr.bf16.mxu0 %v5279
    %6106 = vmatpush1.bf16.msra.mxu0 %v5278
    %6107 = vmatprep.subr.bf16.mxu0 %v5271
    %6108 = vmatpush1.bf16.msra.mxu0 %v5270
    %6109 = vmatprep.subr.bf16.mxu0 %v5263
    %6110 = vmatpush1.bf16.msra.mxu0 %v5262
    %6111 = vmatprep.subr.bf16.mxu0 %v5383
    %6112 = vmatpush2.bf16.msra.mxu0 %v5382
    %6113 = vmatprep.subr.bf16.mxu0 %v5375
    %6114 = vmatpush2.bf16.msra.mxu0 %v5374
    %6115 = vmatprep.subr.bf16.mxu0 %v5367
    %6116 = vmatpush2.bf16.msra.mxu0 %v5366
    %6117 = vmatprep.subr.bf16.mxu0 %v5359
    %6118 = vmatpush2.bf16.msra.mxu0 %v5358
    %6119 = vmatprep.subr.bf16.mxu0 %v5351
    %6120 = vmatpush2.bf16.msra.mxu0 %v5350
    %6121 = vmatprep.subr.bf16.mxu0 %v5343
    %6122 = vmatpush2.bf16.msra.mxu0 %v5342
    %6123 = vmatprep.subr.bf16.mxu0 %v5335
    %6124 = vmatpush2.bf16.msra.mxu0 %v5334
    %6125 = vmatprep.subr.bf16.mxu0 %v5327
    %6126 = vmatpush2.bf16.msra.mxu0 %v5326
    %6127 = vmatprep.mubr.bf16.mxu0 %v5971
    %6128 = vmatmul.mubr.bf16.gmra.mxu0 %v5970
    %v6129 = vpop.f32.mrf.mxu0
    %v6130 = vadd.f32 0.0, %v6129
    %v6131 = vpop.f32.mrf.mxu0
    %v6132 = vadd.f32 0.0, %v6131
    %v6133 = vpop.f32.mrf.mxu0
    %v6134 = vpop.f32.mrf.mxu0
    %6135 = vdwg.mxu0
    %v6136 = vld [vmem:[#allocation2 + $0xc0] sm:$0xff]
    %v6137 = vld [vmem:[#allocation2 + $0xc8] sm:$0xff]
    %v6138 = vld [vmem:[#allocation2 + $0xd0] sm:$0xff]
    %v6139 = vld [vmem:[#allocation2 + $0xd8] sm:$0xff]
    %v6140 = vadd.f32 %v6136, %v6007
    %v6141 = vadd.f32 %v6137, %v6009
    %v6142 = vadd.f32 %v6138, %v6048
    %v6143 = vadd.f32 %v6139, %v6050
    %v6144 = vld [vmem:[#allocation2 + $0x120] sm:$0xff]
    %v6145 = vld [vmem:[#allocation2 + $0x128] sm:$0xff]
    %v6146 = vld [vmem:[#allocation2 + $0x130] sm:$0xff]
    %v6147 = vld [vmem:[#allocation2 + $0x138] sm:$0xff]
    %v6148 = vadd.f32 %v6144, %v6089
    %v6149 = vadd.f32 %v6145, %v6091
    %v6150 = vadd.f32 %v6146, %v6130
    %v6151 = vadd.f32 %v6147, %v6132
    %v6152 = vxor.u32 %v6140, 2147483648
    %v6153 = vxor.u32 %v6141, 2147483648
    %v6154 = vxor.u32 %v6142, 2147483648
    %v6155 = vmul.f32 %v6152, 1.442695
    %v6156 = vpow.pop %v6155
    %v6157 = vmul.f32 %v6153, 1.442695
    %v6158 = vpow.pop %v6157
    %v6159 = vmul.f32 %v6154, 1.442695
    %v6160 = vpow.pop %v6159
    %v6161 = vadd.f32 %v6156, 1.0
    %v6162 = vadd.f32 %v6158, 1.0
    %v6163 = vadd.f32 %v6160, 1.0
    %v6164 = vrcp.pop %v6161
    %v6165 = vmul.f32 1.0, %v6164
    %v6166 = vrcp.pop %v6162
    %v6167 = vmul.f32 1.0, %v6166
    %v6168 = vrcp.pop %v6163
    %v6169 = vmul.f32 1.0, %v6168
    %v6170 = vtanh.pop %v6143
    %v6171 = vmul.f32 %v6167, %v5943
    %v6172 = vmul.f32 %v6165, %v6170
    %v6173 = vadd.f32 %v6171, %v6172
    %v6174 = vtanh.pop %v6173
    %v6175 = vmul.f32 %v6169, %v6174
    %v6176 = vxor.u32 %v6148, 2147483648
    %v6177 = vxor.u32 %v6149, 2147483648
    %v6178 = vxor.u32 %v6150, 2147483648
    %v6179 = vmul.f32 %v6176, 1.442695
    %v6180 = vpow.pop %v6179
    %v6181 = vmul.f32 %v6177, 1.442695
    %v6182 = vpow.pop %v6181
    %v6183 = vmul.f32 %v6178, 1.442695
    %v6184 = vpow.pop %v6183
    %v6185 = vadd.f32 %v6180, 1.0
    %v6186 = vadd.f32 %v6182, 1.0
    %v6187 = vadd.f32 %v6184, 1.0
    %v6188 = vrcp.pop %v6185
    %v6189 = vmul.f32 1.0, %v6188
    %v6190 = vrcp.pop %v6186
    %v6191 = vmul.f32 1.0, %v6190
    %v6192 = vrcp.pop %v6187
    %v6193 = vmul.f32 1.0, %v6192
    %v6194 = vtanh.pop %v6151
    %v6195 = vmul.f32 %v6191, %v5967
    %v6196 = vmul.f32 %v6189, %v6194
    %v6197 = vadd.f32 %v6195, %v6196
    %v6198 = vtanh.pop %v6197
    %v6199 = vmul.f32 %v6193, %v6198
    %v6200 = vpack.c.bf16 %v6175, %v6175
    %v6201 = vpack.c.bf16 %v6199, %v6199
    %6202 = vmatprep.subr.bf16.mxu0 %v5313
    %6203 = vmatpush1.bf16.msra.mxu0 %v5312
    %6204 = vmatprep.subr.bf16.mxu0 %v5305
    %6205 = vmatpush1.bf16.msra.mxu0 %v5304
    %6206 = vmatprep.subr.bf16.mxu0 %v5297
    %6207 = vmatpush1.bf16.msra.mxu0 %v5296
    %6208 = vmatprep.subr.bf16.mxu0 %v5289
    %6209 = vmatpush1.bf16.msra.mxu0 %v5288
    %6210 = vmatprep.subr.bf16.mxu0 %v5281
    %6211 = vmatpush1.bf16.msra.mxu0 %v5280
    %6212 = vmatprep.subr.bf16.mxu0 %v5273
    %6213 = vmatpush1.bf16.msra.mxu0 %v5272
    %6214 = vmatprep.subr.bf16.mxu0 %v5265
    %6215 = vmatpush1.bf16.msra.mxu0 %v5264
    %6216 = vmatprep.subr.bf16.mxu0 %v5257
    %6217 = vmatpush1.bf16.msra.mxu0 %v5256
    %6218 = vmatprep.subr.bf16.mxu0 %v5377
    %6219 = vmatpush2.bf16.msra.mxu0 %v5376
    %6220 = vmatprep.subr.bf16.mxu0 %v5369
    %6221 = vmatpush2.bf16.msra.mxu0 %v5368
    %6222 = vmatprep.subr.bf16.mxu0 %v5361
    %6223 = vmatpush2.bf16.msra.mxu0 %v5360
    %6224 = vmatprep.subr.bf16.mxu0 %v5353
    %6225 = vmatpush2.bf16.msra.mxu0 %v5352
    %6226 = vmatprep.subr.bf16.mxu0 %v5345
    %6227 = vmatpush2.bf16.msra.mxu0 %v5344
    %6228 = vmatprep.subr.bf16.mxu0 %v5337
    %6229 = vmatpush2.bf16.msra.mxu0 %v5336
    %6230 = vmatprep.subr.bf16.mxu0 %v5329
    %6231 = vmatpush2.bf16.msra.mxu0 %v5328
    %6232 = vmatprep.subr.bf16.mxu0 %v5321
    %6233 = vmatpush2.bf16.msra.mxu0 %v5320
    %6234 = vmatprep.mubr.bf16.mxu0 %v6201
    %6235 = vmatmul.mubr.bf16.gmra.mxu0 %v6200
    %v6236 = vpop.f32.mrf.mxu0
    %v6237 = vadd.f32 0.0, %v6236
    %v6238 = vpop.f32.mrf.mxu0
    %v6239 = vadd.f32 0.0, %v6238
    %v6240 = vpop.f32.mrf.mxu0
    %v6241 = vpop.f32.mrf.mxu0
    %6242 = vdwg.mxu0
    %6243 = vmatprep.subr.bf16.mxu0 %v5315
    %6244 = vmatpush1.bf16.msra.mxu0 %v5314
    %6245 = vmatprep.subr.bf16.mxu0 %v5307
    %6246 = vmatpush1.bf16.msra.mxu0 %v5306
    %6247 = vmatprep.subr.bf16.mxu0 %v5299
    %6248 = vmatpush1.bf16.msra.mxu0 %v5298
    %6249 = vmatprep.subr.bf16.mxu0 %v5291
    %6250 = vmatpush1.bf16.msra.mxu0 %v5290
    %6251 = vmatprep.subr.bf16.mxu0 %v5283
    %6252 = vmatpush1.bf16.msra.mxu0 %v5282
    %6253 = vmatprep.subr.bf16.mxu0 %v5275
    %6254 = vmatpush1.bf16.msra.mxu0 %v5274
    %6255 = vmatprep.subr.bf16.mxu0 %v5267
    %6256 = vmatpush1.bf16.msra.mxu0 %v5266
    %6257 = vmatprep.subr.bf16.mxu0 %v5259
    %6258 = vmatpush1.bf16.msra.mxu0 %v5258
    %6259 = vmatprep.subr.bf16.mxu0 %v5379
    %6260 = vmatpush2.bf16.msra.mxu0 %v5378
    %6261 = vmatprep.subr.bf16.mxu0 %v5371
    %6262 = vmatpush2.bf16.msra.mxu0 %v5370
    %6263 = vmatprep.subr.bf16.mxu0 %v5363
    %6264 = vmatpush2.bf16.msra.mxu0 %v5362
    %6265 = vmatprep.subr.bf16.mxu0 %v5355
    %6266 = vmatpush2.bf16.msra.mxu0 %v5354
    %6267 = vmatprep.subr.bf16.mxu0 %v5347
    %6268 = vmatpush2.bf16.msra.mxu0 %v5346
    %6269 = vmatprep.subr.bf16.mxu0 %v5339
    %6270 = vmatpush2.bf16.msra.mxu0 %v5338
    %6271 = vmatprep.subr.bf16.mxu0 %v5331
    %6272 = vmatpush2.bf16.msra.mxu0 %v5330
    %6273 = vmatprep.subr.bf16.mxu0 %v5323
    %6274 = vmatpush2.bf16.msra.mxu0 %v5322
    %6275 = vmatprep.mubr.bf16.mxu0 %v6201
    %6276 = vmatmul.mubr.bf16.gmra.mxu0 %v6200
    %v6277 = vpop.f32.mrf.mxu0
    %v6278 = vadd.f32 0.0, %v6277
    %v6279 = vpop.f32.mrf.mxu0
    %v6280 = vadd.f32 0.0, %v6279
    %v6281 = vpop.f32.mrf.mxu0
    %v6282 = vpop.f32.mrf.mxu0
    %6283 = vdwg.mxu0
    %6284 = vmatprep.subr.bf16.mxu0 %v5317
    %6285 = vmatpush1.bf16.msra.mxu0 %v5316
    %6286 = vmatprep.subr.bf16.mxu0 %v5309
    %6287 = vmatpush1.bf16.msra.mxu0 %v5308
    %6288 = vmatprep.subr.bf16.mxu0 %v5301
    %6289 = vmatpush1.bf16.msra.mxu0 %v5300
    %6290 = vmatprep.subr.bf16.mxu0 %v5293
    %6291 = vmatpush1.bf16.msra.mxu0 %v5292
    %6292 = vmatprep.subr.bf16.mxu0 %v5285
    %6293 = vmatpush1.bf16.msra.mxu0 %v5284
    %6294 = vmatprep.subr.bf16.mxu0 %v5277
    %6295 = vmatpush1.bf16.msra.mxu0 %v5276
    %6296 = vmatprep.subr.bf16.mxu0 %v5269
    %6297 = vmatpush1.bf16.msra.mxu0 %v5268
    %6298 = vmatprep.subr.bf16.mxu0 %v5261
    %6299 = vmatpush1.bf16.msra.mxu0 %v5260
    %6300 = vmatprep.subr.bf16.mxu0 %v5381
    %6301 = vmatpush2.bf16.msra.mxu0 %v5380
    %6302 = vmatprep.subr.bf16.mxu0 %v5373
    %6303 = vmatpush2.bf16.msra.mxu0 %v5372
    %6304 = vmatprep.subr.bf16.mxu0 %v5365
    %6305 = vmatpush2.bf16.msra.mxu0 %v5364
    %6306 = vmatprep.subr.bf16.mxu0 %v5357
    %6307 = vmatpush2.bf16.msra.mxu0 %v5356
    %6308 = vmatprep.subr.bf16.mxu0 %v5349
    %6309 = vmatpush2.bf16.msra.mxu0 %v5348
    %6310 = vmatprep.subr.bf16.mxu0 %v5341
    %6311 = vmatpush2.bf16.msra.mxu0 %v5340
    %6312 = vmatprep.subr.bf16.mxu0 %v5333
    %6313 = vmatpush2.bf16.msra.mxu0 %v5332
    %6314 = vmatprep.subr.bf16.mxu0 %v5325
    %6315 = vmatpush2.bf16.msra.mxu0 %v5324
    %6316 = vmatprep.mubr.bf16.mxu0 %v6201
    %6317 = vmatmul.mubr.bf16.gmra.mxu0 %v6200
    %v6318 = vpop.f32.mrf.mxu0
    %v6319 = vadd.f32 0.0, %v6318
    %v6320 = vpop.f32.mrf.mxu0
    %v6321 = vadd.f32 0.0, %v6320
    %v6322 = vpop.f32.mrf.mxu0
    %v6323 = vpop.f32.mrf.mxu0
    %6324 = vdwg.mxu0
    %6325 = vmatprep.subr.bf16.mxu0 %v5319
    %6326 = vmatpush1.bf16.msra.mxu0 %v5318
    %6327 = vmatprep.subr.bf16.mxu0 %v5311
    %6328 = vmatpush1.bf16.msra.mxu0 %v5310
    %6329 = vmatprep.subr.bf16.mxu0 %v5303
    %6330 = vmatpush1.bf16.msra.mxu0 %v5302
    %6331 = vmatprep.subr.bf16.mxu0 %v5295
    %6332 = vmatpush1.bf16.msra.mxu0 %v5294
    %6333 = vmatprep.subr.bf16.mxu0 %v5287
    %6334 = vmatpush1.bf16.msra.mxu0 %v5286
    %6335 = vmatprep.subr.bf16.mxu0 %v5279
    %6336 = vmatpush1.bf16.msra.mxu0 %v5278
    %6337 = vmatprep.subr.bf16.mxu0 %v5271
    %6338 = vmatpush1.bf16.msra.mxu0 %v5270
    %6339 = vmatprep.subr.bf16.mxu0 %v5263
    %6340 = vmatpush1.bf16.msra.mxu0 %v5262
    %6341 = vmatprep.subr.bf16.mxu0 %v5383
    %6342 = vmatpush2.bf16.msra.mxu0 %v5382
    %6343 = vmatprep.subr.bf16.mxu0 %v5375
    %6344 = vmatpush2.bf16.msra.mxu0 %v5374
    %6345 = vmatprep.subr.bf16.mxu0 %v5367
    %6346 = vmatpush2.bf16.msra.mxu0 %v5366
    %6347 = vmatprep.subr.bf16.mxu0 %v5359
    %6348 = vmatpush2.bf16.msra.mxu0 %v5358
    %6349 = vmatprep.subr.bf16.mxu0 %v5351
    %6350 = vmatpush2.bf16.msra.mxu0 %v5350
    %6351 = vmatprep.subr.bf16.mxu0 %v5343
    %6352 = vmatpush2.bf16.msra.mxu0 %v5342
    %6353 = vmatprep.subr.bf16.mxu0 %v5335
    %6354 = vmatpush2.bf16.msra.mxu0 %v5334
    %6355 = vmatprep.subr.bf16.mxu0 %v5327
    %6356 = vmatpush2.bf16.msra.mxu0 %v5326
    %6357 = vmatprep.mubr.bf16.mxu0 %v6201
    %6358 = vmatmul.mubr.bf16.gmra.mxu0 %v6200
    %v6359 = vpop.f32.mrf.mxu0
    %v6360 = vadd.f32 0.0, %v6359
    %v6361 = vpop.f32.mrf.mxu0
    %v6362 = vadd.f32 0.0, %v6361
    %v6363 = vpop.f32.mrf.mxu0
    %v6364 = vpop.f32.mrf.mxu0
    %6365 = vdwg.mxu0
    %v6366 = vld [vmem:[#allocation2 + $0x100] sm:$0xff]
    %v6367 = vld [vmem:[#allocation2 + $0x108] sm:$0xff]
    %v6368 = vld [vmem:[#allocation2 + $0x110] sm:$0xff]
    %v6369 = vld [vmem:[#allocation2 + $0x118] sm:$0xff]
    %v6370 = vadd.f32 %v6366, %v6237
    %v6371 = vadd.f32 %v6367, %v6239
    %v6372 = vadd.f32 %v6368, %v6278
    %v6373 = vadd.f32 %v6369, %v6280
    %v6374 = vld [vmem:[#allocation2 + $0xe0] sm:$0xff]
    %v6375 = vld [vmem:[#allocation2 + $0xe8] sm:$0xff]
    %v6376 = vld [vmem:[#allocation2 + $0xf0] sm:$0xff]
    %v6377 = vld [vmem:[#allocation2 + $0xf8] sm:$0xff]
    %v6378 = vadd.f32 %v6374, %v6319
    %v6379 = vadd.f32 %v6375, %v6321
    %v6380 = vadd.f32 %v6376, %v6360
    %v6381 = vadd.f32 %v6377, %v6362
    %v6382 = vxor.u32 %v6370, 2147483648
    %v6383 = vxor.u32 %v6371, 2147483648
    %v6384 = vxor.u32 %v6372, 2147483648
    %v6385 = vmul.f32 %v6382, 1.442695
    %v6386 = vpow.pop %v6385
    %v6387 = vmul.f32 %v6383, 1.442695
    %v6388 = vpow.pop %v6387
    %v6389 = vmul.f32 %v6384, 1.442695
    %v6390 = vpow.pop %v6389
    %v6391 = vadd.f32 %v6386, 1.0
    %v6392 = vadd.f32 %v6388, 1.0
    %v6393 = vadd.f32 %v6390, 1.0
    %v6394 = vrcp.pop %v6391
    %v6395 = vmul.f32 1.0, %v6394
    %v6396 = vrcp.pop %v6392
    %v6397 = vmul.f32 1.0, %v6396
    %v6398 = vrcp.pop %v6393
    %v6399 = vmul.f32 1.0, %v6398
    %v6400 = vtanh.pop %v6373
    %v6401 = vmul.f32 %v6397, %v6173
    %v6402 = vmul.f32 %v6395, %v6400
    %v6403 = vadd.f32 %v6401, %v6402
    %v6404 = vtanh.pop %v6403
    %v6405 = vmul.f32 %v6399, %v6404
    %v6406 = vxor.u32 %v6378, 2147483648
    %v6407 = vxor.u32 %v6379, 2147483648
    %v6408 = vxor.u32 %v6380, 2147483648
    %v6409 = vmul.f32 %v6406, 1.442695
    %v6410 = vpow.pop %v6409
    %v6411 = vmul.f32 %v6407, 1.442695
    %v6412 = vpow.pop %v6411
    %v6413 = vmul.f32 %v6408, 1.442695
    %v6414 = vpow.pop %v6413
    %v6415 = vadd.f32 %v6410, 1.0
    %v6416 = vadd.f32 %v6412, 1.0
    %v6417 = vadd.f32 %v6414, 1.0
    %v6418 = vrcp.pop %v6415
    %v6419 = vmul.f32 1.0, %v6418
    %v6420 = vrcp.pop %v6416
    %v6421 = vmul.f32 1.0, %v6420
    %v6422 = vrcp.pop %v6417
    %v6423 = vmul.f32 1.0, %v6422
    %v6424 = vtanh.pop %v6381
    %v6425 = vmul.f32 %v6421, %v6197
    %v6426 = vmul.f32 %v6419, %v6424
    %v6427 = vadd.f32 %v6425, %v6426
    %v6428 = vtanh.pop %v6427
    %v6429 = vmul.f32 %v6423, %v6428
    %v6430 = vpack.c.bf16 %v6405, %v6405
    %v6431 = vpack.c.bf16 %v6429, %v6429
    %6432 = vmatprep.subr.bf16.mxu0 %v5313
    %6433 = vmatpush1.bf16.msra.mxu0 %v5312
    %6434 = vmatprep.subr.bf16.mxu0 %v5305
    %6435 = vmatpush1.bf16.msra.mxu0 %v5304
    %6436 = vmatprep.subr.bf16.mxu0 %v5297
    %6437 = vmatpush1.bf16.msra.mxu0 %v5296
    %6438 = vmatprep.subr.bf16.mxu0 %v5289
    %6439 = vmatpush1.bf16.msra.mxu0 %v5288
    %6440 = vmatprep.subr.bf16.mxu0 %v5281
    %6441 = vmatpush1.bf16.msra.mxu0 %v5280
    %6442 = vmatprep.subr.bf16.mxu0 %v5273
    %6443 = vmatpush1.bf16.msra.mxu0 %v5272
    %6444 = vmatprep.subr.bf16.mxu0 %v5265
    %6445 = vmatpush1.bf16.msra.mxu0 %v5264
    %6446 = vmatprep.subr.bf16.mxu0 %v5257
    %6447 = vmatpush1.bf16.msra.mxu0 %v5256
    %6448 = vmatprep.subr.bf16.mxu0 %v5377
    %6449 = vmatpush2.bf16.msra.mxu0 %v5376
    %6450 = vmatprep.subr.bf16.mxu0 %v5369
    %6451 = vmatpush2.bf16.msra.mxu0 %v5368
    %6452 = vmatprep.subr.bf16.mxu0 %v5361
    %6453 = vmatpush2.bf16.msra.mxu0 %v5360
    %6454 = vmatprep.subr.bf16.mxu0 %v5353
    %6455 = vmatpush2.bf16.msra.mxu0 %v5352
    %6456 = vmatprep.subr.bf16.mxu0 %v5345
    %6457 = vmatpush2.bf16.msra.mxu0 %v5344
    %6458 = vmatprep.subr.bf16.mxu0 %v5337
    %6459 = vmatpush2.bf16.msra.mxu0 %v5336
    %6460 = vmatprep.subr.bf16.mxu0 %v5329
    %6461 = vmatpush2.bf16.msra.mxu0 %v5328
    %6462 = vmatprep.subr.bf16.mxu0 %v5321
    %6463 = vmatpush2.bf16.msra.mxu0 %v5320
    %6464 = vmatprep.mubr.bf16.mxu0 %v6431
    %6465 = vmatmul.mubr.bf16.gmra.mxu0 %v6430
    %v6466 = vpop.f32.mrf.mxu0
    %v6467 = vadd.f32 0.0, %v6466
    %v6468 = vpop.f32.mrf.mxu0
    %v6469 = vadd.f32 0.0, %v6468
    %v6470 = vpop.f32.mrf.mxu0
    %v6471 = vpop.f32.mrf.mxu0
    %6472 = vdwg.mxu0
    %6473 = vmatprep.subr.bf16.mxu0 %v5315
    %6474 = vmatpush1.bf16.msra.mxu0 %v5314
    %6475 = vmatprep.subr.bf16.mxu0 %v5307
    %6476 = vmatpush1.bf16.msra.mxu0 %v5306
    %6477 = vmatprep.subr.bf16.mxu0 %v5299
    %6478 = vmatpush1.bf16.msra.mxu0 %v5298
    %6479 = vmatprep.subr.bf16.mxu0 %v5291
    %6480 = vmatpush1.bf16.msra.mxu0 %v5290
    %6481 = vmatprep.subr.bf16.mxu0 %v5283
    %6482 = vmatpush1.bf16.msra.mxu0 %v5282
    %6483 = vmatprep.subr.bf16.mxu0 %v5275
    %6484 = vmatpush1.bf16.msra.mxu0 %v5274
    %6485 = vmatprep.subr.bf16.mxu0 %v5267
    %6486 = vmatpush1.bf16.msra.mxu0 %v5266
    %6487 = vmatprep.subr.bf16.mxu0 %v5259
    %6488 = vmatpush1.bf16.msra.mxu0 %v5258
    %6489 = vmatprep.subr.bf16.mxu0 %v5379
    %6490 = vmatpush2.bf16.msra.mxu0 %v5378
    %6491 = vmatprep.subr.bf16.mxu0 %v5371
    %6492 = vmatpush2.bf16.msra.mxu0 %v5370
    %6493 = vmatprep.subr.bf16.mxu0 %v5363
    %6494 = vmatpush2.bf16.msra.mxu0 %v5362
    %6495 = vmatprep.subr.bf16.mxu0 %v5355
    %6496 = vmatpush2.bf16.msra.mxu0 %v5354
    %6497 = vmatprep.subr.bf16.mxu0 %v5347
    %6498 = vmatpush2.bf16.msra.mxu0 %v5346
    %6499 = vmatprep.subr.bf16.mxu0 %v5339
    %6500 = vmatpush2.bf16.msra.mxu0 %v5338
    %6501 = vmatprep.subr.bf16.mxu0 %v5331
    %6502 = vmatpush2.bf16.msra.mxu0 %v5330
    %6503 = vmatprep.subr.bf16.mxu0 %v5323
    %6504 = vmatpush2.bf16.msra.mxu0 %v5322
    %6505 = vmatprep.mubr.bf16.mxu0 %v6431
    %6506 = vmatmul.mubr.bf16.gmra.mxu0 %v6430
    %v6507 = vpop.f32.mrf.mxu0
    %v6508 = vadd.f32 0.0, %v6507
    %v6509 = vpop.f32.mrf.mxu0
    %v6510 = vadd.f32 0.0, %v6509
    %v6511 = vpop.f32.mrf.mxu0
    %v6512 = vpop.f32.mrf.mxu0
    %6513 = vdwg.mxu0
    %6514 = vmatprep.subr.bf16.mxu0 %v5317
    %6515 = vmatpush1.bf16.msra.mxu0 %v5316
    %6516 = vmatprep.subr.bf16.mxu0 %v5309
    %6517 = vmatpush1.bf16.msra.mxu0 %v5308
    %6518 = vmatprep.subr.bf16.mxu0 %v5301
    %6519 = vmatpush1.bf16.msra.mxu0 %v5300
    %6520 = vmatprep.subr.bf16.mxu0 %v5293
    %6521 = vmatpush1.bf16.msra.mxu0 %v5292
    %6522 = vmatprep.subr.bf16.mxu0 %v5285
    %6523 = vmatpush1.bf16.msra.mxu0 %v5284
    %6524 = vmatprep.subr.bf16.mxu0 %v5277
    %6525 = vmatpush1.bf16.msra.mxu0 %v5276
    %6526 = vmatprep.subr.bf16.mxu0 %v5269
    %6527 = vmatpush1.bf16.msra.mxu0 %v5268
    %6528 = vmatprep.subr.bf16.mxu0 %v5261
    %6529 = vmatpush1.bf16.msra.mxu0 %v5260
    %6530 = vmatprep.subr.bf16.mxu0 %v5381
    %6531 = vmatpush2.bf16.msra.mxu0 %v5380
    %6532 = vmatprep.subr.bf16.mxu0 %v5373
    %6533 = vmatpush2.bf16.msra.mxu0 %v5372
    %6534 = vmatprep.subr.bf16.mxu0 %v5365
    %6535 = vmatpush2.bf16.msra.mxu0 %v5364
    %6536 = vmatprep.subr.bf16.mxu0 %v5357
    %6537 = vmatpush2.bf16.msra.mxu0 %v5356
    %6538 = vmatprep.subr.bf16.mxu0 %v5349
    %6539 = vmatpush2.bf16.msra.mxu0 %v5348
    %6540 = vmatprep.subr.bf16.mxu0 %v5341
    %6541 = vmatpush2.bf16.msra.mxu0 %v5340
    %6542 = vmatprep.subr.bf16.mxu0 %v5333
    %6543 = vmatpush2.bf16.msra.mxu0 %v5332
    %6544 = vmatprep.subr.bf16.mxu0 %v5325
    %6545 = vmatpush2.bf16.msra.mxu0 %v5324
    %6546 = vmatprep.mubr.bf16.mxu0 %v6431
    %6547 = vmatmul.mubr.bf16.gmra.mxu0 %v6430
    %v6548 = vpop.f32.mrf.mxu0
    %v6549 = vadd.f32 0.0, %v6548
    %v6550 = vpop.f32.mrf.mxu0
    %v6551 = vadd.f32 0.0, %v6550
    %v6552 = vpop.f32.mrf.mxu0
    %v6553 = vpop.f32.mrf.mxu0
    %6554 = vdwg.mxu0
    %6555 = vmatprep.subr.bf16.mxu0 %v5319
    %6556 = vmatpush1.bf16.msra.mxu0 %v5318
    %6557 = vmatprep.subr.bf16.mxu0 %v5311
    %6558 = vmatpush1.bf16.msra.mxu0 %v5310
    %6559 = vmatprep.subr.bf16.mxu0 %v5303
    %6560 = vmatpush1.bf16.msra.mxu0 %v5302
    %6561 = vmatprep.subr.bf16.mxu0 %v5295
    %6562 = vmatpush1.bf16.msra.mxu0 %v5294
    %6563 = vmatprep.subr.bf16.mxu0 %v5287
    %6564 = vmatpush1.bf16.msra.mxu0 %v5286
    %6565 = vmatprep.subr.bf16.mxu0 %v5279
    %6566 = vmatpush1.bf16.msra.mxu0 %v5278
    %6567 = vmatprep.subr.bf16.mxu0 %v5271
    %6568 = vmatpush1.bf16.msra.mxu0 %v5270
    %6569 = vmatprep.subr.bf16.mxu0 %v5263
    %6570 = vmatpush1.bf16.msra.mxu0 %v5262
    %6571 = vmatprep.subr.bf16.mxu0 %v5383
    %6572 = vmatpush2.bf16.msra.mxu0 %v5382
    %6573 = vmatprep.subr.bf16.mxu0 %v5375
    %6574 = vmatpush2.bf16.msra.mxu0 %v5374
    %6575 = vmatprep.subr.bf16.mxu0 %v5367
    %6576 = vmatpush2.bf16.msra.mxu0 %v5366
    %6577 = vmatprep.subr.bf16.mxu0 %v5359
    %6578 = vmatpush2.bf16.msra.mxu0 %v5358
    %6579 = vmatprep.subr.bf16.mxu0 %v5351
    %6580 = vmatpush2.bf16.msra.mxu0 %v5350
    %6581 = vmatprep.subr.bf16.mxu0 %v5343
    %6582 = vmatpush2.bf16.msra.mxu0 %v5342
    %6583 = vmatprep.subr.bf16.mxu0 %v5335
    %6584 = vmatpush2.bf16.msra.mxu0 %v5334
    %6585 = vmatprep.subr.bf16.mxu0 %v5327
    %6586 = vmatpush2.bf16.msra.mxu0 %v5326
    %6587 = vmatprep.mubr.bf16.mxu0 %v6431
    %6588 = vmatmul.mubr.bf16.gmra.mxu0 %v6430
    %v6589 = vpop.f32.mrf.mxu0
    %v6590 = vadd.f32 0.0, %v6589
    %v6591 = vpop.f32.mrf.mxu0
    %v6592 = vadd.f32 0.0, %v6591
    %v6593 = vpop.f32.mrf.mxu0
    %v6594 = vpop.f32.mrf.mxu0
    %6595 = vdwg.mxu0
    %v6596 = vld [vmem:[#allocation2 + $0x140] sm:$0xff]
    %v6597 = vld [vmem:[#allocation2 + $0x148] sm:$0xff]
    %v6598 = vld [vmem:[#allocation2 + $0x150] sm:$0xff]
    %v6599 = vld [vmem:[#allocation2 + $0x158] sm:$0xff]
    %v6600 = vadd.f32 %v6596, %v6467
    %v6601 = vadd.f32 %v6597, %v6469
    %v6602 = vadd.f32 %v6598, %v6508
    %v6603 = vadd.f32 %v6599, %v6510
    %v6604 = vld [vmem:[#allocation2 + $0xa0] sm:$0xff]
    %v6605 = vld [vmem:[#allocation2 + $0xa8] sm:$0xff]
    %v6606 = vld [vmem:[#allocation2 + $0xb0] sm:$0xff]
    %v6607 = vld [vmem:[#allocation2 + $0xb8] sm:$0xff]
    %v6608 = vadd.f32 %v6604, %v6549
    %v6609 = vadd.f32 %v6605, %v6551
    %v6610 = vadd.f32 %v6606, %v6590
    %v6611 = vadd.f32 %v6607, %v6592
    %v6612 = vxor.u32 %v6600, 2147483648
    %v6613 = vxor.u32 %v6601, 2147483648
    %v6614 = vxor.u32 %v6602, 2147483648
    %v6615 = vmul.f32 %v6612, 1.442695
    %v6616 = vpow.pop %v6615
    %v6617 = vmul.f32 %v6613, 1.442695
    %v6618 = vpow.pop %v6617
    %v6619 = vmul.f32 %v6614, 1.442695
    %v6620 = vpow.pop %v6619
    %v6621 = vadd.f32 %v6616, 1.0
    %v6622 = vadd.f32 %v6618, 1.0
    %v6623 = vadd.f32 %v6620, 1.0
    %v6624 = vrcp.pop %v6621
    %v6625 = vmul.f32 1.0, %v6624
    %v6626 = vrcp.pop %v6622
    %v6627 = vmul.f32 1.0, %v6626
    %v6628 = vrcp.pop %v6623
    %v6629 = vmul.f32 1.0, %v6628
    %v6630 = vtanh.pop %v6603
    %v6631 = vmul.f32 %v6627, %v6403
    %v6632 = vmul.f32 %v6625, %v6630
    %v6633 = vadd.f32 %v6631, %v6632
    %v6634 = vtanh.pop %v6633
    %v6635 = vmul.f32 %v6629, %v6634
    %v6636 = vxor.u32 %v6608, 2147483648
    %v6637 = vxor.u32 %v6609, 2147483648
    %v6638 = vxor.u32 %v6610, 2147483648
    %v6639 = vmul.f32 %v6636, 1.442695
    %v6640 = vpow.pop %v6639
    %v6641 = vmul.f32 %v6637, 1.442695
    %v6642 = vpow.pop %v6641
    %v6643 = vmul.f32 %v6638, 1.442695
    %v6644 = vpow.pop %v6643
    %v6645 = vadd.f32 %v6640, 1.0
    %v6646 = vadd.f32 %v6642, 1.0
    %v6647 = vadd.f32 %v6644, 1.0
    %v6648 = vrcp.pop %v6645
    %v6649 = vmul.f32 1.0, %v6648
    %v6650 = vrcp.pop %v6646
    %v6651 = vmul.f32 1.0, %v6650
    %v6652 = vrcp.pop %v6647
    %v6653 = vmul.f32 1.0, %v6652
    %v6654 = vtanh.pop %v6611
    %v6655 = vmul.f32 %v6651, %v6427
    %v6656 = vmul.f32 %v6649, %v6654
    %v6657 = vadd.f32 %v6655, %v6656
    %v6658 = vtanh.pop %v6657
    %v6659 = vmul.f32 %v6653, %v6658
    %v6660 = vpack.c.bf16 %v6635, %v6635
    %v6661 = vpack.c.bf16 %v6659, %v6659
    %6662 = vmatprep.subr.bf16.mxu0 %v5313
    %6663 = vmatpush1.bf16.msra.mxu0 %v5312
    %6664 = vmatprep.subr.bf16.mxu0 %v5305
    %6665 = vmatpush1.bf16.msra.mxu0 %v5304
    %6666 = vmatprep.subr.bf16.mxu0 %v5297
    %6667 = vmatpush1.bf16.msra.mxu0 %v5296
    %6668 = vmatprep.subr.bf16.mxu0 %v5289
    %6669 = vmatpush1.bf16.msra.mxu0 %v5288
    %6670 = vmatprep.subr.bf16.mxu0 %v5281
    %6671 = vmatpush1.bf16.msra.mxu0 %v5280
    %6672 = vmatprep.subr.bf16.mxu0 %v5273
    %6673 = vmatpush1.bf16.msra.mxu0 %v5272
    %6674 = vmatprep.subr.bf16.mxu0 %v5265
    %6675 = vmatpush1.bf16.msra.mxu0 %v5264
    %6676 = vmatprep.subr.bf16.mxu0 %v5257
    %6677 = vmatpush1.bf16.msra.mxu0 %v5256
    %6678 = vmatprep.subr.bf16.mxu0 %v5377
    %6679 = vmatpush2.bf16.msra.mxu0 %v5376
    %6680 = vmatprep.subr.bf16.mxu0 %v5369
    %6681 = vmatpush2.bf16.msra.mxu0 %v5368
    %6682 = vmatprep.subr.bf16.mxu0 %v5361
    %6683 = vmatpush2.bf16.msra.mxu0 %v5360
    %6684 = vmatprep.subr.bf16.mxu0 %v5353
    %6685 = vmatpush2.bf16.msra.mxu0 %v5352
    %6686 = vmatprep.subr.bf16.mxu0 %v5345
    %6687 = vmatpush2.bf16.msra.mxu0 %v5344
    %6688 = vmatprep.subr.bf16.mxu0 %v5337
    %6689 = vmatpush2.bf16.msra.mxu0 %v5336
    %6690 = vmatprep.subr.bf16.mxu0 %v5329
    %6691 = vmatpush2.bf16.msra.mxu0 %v5328
    %6692 = vmatprep.subr.bf16.mxu0 %v5321
    %6693 = vmatpush2.bf16.msra.mxu0 %v5320
    %6694 = vmatprep.mubr.bf16.mxu0 %v6661
    %6695 = vmatmul.mubr.bf16.gmra.mxu0 %v6660
    %v6696 = vpop.f32.mrf.mxu0
    %v6697 = vadd.f32 0.0, %v6696
    %v6698 = vpop.f32.mrf.mxu0
    %v6699 = vadd.f32 0.0, %v6698
    %v6700 = vpop.f32.mrf.mxu0
    %v6701 = vpop.f32.mrf.mxu0
    %6702 = vdwg.mxu0
    %6703 = vmatprep.subr.bf16.mxu0 %v5315
    %6704 = vmatpush1.bf16.msra.mxu0 %v5314
    %6705 = vmatprep.subr.bf16.mxu0 %v5307
    %6706 = vmatpush1.bf16.msra.mxu0 %v5306
    %6707 = vmatprep.subr.bf16.mxu0 %v5299
    %6708 = vmatpush1.bf16.msra.mxu0 %v5298
    %6709 = vmatprep.subr.bf16.mxu0 %v5291
    %6710 = vmatpush1.bf16.msra.mxu0 %v5290
    %6711 = vmatprep.subr.bf16.mxu0 %v5283
    %6712 = vmatpush1.bf16.msra.mxu0 %v5282
    %6713 = vmatprep.subr.bf16.mxu0 %v5275
    %6714 = vmatpush1.bf16.msra.mxu0 %v5274
    %6715 = vmatprep.subr.bf16.mxu0 %v5267
    %6716 = vmatpush1.bf16.msra.mxu0 %v5266
    %6717 = vmatprep.subr.bf16.mxu0 %v5259
    %6718 = vmatpush1.bf16.msra.mxu0 %v5258
    %6719 = vmatprep.subr.bf16.mxu0 %v5379
    %6720 = vmatpush2.bf16.msra.mxu0 %v5378
    %6721 = vmatprep.subr.bf16.mxu0 %v5371
    %6722 = vmatpush2.bf16.msra.mxu0 %v5370
    %6723 = vmatprep.subr.bf16.mxu0 %v5363
    %6724 = vmatpush2.bf16.msra.mxu0 %v5362
    %6725 = vmatprep.subr.bf16.mxu0 %v5355
    %6726 = vmatpush2.bf16.msra.mxu0 %v5354
    %6727 = vmatprep.subr.bf16.mxu0 %v5347
    %6728 = vmatpush2.bf16.msra.mxu0 %v5346
    %6729 = vmatprep.subr.bf16.mxu0 %v5339
    %6730 = vmatpush2.bf16.msra.mxu0 %v5338
    %6731 = vmatprep.subr.bf16.mxu0 %v5331
    %6732 = vmatpush2.bf16.msra.mxu0 %v5330
    %6733 = vmatprep.subr.bf16.mxu0 %v5323
    %6734 = vmatpush2.bf16.msra.mxu0 %v5322
    %6735 = vmatprep.mubr.bf16.mxu0 %v6661
    %6736 = vmatmul.mubr.bf16.gmra.mxu0 %v6660
    %v6737 = vpop.f32.mrf.mxu0
    %v6738 = vadd.f32 0.0, %v6737
    %v6739 = vpop.f32.mrf.mxu0
    %v6740 = vadd.f32 0.0, %v6739
    %v6741 = vpop.f32.mrf.mxu0
    %v6742 = vpop.f32.mrf.mxu0
    %6743 = vdwg.mxu0
    %6744 = vmatprep.subr.bf16.mxu0 %v5317
    %6745 = vmatpush1.bf16.msra.mxu0 %v5316
    %6746 = vmatprep.subr.bf16.mxu0 %v5309
    %6747 = vmatpush1.bf16.msra.mxu0 %v5308
    %6748 = vmatprep.subr.bf16.mxu0 %v5301
    %6749 = vmatpush1.bf16.msra.mxu0 %v5300
    %6750 = vmatprep.subr.bf16.mxu0 %v5293
    %6751 = vmatpush1.bf16.msra.mxu0 %v5292
    %6752 = vmatprep.subr.bf16.mxu0 %v5285
    %6753 = vmatpush1.bf16.msra.mxu0 %v5284
    %6754 = vmatprep.subr.bf16.mxu0 %v5277
    %6755 = vmatpush1.bf16.msra.mxu0 %v5276
    %6756 = vmatprep.subr.bf16.mxu0 %v5269
    %6757 = vmatpush1.bf16.msra.mxu0 %v5268
    %6758 = vmatprep.subr.bf16.mxu0 %v5261
    %6759 = vmatpush1.bf16.msra.mxu0 %v5260
    %6760 = vmatprep.subr.bf16.mxu0 %v5381
    %6761 = vmatpush2.bf16.msra.mxu0 %v5380
    %6762 = vmatprep.subr.bf16.mxu0 %v5373
    %6763 = vmatpush2.bf16.msra.mxu0 %v5372
    %6764 = vmatprep.subr.bf16.mxu0 %v5365
    %6765 = vmatpush2.bf16.msra.mxu0 %v5364
    %6766 = vmatprep.subr.bf16.mxu0 %v5357
    %6767 = vmatpush2.bf16.msra.mxu0 %v5356
    %6768 = vmatprep.subr.bf16.mxu0 %v5349
    %6769 = vmatpush2.bf16.msra.mxu0 %v5348
    %6770 = vmatprep.subr.bf16.mxu0 %v5341
    %6771 = vmatpush2.bf16.msra.mxu0 %v5340
    %6772 = vmatprep.subr.bf16.mxu0 %v5333
    %6773 = vmatpush2.bf16.msra.mxu0 %v5332
    %6774 = vmatprep.subr.bf16.mxu0 %v5325
    %6775 = vmatpush2.bf16.msra.mxu0 %v5324
    %6776 = vmatprep.mubr.bf16.mxu0 %v6661
    %6777 = vmatmul.mubr.bf16.gmra.mxu0 %v6660
    %v6778 = vpop.f32.mrf.mxu0
    %v6779 = vadd.f32 0.0, %v6778
    %v6780 = vpop.f32.mrf.mxu0
    %v6781 = vadd.f32 0.0, %v6780
    %v6782 = vpop.f32.mrf.mxu0
    %v6783 = vpop.f32.mrf.mxu0
    %6784 = vdwg.mxu0
    %6785 = vmatprep.subr.bf16.mxu0 %v5319
    %6786 = vmatpush1.bf16.msra.mxu0 %v5318
    %6787 = vmatprep.subr.bf16.mxu0 %v5311
    %6788 = vmatpush1.bf16.msra.mxu0 %v5310
    %6789 = vmatprep.subr.bf16.mxu0 %v5303
    %6790 = vmatpush1.bf16.msra.mxu0 %v5302
    %6791 = vmatprep.subr.bf16.mxu0 %v5295
    %6792 = vmatpush1.bf16.msra.mxu0 %v5294
    %6793 = vmatprep.subr.bf16.mxu0 %v5287
    %6794 = vmatpush1.bf16.msra.mxu0 %v5286
    %6795 = vmatprep.subr.bf16.mxu0 %v5279
    %6796 = vmatpush1.bf16.msra.mxu0 %v5278
    %6797 = vmatprep.subr.bf16.mxu0 %v5271
    %6798 = vmatpush1.bf16.msra.mxu0 %v5270
    %6799 = vmatprep.subr.bf16.mxu0 %v5263
    %6800 = vmatpush1.bf16.msra.mxu0 %v5262
    %6801 = vmatprep.subr.bf16.mxu0 %v5383
    %6802 = vmatpush2.bf16.msra.mxu0 %v5382
    %6803 = vmatprep.subr.bf16.mxu0 %v5375
    %6804 = vmatpush2.bf16.msra.mxu0 %v5374
    %6805 = vmatprep.subr.bf16.mxu0 %v5367
    %6806 = vmatpush2.bf16.msra.mxu0 %v5366
    %6807 = vmatprep.subr.bf16.mxu0 %v5359
    %6808 = vmatpush2.bf16.msra.mxu0 %v5358
    %6809 = vmatprep.subr.bf16.mxu0 %v5351
    %6810 = vmatpush2.bf16.msra.mxu0 %v5350
    %6811 = vmatprep.subr.bf16.mxu0 %v5343
    %6812 = vmatpush2.bf16.msra.mxu0 %v5342
    %6813 = vmatprep.subr.bf16.mxu0 %v5335
    %6814 = vmatpush2.bf16.msra.mxu0 %v5334
    %6815 = vmatprep.subr.bf16.mxu0 %v5327
    %6816 = vmatpush2.bf16.msra.mxu0 %v5326
    %6817 = vmatprep.mubr.bf16.mxu0 %v6661
    %6818 = vmatmul.mubr.bf16.gmra.mxu0 %v6660
    %v6819 = vpop.f32.mrf.mxu0
    %v6820 = vadd.f32 0.0, %v6819
    %v6821 = vpop.f32.mrf.mxu0
    %v6822 = vadd.f32 0.0, %v6821
    %v6823 = vpop.f32.mrf.mxu0
    %v6824 = vpop.f32.mrf.mxu0
    %6825 = vdwg.mxu0
    %v6826 = vld [vmem:[#allocation2 + $0x180] sm:$0xff]
    %v6827 = vld [vmem:[#allocation2 + $0x188] sm:$0xff]
    %v6828 = vld [vmem:[#allocation2 + $0x190] sm:$0xff]
    %v6829 = vld [vmem:[#allocation2 + $0x198] sm:$0xff]
    %v6830 = vadd.f32 %v6826, %v6697
    %v6831 = vadd.f32 %v6827, %v6699
    %v6832 = vadd.f32 %v6828, %v6738
    %v6833 = vadd.f32 %v6829, %v6740
    %v6834 = vld [vmem:[#allocation2 + $0x60] sm:$0xff]
    %v6835 = vld [vmem:[#allocation2 + $0x68] sm:$0xff]
    %v6836 = vld [vmem:[#allocation2 + $0x70] sm:$0xff]
    %v6837 = vld [vmem:[#allocation2 + $0x78] sm:$0xff]
    %v6838 = vadd.f32 %v6834, %v6779
    %v6839 = vadd.f32 %v6835, %v6781
    %v6840 = vadd.f32 %v6836, %v6820
    %v6841 = vadd.f32 %v6837, %v6822
    %v6842 = vxor.u32 %v6830, 2147483648
    %v6843 = vxor.u32 %v6831, 2147483648
    %v6844 = vxor.u32 %v6832, 2147483648
    %v6845 = vmul.f32 %v6842, 1.442695
    %v6846 = vpow.pop %v6845
    %v6847 = vmul.f32 %v6843, 1.442695
    %v6848 = vpow.pop %v6847
    %v6849 = vmul.f32 %v6844, 1.442695
    %v6850 = vpow.pop %v6849
    %v6851 = vadd.f32 %v6846, 1.0
    %v6852 = vadd.f32 %v6848, 1.0
    %v6853 = vadd.f32 %v6850, 1.0
    %v6854 = vrcp.pop %v6851
    %v6855 = vmul.f32 1.0, %v6854
    %v6856 = vrcp.pop %v6852
    %v6857 = vmul.f32 1.0, %v6856
    %v6858 = vrcp.pop %v6853
    %v6859 = vmul.f32 1.0, %v6858
    %v6860 = vtanh.pop %v6833
    %v6861 = vmul.f32 %v6857, %v6633
    %v6862 = vmul.f32 %v6855, %v6860
    %v6863 = vadd.f32 %v6861, %v6862
    %v6864 = vtanh.pop %v6863
    %v6865 = vmul.f32 %v6859, %v6864
    %v6866 = vxor.u32 %v6838, 2147483648
    %v6867 = vxor.u32 %v6839, 2147483648
    %v6868 = vxor.u32 %v6840, 2147483648
    %v6869 = vmul.f32 %v6866, 1.442695
    %v6870 = vpow.pop %v6869
    %v6871 = vmul.f32 %v6867, 1.442695
    %v6872 = vpow.pop %v6871
    %v6873 = vmul.f32 %v6868, 1.442695
    %v6874 = vpow.pop %v6873
    %v6875 = vadd.f32 %v6870, 1.0
    %v6876 = vadd.f32 %v6872, 1.0
    %v6877 = vadd.f32 %v6874, 1.0
    %v6878 = vrcp.pop %v6875
    %v6879 = vmul.f32 1.0, %v6878
    %v6880 = vrcp.pop %v6876
    %v6881 = vmul.f32 1.0, %v6880
    %v6882 = vrcp.pop %v6877
    %v6883 = vmul.f32 1.0, %v6882
    %v6884 = vtanh.pop %v6841
    %v6885 = vmul.f32 %v6881, %v6657
    %v6886 = vmul.f32 %v6879, %v6884
    %v6887 = vadd.f32 %v6885, %v6886
    %v6888 = vtanh.pop %v6887
    %v6889 = vmul.f32 %v6883, %v6888
    %v6890 = vpack.c.bf16 %v6865, %v6865
    %v6891 = vpack.c.bf16 %v6889, %v6889
    %6892 = vmatprep.subr.bf16.mxu0 %v5313
    %6893 = vmatpush1.bf16.msra.mxu0 %v5312
    %6894 = vmatprep.subr.bf16.mxu0 %v5305
    %6895 = vmatpush1.bf16.msra.mxu0 %v5304
    %6896 = vmatprep.subr.bf16.mxu0 %v5297
    %6897 = vmatpush1.bf16.msra.mxu0 %v5296
    %6898 = vmatprep.subr.bf16.mxu0 %v5289
    %6899 = vmatpush1.bf16.msra.mxu0 %v5288
    %6900 = vmatprep.subr.bf16.mxu0 %v5281
    %6901 = vmatpush1.bf16.msra.mxu0 %v5280
    %6902 = vmatprep.subr.bf16.mxu0 %v5273
    %6903 = vmatpush1.bf16.msra.mxu0 %v5272
    %6904 = vmatprep.subr.bf16.mxu0 %v5265
    %6905 = vmatpush1.bf16.msra.mxu0 %v5264
    %6906 = vmatprep.subr.bf16.mxu0 %v5257
    %6907 = vmatpush1.bf16.msra.mxu0 %v5256
    %6908 = vmatprep.subr.bf16.mxu0 %v5377
    %6909 = vmatpush2.bf16.msra.mxu0 %v5376
    %6910 = vmatprep.subr.bf16.mxu0 %v5369
    %6911 = vmatpush2.bf16.msra.mxu0 %v5368
    %6912 = vmatprep.subr.bf16.mxu0 %v5361
    %6913 = vmatpush2.bf16.msra.mxu0 %v5360
    %6914 = vmatprep.subr.bf16.mxu0 %v5353
    %6915 = vmatpush2.bf16.msra.mxu0 %v5352
    %6916 = vmatprep.subr.bf16.mxu0 %v5345
    %6917 = vmatpush2.bf16.msra.mxu0 %v5344
    %6918 = vmatprep.subr.bf16.mxu0 %v5337
    %6919 = vmatpush2.bf16.msra.mxu0 %v5336
    %6920 = vmatprep.subr.bf16.mxu0 %v5329
    %6921 = vmatpush2.bf16.msra.mxu0 %v5328
    %6922 = vmatprep.subr.bf16.mxu0 %v5321
    %6923 = vmatpush2.bf16.msra.mxu0 %v5320
    %6924 = vmatprep.mubr.bf16.mxu0 %v6891
    %6925 = vmatmul.mubr.bf16.gmra.mxu0 %v6890
    %v6926 = vpop.f32.mrf.mxu0
    %v6927 = vadd.f32 0.0, %v6926
    %v6928 = vpop.f32.mrf.mxu0
    %v6929 = vadd.f32 0.0, %v6928
    %v6930 = vpop.f32.mrf.mxu0
    %v6931 = vpop.f32.mrf.mxu0
    %6932 = vdwg.mxu0
    %6933 = vmatprep.subr.bf16.mxu0 %v5315
    %6934 = vmatpush1.bf16.msra.mxu0 %v5314
    %6935 = vmatprep.subr.bf16.mxu0 %v5307
    %6936 = vmatpush1.bf16.msra.mxu0 %v5306
    %6937 = vmatprep.subr.bf16.mxu0 %v5299
    %6938 = vmatpush1.bf16.msra.mxu0 %v5298
    %6939 = vmatprep.subr.bf16.mxu0 %v5291
    %6940 = vmatpush1.bf16.msra.mxu0 %v5290
    %6941 = vmatprep.subr.bf16.mxu0 %v5283
    %6942 = vmatpush1.bf16.msra.mxu0 %v5282
    %6943 = vmatprep.subr.bf16.mxu0 %v5275
    %6944 = vmatpush1.bf16.msra.mxu0 %v5274
    %6945 = vmatprep.subr.bf16.mxu0 %v5267
    %6946 = vmatpush1.bf16.msra.mxu0 %v5266
    %6947 = vmatprep.subr.bf16.mxu0 %v5259
    %6948 = vmatpush1.bf16.msra.mxu0 %v5258
    %6949 = vmatprep.subr.bf16.mxu0 %v5379
    %6950 = vmatpush2.bf16.msra.mxu0 %v5378
    %6951 = vmatprep.subr.bf16.mxu0 %v5371
    %6952 = vmatpush2.bf16.msra.mxu0 %v5370
    %6953 = vmatprep.subr.bf16.mxu0 %v5363
    %6954 = vmatpush2.bf16.msra.mxu0 %v5362
    %6955 = vmatprep.subr.bf16.mxu0 %v5355
    %6956 = vmatpush2.bf16.msra.mxu0 %v5354
    %6957 = vmatprep.subr.bf16.mxu0 %v5347
    %6958 = vmatpush2.bf16.msra.mxu0 %v5346
    %6959 = vmatprep.subr.bf16.mxu0 %v5339
    %6960 = vmatpush2.bf16.msra.mxu0 %v5338
    %6961 = vmatprep.subr.bf16.mxu0 %v5331
    %6962 = vmatpush2.bf16.msra.mxu0 %v5330
    %6963 = vmatprep.subr.bf16.mxu0 %v5323
    %6964 = vmatpush2.bf16.msra.mxu0 %v5322
    %6965 = vmatprep.mubr.bf16.mxu0 %v6891
    %6966 = vmatmul.mubr.bf16.gmra.mxu0 %v6890
    %v6967 = vpop.f32.mrf.mxu0
    %v6968 = vadd.f32 0.0, %v6967
    %v6969 = vpop.f32.mrf.mxu0
    %v6970 = vadd.f32 0.0, %v6969
    %v6971 = vpop.f32.mrf.mxu0
    %v6972 = vpop.f32.mrf.mxu0
    %6973 = vdwg.mxu0
    %6974 = vmatprep.subr.bf16.mxu0 %v5317
    %6975 = vmatpush1.bf16.msra.mxu0 %v5316
    %6976 = vmatprep.subr.bf16.mxu0 %v5309
    %6977 = vmatpush1.bf16.msra.mxu0 %v5308
    %6978 = vmatprep.subr.bf16.mxu0 %v5301
    %6979 = vmatpush1.bf16.msra.mxu0 %v5300
    %6980 = vmatprep.subr.bf16.mxu0 %v5293
    %6981 = vmatpush1.bf16.msra.mxu0 %v5292
    %6982 = vmatprep.subr.bf16.mxu0 %v5285
    %6983 = vmatpush1.bf16.msra.mxu0 %v5284
    %6984 = vmatprep.subr.bf16.mxu0 %v5277
    %6985 = vmatpush1.bf16.msra.mxu0 %v5276
    %6986 = vmatprep.subr.bf16.mxu0 %v5269
    %6987 = vmatpush1.bf16.msra.mxu0 %v5268
    %6988 = vmatprep.subr.bf16.mxu0 %v5261
    %6989 = vmatpush1.bf16.msra.mxu0 %v5260
    %6990 = vmatprep.subr.bf16.mxu0 %v5381
    %6991 = vmatpush2.bf16.msra.mxu0 %v5380
    %6992 = vmatprep.subr.bf16.mxu0 %v5373
    %6993 = vmatpush2.bf16.msra.mxu0 %v5372
    %6994 = vmatprep.subr.bf16.mxu0 %v5365
    %6995 = vmatpush2.bf16.msra.mxu0 %v5364
    %6996 = vmatprep.subr.bf16.mxu0 %v5357
    %6997 = vmatpush2.bf16.msra.mxu0 %v5356
    %6998 = vmatprep.subr.bf16.mxu0 %v5349
    %6999 = vmatpush2.bf16.msra.mxu0 %v5348
    %7000 = vmatprep.subr.bf16.mxu0 %v5341
    %7001 = vmatpush2.bf16.msra.mxu0 %v5340
    %7002 = vmatprep.subr.bf16.mxu0 %v5333
    %7003 = vmatpush2.bf16.msra.mxu0 %v5332
    %7004 = vmatprep.subr.bf16.mxu0 %v5325
    %7005 = vmatpush2.bf16.msra.mxu0 %v5324
    %7006 = vmatprep.mubr.bf16.mxu0 %v6891
    %7007 = vmatmul.mubr.bf16.gmra.mxu0 %v6890
    %v7008 = vpop.f32.mrf.mxu0
    %v7009 = vadd.f32 0.0, %v7008
    %v7010 = vpop.f32.mrf.mxu0
    %v7011 = vadd.f32 0.0, %v7010
    %v7012 = vpop.f32.mrf.mxu0
    %v7013 = vpop.f32.mrf.mxu0
    %7014 = vdwg.mxu0
    %7015 = vmatprep.subr.bf16.mxu0 %v5319
    %7016 = vmatpush1.bf16.msra.mxu0 %v5318
    %7017 = vmatprep.subr.bf16.mxu0 %v5311
    %7018 = vmatpush1.bf16.msra.mxu0 %v5310
    %7019 = vmatprep.subr.bf16.mxu0 %v5303
    %7020 = vmatpush1.bf16.msra.mxu0 %v5302
    %7021 = vmatprep.subr.bf16.mxu0 %v5295
    %7022 = vmatpush1.bf16.msra.mxu0 %v5294
    %7023 = vmatprep.subr.bf16.mxu0 %v5287
    %7024 = vmatpush1.bf16.msra.mxu0 %v5286
    %7025 = vmatprep.subr.bf16.mxu0 %v5279
    %7026 = vmatpush1.bf16.msra.mxu0 %v5278
    %7027 = vmatprep.subr.bf16.mxu0 %v5271
    %7028 = vmatpush1.bf16.msra.mxu0 %v5270
    %7029 = vmatprep.subr.bf16.mxu0 %v5263
    %7030 = vmatpush1.bf16.msra.mxu0 %v5262
    %7031 = vmatprep.subr.bf16.mxu0 %v5383
    %7032 = vmatpush2.bf16.msra.mxu0 %v5382
    %7033 = vmatprep.subr.bf16.mxu0 %v5375
    %7034 = vmatpush2.bf16.msra.mxu0 %v5374
    %7035 = vmatprep.subr.bf16.mxu0 %v5367
    %7036 = vmatpush2.bf16.msra.mxu0 %v5366
    %7037 = vmatprep.subr.bf16.mxu0 %v5359
    %7038 = vmatpush2.bf16.msra.mxu0 %v5358
    %7039 = vmatprep.subr.bf16.mxu0 %v5351
    %7040 = vmatpush2.bf16.msra.mxu0 %v5350
    %7041 = vmatprep.subr.bf16.mxu0 %v5343
    %7042 = vmatpush2.bf16.msra.mxu0 %v5342
    %7043 = vmatprep.subr.bf16.mxu0 %v5335
    %7044 = vmatpush2.bf16.msra.mxu0 %v5334
    %7045 = vmatprep.subr.bf16.mxu0 %v5327
    %7046 = vmatpush2.bf16.msra.mxu0 %v5326
    %7047 = vmatprep.mubr.bf16.mxu0 %v6891
    %7048 = vmatmul.mubr.bf16.gmra.mxu0 %v6890
    %v7049 = vpop.f32.mrf.mxu0
    %v7050 = vadd.f32 0.0, %v7049
    %v7051 = vpop.f32.mrf.mxu0
    %v7052 = vadd.f32 0.0, %v7051
    %v7053 = vpop.f32.mrf.mxu0
    %v7054 = vpop.f32.mrf.mxu0
    %7055 = vdwg.mxu0
    %v7056 = vld [vmem:[#allocation2 + $0x1c0] sm:$0xff]
    %v7057 = vld [vmem:[#allocation2 + $0x1c8] sm:$0xff]
    %v7058 = vld [vmem:[#allocation2 + $0x1d0] sm:$0xff]
    %v7059 = vld [vmem:[#allocation2 + $0x1d8] sm:$0xff]
    %v7060 = vadd.f32 %v7056, %v6927
    %v7061 = vadd.f32 %v7057, %v6929
    %v7062 = vadd.f32 %v7058, %v6968
    %v7063 = vadd.f32 %v7059, %v6970
    %v7064 = vld [vmem:[#allocation2 + $0x20] sm:$0xff]
    %v7065 = vld [vmem:[#allocation2 + $0x28] sm:$0xff]
    %v7066 = vld [vmem:[#allocation2 + $0x30] sm:$0xff]
    %v7067 = vld [vmem:[#allocation2 + $0x38] sm:$0xff]
    %v7068 = vadd.f32 %v7064, %v7009
    %v7069 = vadd.f32 %v7065, %v7011
    %v7070 = vadd.f32 %v7066, %v7050
    %v7071 = vadd.f32 %v7067, %v7052
    %v7072 = vxor.u32 %v7060, 2147483648
    %v7073 = vxor.u32 %v7061, 2147483648
    %v7074 = vxor.u32 %v7062, 2147483648
    %v7075 = vmul.f32 %v7072, 1.442695
    %v7076 = vpow.pop %v7075
    %v7077 = vmul.f32 %v7073, 1.442695
    %v7078 = vpow.pop %v7077
    %v7079 = vmul.f32 %v7074, 1.442695
    %v7080 = vpow.pop %v7079
    %v7081 = vadd.f32 %v7076, 1.0
    %v7082 = vadd.f32 %v7078, 1.0
    %v7083 = vadd.f32 %v7080, 1.0
    %v7084 = vrcp.pop %v7081
    %v7085 = vmul.f32 1.0, %v7084
    %v7086 = vrcp.pop %v7082
    %v7087 = vmul.f32 1.0, %v7086
    %v7088 = vrcp.pop %v7083
    %v7089 = vmul.f32 1.0, %v7088
    %v7090 = vtanh.pop %v7063
    %v7091 = vmul.f32 %v7087, %v6863
    %v7092 = vmul.f32 %v7085, %v7090
    %v7093 = vadd.f32 %v7091, %v7092
    %v7094 = vtanh.pop %v7093
    %v7095 = vmul.f32 %v7089, %v7094
    %v7096 = vxor.u32 %v7068, 2147483648
    %v7097 = vxor.u32 %v7069, 2147483648
    %v7098 = vxor.u32 %v7070, 2147483648
    %v7099 = vmul.f32 %v7096, 1.442695
    %v7100 = vpow.pop %v7099
    %v7101 = vmul.f32 %v7097, 1.442695
    %v7102 = vpow.pop %v7101
    %v7103 = vmul.f32 %v7098, 1.442695
    %v7104 = vpow.pop %v7103
    %v7105 = vadd.f32 %v7100, 1.0
    %v7106 = vadd.f32 %v7102, 1.0
    %v7107 = vadd.f32 %v7104, 1.0
    %v7108 = vrcp.pop %v7105
    %v7109 = vmul.f32 1.0, %v7108
    %v7110 = vrcp.pop %v7106
    %v7111 = vmul.f32 1.0, %v7110
    %v7112 = vrcp.pop %v7107
    %v7113 = vmul.f32 1.0, %v7112
    %v7114 = vtanh.pop %v7071
    %v7115 = vmul.f32 %v7111, %v6887
    %v7116 = vmul.f32 %v7109, %v7114
    %v7117 = vadd.f32 %v7115, %v7116
    %v7118 = vtanh.pop %v7117
    %v7119 = vmul.f32 %v7113, %v7118
    %v7120 = vpack.c.bf16 %v7119, %v7119
    %v7121 = vpack.c.bf16 %v7095, %v7095
    %v7122 = vld [vmem:[%s4] sm:$0xf]
    %v7123 = vld [vmem:[%s4 + $0x4] sm:$0xf]
    %v7124 = vld [vmem:[%s4 + $0x8] sm:$0xf]
    %v7125 = vld [vmem:[%s4 + $0xc] sm:$0xf]
    %v7126 = vld [vmem:[%s4 + $0x10] sm:$0xf]
    %v7127 = vld [vmem:[%s4 + $0x14] sm:$0xf]
    %v7128 = vld [vmem:[%s4 + $0x18] sm:$0xf]
    %v7129 = vld [vmem:[%s4 + $0x1c] sm:$0xf]
    %v7130 = vld [vmem:[%s4 + $0x20] sm:$0xf]
    %v7131 = vld [vmem:[%s4 + $0x24] sm:$0xf]
    %v7132 = vld [vmem:[%s4 + $0x28] sm:$0xf]
    %v7133 = vld [vmem:[%s4 + $0x2c] sm:$0xf]
    %v7134 = vld [vmem:[%s4 + $0x30] sm:$0xf]
    %v7135 = vld [vmem:[%s4 + $0x34] sm:$0xf]
    %v7136 = vld [vmem:[%s4 + $0x38] sm:$0xf]
    %v7137 = vld [vmem:[%s4 + $0x3c] sm:$0xf]
    %v7138 = vld [vmem:[%s4 + $0x40] sm:$0xf]
    %v7139 = vld [vmem:[%s4 + $0x44] sm:$0xf]
    %v7140 = vld [vmem:[%s4 + $0x48] sm:$0xf]
    %v7141 = vld [vmem:[%s4 + $0x4c] sm:$0xf]
    %v7142 = vld [vmem:[%s4 + $0x50] sm:$0xf]
    %v7143 = vld [vmem:[%s4 + $0x54] sm:$0xf]
    %v7144 = vld [vmem:[%s4 + $0x58] sm:$0xf]
    %v7145 = vld [vmem:[%s4 + $0x5c] sm:$0xf]
    %v7146 = vld [vmem:[%s4 + $0x60] sm:$0xf]
    %v7147 = vld [vmem:[%s4 + $0x64] sm:$0xf]
    %v7148 = vld [vmem:[%s4 + $0x68] sm:$0xf]
    %v7149 = vld [vmem:[%s4 + $0x6c] sm:$0xf]
    %v7150 = vld [vmem:[%s4 + $0x70] sm:$0xf]
    %v7151 = vld [vmem:[%s4 + $0x74] sm:$0xf]
    %v7152 = vld [vmem:[%s4 + $0x78] sm:$0xf]
    %v7153 = vld [vmem:[%s4 + $0x7c] sm:$0xf]
    %v7154 = vld [vmem:[%s4 + $0x80] sm:$0xf]
    %v7155 = vld [vmem:[%s4 + $0x84] sm:$0xf]
    %v7156 = vld [vmem:[%s4 + $0x88] sm:$0xf]
    %v7157 = vld [vmem:[%s4 + $0x8c] sm:$0xf]
    %v7158 = vld [vmem:[%s4 + $0x90] sm:$0xf]
    %v7159 = vld [vmem:[%s4 + $0x94] sm:$0xf]
    %v7160 = vld [vmem:[%s4 + $0x98] sm:$0xf]
    %v7161 = vld [vmem:[%s4 + $0x9c] sm:$0xf]
    %v7162 = vld [vmem:[%s4 + $0xa0] sm:$0xf]
    %v7163 = vld [vmem:[%s4 + $0xa4] sm:$0xf]
    %v7164 = vld [vmem:[%s4 + $0xa8] sm:$0xf]
    %v7165 = vld [vmem:[%s4 + $0xac] sm:$0xf]
    %v7166 = vld [vmem:[%s4 + $0xb0] sm:$0xf]
    %v7167 = vld [vmem:[%s4 + $0xb4] sm:$0xf]
    %v7168 = vld [vmem:[%s4 + $0xb8] sm:$0xf]
    %v7169 = vld [vmem:[%s4 + $0xbc] sm:$0xf]
    %v7170 = vld [vmem:[%s4 + $0xc0] sm:$0xf]
    %v7171 = vld [vmem:[%s4 + $0xc4] sm:$0xf]
    %v7172 = vld [vmem:[%s4 + $0xc8] sm:$0xf]
    %v7173 = vld [vmem:[%s4 + $0xcc] sm:$0xf]
    %v7174 = vld [vmem:[%s4 + $0xd0] sm:$0xf]
    %v7175 = vld [vmem:[%s4 + $0xd4] sm:$0xf]
    %v7176 = vld [vmem:[%s4 + $0xd8] sm:$0xf]
    %v7177 = vld [vmem:[%s4 + $0xdc] sm:$0xf]
    %v7178 = vld [vmem:[%s4 + $0xe0] sm:$0xf]
    %v7179 = vld [vmem:[%s4 + $0xe4] sm:$0xf]
    %v7180 = vld [vmem:[%s4 + $0xe8] sm:$0xf]
    %v7181 = vld [vmem:[%s4 + $0xec] sm:$0xf]
    %v7182 = vld [vmem:[%s4 + $0xf0] sm:$0xf]
    %v7183 = vld [vmem:[%s4 + $0xf4] sm:$0xf]
    %v7184 = vld [vmem:[%s4 + $0xf8] sm:$0xf]
    %v7185 = vld [vmem:[%s4 + $0xfc] sm:$0xf]
    %v7186 = vld [vmem:[#allocation8] sm:$0x1]
    %v7188 = vlaneseq
    %v7189 = vshrl.u32 %v7188, 7
    %v7190 = vsub.s32 0, %v7189
    %v7191 = vrot.slane %v7186, %v7190
    %v7257 = vunpack.c.l.b16 %v7122
    %v7258 = vunpack.c.l.b16 %v7123
    %v7259 = vunpack.c.l.b16 %v7124
    %v7260 = vunpack.c.l.b16 %v7125
    %v7261 = vunpack.c.l.b16 %v7126
    %v7262 = vunpack.c.l.b16 %v7127
    %v7263 = vunpack.c.l.b16 %v7128
    %v7264 = vunpack.c.l.b16 %v7129
    %v7265 = vunpack.c.l.b16 %v7130
    %v7266 = vunpack.c.l.b16 %v7131
    %v7267 = vunpack.c.l.b16 %v7132
    %v7268 = vunpack.c.l.b16 %v7133
    %v7269 = vunpack.c.l.b16 %v7134
    %v7270 = vunpack.c.l.b16 %v7135
    %v7271 = vunpack.c.l.b16 %v7136
    %v7272 = vunpack.c.l.b16 %v7137
    %v7273 = vunpack.c.l.b16 %v7138
    %v7274 = vunpack.c.l.b16 %v7139
    %v7275 = vunpack.c.l.b16 %v7140
    %v7276 = vunpack.c.l.b16 %v7141
    %v7277 = vunpack.c.l.b16 %v7142
    %v7278 = vunpack.c.l.b16 %v7143
    %v7279 = vunpack.c.l.b16 %v7144
    %v7280 = vunpack.c.l.b16 %v7145
    %v7281 = vunpack.c.l.b16 %v7146
    %v7282 = vunpack.c.l.b16 %v7147
    %v7283 = vunpack.c.l.b16 %v7148
    %v7284 = vunpack.c.l.b16 %v7149
    %v7285 = vunpack.c.l.b16 %v7150
    %v7286 = vunpack.c.l.b16 %v7151
    %v7287 = vunpack.c.l.b16 %v7152
    %v7288 = vunpack.c.l.b16 %v7153
    %v7289 = vunpack.c.l.b16 %v7154
    %v7290 = vunpack.c.l.b16 %v7155
    %v7291 = vunpack.c.l.b16 %v7156
    %v7292 = vunpack.c.l.b16 %v7157
    %v7293 = vunpack.c.l.b16 %v7158
    %v7294 = vunpack.c.l.b16 %v7159
    %v7295 = vunpack.c.l.b16 %v7160
    %v7296 = vunpack.c.l.b16 %v7161
    %v7297 = vunpack.c.l.b16 %v7162
    %v7298 = vunpack.c.l.b16 %v7163
    %v7299 = vunpack.c.l.b16 %v7164
    %v7300 = vunpack.c.l.b16 %v7165
    %v7301 = vunpack.c.l.b16 %v7166
    %v7302 = vunpack.c.l.b16 %v7167
    %v7303 = vunpack.c.l.b16 %v7168
    %v7304 = vunpack.c.l.b16 %v7169
    %v7305 = vunpack.c.l.b16 %v7170
    %v7306 = vunpack.c.l.b16 %v7171
    %v7307 = vunpack.c.l.b16 %v7172
    %v7308 = vunpack.c.l.b16 %v7173
    %v7309 = vunpack.c.l.b16 %v7174
    %v7310 = vunpack.c.l.b16 %v7175
    %v7311 = vunpack.c.l.b16 %v7176
    %v7312 = vunpack.c.l.b16 %v7177
    %v7313 = vunpack.c.l.b16 %v7178
    %v7314 = vunpack.c.l.b16 %v7179
    %v7315 = vunpack.c.l.b16 %v7180
    %v7316 = vunpack.c.l.b16 %v7181
    %v7317 = vunpack.c.l.b16 %v7182
    %v7318 = vunpack.c.l.b16 %v7183
    %v7319 = vunpack.c.l.b16 %v7184
    %v7320 = vunpack.c.l.b16 %v7185
    %v7321 = vpack.c.b16 %v7258, %v7257
    %v7322 = vpack.c.b16 %v7260, %v7259
    %v7323 = vpack.c.b16 %v7262, %v7261
    %v7324 = vpack.c.b16 %v7264, %v7263
    %v7325 = vpack.c.b16 %v7266, %v7265
    %v7326 = vpack.c.b16 %v7268, %v7267
    %v7327 = vpack.c.b16 %v7270, %v7269
    %v7328 = vpack.c.b16 %v7272, %v7271
    %v7329 = vpack.c.b16 %v7274, %v7273
    %v7330 = vpack.c.b16 %v7276, %v7275
    %v7331 = vpack.c.b16 %v7278, %v7277
    %v7332 = vpack.c.b16 %v7280, %v7279
    %v7333 = vpack.c.b16 %v7282, %v7281
    %v7334 = vpack.c.b16 %v7284, %v7283
    %v7335 = vpack.c.b16 %v7286, %v7285
    %v7336 = vpack.c.b16 %v7288, %v7287
    %v7337 = vpack.c.b16 %v7290, %v7289
    %v7338 = vpack.c.b16 %v7292, %v7291
    %v7339 = vpack.c.b16 %v7294, %v7293
    %v7340 = vpack.c.b16 %v7296, %v7295
    %v7341 = vpack.c.b16 %v7298, %v7297
    %v7342 = vpack.c.b16 %v7300, %v7299
    %v7343 = vpack.c.b16 %v7302, %v7301
    %v7344 = vpack.c.b16 %v7304, %v7303
    %v7345 = vpack.c.b16 %v7306, %v7305
    %v7346 = vpack.c.b16 %v7308, %v7307
    %v7347 = vpack.c.b16 %v7310, %v7309
    %v7348 = vpack.c.b16 %v7312, %v7311
    %v7349 = vpack.c.b16 %v7314, %v7313
    %v7350 = vpack.c.b16 %v7316, %v7315
    %v7351 = vpack.c.b16 %v7318, %v7317
    %v7352 = vpack.c.b16 %v7320, %v7319
    %7385 = vmatprep.subr.bf16.mxu0 0
    %7386 = vmatpush1.bf16.msra.mxu0 %v7328
    %7387 = vmatprep.subr.bf16.mxu0 0
    %7388 = vmatpush1.bf16.msra.mxu0 %v7327
    %7389 = vmatprep.subr.bf16.mxu0 0
    %7390 = vmatpush1.bf16.msra.mxu0 %v7326
    %7391 = vmatprep.subr.bf16.mxu0 0
    %7392 = vmatpush1.bf16.msra.mxu0 %v7325
    %7393 = vmatprep.subr.bf16.mxu0 0
    %7394 = vmatpush1.bf16.msra.mxu0 %v7324
    %7395 = vmatprep.subr.bf16.mxu0 0
    %7396 = vmatpush1.bf16.msra.mxu0 %v7323
    %7397 = vmatprep.subr.bf16.mxu0 0
    %7398 = vmatpush1.bf16.msra.mxu0 %v7322
    %7399 = vmatprep.subr.bf16.mxu0 0
    %7400 = vmatpush1.bf16.msra.mxu0 %v7321
    %7401 = vmatprep.subr.bf16.mxu0 0
    %7402 = vmatpush2.bf16.msra.mxu0 %v7336
    %7403 = vmatprep.subr.bf16.mxu0 0
    %7404 = vmatpush2.bf16.msra.mxu0 %v7335
    %7405 = vmatprep.subr.bf16.mxu0 0
    %7406 = vmatpush2.bf16.msra.mxu0 %v7334
    %7407 = vmatprep.subr.bf16.mxu0 0
    %7408 = vmatpush2.bf16.msra.mxu0 %v7333
    %7409 = vmatprep.subr.bf16.mxu0 0
    %7410 = vmatpush2.bf16.msra.mxu0 %v7332
    %7411 = vmatprep.subr.bf16.mxu0 0
    %7412 = vmatpush2.bf16.msra.mxu0 %v7331
    %7413 = vmatprep.subr.bf16.mxu0 0
    %7414 = vmatpush2.bf16.msra.mxu0 %v7330
    %7415 = vmatprep.subr.bf16.mxu0 0
    %7416 = vmatpush2.bf16.msra.mxu0 %v7329
    %7417 = vmatprep.mubr.bf16.mxu0 %v7120
    %7418 = vmatmul.mubr.bf16.gmra.mxu0 %v4742
    %v7419 = vpop.f32.mrf.mxu0
    %v7420 = vadd.f32 %v7191, %v7419
    %v7421 = vpop.f32.mrf.mxu0
    %v7422 = vpop.f32.mrf.mxu0
    %v7423 = vpop.f32.mrf.mxu0
    %7424 = vdwg.mxu0
    %7425 = vmatprep.subr.bf16.mxu0 0
    %7426 = vmatpush1.bf16.msra.mxu0 %v7344
    %7427 = vmatprep.subr.bf16.mxu0 0
    %7428 = vmatpush1.bf16.msra.mxu0 %v7343
    %7429 = vmatprep.subr.bf16.mxu0 0
    %7430 = vmatpush1.bf16.msra.mxu0 %v7342
    %7431 = vmatprep.subr.bf16.mxu0 0
    %7432 = vmatpush1.bf16.msra.mxu0 %v7341
    %7433 = vmatprep.subr.bf16.mxu0 0
    %7434 = vmatpush1.bf16.msra.mxu0 %v7340
    %7435 = vmatprep.subr.bf16.mxu0 0
    %7436 = vmatpush1.bf16.msra.mxu0 %v7339
    %7437 = vmatprep.subr.bf16.mxu0 0
    %7438 = vmatpush1.bf16.msra.mxu0 %v7338
    %7439 = vmatprep.subr.bf16.mxu0 0
    %7440 = vmatpush1.bf16.msra.mxu0 %v7337
    %7441 = vmatprep.subr.bf16.mxu0 0
    %7442 = vmatpush2.bf16.msra.mxu0 %v7352
    %7443 = vmatprep.subr.bf16.mxu0 0
    %7444 = vmatpush2.bf16.msra.mxu0 %v7351
    %7445 = vmatprep.subr.bf16.mxu0 0
    %7446 = vmatpush2.bf16.msra.mxu0 %v7350
    %7447 = vmatprep.subr.bf16.mxu0 0
    %7448 = vmatpush2.bf16.msra.mxu0 %v7349
    %7449 = vmatprep.subr.bf16.mxu0 0
    %7450 = vmatpush2.bf16.msra.mxu0 %v7348
    %7451 = vmatprep.subr.bf16.mxu0 0
    %7452 = vmatpush2.bf16.msra.mxu0 %v7347
    %7453 = vmatprep.subr.bf16.mxu0 0
    %7454 = vmatpush2.bf16.msra.mxu0 %v7346
    %7455 = vmatprep.subr.bf16.mxu0 0
    %7456 = vmatpush2.bf16.msra.mxu0 %v7345
    %7457 = vmatprep.mubr.bf16.mxu0 %v4743
    %7458 = vmatmul.mubr.bf16.gmra.mxu0 %v7121
    %v7459 = vpop.f32.mrf.mxu0
    %v7460 = vadd.f32 %v7420, %v7459
    %v7461 = vpop.f32.mrf.mxu0
    %v7462 = vpop.f32.mrf.mxu0
    %v7463 = vpop.f32.mrf.mxu0
    %7464 = vdwg.mxu0
    %vm7465 = vcmask 15360
    %7466 = vst.msk [vmem:[%s6] sm:$0xff] %vm7465, %v7460
    // Predicated region
    $region42: #{birnn_forward.1} parent=1 // pred_check
      _
    $region43: #{birnn_forward.1} parent=1 // pred_check_branch
      %7468 = sbr.rel (0) target = $region45
    $region44: #{birnn_forward.1} parent=1 // pred_region
      _
    $region45: #{birnn_forward.1} parent=1 // pred_fallthru
      _
    // Predicated region
    $region46: #{birnn_forward.1} parent=1 // pred_check
      _
    $region47: #{birnn_forward.1} parent=1 // pred_check_branch
      %7470 = sbr.rel (0) target = $region49
    $region48: #{birnn_forward.1} parent=1 // pred_region
      _
    $region49: #{birnn_forward.1} parent=1 // pred_fallthru
      _
    %7471 = vsyncpa [#allocation4], 1
    %7472 = vsyncpa [#allocation6], 1
    %7473 = vsyncpa [#allocation9], 1

</llo_original>
